<compile_context>
chip_gen: v7x
topology: tpu7x:2x2x1
jax: 0.10.0
libtpu: 0.0.40
codegen_flags: <defaults>
</compile_context>

<pallas_src>
import jax
import jax.numpy as jnp
from jax import lax
from jax.experimental import pallas as pl
from jax.experimental.pallas import tpu as pltpu


def llpkt_kernel(q_ref, qa_ref, l_ref, key_ref, vm0_ref, wea_ref, bea_ref,
                 w0_ref, biasp_ref, bfold_ref,
                 out_ref,
                 vm_scr, qcw_scr, lcw_scr, ler_scr, lad_scr,
                 qer_scr, qad_scr, mast_scr):
    c = pl.program_id(1)                      # chunk index (inner, "arbitrary")
    T, B, D = q_ref.shape                     # B == batch-tile size here
    L = l_ref.shape[1]
    C = key_ref.shape[0]
    LD = 4 * D
    TB = T * B
    TLB = T * L * B
    sdt = ler_scr.dtype                       # state-scratch dtype (f32 / bf16)

    @pl.when(c == 0)
    def _():
        # torch re-inits value_matrix (kaiming) every forward(); a deterministic
        # init is passed in and tiled over the batch tile.
        vm_scr[...] = jnp.broadcast_to(vm0_ref[...][None, :, :], (B, C, D))

    # ---------------- Phase 1: batched, vm-independent MXU work -------------
    q_bf = q_ref[...]                         # (T, B, D) bf16
    qa_bf = qa_ref[...]                       # (T, B, D) bf16
    l_bf = l_ref[...]                         # (T, L, B, D) bf16
    q_flat = q_bf.reshape(TB, D)
    qa_flat = qa_bf.reshape(TB, D)
    l_flat = l_bf.reshape(TLB, D)

    # correlation weights: softmax(x @ key.T) for all q rows and lecture rows
    x_corr = jnp.concatenate([q_flat, l_flat], axis=0)            # (TB+TLB, D)
    sim = lax.dot_general(x_corr, key_ref[...], (((1,), (1,)), ((), ())),
                          preferred_element_type=jnp.float32)     # (TB+TLB, C)
    sim = sim - jnp.max(sim, axis=1, keepdims=True)
    e = jnp.exp(sim)
    cw = e * pl.reciprocal(jnp.sum(e, axis=1, keepdims=True), approx=True)
    # One batched relayout per chunk: C moves lanes -> sublanes so the per-step
    # broadcast onto vm's (B, C=sublane, D=lane) layout is a lane splat only.
    qcw_scr[...] = cw[:TB].reshape(T, B, C)[..., None].astype(sdt)
    lcw_scr[...] = cw[TB:].reshape(T, L, B, C)[..., None].astype(sdt)

    # fused erase|add projections for all lecture rows and all qa rows
    x_ea = jnp.concatenate([l_flat, qa_flat], axis=0)             # (TLB+TB, D)
    ea = jnp.dot(x_ea, wea_ref[...],
                 preferred_element_type=jnp.float32) + bea_ref[...]
    erase = jax.nn.sigmoid(ea[:, :D])
    add = jnp.tanh(ea[:, D:])
    ler_scr[...] = erase[:TLB].reshape(T, L, B, D).astype(sdt)
    lad_scr[...] = add[:TLB].reshape(T, L, B, D).astype(sdt)
    qer_scr[...] = erase[TLB:].reshape(T, B, D).astype(sdt)
    qad_scr[...] = add[TLB:].reshape(T, B, D).astype(sdt)

    # recurrence-independent mastery-feature quarters, written batched.
    # TODO(synk): torch feeds f32 embeddings here; bf16-gathered tables cause a
    # tiny (~1e-3 relative) drift in the prediction-head inputs.
    mast_scr[:, :, D:2 * D] = q_bf.astype(jnp.float32)
    mast_scr[:, :, 3 * D:] = l_bf[:, L - 1].astype(jnp.float32)

    # ---------------- Phase 2: sequential DKVMN recurrence (VPU only) -------
    def step(t, vm):
        q_cwb = jnp.broadcast_to(qcw_scr[t].astype(jnp.float32), (B, C, D))
        mast_scr[t, :, :D] = jnp.sum(q_cwb * vm, axis=1)          # q_read

        l_read = jnp.zeros((B, D), jnp.float32)
        for j in range(L):                    # lec_len: small, static unroll
            l_cwb = jnp.broadcast_to(lcw_scr[t, j].astype(jnp.float32),
                                     (B, C, D))
            l_read = l_read + jnp.sum(l_cwb * vm, axis=1)         # read first
            er = ler_scr[t, j].astype(jnp.float32)[:, None, :]    # (B, 1, D)
            ad = lad_scr[t, j].astype(jnp.float32)[:, None, :]
            vm = vm * (1.0 - er * l_cwb) + ad * l_cwb             # then write
        mast_scr[t, :, 2 * D:3 * D] = l_read

        # post-prediction write with (q correlation weight, qa interaction)
        er = qer_scr[t].astype(jnp.float32)[:, None, :]
        ad = qad_scr[t].astype(jnp.float32)[:, None, :]
        vm = vm * (1.0 - er * q_cwb) + ad * q_cwb
        return vm

    # NOTE: padded tail timesteps also run (vm keeps mutating past the last
    # real step); harmless because vm is never an output and padding is only at
    # the sequence tail.
    unroll = T if T <= 16 else 8
    vm_scr[...] = lax.fori_loop(0, T, step, vm_scr[...], unroll=unroll)

    # ---------------- Phase 3: batched LayerNorm + FFN + folded head --------
    bp = biasp_ref[...]                       # (4, LD) packed row params
    ln_g = bp[0:1, :]
    ln_b = bp[1:2, :]
    b0 = bp[2:3, :]
    w1f = bp[3:4, :]                          # ffn[1].weight @ wout (folded)

    x = mast_scr[...].reshape(TB, LD)
    mu = jnp.mean(x, axis=1, keepdims=True)
    var = jnp.mean(jnp.square(x - mu), axis=1, keepdims=True)
    xn = (x - mu) * lax.rsqrt(var + 1e-5) * ln_g + ln_b           # layer_norm1

    h = jnp.maximum(
        jnp.dot(xn.astype(jnp.bfloat16), w0_ref[...],
                preferred_element_type=jnp.float32) + b0, 0.0)
    # TODO(synk): nn.Dropout after ffn[1] is train-mode only; eval identity.
    logit = jnp.sum(h * w1f, axis=1, keepdims=True) + bfold_ref[0, 0]
    out_ref[...] = jax.nn.sigmoid(logit).reshape(1, 1, 1, TB)     # lane-dense


def llpkt_forward(q_data, qa_data, l_data, params, *, chunk=32,
                  batch_tile=None, state_scratch_dtype=jnp.float32):
    B, S = q_data.shape
    L = l_data.shape[2]
    C, D = params["key"].shape
    LD = 4 * D

    # Embedding gathers directly in seq-major layout (no activation transposes
    # in the wrapper); matmul operands cast to bf16 once, biases/state stay f32.
    q_tab = params["q_embed_w"].astype(jnp.bfloat16)
    qa_tab = params["qa_embed_w"].astype(jnp.bfloat16)
    q_sm = q_tab[q_data.T]                                        # (S, B, D)
    qa_sm = qa_tab[qa_data.T]                                     # (S, B, D)
    l_sm = q_tab[jnp.transpose(l_data, (1, 2, 0))]                # (S, L, B, D)

    # chunk the sequence: T timesteps per grid step
    T = S if S <= chunk else chunk
    S_pad = int(pl.cdiv(S, T)) * T
    if S_pad != S:
        pad = S_pad - S                  # zero rows == padding_idx=0 embeddings
        q_sm = jnp.pad(q_sm, ((0, pad), (0, 0), (0, 0)))
        qa_sm = jnp.pad(qa_sm, ((0, pad), (0, 0), (0, 0)))
        l_sm = jnp.pad(l_sm, ((0, pad), (0, 0), (0, 0), (0, 0)))
    n_chunks = S_pad // T

    # batch tiles (leading "parallel" grid axis; second TensorCore on v7x)
    Bt = B if batch_tile is None else batch_tile
    assert B % Bt == 0 and (Bt == B or Bt % 8 == 0), "bad batch_tile"
    n_btiles = B // Bt

    # fused / folded / packed parameters
    wea = jnp.concatenate([params["we"], params["wa"]], axis=1).astype(jnp.bfloat16)
    bea = jnp.concatenate([params["be"], params["ba"]], axis=1)           # (1, 2D)
    w1f = (params["w1"] @ params["wout"].T).reshape(1, LD)                # fold linear_out into ffn[1]
    bfold = params["b1"] @ params["wout"].T + params["bout"]              # (1, 1)
    biasp = jnp.concatenate([params["ln_g"], params["ln_b"], params["b0"],
                             w1f], axis=0)                                # (4, LD)
    key_bf = params["key"].astype(jnp.bfloat16)
    w0_bf = params["w0"].astype(jnp.bfloat16)

    # explicit VMEM budget: scratch + double-buffered blocks + resident weights
    st = jnp.dtype(state_scratch_dtype).itemsize
    scratch_bytes = (
        4 * Bt * C * D                                   # value-matrix carry (f32)
        + st * T * Bt * (L + 1) * C * 128                # cw scratches (lane-padded)
        + st * 2 * T * Bt * (L + 1) * D                  # erase / add scratches
        + 4 * T * Bt * LD)                               # mastery features
    block_bytes = 2 * 2 * (2 * T * Bt * D + T * L * Bt * D)   # bf16 q/qa/l blocks
    weight_bytes = 2 * 2 * (2 * C * D + 2 * D * D + LD * LD) + 4 * (4 * LD + 2 * D)
    vmem_limit = int(min(max(1.3 * (scratch_bytes + block_bytes + weight_bytes),
                             32 << 20), 64 << 20))

    def const(shape):
        nd = len(shape)
        # TODO(synk): these operands are grid-invariant; pl.Buffered(1) would
        # drop their second VMEM buffer, left default here for portability.
        return pl.BlockSpec(shape, lambda bt, c, _nd=nd: (0,) * _nd)

    in_specs = [
        pl.BlockSpec((T, Bt, D), lambda bt, c: (c, bt, 0)),        # q embeddings
        pl.BlockSpec((T, Bt, D), lambda bt, c: (c, bt, 0)),        # qa embeddings
        pl.BlockSpec((T, L, Bt, D), lambda bt, c: (c, 0, bt, 0)),  # lecture emb.
        const((C, D)),                                             # key matrix
        const((C, D)),                                             # value-matrix init
        const((D, 2 * D)),                                         # fused erase|add W
        const((1, 2 * D)),                                         # fused erase|add b
        const((LD, LD)),                                           # ffn[0] weight
        const((4, LD)),                                            # packed row params
        pl.BlockSpec(memory_space=pltpu.MemorySpace.SMEM),         # folded out bias
    ]
    out_spec = pl.BlockSpec((1, 1, 1, T * Bt), lambda bt, c: (bt, c, 0, 0))

    out = pl.pallas_call(
        llpkt_kernel,
        out_shape=jax.ShapeDtypeStruct((n_btiles, n_chunks, 1, T * Bt),
                                       jnp.float32),
        grid_spec=pltpu.PrefetchScalarGridSpec(
            num_scalar_prefetch=0,
            grid=(n_btiles, n_chunks),
            in_specs=in_specs,
            out_specs=out_spec,
            scratch_shapes=[
                pltpu.VMEM((Bt, C, D), jnp.float32),               # vm carry
                pltpu.VMEM((T, Bt, C, 1), state_scratch_dtype),    # q corr w
                pltpu.VMEM((T, L, Bt, C, 1), state_scratch_dtype), # lecture corr w
                pltpu.VMEM((T, L, Bt, D), state_scratch_dtype),    # lecture erase
                pltpu.VMEM((T, L, Bt, D), state_scratch_dtype),    # lecture add
                pltpu.VMEM((T, Bt, D), state_scratch_dtype),       # qa erase
                pltpu.VMEM((T, Bt, D), state_scratch_dtype),       # qa add
                pltpu.VMEM((T, Bt, LD), jnp.float32),              # mastery feats
            ],
        ),
        compiler_params=pltpu.CompilerParams(
            # batch tiles independent -> "parallel"; vm carried over chunks ->
            # "arbitrary" (sequential) inner axis.
            dimension_semantics=("parallel", "arbitrary"),
            vmem_limit_bytes=vmem_limit),
    )(q_sm, qa_sm, l_sm, key_bf, params["vm0"], wea, bea, w0_bf, biasp, bfold)

    out = out.reshape(n_btiles, n_chunks, T, Bt)
    out = jnp.transpose(out, (0, 3, 1, 2)).reshape(B, S_pad)
    return out[:, :S]                                              # (B, S)


if __name__ == "__main__":
    # small config consistent with the module
    B, S, L = 4, 6, 3          # batch, seq_len, lec_len
    D = 128                    # hidden_dim (= key_dim = value_dim)
    C = 8                      # num_concepts
    NQ, NL = 16, 8             # num_items, num_nonassessed_items
    LD = 4 * D

    key = jax.random.PRNGKey(0)
    ks = jax.random.split(key, 16)

    def kaiming(k, shape, fan_in):
        return jax.random.normal(k, shape, jnp.float32) * jnp.sqrt(2.0 / fan_in)

    params = {
        # key_matrix_embed rows 1..C (row 0 is never looked up)
        "key": kaiming(ks[0], (C, D), D),
        # per-forward value_matrix init (kaiming normal, deterministic here)
        "vm0": kaiming(ks[1], (C, D), D),
        # q_embed_matrix / qa_embed_matrix with padding_idx=0 zeroed
        "q_embed_w": kaiming(ks[2], (NQ + NL + 1, D), D).at[0].set(0.0),
        "qa_embed_w": kaiming(ks[3], (2 * NQ + 1, D), D).at[0].set(0.0),
        # erase / add linears (weights stored as (in, out))
        "we": kaiming(ks[4], (D, D), D),
        "be": jax.random.normal(ks[5], (1, D), jnp.float32) * 0.02,
        "wa": kaiming(ks[6], (D, D), D),
        "ba": jax.random.normal(ks[7], (1, D), jnp.float32) * 0.02,
        # layer_norm1 (torch defaults: gamma=1, beta=0)
        "ln_g": jnp.ones((1, LD), jnp.float32),
        "ln_b": jnp.zeros((1, LD), jnp.float32),
        # ffn[0], ffn[1]
        "w0": kaiming(ks[8], (LD, LD), LD),
        "b0": jax.random.normal(ks[9], (1, LD), jnp.float32) * 0.02,
        "w1": kaiming(ks[10], (LD, LD), LD),
        "b1": jax.random.normal(ks[11], (1, LD), jnp.float32) * 0.02,
        # linear_out (4D -> 1)
        "wout": kaiming(ks[12], (1, LD), LD),
        "bout": jnp.zeros((1, 1), jnp.float32),
    }

    q_data = jax.random.randint(ks[13], (B, S), 1, NQ + 1)
    qa_data = jax.random.randint(ks[14], (B, S), 1, 2 * NQ + 1)
    l_data = jax.random.randint(ks[15], (B, S, L), 1, NQ + NL + 1)
    # NOTE: `users` / u_embed_matrix are looked up in the torch forward but
    # never used in the prediction path (write() ignores user_embedded), so the
    # lookup is omitted.

    out = llpkt_forward(q_data, qa_data, l_data, params)
    jax.block_until_ready(out)
    assert out.shape == (B, S) and out.dtype == jnp.float32
    assert bool(jnp.all(jnp.isfinite(out)))
    print("KERNEL_OK")
</pallas_src>

<mosaic_0001>
module attributes {stable_mosaic.version = 11 : i64} {
  func.func @llpkt_kernel(%arg0: i32, %arg1: i32, %arg2: memref<6x4x128xbf16, #tpu.memory_space<vmem>>, %arg3: memref<6x4x128xbf16, #tpu.memory_space<vmem>>, %arg4: memref<6x3x4x128xbf16, #tpu.memory_space<vmem>>, %arg5: memref<8x128xbf16, #tpu.memory_space<vmem>>, %arg6: memref<8x128xf32, #tpu.memory_space<vmem>>, %arg7: memref<128x256xbf16, #tpu.memory_space<vmem>>, %arg8: memref<1x256xf32, #tpu.memory_space<vmem>>, %arg9: memref<512x512xbf16, #tpu.memory_space<vmem>>, %arg10: memref<4x512xf32, #tpu.memory_space<vmem>>, %arg11: memref<1x1xf32, #tpu.memory_space<smem>>, %arg12: memref<1x1x1x24xf32, #tpu.memory_space<vmem>>, %arg13: memref<4x8x128xf32, #tpu.memory_space<vmem>>, %arg14: memref<6x4x8x1xf32, #tpu.memory_space<vmem>>, %arg15: memref<6x3x4x8x1xf32, #tpu.memory_space<vmem>>, %arg16: memref<6x3x4x128xf32, #tpu.memory_space<vmem>>, %arg17: memref<6x3x4x128xf32, #tpu.memory_space<vmem>>, %arg18: memref<6x4x128xf32, #tpu.memory_space<vmem>>, %arg19: memref<6x4x128xf32, #tpu.memory_space<vmem>>, %arg20: memref<6x4x512xf32, #tpu.memory_space<vmem>>) attributes {dimension_semantics = [#tpu.dimension_semantics<parallel>, #tpu.dimension_semantics<arbitrary>], iteration_bounds = array<i64: 1, 1>, scalar_prefetch = 0 : i64, scratch_operands = 8 : i64, tpu.core_type = #tpu.core_type<tc>, window_params = [{transform_indices = @transform_0, window_bounds = array<i64: 6, 4, 128>}, {transform_indices = @transform_1, window_bounds = array<i64: 6, 4, 128>}, {transform_indices = @transform_2, window_bounds = array<i64: 6, 3, 4, 128>}, {pipeline_mode = #tpu.pipeline_mode<synchronous>, transform_indices = @transform_3, window_bounds = array<i64: 8, 128>}, {pipeline_mode = #tpu.pipeline_mode<synchronous>, transform_indices = @transform_4, window_bounds = array<i64: 8, 128>}, {pipeline_mode = #tpu.pipeline_mode<synchronous>, transform_indices = @transform_5, window_bounds = array<i64: 128, 256>}, {pipeline_mode = #tpu.pipeline_mode<synchronous>, transform_indices = @transform_6, window_bounds = array<i64: 1, 256>}, {pipeline_mode = #tpu.pipeline_mode<synchronous>, transform_indices = @transform_7, window_bounds = array<i64: 512, 512>}, {pipeline_mode = #tpu.pipeline_mode<synchronous>, transform_indices = @transform_8, window_bounds = array<i64: 4, 512>}, {transform_indices = @transform_9, window_bounds = array<i64: 1, 1>}, {transform_indices = @transform_10, window_bounds = array<i64: 1, 1, 1, 24>}]} {
    %c0_i32 = arith.constant 0 : i32
    %0 = arith.cmpi eq, %arg1, %c0_i32 : i32
    %1 = arith.extui %0 : i1 to i32
    %c0_i32_0 = arith.constant 0 : i32
    %2 = arith.cmpi ne, %1, %c0_i32_0 : i32
    scf.if %2 {
      %c0_373 = arith.constant 0 : index
      %c0_374 = arith.constant 0 : index
      %738 = vector.load %arg6[%c0_373, %c0_374] : memref<8x128xf32, #tpu.memory_space<vmem>>, vector<8x128xf32>
      %739 = vector.shape_cast %738 : vector<8x128xf32> to vector<1x8x128xf32>
      %740 = vector.shape_cast %739 : vector<1x8x128xf32> to vector<1x8x128xf32>
      %741 = vector.broadcast %740 : vector<1x8x128xf32> to vector<4x8x128xf32>
      %c0_375 = arith.constant 0 : index
      %c0_376 = arith.constant 0 : index
      %c0_377 = arith.constant 0 : index
      %742 = vector.load %arg13[%c0_375, %c0_376, %c0_377] : memref<4x8x128xf32, #tpu.memory_space<vmem>>, vector<4x8x128xf32>
      tpu.vector_store %arg13[%c0_375, %c0_376, %c0_377], %741 {strides = array<i32>} : memref<4x8x128xf32, #tpu.memory_space<vmem>>, vector<4x8x128xf32>,
    } else {
    }
    %c0 = arith.constant 0 : index
    %c0_1 = arith.constant 0 : index
    %c0_2 = arith.constant 0 : index
    %3 = vector.load %arg2[%c0, %c0_1, %c0_2] : memref<6x4x128xbf16, #tpu.memory_space<vmem>>, vector<6x4x128xbf16>
    %c0_3 = arith.constant 0 : index
    %c0_4 = arith.constant 0 : index
    %c0_5 = arith.constant 0 : index
    %4 = vector.load %arg3[%c0_3, %c0_4, %c0_5] : memref<6x4x128xbf16, #tpu.memory_space<vmem>>, vector<6x4x128xbf16>
    %c0_6 = arith.constant 0 : index
    %c0_7 = arith.constant 0 : index
    %c0_8 = arith.constant 0 : index
    %c0_9 = arith.constant 0 : index
    %5 = vector.load %arg4[%c0_6, %c0_7, %c0_8, %c0_9] : memref<6x3x4x128xbf16, #tpu.memory_space<vmem>>, vector<6x3x4x128xbf16>
    %6 = vector.shape_cast %3 : vector<6x4x128xbf16> to vector<24x128xbf16>
    %7 = vector.shape_cast %4 : vector<6x4x128xbf16> to vector<24x128xbf16>
    %8 = vector.shape_cast %5 : vector<6x3x4x128xbf16> to vector<72x128xbf16>
    %9 = tpu.concatenate %6, %8 in 0 : vector<24x128xbf16>, vector<72x128xbf16> -> vector<96x128xbf16>
    %c0_10 = arith.constant 0 : index
    %c0_11 = arith.constant 0 : index
    %10 = vector.load %arg5[%c0_10, %c0_11] : memref<8x128xbf16, #tpu.memory_space<vmem>>, vector<8x128xbf16>
    %cst = arith.constant dense<0.000000e+00> : vector<96x8xf32>
    %11 = tpu.matmul %9, %10, %cst {dimension_numbers = #tpu.dot_dimension_numbers<[1], [1], [0], [0], [0, 0, 1, 0], [], []>} : vector<96x128xbf16>, vector<8x128xbf16>, vector<96x8xf32> -> vector<96x8xf32>
    %cst_12 = arith.constant dense<0xFF800000> : vector<96xf32>
    %12 = vector.multi_reduction <maximumf>, %11, %cst_12 [1] : vector<96x8xf32> to vector<96xf32>
    %13 = vector.shape_cast %12 : vector<96xf32> to vector<96x1xf32>
    %14 = vector.broadcast %13 : vector<96x1xf32> to vector<96x8xf32>
    %15 = arith.subf %11, %14 : vector<96x8xf32>
    %16 = math.exp %15 : vector<96x8xf32>
    %cst_13 = arith.constant dense<0.000000e+00> : vector<96xf32>
    %17 = vector.multi_reduction <add>, %16, %cst_13 [1] : vector<96x8xf32> to vector<96xf32>
    %18 = vector.shape_cast %17 : vector<96xf32> to vector<96x1xf32>
    %19 = tpu.reciprocal %18 {approx = true} : vector<96x1xf32> -> vector<96x1xf32>
    %20 = vector.broadcast %19 : vector<96x1xf32> to vector<96x8xf32>
    %21 = arith.mulf %16, %20 : vector<96x8xf32>
    %22 = vector.extract_strided_slice %21 {offsets = [0, 0], sizes = [24, 8], strides = [1, 1]} : vector<96x8xf32> to vector<24x8xf32>
    %23 = vector.shape_cast %22 : vector<24x8xf32> to vector<6x4x8xf32>
    %24 = vector.shape_cast %23 : vector<6x4x8xf32> to vector<6x4x8x1xf32>
    %c0_14 = arith.constant 0 : index
    %c0_15 = arith.constant 0 : index
    %c0_16 = arith.constant 0 : index
    %c0_17 = arith.constant 0 : index
    %25 = vector.load %arg14[%c0_14, %c0_15, %c0_16, %c0_17] : memref<6x4x8x1xf32, #tpu.memory_space<vmem>>, vector<6x4x8x1xf32>
    tpu.vector_store %arg14[%c0_14, %c0_15, %c0_16, %c0_17], %24 {strides = array<i32>} : memref<6x4x8x1xf32, #tpu.memory_space<vmem>>, vector<6x4x8x1xf32>,
    %26 = vector.extract_strided_slice %21 {offsets = [24, 0], sizes = [72, 8], strides = [1, 1]} : vector<96x8xf32> to vector<72x8xf32>
    %27 = vector.shape_cast %26 : vector<72x8xf32> to vector<6x3x4x8xf32>
    %28 = vector.shape_cast %27 : vector<6x3x4x8xf32> to vector<6x3x4x8x1xf32>
    %c0_18 = arith.constant 0 : index
    %c0_19 = arith.constant 0 : index
    %c0_20 = arith.constant 0 : index
    %c0_21 = arith.constant 0 : index
    %c0_22 = arith.constant 0 : index
    %29 = vector.load %arg15[%c0_18, %c0_19, %c0_20, %c0_21, %c0_22] : memref<6x3x4x8x1xf32, #tpu.memory_space<vmem>>, vector<6x3x4x8x1xf32>
    tpu.vector_store %arg15[%c0_18, %c0_19, %c0_20, %c0_21, %c0_22], %28 {strides = array<i32>} : memref<6x3x4x8x1xf32, #tpu.memory_space<vmem>>, vector<6x3x4x8x1xf32>,
    %30 = tpu.concatenate %8, %7 in 0 : vector<72x128xbf16>, vector<24x128xbf16> -> vector<96x128xbf16>
    %c0_23 = arith.constant 0 : index
    %c0_24 = arith.constant 0 : index
    %31 = vector.load %arg7[%c0_23, %c0_24] : memref<128x256xbf16, #tpu.memory_space<vmem>>, vector<128x256xbf16>
    %cst_25 = arith.constant dense<0.000000e+00> : vector<96x256xf32>
    %32 = tpu.matmul %30, %31, %cst_25 {dimension_numbers = #tpu.dot_dimension_numbers<[1], [0], [0], [1], [0, 0, 1, 1], [], []>} : vector<96x128xbf16>, vector<128x256xbf16>, vector<96x256xf32> -> vector<96x256xf32>
    %c0_26 = arith.constant 0 : index
    %c0_27 = arith.constant 0 : index
    %33 = vector.load %arg8[%c0_26, %c0_27] : memref<1x256xf32, #tpu.memory_space<vmem>>, vector<1x256xf32>
    %34 = vector.broadcast %33 : vector<1x256xf32> to vector<96x256xf32>
    %35 = arith.addf %32, %34 : vector<96x256xf32>
    %36 = vector.extract_strided_slice %35 {offsets = [0, 0], sizes = [96, 128], strides = [1, 1]} : vector<96x256xf32> to vector<96x128xf32>
    %37 = arith.negf %36 : vector<96x128xf32>
    %38 = math.exp %37 : vector<96x128xf32>
    %cst_28 = arith.constant 1.000000e+00 : f32
    %39 = vector.broadcast %cst_28 : f32 to vector<96x128xf32>
    %40 = arith.addf %39, %38 : vector<96x128xf32>
    %41 = arith.divf %39, %40 : vector<96x128xf32>
    %42 = vector.extract_strided_slice %35 {offsets = [0, 128], sizes = [96, 128], strides = [1, 1]} : vector<96x256xf32> to vector<96x128xf32>
    %43 = math.tanh %42 : vector<96x128xf32>
    %44 = vector.extract_strided_slice %41 {offsets = [0, 0], sizes = [72, 128], strides = [1, 1]} : vector<96x128xf32> to vector<72x128xf32>
    %45 = vector.shape_cast %44 : vector<72x128xf32> to vector<6x3x4x128xf32>
    %c0_29 = arith.constant 0 : index
    %c0_30 = arith.constant 0 : index
    %c0_31 = arith.constant 0 : index
    %c0_32 = arith.constant 0 : index
    %46 = vector.load %arg16[%c0_29, %c0_30, %c0_31, %c0_32] : memref<6x3x4x128xf32, #tpu.memory_space<vmem>>, vector<6x3x4x128xf32>
    tpu.vector_store %arg16[%c0_29, %c0_30, %c0_31, %c0_32], %45 {strides = array<i32>} : memref<6x3x4x128xf32, #tpu.memory_space<vmem>>, vector<6x3x4x128xf32>,
    %47 = vector.extract_strided_slice %43 {offsets = [0, 0], sizes = [72, 128], strides = [1, 1]} : vector<96x128xf32> to vector<72x128xf32>
    %48 = vector.shape_cast %47 : vector<72x128xf32> to vector<6x3x4x128xf32>
    %c0_33 = arith.constant 0 : index
    %c0_34 = arith.constant 0 : index
    %c0_35 = arith.constant 0 : index
    %c0_36 = arith.constant 0 : index
    %49 = vector.load %arg17[%c0_33, %c0_34, %c0_35, %c0_36] : memref<6x3x4x128xf32, #tpu.memory_space<vmem>>, vector<6x3x4x128xf32>
    tpu.vector_store %arg17[%c0_33, %c0_34, %c0_35, %c0_36], %48 {strides = array<i32>} : memref<6x3x4x128xf32, #tpu.memory_space<vmem>>, vector<6x3x4x128xf32>,
    %50 = vector.extract_strided_slice %41 {offsets = [72, 0], sizes = [24, 128], strides = [1, 1]} : vector<96x128xf32> to vector<24x128xf32>
    %51 = vector.shape_cast %50 : vector<24x128xf32> to vector<6x4x128xf32>
    %c0_37 = arith.constant 0 : index
    %c0_38 = arith.constant 0 : index
    %c0_39 = arith.constant 0 : index
    %52 = vector.load %arg18[%c0_37, %c0_38, %c0_39] : memref<6x4x128xf32, #tpu.memory_space<vmem>>, vector<6x4x128xf32>
    tpu.vector_store %arg18[%c0_37, %c0_38, %c0_39], %51 {strides = array<i32>} : memref<6x4x128xf32, #tpu.memory_space<vmem>>, vector<6x4x128xf32>,
    %53 = vector.extract_strided_slice %43 {offsets = [72, 0], sizes = [24, 128], strides = [1, 1]} : vector<96x128xf32> to vector<24x128xf32>
    %54 = vector.shape_cast %53 : vector<24x128xf32> to vector<6x4x128xf32>
    %c0_40 = arith.constant 0 : index
    %c0_41 = arith.constant 0 : index
    %c0_42 = arith.constant 0 : index
    %55 = vector.load %arg19[%c0_40, %c0_41, %c0_42] : memref<6x4x128xf32, #tpu.memory_space<vmem>>, vector<6x4x128xf32>
    tpu.vector_store %arg19[%c0_40, %c0_41, %c0_42], %54 {strides = array<i32>} : memref<6x4x128xf32, #tpu.memory_space<vmem>>, vector<6x4x128xf32>,
    %56 = arith.extf %3 : vector<6x4x128xbf16> to vector<6x4x128xf32>
    %c0_43 = arith.constant 0 : index
    %c0_44 = arith.constant 0 : index
    %c128 = arith.constant 128 : index
    %57 = vector.load %arg20[%c0_43, %c0_44, %c128] : memref<6x4x512xf32, #tpu.memory_space<vmem>>, vector<6x4x128xf32>
    tpu.vector_store %arg20[%c0_43, %c0_44, %c128], %56 {strides = array<i32>} : memref<6x4x512xf32, #tpu.memory_space<vmem>>, vector<6x4x128xf32>,
    %58 = vector.extract_strided_slice %5 {offsets = [0, 2, 0, 0], sizes = [6, 1, 4, 128], strides = [1, 1, 1, 1]} : vector<6x3x4x128xbf16> to vector<6x1x4x128xbf16>
    %59 = vector.shape_cast %58 : vector<6x1x4x128xbf16> to vector<6x4x128xbf16>
    %60 = arith.extf %59 : vector<6x4x128xbf16> to vector<6x4x128xf32>
    %c0_45 = arith.constant 0 : index
    %c0_46 = arith.constant 0 : index
    %c384 = arith.constant 384 : index
    %61 = vector.load %arg20[%c0_45, %c0_46, %c384] : memref<6x4x512xf32, #tpu.memory_space<vmem>>, vector<6x4x128xf32>
    tpu.vector_store %arg20[%c0_45, %c0_46, %c384], %60 {strides = array<i32>} : memref<6x4x512xf32, #tpu.memory_space<vmem>>, vector<6x4x128xf32>,
    %c0_47 = arith.constant 0 : index
    %c0_48 = arith.constant 0 : index
    %c0_49 = arith.constant 0 : index
    %62 = vector.load %arg13[%c0_47, %c0_48, %c0_49] : memref<4x8x128xf32, #tpu.memory_space<vmem>>, vector<4x8x128xf32>
    %c0_i32_50 = arith.constant 0 : i32
    %63 = arith.index_cast %c0_i32_50 : i32 to index
    %c0_51 = arith.constant 0 : index
    %c0_52 = arith.constant 0 : index
    %c0_53 = arith.constant 0 : index
    %64 = vector.load %arg14[%63, %c0_51, %c0_52, %c0_53] : memref<6x4x8x1xf32, #tpu.memory_space<vmem>>, vector<1x4x8x1xf32>
    %65 = vector.shape_cast %64 : vector<1x4x8x1xf32> to vector<4x8x1xf32>
    %66 = vector.shape_cast %65 : vector<4x8x1xf32> to vector<4x8x1xf32>
    %67 = vector.broadcast %66 : vector<4x8x1xf32> to vector<4x8x128xf32>
    %68 = arith.mulf %67, %62 : vector<4x8x128xf32>
    %cst_54 = arith.constant dense<0.000000e+00> : vector<4x128xf32>
    %69 = vector.multi_reduction <add>, %68, %cst_54 [1] : vector<4x8x128xf32> to vector<4x128xf32>
    %70 = arith.index_cast %c0_i32_50 : i32 to index
    %c0_55 = arith.constant 0 : index
    %c0_56 = arith.constant 0 : index
    %71 = vector.load %arg20[%70, %c0_55, %c0_56] : memref<6x4x512xf32, #tpu.memory_space<vmem>>, vector<1x4x128xf32>
    %72 = vector.shape_cast %71 : vector<1x4x128xf32> to vector<4x128xf32>
    %73 = vector.shape_cast %69 : vector<4x128xf32> to vector<1x4x128xf32>
    tpu.vector_store %arg20[%70, %c0_55, %c0_56], %73 {strides = array<i32>} : memref<6x4x512xf32, #tpu.memory_space<vmem>>, vector<1x4x128xf32>,
    %cst_57 = arith.constant 0.000000e+00 : f32
    %74 = vector.broadcast %cst_57 : f32 to vector<4x128xf32>
    %75 = arith.index_cast %c0_i32_50 : i32 to index
    %c0_58 = arith.constant 0 : index
    %c0_59 = arith.constant 0 : index
    %c0_60 = arith.constant 0 : index
    %c0_61 = arith.constant 0 : index
    %76 = vector.load %arg15[%75, %c0_58, %c0_59, %c0_60, %c0_61] : memref<6x3x4x8x1xf32, #tpu.memory_space<vmem>>, vector<1x1x4x8x1xf32>
    %77 = vector.shape_cast %76 : vector<1x1x4x8x1xf32> to vector<4x8x1xf32>
    %78 = vector.shape_cast %77 : vector<4x8x1xf32> to vector<4x8x1xf32>
    %79 = vector.broadcast %78 : vector<4x8x1xf32> to vector<4x8x128xf32>
    %80 = arith.mulf %79, %62 : vector<4x8x128xf32>
    %cst_62 = arith.constant dense<0.000000e+00> : vector<4x128xf32>
    %81 = vector.multi_reduction <add>, %80, %cst_62 [1] : vector<4x8x128xf32> to vector<4x128xf32>
    %82 = arith.addf %74, %81 : vector<4x128xf32>
    %83 = arith.index_cast %c0_i32_50 : i32 to index
    %c0_63 = arith.constant 0 : index
    %c0_64 = arith.constant 0 : index
    %c0_65 = arith.constant 0 : index
    %84 = vector.load %arg16[%83, %c0_63, %c0_64, %c0_65] : memref<6x3x4x128xf32, #tpu.memory_space<vmem>>, vector<1x1x4x128xf32>
    %85 = vector.shape_cast %84 : vector<1x1x4x128xf32> to vector<4x128xf32>
    %86 = vector.shape_cast %85 : vector<4x128xf32> to vector<4x1x128xf32>
    %87 = arith.index_cast %c0_i32_50 : i32 to index
    %c0_66 = arith.constant 0 : index
    %c0_67 = arith.constant 0 : index
    %c0_68 = arith.constant 0 : index
    %88 = vector.load %arg17[%87, %c0_66, %c0_67, %c0_68] : memref<6x3x4x128xf32, #tpu.memory_space<vmem>>, vector<1x1x4x128xf32>
    %89 = vector.shape_cast %88 : vector<1x1x4x128xf32> to vector<4x128xf32>
    %90 = vector.shape_cast %89 : vector<4x128xf32> to vector<4x1x128xf32>
    %91 = vector.broadcast %86 : vector<4x1x128xf32> to vector<4x8x128xf32>
    %92 = arith.mulf %91, %79 : vector<4x8x128xf32>
    %cst_69 = arith.constant 1.000000e+00 : f32
    %93 = vector.broadcast %cst_69 : f32 to vector<4x8x128xf32>
    %94 = arith.subf %93, %92 : vector<4x8x128xf32>
    %95 = arith.mulf %62, %94 : vector<4x8x128xf32>
    %96 = vector.broadcast %90 : vector<4x1x128xf32> to vector<4x8x128xf32>
    %97 = arith.mulf %96, %79 : vector<4x8x128xf32>
    %98 = arith.addf %95, %97 : vector<4x8x128xf32>
    %99 = arith.index_cast %c0_i32_50 : i32 to index
    %c1 = arith.constant 1 : index
    %c0_70 = arith.constant 0 : index
    %c0_71 = arith.constant 0 : index
    %c0_72 = arith.constant 0 : index
    %100 = vector.load %arg15[%99, %c1, %c0_70, %c0_71, %c0_72] : memref<6x3x4x8x1xf32, #tpu.memory_space<vmem>>, vector<1x1x4x8x1xf32>
    %101 = vector.shape_cast %100 : vector<1x1x4x8x1xf32> to vector<4x8x1xf32>
    %102 = vector.shape_cast %101 : vector<4x8x1xf32> to vector<4x8x1xf32>
    %103 = vector.broadcast %102 : vector<4x8x1xf32> to vector<4x8x128xf32>
    %104 = arith.mulf %103, %98 : vector<4x8x128xf32>
    %cst_73 = arith.constant dense<0.000000e+00> : vector<4x128xf32>
    %105 = vector.multi_reduction <add>, %104, %cst_73 [1] : vector<4x8x128xf32> to vector<4x128xf32>
    %106 = arith.addf %82, %105 : vector<4x128xf32>
    %107 = arith.index_cast %c0_i32_50 : i32 to index
    %c1_74 = arith.constant 1 : index
    %c0_75 = arith.constant 0 : index
    %c0_76 = arith.constant 0 : index
    %108 = vector.load %arg16[%107, %c1_74, %c0_75, %c0_76] : memref<6x3x4x128xf32, #tpu.memory_space<vmem>>, vector<1x1x4x128xf32>
    %109 = vector.shape_cast %108 : vector<1x1x4x128xf32> to vector<4x128xf32>
    %110 = vector.shape_cast %109 : vector<4x128xf32> to vector<4x1x128xf32>
    %111 = arith.index_cast %c0_i32_50 : i32 to index
    %c1_77 = arith.constant 1 : index
    %c0_78 = arith.constant 0 : index
    %c0_79 = arith.constant 0 : index
    %112 = vector.load %arg17[%111, %c1_77, %c0_78, %c0_79] : memref<6x3x4x128xf32, #tpu.memory_space<vmem>>, vector<1x1x4x128xf32>
    %113 = vector.shape_cast %112 : vector<1x1x4x128xf32> to vector<4x128xf32>
    %114 = vector.shape_cast %113 : vector<4x128xf32> to vector<4x1x128xf32>
    %115 = vector.broadcast %110 : vector<4x1x128xf32> to vector<4x8x128xf32>
    %116 = arith.mulf %115, %103 : vector<4x8x128xf32>
    %cst_80 = arith.constant 1.000000e+00 : f32
    %117 = vector.broadcast %cst_80 : f32 to vector<4x8x128xf32>
    %118 = arith.subf %117, %116 : vector<4x8x128xf32>
    %119 = arith.mulf %98, %118 : vector<4x8x128xf32>
    %120 = vector.broadcast %114 : vector<4x1x128xf32> to vector<4x8x128xf32>
    %121 = arith.mulf %120, %103 : vector<4x8x128xf32>
    %122 = arith.addf %119, %121 : vector<4x8x128xf32>
    %123 = arith.index_cast %c0_i32_50 : i32 to index
    %c2 = arith.constant 2 : index
    %c0_81 = arith.constant 0 : index
    %c0_82 = arith.constant 0 : index
    %c0_83 = arith.constant 0 : index
    %124 = vector.load %arg15[%123, %c2, %c0_81, %c0_82, %c0_83] : memref<6x3x4x8x1xf32, #tpu.memory_space<vmem>>, vector<1x1x4x8x1xf32>
    %125 = vector.shape_cast %124 : vector<1x1x4x8x1xf32> to vector<4x8x1xf32>
    %126 = vector.shape_cast %125 : vector<4x8x1xf32> to vector<4x8x1xf32>
    %127 = vector.broadcast %126 : vector<4x8x1xf32> to vector<4x8x128xf32>
    %128 = arith.mulf %127, %122 : vector<4x8x128xf32>
    %cst_84 = arith.constant dense<0.000000e+00> : vector<4x128xf32>
    %129 = vector.multi_reduction <add>, %128, %cst_84 [1] : vector<4x8x128xf32> to vector<4x128xf32>
    %130 = arith.addf %106, %129 : vector<4x128xf32>
    %131 = arith.index_cast %c0_i32_50 : i32 to index
    %c2_85 = arith.constant 2 : index
    %c0_86 = arith.constant 0 : index
    %c0_87 = arith.constant 0 : index
    %132 = vector.load %arg16[%131, %c2_85, %c0_86, %c0_87] : memref<6x3x4x128xf32, #tpu.memory_space<vmem>>, vector<1x1x4x128xf32>
    %133 = vector.shape_cast %132 : vector<1x1x4x128xf32> to vector<4x128xf32>
    %134 = vector.shape_cast %133 : vector<4x128xf32> to vector<4x1x128xf32>
    %135 = arith.index_cast %c0_i32_50 : i32 to index
    %c2_88 = arith.constant 2 : index
    %c0_89 = arith.constant 0 : index
    %c0_90 = arith.constant 0 : index
    %136 = vector.load %arg17[%135, %c2_88, %c0_89, %c0_90] : memref<6x3x4x128xf32, #tpu.memory_space<vmem>>, vector<1x1x4x128xf32>
    %137 = vector.shape_cast %136 : vector<1x1x4x128xf32> to vector<4x128xf32>
    %138 = vector.shape_cast %137 : vector<4x128xf32> to vector<4x1x128xf32>
    %139 = vector.broadcast %134 : vector<4x1x128xf32> to vector<4x8x128xf32>
    %140 = arith.mulf %139, %127 : vector<4x8x128xf32>
    %cst_91 = arith.constant 1.000000e+00 : f32
    %141 = vector.broadcast %cst_91 : f32 to vector<4x8x128xf32>
    %142 = arith.subf %141, %140 : vector<4x8x128xf32>
    %143 = arith.mulf %122, %142 : vector<4x8x128xf32>
    %144 = vector.broadcast %138 : vector<4x1x128xf32> to vector<4x8x128xf32>
    %145 = arith.mulf %144, %127 : vector<4x8x128xf32>
    %146 = arith.addf %143, %145 : vector<4x8x128xf32>
    %147 = arith.index_cast %c0_i32_50 : i32 to index
    %c0_92 = arith.constant 0 : index
    %c256 = arith.constant 256 : index
    %148 = vector.load %arg20[%147, %c0_92, %c256] : memref<6x4x512xf32, #tpu.memory_space<vmem>>, vector<1x4x128xf32>
    %149 = vector.shape_cast %148 : vector<1x4x128xf32> to vector<4x128xf32>
    %150 = vector.shape_cast %130 : vector<4x128xf32> to vector<1x4x128xf32>
    tpu.vector_store %arg20[%147, %c0_92, %c256], %150 {strides = array<i32>} : memref<6x4x512xf32, #tpu.memory_space<vmem>>, vector<1x4x128xf32>,
    %151 = arith.index_cast %c0_i32_50 : i32 to index
    %c0_93 = arith.constant 0 : index
    %c0_94 = arith.constant 0 : index
    %152 = vector.load %arg18[%151, %c0_93, %c0_94] : memref<6x4x128xf32, #tpu.memory_space<vmem>>, vector<1x4x128xf32>
    %153 = vector.shape_cast %152 : vector<1x4x128xf32> to vector<4x128xf32>
    %154 = vector.shape_cast %153 : vector<4x128xf32> to vector<4x1x128xf32>
    %155 = arith.index_cast %c0_i32_50 : i32 to index
    %c0_95 = arith.constant 0 : index
    %c0_96 = arith.constant 0 : index
    %156 = vector.load %arg19[%155, %c0_95, %c0_96] : memref<6x4x128xf32, #tpu.memory_space<vmem>>, vector<1x4x128xf32>
    %157 = vector.shape_cast %156 : vector<1x4x128xf32> to vector<4x128xf32>
    %158 = vector.shape_cast %157 : vector<4x128xf32> to vector<4x1x128xf32>
    %159 = vector.broadcast %154 : vector<4x1x128xf32> to vector<4x8x128xf32>
    %160 = arith.mulf %159, %67 : vector<4x8x128xf32>
    %cst_97 = arith.constant 1.000000e+00 : f32
    %161 = vector.broadcast %cst_97 : f32 to vector<4x8x128xf32>
    %162 = arith.subf %161, %160 : vector<4x8x128xf32>
    %163 = arith.mulf %146, %162 : vector<4x8x128xf32>
    %164 = vector.broadcast %158 : vector<4x1x128xf32> to vector<4x8x128xf32>
    %165 = arith.mulf %164, %67 : vector<4x8x128xf32>
    %166 = arith.addf %163, %165 : vector<4x8x128xf32>
    %c1_i32 = arith.constant 1 : i32
    %167 = arith.index_cast %c1_i32 : i32 to index
    %c0_98 = arith.constant 0 : index
    %c0_99 = arith.constant 0 : index
    %c0_100 = arith.constant 0 : index
    %168 = vector.load %arg14[%167, %c0_98, %c0_99, %c0_100] : memref<6x4x8x1xf32, #tpu.memory_space<vmem>>, vector<1x4x8x1xf32>
    %169 = vector.shape_cast %168 : vector<1x4x8x1xf32> to vector<4x8x1xf32>
    %170 = vector.shape_cast %169 : vector<4x8x1xf32> to vector<4x8x1xf32>
    %171 = vector.broadcast %170 : vector<4x8x1xf32> to vector<4x8x128xf32>
    %172 = arith.mulf %171, %166 : vector<4x8x128xf32>
    %cst_101 = arith.constant dense<0.000000e+00> : vector<4x128xf32>
    %173 = vector.multi_reduction <add>, %172, %cst_101 [1] : vector<4x8x128xf32> to vector<4x128xf32>
    %174 = arith.index_cast %c1_i32 : i32 to index
    %c0_102 = arith.constant 0 : index
    %c0_103 = arith.constant 0 : index
    %175 = vector.load %arg20[%174, %c0_102, %c0_103] : memref<6x4x512xf32, #tpu.memory_space<vmem>>, vector<1x4x128xf32>
    %176 = vector.shape_cast %175 : vector<1x4x128xf32> to vector<4x128xf32>
    %177 = vector.shape_cast %173 : vector<4x128xf32> to vector<1x4x128xf32>
    tpu.vector_store %arg20[%174, %c0_102, %c0_103], %177 {strides = array<i32>} : memref<6x4x512xf32, #tpu.memory_space<vmem>>, vector<1x4x128xf32>,
    %cst_104 = arith.constant 0.000000e+00 : f32
    %178 = vector.broadcast %cst_104 : f32 to vector<4x128xf32>
    %179 = arith.index_cast %c1_i32 : i32 to index
    %c0_105 = arith.constant 0 : index
    %c0_106 = arith.constant 0 : index
    %c0_107 = arith.constant 0 : index
    %c0_108 = arith.constant 0 : index
    %180 = vector.load %arg15[%179, %c0_105, %c0_106, %c0_107, %c0_108] : memref<6x3x4x8x1xf32, #tpu.memory_space<vmem>>, vector<1x1x4x8x1xf32>
    %181 = vector.shape_cast %180 : vector<1x1x4x8x1xf32> to vector<4x8x1xf32>
    %182 = vector.shape_cast %181 : vector<4x8x1xf32> to vector<4x8x1xf32>
    %183 = vector.broadcast %182 : vector<4x8x1xf32> to vector<4x8x128xf32>
    %184 = arith.mulf %183, %166 : vector<4x8x128xf32>
    %cst_109 = arith.constant dense<0.000000e+00> : vector<4x128xf32>
    %185 = vector.multi_reduction <add>, %184, %cst_109 [1] : vector<4x8x128xf32> to vector<4x128xf32>
    %186 = arith.addf %178, %185 : vector<4x128xf32>
    %187 = arith.index_cast %c1_i32 : i32 to index
    %c0_110 = arith.constant 0 : index
    %c0_111 = arith.constant 0 : index
    %c0_112 = arith.constant 0 : index
    %188 = vector.load %arg16[%187, %c0_110, %c0_111, %c0_112] : memref<6x3x4x128xf32, #tpu.memory_space<vmem>>, vector<1x1x4x128xf32>
    %189 = vector.shape_cast %188 : vector<1x1x4x128xf32> to vector<4x128xf32>
    %190 = vector.shape_cast %189 : vector<4x128xf32> to vector<4x1x128xf32>
    %191 = arith.index_cast %c1_i32 : i32 to index
    %c0_113 = arith.constant 0 : index
    %c0_114 = arith.constant 0 : index
    %c0_115 = arith.constant 0 : index
    %192 = vector.load %arg17[%191, %c0_113, %c0_114, %c0_115] : memref<6x3x4x128xf32, #tpu.memory_space<vmem>>, vector<1x1x4x128xf32>
    %193 = vector.shape_cast %192 : vector<1x1x4x128xf32> to vector<4x128xf32>
    %194 = vector.shape_cast %193 : vector<4x128xf32> to vector<4x1x128xf32>
    %195 = vector.broadcast %190 : vector<4x1x128xf32> to vector<4x8x128xf32>
    %196 = arith.mulf %195, %183 : vector<4x8x128xf32>
    %cst_116 = arith.constant 1.000000e+00 : f32
    %197 = vector.broadcast %cst_116 : f32 to vector<4x8x128xf32>
    %198 = arith.subf %197, %196 : vector<4x8x128xf32>
    %199 = arith.mulf %166, %198 : vector<4x8x128xf32>
    %200 = vector.broadcast %194 : vector<4x1x128xf32> to vector<4x8x128xf32>
    %201 = arith.mulf %200, %183 : vector<4x8x128xf32>
    %202 = arith.addf %199, %201 : vector<4x8x128xf32>
    %203 = arith.index_cast %c1_i32 : i32 to index
    %c1_117 = arith.constant 1 : index
    %c0_118 = arith.constant 0 : index
    %c0_119 = arith.constant 0 : index
    %c0_120 = arith.constant 0 : index
    %204 = vector.load %arg15[%203, %c1_117, %c0_118, %c0_119, %c0_120] : memref<6x3x4x8x1xf32, #tpu.memory_space<vmem>>, vector<1x1x4x8x1xf32>
    %205 = vector.shape_cast %204 : vector<1x1x4x8x1xf32> to vector<4x8x1xf32>
    %206 = vector.shape_cast %205 : vector<4x8x1xf32> to vector<4x8x1xf32>
    %207 = vector.broadcast %206 : vector<4x8x1xf32> to vector<4x8x128xf32>
    %208 = arith.mulf %207, %202 : vector<4x8x128xf32>
    %cst_121 = arith.constant dense<0.000000e+00> : vector<4x128xf32>
    %209 = vector.multi_reduction <add>, %208, %cst_121 [1] : vector<4x8x128xf32> to vector<4x128xf32>
    %210 = arith.addf %186, %209 : vector<4x128xf32>
    %211 = arith.index_cast %c1_i32 : i32 to index
    %c1_122 = arith.constant 1 : index
    %c0_123 = arith.constant 0 : index
    %c0_124 = arith.constant 0 : index
    %212 = vector.load %arg16[%211, %c1_122, %c0_123, %c0_124] : memref<6x3x4x128xf32, #tpu.memory_space<vmem>>, vector<1x1x4x128xf32>
    %213 = vector.shape_cast %212 : vector<1x1x4x128xf32> to vector<4x128xf32>
    %214 = vector.shape_cast %213 : vector<4x128xf32> to vector<4x1x128xf32>
    %215 = arith.index_cast %c1_i32 : i32 to index
    %c1_125 = arith.constant 1 : index
    %c0_126 = arith.constant 0 : index
    %c0_127 = arith.constant 0 : index
    %216 = vector.load %arg17[%215, %c1_125, %c0_126, %c0_127] : memref<6x3x4x128xf32, #tpu.memory_space<vmem>>, vector<1x1x4x128xf32>
    %217 = vector.shape_cast %216 : vector<1x1x4x128xf32> to vector<4x128xf32>
    %218 = vector.shape_cast %217 : vector<4x128xf32> to vector<4x1x128xf32>
    %219 = vector.broadcast %214 : vector<4x1x128xf32> to vector<4x8x128xf32>
    %220 = arith.mulf %219, %207 : vector<4x8x128xf32>
    %cst_128 = arith.constant 1.000000e+00 : f32
    %221 = vector.broadcast %cst_128 : f32 to vector<4x8x128xf32>
    %222 = arith.subf %221, %220 : vector<4x8x128xf32>
    %223 = arith.mulf %202, %222 : vector<4x8x128xf32>
    %224 = vector.broadcast %218 : vector<4x1x128xf32> to vector<4x8x128xf32>
    %225 = arith.mulf %224, %207 : vector<4x8x128xf32>
    %226 = arith.addf %223, %225 : vector<4x8x128xf32>
    %227 = arith.index_cast %c1_i32 : i32 to index
    %c2_129 = arith.constant 2 : index
    %c0_130 = arith.constant 0 : index
    %c0_131 = arith.constant 0 : index
    %c0_132 = arith.constant 0 : index
    %228 = vector.load %arg15[%227, %c2_129, %c0_130, %c0_131, %c0_132] : memref<6x3x4x8x1xf32, #tpu.memory_space<vmem>>, vector<1x1x4x8x1xf32>
    %229 = vector.shape_cast %228 : vector<1x1x4x8x1xf32> to vector<4x8x1xf32>
    %230 = vector.shape_cast %229 : vector<4x8x1xf32> to vector<4x8x1xf32>
    %231 = vector.broadcast %230 : vector<4x8x1xf32> to vector<4x8x128xf32>
    %232 = arith.mulf %231, %226 : vector<4x8x128xf32>
    %cst_133 = arith.constant dense<0.000000e+00> : vector<4x128xf32>
    %233 = vector.multi_reduction <add>, %232, %cst_133 [1] : vector<4x8x128xf32> to vector<4x128xf32>
    %234 = arith.addf %210, %233 : vector<4x128xf32>
    %235 = arith.index_cast %c1_i32 : i32 to index
    %c2_134 = arith.constant 2 : index
    %c0_135 = arith.constant 0 : index
    %c0_136 = arith.constant 0 : index
    %236 = vector.load %arg16[%235, %c2_134, %c0_135, %c0_136] : memref<6x3x4x128xf32, #tpu.memory_space<vmem>>, vector<1x1x4x128xf32>
    %237 = vector.shape_cast %236 : vector<1x1x4x128xf32> to vector<4x128xf32>
    %238 = vector.shape_cast %237 : vector<4x128xf32> to vector<4x1x128xf32>
    %239 = arith.index_cast %c1_i32 : i32 to index
    %c2_137 = arith.constant 2 : index
    %c0_138 = arith.constant 0 : index
    %c0_139 = arith.constant 0 : index
    %240 = vector.load %arg17[%239, %c2_137, %c0_138, %c0_139] : memref<6x3x4x128xf32, #tpu.memory_space<vmem>>, vector<1x1x4x128xf32>
    %241 = vector.shape_cast %240 : vector<1x1x4x128xf32> to vector<4x128xf32>
    %242 = vector.shape_cast %241 : vector<4x128xf32> to vector<4x1x128xf32>
    %243 = vector.broadcast %238 : vector<4x1x128xf32> to vector<4x8x128xf32>
    %244 = arith.mulf %243, %231 : vector<4x8x128xf32>
    %cst_140 = arith.constant 1.000000e+00 : f32
    %245 = vector.broadcast %cst_140 : f32 to vector<4x8x128xf32>
    %246 = arith.subf %245, %244 : vector<4x8x128xf32>
    %247 = arith.mulf %226, %246 : vector<4x8x128xf32>
    %248 = vector.broadcast %242 : vector<4x1x128xf32> to vector<4x8x128xf32>
    %249 = arith.mulf %248, %231 : vector<4x8x128xf32>
    %250 = arith.addf %247, %249 : vector<4x8x128xf32>
    %251 = arith.index_cast %c1_i32 : i32 to index
    %c0_141 = arith.constant 0 : index
    %c256_142 = arith.constant 256 : index
    %252 = vector.load %arg20[%251, %c0_141, %c256_142] : memref<6x4x512xf32, #tpu.memory_space<vmem>>, vector<1x4x128xf32>
    %253 = vector.shape_cast %252 : vector<1x4x128xf32> to vector<4x128xf32>
    %254 = vector.shape_cast %234 : vector<4x128xf32> to vector<1x4x128xf32>
    tpu.vector_store %arg20[%251, %c0_141, %c256_142], %254 {strides = array<i32>} : memref<6x4x512xf32, #tpu.memory_space<vmem>>, vector<1x4x128xf32>,
    %255 = arith.index_cast %c1_i32 : i32 to index
    %c0_143 = arith.constant 0 : index
    %c0_144 = arith.constant 0 : index
    %256 = vector.load %arg18[%255, %c0_143, %c0_144] : memref<6x4x128xf32, #tpu.memory_space<vmem>>, vector<1x4x128xf32>
    %257 = vector.shape_cast %256 : vector<1x4x128xf32> to vector<4x128xf32>
    %258 = vector.shape_cast %257 : vector<4x128xf32> to vector<4x1x128xf32>
    %259 = arith.index_cast %c1_i32 : i32 to index
    %c0_145 = arith.constant 0 : index
    %c0_146 = arith.constant 0 : index
    %260 = vector.load %arg19[%259, %c0_145, %c0_146] : memref<6x4x128xf32, #tpu.memory_space<vmem>>, vector<1x4x128xf32>
    %261 = vector.shape_cast %260 : vector<1x4x128xf32> to vector<4x128xf32>
    %262 = vector.shape_cast %261 : vector<4x128xf32> to vector<4x1x128xf32>
    %263 = vector.broadcast %258 : vector<4x1x128xf32> to vector<4x8x128xf32>
    %264 = arith.mulf %263, %171 : vector<4x8x128xf32>
    %cst_147 = arith.constant 1.000000e+00 : f32
    %265 = vector.broadcast %cst_147 : f32 to vector<4x8x128xf32>
    %266 = arith.subf %265, %264 : vector<4x8x128xf32>
    %267 = arith.mulf %250, %266 : vector<4x8x128xf32>
    %268 = vector.broadcast %262 : vector<4x1x128xf32> to vector<4x8x128xf32>
    %269 = arith.mulf %268, %171 : vector<4x8x128xf32>
    %270 = arith.addf %267, %269 : vector<4x8x128xf32>
    %c2_i32 = arith.constant 2 : i32
    %271 = arith.index_cast %c2_i32 : i32 to index
    %c0_148 = arith.constant 0 : index
    %c0_149 = arith.constant 0 : index
    %c0_150 = arith.constant 0 : index
    %272 = vector.load %arg14[%271, %c0_148, %c0_149, %c0_150] : memref<6x4x8x1xf32, #tpu.memory_space<vmem>>, vector<1x4x8x1xf32>
    %273 = vector.shape_cast %272 : vector<1x4x8x1xf32> to vector<4x8x1xf32>
    %274 = vector.shape_cast %273 : vector<4x8x1xf32> to vector<4x8x1xf32>
    %275 = vector.broadcast %274 : vector<4x8x1xf32> to vector<4x8x128xf32>
    %276 = arith.mulf %275, %270 : vector<4x8x128xf32>
    %cst_151 = arith.constant dense<0.000000e+00> : vector<4x128xf32>
    %277 = vector.multi_reduction <add>, %276, %cst_151 [1] : vector<4x8x128xf32> to vector<4x128xf32>
    %278 = arith.index_cast %c2_i32 : i32 to index
    %c0_152 = arith.constant 0 : index
    %c0_153 = arith.constant 0 : index
    %279 = vector.load %arg20[%278, %c0_152, %c0_153] : memref<6x4x512xf32, #tpu.memory_space<vmem>>, vector<1x4x128xf32>
    %280 = vector.shape_cast %279 : vector<1x4x128xf32> to vector<4x128xf32>
    %281 = vector.shape_cast %277 : vector<4x128xf32> to vector<1x4x128xf32>
    tpu.vector_store %arg20[%278, %c0_152, %c0_153], %281 {strides = array<i32>} : memref<6x4x512xf32, #tpu.memory_space<vmem>>, vector<1x4x128xf32>,
    %cst_154 = arith.constant 0.000000e+00 : f32
    %282 = vector.broadcast %cst_154 : f32 to vector<4x128xf32>
    %283 = arith.index_cast %c2_i32 : i32 to index
    %c0_155 = arith.constant 0 : index
    %c0_156 = arith.constant 0 : index
    %c0_157 = arith.constant 0 : index
    %c0_158 = arith.constant 0 : index
    %284 = vector.load %arg15[%283, %c0_155, %c0_156, %c0_157, %c0_158] : memref<6x3x4x8x1xf32, #tpu.memory_space<vmem>>, vector<1x1x4x8x1xf32>
    %285 = vector.shape_cast %284 : vector<1x1x4x8x1xf32> to vector<4x8x1xf32>
    %286 = vector.shape_cast %285 : vector<4x8x1xf32> to vector<4x8x1xf32>
    %287 = vector.broadcast %286 : vector<4x8x1xf32> to vector<4x8x128xf32>
    %288 = arith.mulf %287, %270 : vector<4x8x128xf32>
    %cst_159 = arith.constant dense<0.000000e+00> : vector<4x128xf32>
    %289 = vector.multi_reduction <add>, %288, %cst_159 [1] : vector<4x8x128xf32> to vector<4x128xf32>
    %290 = arith.addf %282, %289 : vector<4x128xf32>
    %291 = arith.index_cast %c2_i32 : i32 to index
    %c0_160 = arith.constant 0 : index
    %c0_161 = arith.constant 0 : index
    %c0_162 = arith.constant 0 : index
    %292 = vector.load %arg16[%291, %c0_160, %c0_161, %c0_162] : memref<6x3x4x128xf32, #tpu.memory_space<vmem>>, vector<1x1x4x128xf32>
    %293 = vector.shape_cast %292 : vector<1x1x4x128xf32> to vector<4x128xf32>
    %294 = vector.shape_cast %293 : vector<4x128xf32> to vector<4x1x128xf32>
    %295 = arith.index_cast %c2_i32 : i32 to index
    %c0_163 = arith.constant 0 : index
    %c0_164 = arith.constant 0 : index
    %c0_165 = arith.constant 0 : index
    %296 = vector.load %arg17[%295, %c0_163, %c0_164, %c0_165] : memref<6x3x4x128xf32, #tpu.memory_space<vmem>>, vector<1x1x4x128xf32>
    %297 = vector.shape_cast %296 : vector<1x1x4x128xf32> to vector<4x128xf32>
    %298 = vector.shape_cast %297 : vector<4x128xf32> to vector<4x1x128xf32>
    %299 = vector.broadcast %294 : vector<4x1x128xf32> to vector<4x8x128xf32>
    %300 = arith.mulf %299, %287 : vector<4x8x128xf32>
    %cst_166 = arith.constant 1.000000e+00 : f32
    %301 = vector.broadcast %cst_166 : f32 to vector<4x8x128xf32>
    %302 = arith.subf %301, %300 : vector<4x8x128xf32>
    %303 = arith.mulf %270, %302 : vector<4x8x128xf32>
    %304 = vector.broadcast %298 : vector<4x1x128xf32> to vector<4x8x128xf32>
    %305 = arith.mulf %304, %287 : vector<4x8x128xf32>
    %306 = arith.addf %303, %305 : vector<4x8x128xf32>
    %307 = arith.index_cast %c2_i32 : i32 to index
    %c1_167 = arith.constant 1 : index
    %c0_168 = arith.constant 0 : index
    %c0_169 = arith.constant 0 : index
    %c0_170 = arith.constant 0 : index
    %308 = vector.load %arg15[%307, %c1_167, %c0_168, %c0_169, %c0_170] : memref<6x3x4x8x1xf32, #tpu.memory_space<vmem>>, vector<1x1x4x8x1xf32>
    %309 = vector.shape_cast %308 : vector<1x1x4x8x1xf32> to vector<4x8x1xf32>
    %310 = vector.shape_cast %309 : vector<4x8x1xf32> to vector<4x8x1xf32>
    %311 = vector.broadcast %310 : vector<4x8x1xf32> to vector<4x8x128xf32>
    %312 = arith.mulf %311, %306 : vector<4x8x128xf32>
    %cst_171 = arith.constant dense<0.000000e+00> : vector<4x128xf32>
    %313 = vector.multi_reduction <add>, %312, %cst_171 [1] : vector<4x8x128xf32> to vector<4x128xf32>
    %314 = arith.addf %290, %313 : vector<4x128xf32>
    %315 = arith.index_cast %c2_i32 : i32 to index
    %c1_172 = arith.constant 1 : index
    %c0_173 = arith.constant 0 : index
    %c0_174 = arith.constant 0 : index
    %316 = vector.load %arg16[%315, %c1_172, %c0_173, %c0_174] : memref<6x3x4x128xf32, #tpu.memory_space<vmem>>, vector<1x1x4x128xf32>
    %317 = vector.shape_cast %316 : vector<1x1x4x128xf32> to vector<4x128xf32>
    %318 = vector.shape_cast %317 : vector<4x128xf32> to vector<4x1x128xf32>
    %319 = arith.index_cast %c2_i32 : i32 to index
    %c1_175 = arith.constant 1 : index
    %c0_176 = arith.constant 0 : index
    %c0_177 = arith.constant 0 : index
    %320 = vector.load %arg17[%319, %c1_175, %c0_176, %c0_177] : memref<6x3x4x128xf32, #tpu.memory_space<vmem>>, vector<1x1x4x128xf32>
    %321 = vector.shape_cast %320 : vector<1x1x4x128xf32> to vector<4x128xf32>
    %322 = vector.shape_cast %321 : vector<4x128xf32> to vector<4x1x128xf32>
    %323 = vector.broadcast %318 : vector<4x1x128xf32> to vector<4x8x128xf32>
    %324 = arith.mulf %323, %311 : vector<4x8x128xf32>
    %cst_178 = arith.constant 1.000000e+00 : f32
    %325 = vector.broadcast %cst_178 : f32 to vector<4x8x128xf32>
    %326 = arith.subf %325, %324 : vector<4x8x128xf32>
    %327 = arith.mulf %306, %326 : vector<4x8x128xf32>
    %328 = vector.broadcast %322 : vector<4x1x128xf32> to vector<4x8x128xf32>
    %329 = arith.mulf %328, %311 : vector<4x8x128xf32>
    %330 = arith.addf %327, %329 : vector<4x8x128xf32>
    %331 = arith.index_cast %c2_i32 : i32 to index
    %c2_179 = arith.constant 2 : index
    %c0_180 = arith.constant 0 : index
    %c0_181 = arith.constant 0 : index
    %c0_182 = arith.constant 0 : index
    %332 = vector.load %arg15[%331, %c2_179, %c0_180, %c0_181, %c0_182] : memref<6x3x4x8x1xf32, #tpu.memory_space<vmem>>, vector<1x1x4x8x1xf32>
    %333 = vector.shape_cast %332 : vector<1x1x4x8x1xf32> to vector<4x8x1xf32>
    %334 = vector.shape_cast %333 : vector<4x8x1xf32> to vector<4x8x1xf32>
    %335 = vector.broadcast %334 : vector<4x8x1xf32> to vector<4x8x128xf32>
    %336 = arith.mulf %335, %330 : vector<4x8x128xf32>
    %cst_183 = arith.constant dense<0.000000e+00> : vector<4x128xf32>
    %337 = vector.multi_reduction <add>, %336, %cst_183 [1] : vector<4x8x128xf32> to vector<4x128xf32>
    %338 = arith.addf %314, %337 : vector<4x128xf32>
    %339 = arith.index_cast %c2_i32 : i32 to index
    %c2_184 = arith.constant 2 : index
    %c0_185 = arith.constant 0 : index
    %c0_186 = arith.constant 0 : index
    %340 = vector.load %arg16[%339, %c2_184, %c0_185, %c0_186] : memref<6x3x4x128xf32, #tpu.memory_space<vmem>>, vector<1x1x4x128xf32>
    %341 = vector.shape_cast %340 : vector<1x1x4x128xf32> to vector<4x128xf32>
    %342 = vector.shape_cast %341 : vector<4x128xf32> to vector<4x1x128xf32>
    %343 = arith.index_cast %c2_i32 : i32 to index
    %c2_187 = arith.constant 2 : index
    %c0_188 = arith.constant 0 : index
    %c0_189 = arith.constant 0 : index
    %344 = vector.load %arg17[%343, %c2_187, %c0_188, %c0_189] : memref<6x3x4x128xf32, #tpu.memory_space<vmem>>, vector<1x1x4x128xf32>
    %345 = vector.shape_cast %344 : vector<1x1x4x128xf32> to vector<4x128xf32>
    %346 = vector.shape_cast %345 : vector<4x128xf32> to vector<4x1x128xf32>
    %347 = vector.broadcast %342 : vector<4x1x128xf32> to vector<4x8x128xf32>
    %348 = arith.mulf %347, %335 : vector<4x8x128xf32>
    %cst_190 = arith.constant 1.000000e+00 : f32
    %349 = vector.broadcast %cst_190 : f32 to vector<4x8x128xf32>
    %350 = arith.subf %349, %348 : vector<4x8x128xf32>
    %351 = arith.mulf %330, %350 : vector<4x8x128xf32>
    %352 = vector.broadcast %346 : vector<4x1x128xf32> to vector<4x8x128xf32>
    %353 = arith.mulf %352, %335 : vector<4x8x128xf32>
    %354 = arith.addf %351, %353 : vector<4x8x128xf32>
    %355 = arith.index_cast %c2_i32 : i32 to index
    %c0_191 = arith.constant 0 : index
    %c256_192 = arith.constant 256 : index
    %356 = vector.load %arg20[%355, %c0_191, %c256_192] : memref<6x4x512xf32, #tpu.memory_space<vmem>>, vector<1x4x128xf32>
    %357 = vector.shape_cast %356 : vector<1x4x128xf32> to vector<4x128xf32>
    %358 = vector.shape_cast %338 : vector<4x128xf32> to vector<1x4x128xf32>
    tpu.vector_store %arg20[%355, %c0_191, %c256_192], %358 {strides = array<i32>} : memref<6x4x512xf32, #tpu.memory_space<vmem>>, vector<1x4x128xf32>,
    %359 = arith.index_cast %c2_i32 : i32 to index
    %c0_193 = arith.constant 0 : index
    %c0_194 = arith.constant 0 : index
    %360 = vector.load %arg18[%359, %c0_193, %c0_194] : memref<6x4x128xf32, #tpu.memory_space<vmem>>, vector<1x4x128xf32>
    %361 = vector.shape_cast %360 : vector<1x4x128xf32> to vector<4x128xf32>
    %362 = vector.shape_cast %361 : vector<4x128xf32> to vector<4x1x128xf32>
    %363 = arith.index_cast %c2_i32 : i32 to index
    %c0_195 = arith.constant 0 : index
    %c0_196 = arith.constant 0 : index
    %364 = vector.load %arg19[%363, %c0_195, %c0_196] : memref<6x4x128xf32, #tpu.memory_space<vmem>>, vector<1x4x128xf32>
    %365 = vector.shape_cast %364 : vector<1x4x128xf32> to vector<4x128xf32>
    %366 = vector.shape_cast %365 : vector<4x128xf32> to vector<4x1x128xf32>
    %367 = vector.broadcast %362 : vector<4x1x128xf32> to vector<4x8x128xf32>
    %368 = arith.mulf %367, %275 : vector<4x8x128xf32>
    %cst_197 = arith.constant 1.000000e+00 : f32
    %369 = vector.broadcast %cst_197 : f32 to vector<4x8x128xf32>
    %370 = arith.subf %369, %368 : vector<4x8x128xf32>
    %371 = arith.mulf %354, %370 : vector<4x8x128xf32>
    %372 = vector.broadcast %366 : vector<4x1x128xf32> to vector<4x8x128xf32>
    %373 = arith.mulf %372, %275 : vector<4x8x128xf32>
    %374 = arith.addf %371, %373 : vector<4x8x128xf32>
    %c3_i32 = arith.constant 3 : i32
    %375 = arith.index_cast %c3_i32 : i32 to index
    %c0_198 = arith.constant 0 : index
    %c0_199 = arith.constant 0 : index
    %c0_200 = arith.constant 0 : index
    %376 = vector.load %arg14[%375, %c0_198, %c0_199, %c0_200] : memref<6x4x8x1xf32, #tpu.memory_space<vmem>>, vector<1x4x8x1xf32>
    %377 = vector.shape_cast %376 : vector<1x4x8x1xf32> to vector<4x8x1xf32>
    %378 = vector.shape_cast %377 : vector<4x8x1xf32> to vector<4x8x1xf32>
    %379 = vector.broadcast %378 : vector<4x8x1xf32> to vector<4x8x128xf32>
    %380 = arith.mulf %379, %374 : vector<4x8x128xf32>
    %cst_201 = arith.constant dense<0.000000e+00> : vector<4x128xf32>
    %381 = vector.multi_reduction <add>, %380, %cst_201 [1] : vector<4x8x128xf32> to vector<4x128xf32>
    %382 = arith.index_cast %c3_i32 : i32 to index
    %c0_202 = arith.constant 0 : index
    %c0_203 = arith.constant 0 : index
    %383 = vector.load %arg20[%382, %c0_202, %c0_203] : memref<6x4x512xf32, #tpu.memory_space<vmem>>, vector<1x4x128xf32>
    %384 = vector.shape_cast %383 : vector<1x4x128xf32> to vector<4x128xf32>
    %385 = vector.shape_cast %381 : vector<4x128xf32> to vector<1x4x128xf32>
    tpu.vector_store %arg20[%382, %c0_202, %c0_203], %385 {strides = array<i32>} : memref<6x4x512xf32, #tpu.memory_space<vmem>>, vector<1x4x128xf32>,
    %cst_204 = arith.constant 0.000000e+00 : f32
    %386 = vector.broadcast %cst_204 : f32 to vector<4x128xf32>
    %387 = arith.index_cast %c3_i32 : i32 to index
    %c0_205 = arith.constant 0 : index
    %c0_206 = arith.constant 0 : index
    %c0_207 = arith.constant 0 : index
    %c0_208 = arith.constant 0 : index
    %388 = vector.load %arg15[%387, %c0_205, %c0_206, %c0_207, %c0_208] : memref<6x3x4x8x1xf32, #tpu.memory_space<vmem>>, vector<1x1x4x8x1xf32>
    %389 = vector.shape_cast %388 : vector<1x1x4x8x1xf32> to vector<4x8x1xf32>
    %390 = vector.shape_cast %389 : vector<4x8x1xf32> to vector<4x8x1xf32>
    %391 = vector.broadcast %390 : vector<4x8x1xf32> to vector<4x8x128xf32>
    %392 = arith.mulf %391, %374 : vector<4x8x128xf32>
    %cst_209 = arith.constant dense<0.000000e+00> : vector<4x128xf32>
    %393 = vector.multi_reduction <add>, %392, %cst_209 [1] : vector<4x8x128xf32> to vector<4x128xf32>
    %394 = arith.addf %386, %393 : vector<4x128xf32>
    %395 = arith.index_cast %c3_i32 : i32 to index
    %c0_210 = arith.constant 0 : index
    %c0_211 = arith.constant 0 : index
    %c0_212 = arith.constant 0 : index
    %396 = vector.load %arg16[%395, %c0_210, %c0_211, %c0_212] : memref<6x3x4x128xf32, #tpu.memory_space<vmem>>, vector<1x1x4x128xf32>
    %397 = vector.shape_cast %396 : vector<1x1x4x128xf32> to vector<4x128xf32>
    %398 = vector.shape_cast %397 : vector<4x128xf32> to vector<4x1x128xf32>
    %399 = arith.index_cast %c3_i32 : i32 to index
    %c0_213 = arith.constant 0 : index
    %c0_214 = arith.constant 0 : index
    %c0_215 = arith.constant 0 : index
    %400 = vector.load %arg17[%399, %c0_213, %c0_214, %c0_215] : memref<6x3x4x128xf32, #tpu.memory_space<vmem>>, vector<1x1x4x128xf32>
    %401 = vector.shape_cast %400 : vector<1x1x4x128xf32> to vector<4x128xf32>
    %402 = vector.shape_cast %401 : vector<4x128xf32> to vector<4x1x128xf32>
    %403 = vector.broadcast %398 : vector<4x1x128xf32> to vector<4x8x128xf32>
    %404 = arith.mulf %403, %391 : vector<4x8x128xf32>
    %cst_216 = arith.constant 1.000000e+00 : f32
    %405 = vector.broadcast %cst_216 : f32 to vector<4x8x128xf32>
    %406 = arith.subf %405, %404 : vector<4x8x128xf32>
    %407 = arith.mulf %374, %406 : vector<4x8x128xf32>
    %408 = vector.broadcast %402 : vector<4x1x128xf32> to vector<4x8x128xf32>
    %409 = arith.mulf %408, %391 : vector<4x8x128xf32>
    %410 = arith.addf %407, %409 : vector<4x8x128xf32>
    %411 = arith.index_cast %c3_i32 : i32 to index
    %c1_217 = arith.constant 1 : index
    %c0_218 = arith.constant 0 : index
    %c0_219 = arith.constant 0 : index
    %c0_220 = arith.constant 0 : index
    %412 = vector.load %arg15[%411, %c1_217, %c0_218, %c0_219, %c0_220] : memref<6x3x4x8x1xf32, #tpu.memory_space<vmem>>, vector<1x1x4x8x1xf32>
    %413 = vector.shape_cast %412 : vector<1x1x4x8x1xf32> to vector<4x8x1xf32>
    %414 = vector.shape_cast %413 : vector<4x8x1xf32> to vector<4x8x1xf32>
    %415 = vector.broadcast %414 : vector<4x8x1xf32> to vector<4x8x128xf32>
    %416 = arith.mulf %415, %410 : vector<4x8x128xf32>
    %cst_221 = arith.constant dense<0.000000e+00> : vector<4x128xf32>
    %417 = vector.multi_reduction <add>, %416, %cst_221 [1] : vector<4x8x128xf32> to vector<4x128xf32>
    %418 = arith.addf %394, %417 : vector<4x128xf32>
    %419 = arith.index_cast %c3_i32 : i32 to index
    %c1_222 = arith.constant 1 : index
    %c0_223 = arith.constant 0 : index
    %c0_224 = arith.constant 0 : index
    %420 = vector.load %arg16[%419, %c1_222, %c0_223, %c0_224] : memref<6x3x4x128xf32, #tpu.memory_space<vmem>>, vector<1x1x4x128xf32>
    %421 = vector.shape_cast %420 : vector<1x1x4x128xf32> to vector<4x128xf32>
    %422 = vector.shape_cast %421 : vector<4x128xf32> to vector<4x1x128xf32>
    %423 = arith.index_cast %c3_i32 : i32 to index
    %c1_225 = arith.constant 1 : index
    %c0_226 = arith.constant 0 : index
    %c0_227 = arith.constant 0 : index
    %424 = vector.load %arg17[%423, %c1_225, %c0_226, %c0_227] : memref<6x3x4x128xf32, #tpu.memory_space<vmem>>, vector<1x1x4x128xf32>
    %425 = vector.shape_cast %424 : vector<1x1x4x128xf32> to vector<4x128xf32>
    %426 = vector.shape_cast %425 : vector<4x128xf32> to vector<4x1x128xf32>
    %427 = vector.broadcast %422 : vector<4x1x128xf32> to vector<4x8x128xf32>
    %428 = arith.mulf %427, %415 : vector<4x8x128xf32>
    %cst_228 = arith.constant 1.000000e+00 : f32
    %429 = vector.broadcast %cst_228 : f32 to vector<4x8x128xf32>
    %430 = arith.subf %429, %428 : vector<4x8x128xf32>
    %431 = arith.mulf %410, %430 : vector<4x8x128xf32>
    %432 = vector.broadcast %426 : vector<4x1x128xf32> to vector<4x8x128xf32>
    %433 = arith.mulf %432, %415 : vector<4x8x128xf32>
    %434 = arith.addf %431, %433 : vector<4x8x128xf32>
    %435 = arith.index_cast %c3_i32 : i32 to index
    %c2_229 = arith.constant 2 : index
    %c0_230 = arith.constant 0 : index
    %c0_231 = arith.constant 0 : index
    %c0_232 = arith.constant 0 : index
    %436 = vector.load %arg15[%435, %c2_229, %c0_230, %c0_231, %c0_232] : memref<6x3x4x8x1xf32, #tpu.memory_space<vmem>>, vector<1x1x4x8x1xf32>
    %437 = vector.shape_cast %436 : vector<1x1x4x8x1xf32> to vector<4x8x1xf32>
    %438 = vector.shape_cast %437 : vector<4x8x1xf32> to vector<4x8x1xf32>
    %439 = vector.broadcast %438 : vector<4x8x1xf32> to vector<4x8x128xf32>
    %440 = arith.mulf %439, %434 : vector<4x8x128xf32>
    %cst_233 = arith.constant dense<0.000000e+00> : vector<4x128xf32>
    %441 = vector.multi_reduction <add>, %440, %cst_233 [1] : vector<4x8x128xf32> to vector<4x128xf32>
    %442 = arith.addf %418, %441 : vector<4x128xf32>
    %443 = arith.index_cast %c3_i32 : i32 to index
    %c2_234 = arith.constant 2 : index
    %c0_235 = arith.constant 0 : index
    %c0_236 = arith.constant 0 : index
    %444 = vector.load %arg16[%443, %c2_234, %c0_235, %c0_236] : memref<6x3x4x128xf32, #tpu.memory_space<vmem>>, vector<1x1x4x128xf32>
    %445 = vector.shape_cast %444 : vector<1x1x4x128xf32> to vector<4x128xf32>
    %446 = vector.shape_cast %445 : vector<4x128xf32> to vector<4x1x128xf32>
    %447 = arith.index_cast %c3_i32 : i32 to index
    %c2_237 = arith.constant 2 : index
    %c0_238 = arith.constant 0 : index
    %c0_239 = arith.constant 0 : index
    %448 = vector.load %arg17[%447, %c2_237, %c0_238, %c0_239] : memref<6x3x4x128xf32, #tpu.memory_space<vmem>>, vector<1x1x4x128xf32>
    %449 = vector.shape_cast %448 : vector<1x1x4x128xf32> to vector<4x128xf32>
    %450 = vector.shape_cast %449 : vector<4x128xf32> to vector<4x1x128xf32>
    %451 = vector.broadcast %446 : vector<4x1x128xf32> to vector<4x8x128xf32>
    %452 = arith.mulf %451, %439 : vector<4x8x128xf32>
    %cst_240 = arith.constant 1.000000e+00 : f32
    %453 = vector.broadcast %cst_240 : f32 to vector<4x8x128xf32>
    %454 = arith.subf %453, %452 : vector<4x8x128xf32>
    %455 = arith.mulf %434, %454 : vector<4x8x128xf32>
    %456 = vector.broadcast %450 : vector<4x1x128xf32> to vector<4x8x128xf32>
    %457 = arith.mulf %456, %439 : vector<4x8x128xf32>
    %458 = arith.addf %455, %457 : vector<4x8x128xf32>
    %459 = arith.index_cast %c3_i32 : i32 to index
    %c0_241 = arith.constant 0 : index
    %c256_242 = arith.constant 256 : index
    %460 = vector.load %arg20[%459, %c0_241, %c256_242] : memref<6x4x512xf32, #tpu.memory_space<vmem>>, vector<1x4x128xf32>
    %461 = vector.shape_cast %460 : vector<1x4x128xf32> to vector<4x128xf32>
    %462 = vector.shape_cast %442 : vector<4x128xf32> to vector<1x4x128xf32>
    tpu.vector_store %arg20[%459, %c0_241, %c256_242], %462 {strides = array<i32>} : memref<6x4x512xf32, #tpu.memory_space<vmem>>, vector<1x4x128xf32>,
    %463 = arith.index_cast %c3_i32 : i32 to index
    %c0_243 = arith.constant 0 : index
    %c0_244 = arith.constant 0 : index
    %464 = vector.load %arg18[%463, %c0_243, %c0_244] : memref<6x4x128xf32, #tpu.memory_space<vmem>>, vector<1x4x128xf32>
    %465 = vector.shape_cast %464 : vector<1x4x128xf32> to vector<4x128xf32>
    %466 = vector.shape_cast %465 : vector<4x128xf32> to vector<4x1x128xf32>
    %467 = arith.index_cast %c3_i32 : i32 to index
    %c0_245 = arith.constant 0 : index
    %c0_246 = arith.constant 0 : index
    %468 = vector.load %arg19[%467, %c0_245, %c0_246] : memref<6x4x128xf32, #tpu.memory_space<vmem>>, vector<1x4x128xf32>
    %469 = vector.shape_cast %468 : vector<1x4x128xf32> to vector<4x128xf32>
    %470 = vector.shape_cast %469 : vector<4x128xf32> to vector<4x1x128xf32>
    %471 = vector.broadcast %466 : vector<4x1x128xf32> to vector<4x8x128xf32>
    %472 = arith.mulf %471, %379 : vector<4x8x128xf32>
    %cst_247 = arith.constant 1.000000e+00 : f32
    %473 = vector.broadcast %cst_247 : f32 to vector<4x8x128xf32>
    %474 = arith.subf %473, %472 : vector<4x8x128xf32>
    %475 = arith.mulf %458, %474 : vector<4x8x128xf32>
    %476 = vector.broadcast %470 : vector<4x1x128xf32> to vector<4x8x128xf32>
    %477 = arith.mulf %476, %379 : vector<4x8x128xf32>
    %478 = arith.addf %475, %477 : vector<4x8x128xf32>
    %c4_i32 = arith.constant 4 : i32
    %479 = arith.index_cast %c4_i32 : i32 to index
    %c0_248 = arith.constant 0 : index
    %c0_249 = arith.constant 0 : index
    %c0_250 = arith.constant 0 : index
    %480 = vector.load %arg14[%479, %c0_248, %c0_249, %c0_250] : memref<6x4x8x1xf32, #tpu.memory_space<vmem>>, vector<1x4x8x1xf32>
    %481 = vector.shape_cast %480 : vector<1x4x8x1xf32> to vector<4x8x1xf32>
    %482 = vector.shape_cast %481 : vector<4x8x1xf32> to vector<4x8x1xf32>
    %483 = vector.broadcast %482 : vector<4x8x1xf32> to vector<4x8x128xf32>
    %484 = arith.mulf %483, %478 : vector<4x8x128xf32>
    %cst_251 = arith.constant dense<0.000000e+00> : vector<4x128xf32>
    %485 = vector.multi_reduction <add>, %484, %cst_251 [1] : vector<4x8x128xf32> to vector<4x128xf32>
    %486 = arith.index_cast %c4_i32 : i32 to index
    %c0_252 = arith.constant 0 : index
    %c0_253 = arith.constant 0 : index
    %487 = vector.load %arg20[%486, %c0_252, %c0_253] : memref<6x4x512xf32, #tpu.memory_space<vmem>>, vector<1x4x128xf32>
    %488 = vector.shape_cast %487 : vector<1x4x128xf32> to vector<4x128xf32>
    %489 = vector.shape_cast %485 : vector<4x128xf32> to vector<1x4x128xf32>
    tpu.vector_store %arg20[%486, %c0_252, %c0_253], %489 {strides = array<i32>} : memref<6x4x512xf32, #tpu.memory_space<vmem>>, vector<1x4x128xf32>,
    %cst_254 = arith.constant 0.000000e+00 : f32
    %490 = vector.broadcast %cst_254 : f32 to vector<4x128xf32>
    %491 = arith.index_cast %c4_i32 : i32 to index
    %c0_255 = arith.constant 0 : index
    %c0_256 = arith.constant 0 : index
    %c0_257 = arith.constant 0 : index
    %c0_258 = arith.constant 0 : index
    %492 = vector.load %arg15[%491, %c0_255, %c0_256, %c0_257, %c0_258] : memref<6x3x4x8x1xf32, #tpu.memory_space<vmem>>, vector<1x1x4x8x1xf32>
    %493 = vector.shape_cast %492 : vector<1x1x4x8x1xf32> to vector<4x8x1xf32>
    %494 = vector.shape_cast %493 : vector<4x8x1xf32> to vector<4x8x1xf32>
    %495 = vector.broadcast %494 : vector<4x8x1xf32> to vector<4x8x128xf32>
    %496 = arith.mulf %495, %478 : vector<4x8x128xf32>
    %cst_259 = arith.constant dense<0.000000e+00> : vector<4x128xf32>
    %497 = vector.multi_reduction <add>, %496, %cst_259 [1] : vector<4x8x128xf32> to vector<4x128xf32>
    %498 = arith.addf %490, %497 : vector<4x128xf32>
    %499 = arith.index_cast %c4_i32 : i32 to index
    %c0_260 = arith.constant 0 : index
    %c0_261 = arith.constant 0 : index
    %c0_262 = arith.constant 0 : index
    %500 = vector.load %arg16[%499, %c0_260, %c0_261, %c0_262] : memref<6x3x4x128xf32, #tpu.memory_space<vmem>>, vector<1x1x4x128xf32>
    %501 = vector.shape_cast %500 : vector<1x1x4x128xf32> to vector<4x128xf32>
    %502 = vector.shape_cast %501 : vector<4x128xf32> to vector<4x1x128xf32>
    %503 = arith.index_cast %c4_i32 : i32 to index
    %c0_263 = arith.constant 0 : index
    %c0_264 = arith.constant 0 : index
    %c0_265 = arith.constant 0 : index
    %504 = vector.load %arg17[%503, %c0_263, %c0_264, %c0_265] : memref<6x3x4x128xf32, #tpu.memory_space<vmem>>, vector<1x1x4x128xf32>
    %505 = vector.shape_cast %504 : vector<1x1x4x128xf32> to vector<4x128xf32>
    %506 = vector.shape_cast %505 : vector<4x128xf32> to vector<4x1x128xf32>
    %507 = vector.broadcast %502 : vector<4x1x128xf32> to vector<4x8x128xf32>
    %508 = arith.mulf %507, %495 : vector<4x8x128xf32>
    %cst_266 = arith.constant 1.000000e+00 : f32
    %509 = vector.broadcast %cst_266 : f32 to vector<4x8x128xf32>
    %510 = arith.subf %509, %508 : vector<4x8x128xf32>
    %511 = arith.mulf %478, %510 : vector<4x8x128xf32>
    %512 = vector.broadcast %506 : vector<4x1x128xf32> to vector<4x8x128xf32>
    %513 = arith.mulf %512, %495 : vector<4x8x128xf32>
    %514 = arith.addf %511, %513 : vector<4x8x128xf32>
    %515 = arith.index_cast %c4_i32 : i32 to index
    %c1_267 = arith.constant 1 : index
    %c0_268 = arith.constant 0 : index
    %c0_269 = arith.constant 0 : index
    %c0_270 = arith.constant 0 : index
    %516 = vector.load %arg15[%515, %c1_267, %c0_268, %c0_269, %c0_270] : memref<6x3x4x8x1xf32, #tpu.memory_space<vmem>>, vector<1x1x4x8x1xf32>
    %517 = vector.shape_cast %516 : vector<1x1x4x8x1xf32> to vector<4x8x1xf32>
    %518 = vector.shape_cast %517 : vector<4x8x1xf32> to vector<4x8x1xf32>
    %519 = vector.broadcast %518 : vector<4x8x1xf32> to vector<4x8x128xf32>
    %520 = arith.mulf %519, %514 : vector<4x8x128xf32>
    %cst_271 = arith.constant dense<0.000000e+00> : vector<4x128xf32>
    %521 = vector.multi_reduction <add>, %520, %cst_271 [1] : vector<4x8x128xf32> to vector<4x128xf32>
    %522 = arith.addf %498, %521 : vector<4x128xf32>
    %523 = arith.index_cast %c4_i32 : i32 to index
    %c1_272 = arith.constant 1 : index
    %c0_273 = arith.constant 0 : index
    %c0_274 = arith.constant 0 : index
    %524 = vector.load %arg16[%523, %c1_272, %c0_273, %c0_274] : memref<6x3x4x128xf32, #tpu.memory_space<vmem>>, vector<1x1x4x128xf32>
    %525 = vector.shape_cast %524 : vector<1x1x4x128xf32> to vector<4x128xf32>
    %526 = vector.shape_cast %525 : vector<4x128xf32> to vector<4x1x128xf32>
    %527 = arith.index_cast %c4_i32 : i32 to index
    %c1_275 = arith.constant 1 : index
    %c0_276 = arith.constant 0 : index
    %c0_277 = arith.constant 0 : index
    %528 = vector.load %arg17[%527, %c1_275, %c0_276, %c0_277] : memref<6x3x4x128xf32, #tpu.memory_space<vmem>>, vector<1x1x4x128xf32>
    %529 = vector.shape_cast %528 : vector<1x1x4x128xf32> to vector<4x128xf32>
    %530 = vector.shape_cast %529 : vector<4x128xf32> to vector<4x1x128xf32>
    %531 = vector.broadcast %526 : vector<4x1x128xf32> to vector<4x8x128xf32>
    %532 = arith.mulf %531, %519 : vector<4x8x128xf32>
    %cst_278 = arith.constant 1.000000e+00 : f32
    %533 = vector.broadcast %cst_278 : f32 to vector<4x8x128xf32>
    %534 = arith.subf %533, %532 : vector<4x8x128xf32>
    %535 = arith.mulf %514, %534 : vector<4x8x128xf32>
    %536 = vector.broadcast %530 : vector<4x1x128xf32> to vector<4x8x128xf32>
    %537 = arith.mulf %536, %519 : vector<4x8x128xf32>
    %538 = arith.addf %535, %537 : vector<4x8x128xf32>
    %539 = arith.index_cast %c4_i32 : i32 to index
    %c2_279 = arith.constant 2 : index
    %c0_280 = arith.constant 0 : index
    %c0_281 = arith.constant 0 : index
    %c0_282 = arith.constant 0 : index
    %540 = vector.load %arg15[%539, %c2_279, %c0_280, %c0_281, %c0_282] : memref<6x3x4x8x1xf32, #tpu.memory_space<vmem>>, vector<1x1x4x8x1xf32>
    %541 = vector.shape_cast %540 : vector<1x1x4x8x1xf32> to vector<4x8x1xf32>
    %542 = vector.shape_cast %541 : vector<4x8x1xf32> to vector<4x8x1xf32>
    %543 = vector.broadcast %542 : vector<4x8x1xf32> to vector<4x8x128xf32>
    %544 = arith.mulf %543, %538 : vector<4x8x128xf32>
    %cst_283 = arith.constant dense<0.000000e+00> : vector<4x128xf32>
    %545 = vector.multi_reduction <add>, %544, %cst_283 [1] : vector<4x8x128xf32> to vector<4x128xf32>
    %546 = arith.addf %522, %545 : vector<4x128xf32>
    %547 = arith.index_cast %c4_i32 : i32 to index
    %c2_284 = arith.constant 2 : index
    %c0_285 = arith.constant 0 : index
    %c0_286 = arith.constant 0 : index
    %548 = vector.load %arg16[%547, %c2_284, %c0_285, %c0_286] : memref<6x3x4x128xf32, #tpu.memory_space<vmem>>, vector<1x1x4x128xf32>
    %549 = vector.shape_cast %548 : vector<1x1x4x128xf32> to vector<4x128xf32>
    %550 = vector.shape_cast %549 : vector<4x128xf32> to vector<4x1x128xf32>
    %551 = arith.index_cast %c4_i32 : i32 to index
    %c2_287 = arith.constant 2 : index
    %c0_288 = arith.constant 0 : index
    %c0_289 = arith.constant 0 : index
    %552 = vector.load %arg17[%551, %c2_287, %c0_288, %c0_289] : memref<6x3x4x128xf32, #tpu.memory_space<vmem>>, vector<1x1x4x128xf32>
    %553 = vector.shape_cast %552 : vector<1x1x4x128xf32> to vector<4x128xf32>
    %554 = vector.shape_cast %553 : vector<4x128xf32> to vector<4x1x128xf32>
    %555 = vector.broadcast %550 : vector<4x1x128xf32> to vector<4x8x128xf32>
    %556 = arith.mulf %555, %543 : vector<4x8x128xf32>
    %cst_290 = arith.constant 1.000000e+00 : f32
    %557 = vector.broadcast %cst_290 : f32 to vector<4x8x128xf32>
    %558 = arith.subf %557, %556 : vector<4x8x128xf32>
    %559 = arith.mulf %538, %558 : vector<4x8x128xf32>
    %560 = vector.broadcast %554 : vector<4x1x128xf32> to vector<4x8x128xf32>
    %561 = arith.mulf %560, %543 : vector<4x8x128xf32>
    %562 = arith.addf %559, %561 : vector<4x8x128xf32>
    %563 = arith.index_cast %c4_i32 : i32 to index
    %c0_291 = arith.constant 0 : index
    %c256_292 = arith.constant 256 : index
    %564 = vector.load %arg20[%563, %c0_291, %c256_292] : memref<6x4x512xf32, #tpu.memory_space<vmem>>, vector<1x4x128xf32>
    %565 = vector.shape_cast %564 : vector<1x4x128xf32> to vector<4x128xf32>
    %566 = vector.shape_cast %546 : vector<4x128xf32> to vector<1x4x128xf32>
    tpu.vector_store %arg20[%563, %c0_291, %c256_292], %566 {strides = array<i32>} : memref<6x4x512xf32, #tpu.memory_space<vmem>>, vector<1x4x128xf32>,
    %567 = arith.index_cast %c4_i32 : i32 to index
    %c0_293 = arith.constant 0 : index
    %c0_294 = arith.constant 0 : index
    %568 = vector.load %arg18[%567, %c0_293, %c0_294] : memref<6x4x128xf32, #tpu.memory_space<vmem>>, vector<1x4x128xf32>
    %569 = vector.shape_cast %568 : vector<1x4x128xf32> to vector<4x128xf32>
    %570 = vector.shape_cast %569 : vector<4x128xf32> to vector<4x1x128xf32>
    %571 = arith.index_cast %c4_i32 : i32 to index
    %c0_295 = arith.constant 0 : index
    %c0_296 = arith.constant 0 : index
    %572 = vector.load %arg19[%571, %c0_295, %c0_296] : memref<6x4x128xf32, #tpu.memory_space<vmem>>, vector<1x4x128xf32>
    %573 = vector.shape_cast %572 : vector<1x4x128xf32> to vector<4x128xf32>
    %574 = vector.shape_cast %573 : vector<4x128xf32> to vector<4x1x128xf32>
    %575 = vector.broadcast %570 : vector<4x1x128xf32> to vector<4x8x128xf32>
    %576 = arith.mulf %575, %483 : vector<4x8x128xf32>
    %cst_297 = arith.constant 1.000000e+00 : f32
    %577 = vector.broadcast %cst_297 : f32 to vector<4x8x128xf32>
    %578 = arith.subf %577, %576 : vector<4x8x128xf32>
    %579 = arith.mulf %562, %578 : vector<4x8x128xf32>
    %580 = vector.broadcast %574 : vector<4x1x128xf32> to vector<4x8x128xf32>
    %581 = arith.mulf %580, %483 : vector<4x8x128xf32>
    %582 = arith.addf %579, %581 : vector<4x8x128xf32>
    %c5_i32 = arith.constant 5 : i32
    %583 = arith.index_cast %c5_i32 : i32 to index
    %c0_298 = arith.constant 0 : index
    %c0_299 = arith.constant 0 : index
    %c0_300 = arith.constant 0 : index
    %584 = vector.load %arg14[%583, %c0_298, %c0_299, %c0_300] : memref<6x4x8x1xf32, #tpu.memory_space<vmem>>, vector<1x4x8x1xf32>
    %585 = vector.shape_cast %584 : vector<1x4x8x1xf32> to vector<4x8x1xf32>
    %586 = vector.shape_cast %585 : vector<4x8x1xf32> to vector<4x8x1xf32>
    %587 = vector.broadcast %586 : vector<4x8x1xf32> to vector<4x8x128xf32>
    %588 = arith.mulf %587, %582 : vector<4x8x128xf32>
    %cst_301 = arith.constant dense<0.000000e+00> : vector<4x128xf32>
    %589 = vector.multi_reduction <add>, %588, %cst_301 [1] : vector<4x8x128xf32> to vector<4x128xf32>
    %590 = arith.index_cast %c5_i32 : i32 to index
    %c0_302 = arith.constant 0 : index
    %c0_303 = arith.constant 0 : index
    %591 = vector.load %arg20[%590, %c0_302, %c0_303] : memref<6x4x512xf32, #tpu.memory_space<vmem>>, vector<1x4x128xf32>
    %592 = vector.shape_cast %591 : vector<1x4x128xf32> to vector<4x128xf32>
    %593 = vector.shape_cast %589 : vector<4x128xf32> to vector<1x4x128xf32>
    tpu.vector_store %arg20[%590, %c0_302, %c0_303], %593 {strides = array<i32>} : memref<6x4x512xf32, #tpu.memory_space<vmem>>, vector<1x4x128xf32>,
    %cst_304 = arith.constant 0.000000e+00 : f32
    %594 = vector.broadcast %cst_304 : f32 to vector<4x128xf32>
    %595 = arith.index_cast %c5_i32 : i32 to index
    %c0_305 = arith.constant 0 : index
    %c0_306 = arith.constant 0 : index
    %c0_307 = arith.constant 0 : index
    %c0_308 = arith.constant 0 : index
    %596 = vector.load %arg15[%595, %c0_305, %c0_306, %c0_307, %c0_308] : memref<6x3x4x8x1xf32, #tpu.memory_space<vmem>>, vector<1x1x4x8x1xf32>
    %597 = vector.shape_cast %596 : vector<1x1x4x8x1xf32> to vector<4x8x1xf32>
    %598 = vector.shape_cast %597 : vector<4x8x1xf32> to vector<4x8x1xf32>
    %599 = vector.broadcast %598 : vector<4x8x1xf32> to vector<4x8x128xf32>
    %600 = arith.mulf %599, %582 : vector<4x8x128xf32>
    %cst_309 = arith.constant dense<0.000000e+00> : vector<4x128xf32>
    %601 = vector.multi_reduction <add>, %600, %cst_309 [1] : vector<4x8x128xf32> to vector<4x128xf32>
    %602 = arith.addf %594, %601 : vector<4x128xf32>
    %603 = arith.index_cast %c5_i32 : i32 to index
    %c0_310 = arith.constant 0 : index
    %c0_311 = arith.constant 0 : index
    %c0_312 = arith.constant 0 : index
    %604 = vector.load %arg16[%603, %c0_310, %c0_311, %c0_312] : memref<6x3x4x128xf32, #tpu.memory_space<vmem>>, vector<1x1x4x128xf32>
    %605 = vector.shape_cast %604 : vector<1x1x4x128xf32> to vector<4x128xf32>
    %606 = vector.shape_cast %605 : vector<4x128xf32> to vector<4x1x128xf32>
    %607 = arith.index_cast %c5_i32 : i32 to index
    %c0_313 = arith.constant 0 : index
    %c0_314 = arith.constant 0 : index
    %c0_315 = arith.constant 0 : index
    %608 = vector.load %arg17[%607, %c0_313, %c0_314, %c0_315] : memref<6x3x4x128xf32, #tpu.memory_space<vmem>>, vector<1x1x4x128xf32>
    %609 = vector.shape_cast %608 : vector<1x1x4x128xf32> to vector<4x128xf32>
    %610 = vector.shape_cast %609 : vector<4x128xf32> to vector<4x1x128xf32>
    %611 = vector.broadcast %606 : vector<4x1x128xf32> to vector<4x8x128xf32>
    %612 = arith.mulf %611, %599 : vector<4x8x128xf32>
    %cst_316 = arith.constant 1.000000e+00 : f32
    %613 = vector.broadcast %cst_316 : f32 to vector<4x8x128xf32>
    %614 = arith.subf %613, %612 : vector<4x8x128xf32>
    %615 = arith.mulf %582, %614 : vector<4x8x128xf32>
    %616 = vector.broadcast %610 : vector<4x1x128xf32> to vector<4x8x128xf32>
    %617 = arith.mulf %616, %599 : vector<4x8x128xf32>
    %618 = arith.addf %615, %617 : vector<4x8x128xf32>
    %619 = arith.index_cast %c5_i32 : i32 to index
    %c1_317 = arith.constant 1 : index
    %c0_318 = arith.constant 0 : index
    %c0_319 = arith.constant 0 : index
    %c0_320 = arith.constant 0 : index
    %620 = vector.load %arg15[%619, %c1_317, %c0_318, %c0_319, %c0_320] : memref<6x3x4x8x1xf32, #tpu.memory_space<vmem>>, vector<1x1x4x8x1xf32>
    %621 = vector.shape_cast %620 : vector<1x1x4x8x1xf32> to vector<4x8x1xf32>
    %622 = vector.shape_cast %621 : vector<4x8x1xf32> to vector<4x8x1xf32>
    %623 = vector.broadcast %622 : vector<4x8x1xf32> to vector<4x8x128xf32>
    %624 = arith.mulf %623, %618 : vector<4x8x128xf32>
    %cst_321 = arith.constant dense<0.000000e+00> : vector<4x128xf32>
    %625 = vector.multi_reduction <add>, %624, %cst_321 [1] : vector<4x8x128xf32> to vector<4x128xf32>
    %626 = arith.addf %602, %625 : vector<4x128xf32>
    %627 = arith.index_cast %c5_i32 : i32 to index
    %c1_322 = arith.constant 1 : index
    %c0_323 = arith.constant 0 : index
    %c0_324 = arith.constant 0 : index
    %628 = vector.load %arg16[%627, %c1_322, %c0_323, %c0_324] : memref<6x3x4x128xf32, #tpu.memory_space<vmem>>, vector<1x1x4x128xf32>
    %629 = vector.shape_cast %628 : vector<1x1x4x128xf32> to vector<4x128xf32>
    %630 = vector.shape_cast %629 : vector<4x128xf32> to vector<4x1x128xf32>
    %631 = arith.index_cast %c5_i32 : i32 to index
    %c1_325 = arith.constant 1 : index
    %c0_326 = arith.constant 0 : index
    %c0_327 = arith.constant 0 : index
    %632 = vector.load %arg17[%631, %c1_325, %c0_326, %c0_327] : memref<6x3x4x128xf32, #tpu.memory_space<vmem>>, vector<1x1x4x128xf32>
    %633 = vector.shape_cast %632 : vector<1x1x4x128xf32> to vector<4x128xf32>
    %634 = vector.shape_cast %633 : vector<4x128xf32> to vector<4x1x128xf32>
    %635 = vector.broadcast %630 : vector<4x1x128xf32> to vector<4x8x128xf32>
    %636 = arith.mulf %635, %623 : vector<4x8x128xf32>
    %cst_328 = arith.constant 1.000000e+00 : f32
    %637 = vector.broadcast %cst_328 : f32 to vector<4x8x128xf32>
    %638 = arith.subf %637, %636 : vector<4x8x128xf32>
    %639 = arith.mulf %618, %638 : vector<4x8x128xf32>
    %640 = vector.broadcast %634 : vector<4x1x128xf32> to vector<4x8x128xf32>
    %641 = arith.mulf %640, %623 : vector<4x8x128xf32>
    %642 = arith.addf %639, %641 : vector<4x8x128xf32>
    %643 = arith.index_cast %c5_i32 : i32 to index
    %c2_329 = arith.constant 2 : index
    %c0_330 = arith.constant 0 : index
    %c0_331 = arith.constant 0 : index
    %c0_332 = arith.constant 0 : index
    %644 = vector.load %arg15[%643, %c2_329, %c0_330, %c0_331, %c0_332] : memref<6x3x4x8x1xf32, #tpu.memory_space<vmem>>, vector<1x1x4x8x1xf32>
    %645 = vector.shape_cast %644 : vector<1x1x4x8x1xf32> to vector<4x8x1xf32>
    %646 = vector.shape_cast %645 : vector<4x8x1xf32> to vector<4x8x1xf32>
    %647 = vector.broadcast %646 : vector<4x8x1xf32> to vector<4x8x128xf32>
    %648 = arith.mulf %647, %642 : vector<4x8x128xf32>
    %cst_333 = arith.constant dense<0.000000e+00> : vector<4x128xf32>
    %649 = vector.multi_reduction <add>, %648, %cst_333 [1] : vector<4x8x128xf32> to vector<4x128xf32>
    %650 = arith.addf %626, %649 : vector<4x128xf32>
    %651 = arith.index_cast %c5_i32 : i32 to index
    %c2_334 = arith.constant 2 : index
    %c0_335 = arith.constant 0 : index
    %c0_336 = arith.constant 0 : index
    %652 = vector.load %arg16[%651, %c2_334, %c0_335, %c0_336] : memref<6x3x4x128xf32, #tpu.memory_space<vmem>>, vector<1x1x4x128xf32>
    %653 = vector.shape_cast %652 : vector<1x1x4x128xf32> to vector<4x128xf32>
    %654 = vector.shape_cast %653 : vector<4x128xf32> to vector<4x1x128xf32>
    %655 = arith.index_cast %c5_i32 : i32 to index
    %c2_337 = arith.constant 2 : index
    %c0_338 = arith.constant 0 : index
    %c0_339 = arith.constant 0 : index
    %656 = vector.load %arg17[%655, %c2_337, %c0_338, %c0_339] : memref<6x3x4x128xf32, #tpu.memory_space<vmem>>, vector<1x1x4x128xf32>
    %657 = vector.shape_cast %656 : vector<1x1x4x128xf32> to vector<4x128xf32>
    %658 = vector.shape_cast %657 : vector<4x128xf32> to vector<4x1x128xf32>
    %659 = vector.broadcast %654 : vector<4x1x128xf32> to vector<4x8x128xf32>
    %660 = arith.mulf %659, %647 : vector<4x8x128xf32>
    %cst_340 = arith.constant 1.000000e+00 : f32
    %661 = vector.broadcast %cst_340 : f32 to vector<4x8x128xf32>
    %662 = arith.subf %661, %660 : vector<4x8x128xf32>
    %663 = arith.mulf %642, %662 : vector<4x8x128xf32>
    %664 = vector.broadcast %658 : vector<4x1x128xf32> to vector<4x8x128xf32>
    %665 = arith.mulf %664, %647 : vector<4x8x128xf32>
    %666 = arith.addf %663, %665 : vector<4x8x128xf32>
    %667 = arith.index_cast %c5_i32 : i32 to index
    %c0_341 = arith.constant 0 : index
    %c256_342 = arith.constant 256 : index
    %668 = vector.load %arg20[%667, %c0_341, %c256_342] : memref<6x4x512xf32, #tpu.memory_space<vmem>>, vector<1x4x128xf32>
    %669 = vector.shape_cast %668 : vector<1x4x128xf32> to vector<4x128xf32>
    %670 = vector.shape_cast %650 : vector<4x128xf32> to vector<1x4x128xf32>
    tpu.vector_store %arg20[%667, %c0_341, %c256_342], %670 {strides = array<i32>} : memref<6x4x512xf32, #tpu.memory_space<vmem>>, vector<1x4x128xf32>,
    %671 = arith.index_cast %c5_i32 : i32 to index
    %c0_343 = arith.constant 0 : index
    %c0_344 = arith.constant 0 : index
    %672 = vector.load %arg18[%671, %c0_343, %c0_344] : memref<6x4x128xf32, #tpu.memory_space<vmem>>, vector<1x4x128xf32>
    %673 = vector.shape_cast %672 : vector<1x4x128xf32> to vector<4x128xf32>
    %674 = vector.shape_cast %673 : vector<4x128xf32> to vector<4x1x128xf32>
    %675 = arith.index_cast %c5_i32 : i32 to index
    %c0_345 = arith.constant 0 : index
    %c0_346 = arith.constant 0 : index
    %676 = vector.load %arg19[%675, %c0_345, %c0_346] : memref<6x4x128xf32, #tpu.memory_space<vmem>>, vector<1x4x128xf32>
    %677 = vector.shape_cast %676 : vector<1x4x128xf32> to vector<4x128xf32>
    %678 = vector.shape_cast %677 : vector<4x128xf32> to vector<4x1x128xf32>
    %679 = vector.broadcast %674 : vector<4x1x128xf32> to vector<4x8x128xf32>
    %680 = arith.mulf %679, %587 : vector<4x8x128xf32>
    %cst_347 = arith.constant 1.000000e+00 : f32
    %681 = vector.broadcast %cst_347 : f32 to vector<4x8x128xf32>
    %682 = arith.subf %681, %680 : vector<4x8x128xf32>
    %683 = arith.mulf %666, %682 : vector<4x8x128xf32>
    %684 = vector.broadcast %678 : vector<4x1x128xf32> to vector<4x8x128xf32>
    %685 = arith.mulf %684, %587 : vector<4x8x128xf32>
    %686 = arith.addf %683, %685 : vector<4x8x128xf32>
    %c6_i32 = arith.constant 6 : i32
    %c0_348 = arith.constant 0 : index
    %c0_349 = arith.constant 0 : index
    %c0_350 = arith.constant 0 : index
    %687 = vector.load %arg13[%c0_348, %c0_349, %c0_350] : memref<4x8x128xf32, #tpu.memory_space<vmem>>, vector<4x8x128xf32>
    tpu.vector_store %arg13[%c0_348, %c0_349, %c0_350], %686 {strides = array<i32>} : memref<4x8x128xf32, #tpu.memory_space<vmem>>, vector<4x8x128xf32>,
    %c0_351 = arith.constant 0 : index
    %c0_352 = arith.constant 0 : index
    %688 = vector.load %arg10[%c0_351, %c0_352] : memref<4x512xf32, #tpu.memory_space<vmem>>, vector<4x512xf32>
    %689 = vector.extract_strided_slice %688 {offsets = [0, 0], sizes = [1, 512], strides = [1, 1]} : vector<4x512xf32> to vector<1x512xf32>
    %690 = vector.extract_strided_slice %688 {offsets = [1, 0], sizes = [1, 512], strides = [1, 1]} : vector<4x512xf32> to vector<1x512xf32>
    %691 = vector.extract_strided_slice %688 {offsets = [2, 0], sizes = [1, 512], strides = [1, 1]} : vector<4x512xf32> to vector<1x512xf32>
    %692 = vector.extract_strided_slice %688 {offsets = [3, 0], sizes = [1, 512], strides = [1, 1]} : vector<4x512xf32> to vector<1x512xf32>
    %c0_353 = arith.constant 0 : index
    %c0_354 = arith.constant 0 : index
    %c0_355 = arith.constant 0 : index
    %693 = vector.load %arg20[%c0_353, %c0_354, %c0_355] : memref<6x4x512xf32, #tpu.memory_space<vmem>>, vector<6x4x512xf32>
    %694 = vector.shape_cast %693 : vector<6x4x512xf32> to vector<24x512xf32>
    %cst_356 = arith.constant dense<0.000000e+00> : vector<24xf32>
    %695 = vector.multi_reduction <add>, %694, %cst_356 [1] : vector<24x512xf32> to vector<24xf32>
    %696 = vector.shape_cast %695 : vector<24xf32> to vector<24x1xf32>
    %cst_357 = arith.constant 5.120000e+02 : f32
    %697 = vector.broadcast %cst_357 : f32 to vector<24x1xf32>
    %698 = arith.divf %696, %697 : vector<24x1xf32>
    %699 = vector.broadcast %698 : vector<24x1xf32> to vector<24x512xf32>
    %700 = arith.subf %694, %699 : vector<24x512xf32>
    %701 = arith.mulf %700, %700 : vector<24x512xf32>
    %cst_358 = arith.constant dense<0.000000e+00> : vector<24xf32>
    %702 = vector.multi_reduction <add>, %701, %cst_358 [1] : vector<24x512xf32> to vector<24xf32>
    %703 = vector.shape_cast %702 : vector<24xf32> to vector<24x1xf32>
    %cst_359 = arith.constant 5.120000e+02 : f32
    %704 = vector.broadcast %cst_359 : f32 to vector<24x1xf32>
    %705 = arith.divf %703, %704 : vector<24x1xf32>
    %706 = vector.broadcast %698 : vector<24x1xf32> to vector<24x512xf32>
    %707 = arith.subf %694, %706 : vector<24x512xf32>
    %cst_360 = arith.constant 9.99999974E-6 : f32
    %708 = vector.broadcast %cst_360 : f32 to vector<24x1xf32>
    %709 = arith.addf %705, %708 : vector<24x1xf32>
    %710 = math.rsqrt %709 : vector<24x1xf32>
    %711 = vector.broadcast %710 : vector<24x1xf32> to vector<24x512xf32>
    %712 = arith.mulf %707, %711 : vector<24x512xf32>
    %713 = vector.broadcast %689 : vector<1x512xf32> to vector<24x512xf32>
    %714 = arith.mulf %712, %713 : vector<24x512xf32>
    %715 = vector.broadcast %690 : vector<1x512xf32> to vector<24x512xf32>
    %716 = arith.addf %714, %715 : vector<24x512xf32>
    %717 = arith.truncf %716 : vector<24x512xf32> to vector<24x512xbf16>
    %c0_361 = arith.constant 0 : index
    %c0_362 = arith.constant 0 : index
    %718 = vector.load %arg9[%c0_361, %c0_362] : memref<512x512xbf16, #tpu.memory_space<vmem>>, vector<512x512xbf16>
    %cst_363 = arith.constant dense<0.000000e+00> : vector<24x512xf32>
    %719 = tpu.matmul %717, %718, %cst_363 {dimension_numbers = #tpu.dot_dimension_numbers<[1], [0], [0], [1], [0, 0, 1, 1], [], []>} : vector<24x512xbf16>, vector<512x512xbf16>, vector<24x512xf32> -> vector<24x512xf32>
    %720 = vector.broadcast %691 : vector<1x512xf32> to vector<24x512xf32>
    %721 = arith.addf %719, %720 : vector<24x512xf32>
    %cst_364 = arith.constant 0.000000e+00 : f32
    %722 = vector.broadcast %cst_364 : f32 to vector<24x512xf32>
    %723 = arith.maximumf %721, %722 : vector<24x512xf32>
    %724 = vector.broadcast %692 : vector<1x512xf32> to vector<24x512xf32>
    %725 = arith.mulf %723, %724 : vector<24x512xf32>
    %cst_365 = arith.constant dense<0.000000e+00> : vector<24xf32>
    %726 = vector.multi_reduction <add>, %725, %cst_365 [1] : vector<24x512xf32> to vector<24xf32>
    %727 = vector.shape_cast %726 : vector<24xf32> to vector<24x1xf32>
    %c0_366 = arith.constant 0 : index
    %c0_367 = arith.constant 0 : index
    %728 = memref.load %arg11[%c0_366, %c0_367] : memref<1x1xf32, #tpu.memory_space<smem>>
    %729 = vector.broadcast %728 : f32 to vector<24x1xf32>
    %730 = arith.addf %727, %729 : vector<24x1xf32>
    %731 = arith.negf %730 : vector<24x1xf32>
    %732 = math.exp %731 : vector<24x1xf32>
    %cst_368 = arith.constant 1.000000e+00 : f32
    %733 = vector.broadcast %cst_368 : f32 to vector<24x1xf32>
    %734 = arith.addf %733, %732 : vector<24x1xf32>
    %735 = arith.divf %733, %734 : vector<24x1xf32>
    %736 = vector.shape_cast %735 : vector<24x1xf32> to vector<1x1x1x24xf32>
    %c0_369 = arith.constant 0 : index
    %c0_370 = arith.constant 0 : index
    %c0_371 = arith.constant 0 : index
    %c0_372 = arith.constant 0 : index
    %737 = vector.load %arg12[%c0_369, %c0_370, %c0_371, %c0_372] : memref<1x1x1x24xf32, #tpu.memory_space<vmem>>, vector<1x1x1x24xf32>
    tpu.vector_store %arg12[%c0_369, %c0_370, %c0_371, %c0_372], %736 {strides = array<i32>} : memref<1x1x1x24xf32, #tpu.memory_space<vmem>>, vector<1x1x1x24xf32>,
    return
  }
  func.func @transform_0(%arg0: i32, %arg1: i32) -> (i32, i32, i32) {
    %c0_i32 = arith.constant 0 : i32
    %c0_i32_0 = arith.constant 0 : i32
    return %arg1, %arg0, %c0_i32 : i32, i32, i32
  }
  func.func @transform_1(%arg0: i32, %arg1: i32) -> (i32, i32, i32) {
    %c0_i32 = arith.constant 0 : i32
    %c0_i32_0 = arith.constant 0 : i32
    return %arg1, %arg0, %c0_i32 : i32, i32, i32
  }
  func.func @transform_2(%arg0: i32, %arg1: i32) -> (i32, i32, i32, i32) {
    %c0_i32 = arith.constant 0 : i32
    %c0_i32_0 = arith.constant 0 : i32
    %c0_i32_1 = arith.constant 0 : i32
    return %arg1, %c0_i32, %arg0, %c0_i32_0 : i32, i32, i32, i32
  }
  func.func @transform_3(%arg0: i32, %arg1: i32) -> (i32, i32) {
    %c0_i32 = arith.constant 0 : i32
    %c0_i32_0 = arith.constant 0 : i32
    %c0_i32_1 = arith.constant 0 : i32
    return %c0_i32, %c0_i32_0 : i32, i32
  }
  func.func @transform_4(%arg0: i32, %arg1: i32) -> (i32, i32) {
    %c0_i32 = arith.constant 0 : i32
    %c0_i32_0 = arith.constant 0 : i32
    %c0_i32_1 = arith.constant 0 : i32
    return %c0_i32, %c0_i32_0 : i32, i32
  }
  func.func @transform_5(%arg0: i32, %arg1: i32) -> (i32, i32) {
    %c0_i32 = arith.constant 0 : i32
    %c0_i32_0 = arith.constant 0 : i32
    %c0_i32_1 = arith.constant 0 : i32
    return %c0_i32, %c0_i32_0 : i32, i32
  }
  func.func @transform_6(%arg0: i32, %arg1: i32) -> (i32, i32) {
    %c0_i32 = arith.constant 0 : i32
    %c0_i32_0 = arith.constant 0 : i32
    %c0_i32_1 = arith.constant 0 : i32
    return %c0_i32, %c0_i32_0 : i32, i32
  }
  func.func @transform_7(%arg0: i32, %arg1: i32) -> (i32, i32) {
    %c0_i32 = arith.constant 0 : i32
    %c0_i32_0 = arith.constant 0 : i32
    %c0_i32_1 = arith.constant 0 : i32
    return %c0_i32, %c0_i32_0 : i32, i32
  }
  func.func @transform_8(%arg0: i32, %arg1: i32) -> (i32, i32) {
    %c0_i32 = arith.constant 0 : i32
    %c0_i32_0 = arith.constant 0 : i32
    %c0_i32_1 = arith.constant 0 : i32
    return %c0_i32, %c0_i32_0 : i32, i32
  }
  func.func @transform_9(%arg0: i32, %arg1: i32) -> (i32, i32) {
    %c0_i32 = arith.constant 0 : i32
    %c0_i32_0 = arith.constant 0 : i32
    %c0_i32_1 = arith.constant 0 : i32
    return %c0_i32, %c0_i32_0 : i32, i32
  }
  func.func @transform_10(%arg0: i32, %arg1: i32) -> (i32, i32, i32, i32) {
    %c0_i32 = arith.constant 0 : i32
    %c0_i32_0 = arith.constant 0 : i32
    %c0_i32_1 = arith.constant 0 : i32
    return %arg0, %arg1, %c0_i32, %c0_i32_0 : i32, i32, i32, i32
  }
}

</mosaic_0001>

<llo_original>
// kernel: tpu_custom_call.1
$region0: #{tpu_custom_call.1}
  #allocation0 [shape = 'u32[]', space=smem, size = 0x4, offset = 0x4, fixed_abs, tag = 'smem constant byte address 0x4 - core index']
  #allocation1 [shape = 'u32[144,128]{1,0:T(1,128)}', space=vmem, size = 0x12000, scoped, tag = 'internal scratch']
  #allocation2 [shape = 'f32[4,8,128]{2,1,0:T(8,128)}', space=vmem, size = 0x4000, scoped, tag = 'scratch operand']
  #allocation3 [shape = 'f32[6,4,8,1]{3,2,1,0:T(8,128)}', space=vmem, size = 0x18000, scoped, tag = 'scratch operand']
  #allocation4 [shape = 'f32[6,3,4,8,1]{4,3,2,1,0:T(8,128)}', space=vmem, size = 0x48000, scoped, tag = 'scratch operand']
  #allocation5 [shape = 'f32[6,3,4,128]{3,2,1,0:T(4,128)}', space=vmem, size = 0x9000, scoped, tag = 'scratch operand']
  #allocation6 [shape = 'f32[6,3,4,128]{3,2,1,0:T(4,128)}', space=vmem, size = 0x9000, scoped, tag = 'scratch operand']
  #allocation7 [shape = 'f32[6,4,128]{2,1,0:T(4,128)}', space=vmem, size = 0x3000, scoped, tag = 'scratch operand']
  #allocation8 [shape = 'f32[6,4,128]{2,1,0:T(4,128)}', space=vmem, size = 0x3000, scoped, tag = 'scratch operand']
  #allocation9 [shape = 'f32[6,4,512]{2,1,0:T(4,128)}', space=vmem, size = 0xc000, scoped, tag = 'scratch operand']
  #allocation10 [shape = 'f32[1,1]{1,0:T(1,128)S(6)}', space=smem, size = 0x200, scoped, tag = 'scoped memory for tpu_custom_call.1']
  %s0 = inlined_call_operand.hbm [shape: bf16[6,4,128], index: 0, kind: input, shape index: {}]
  %s1 = inlined_call_operand.hbm [shape: bf16[6,4,128], index: 1, kind: input, shape index: {}]
  %s2 = inlined_call_operand.hbm [shape: bf16[6,3,4,128], index: 2, kind: input, shape index: {}]
  %s3 = inlined_call_operand.vmem [shape: bf16[8,128], index: 3, kind: input, shape index: {}]
  %s4 = inlined_call_operand.vmem [shape: f32[8,128], index: 4, kind: input, shape index: {}]
  %s5 = inlined_call_operand.hbm [shape: bf16[128,256], index: 5, kind: input, shape index: {}]
  %s6 = inlined_call_operand.vmem [shape: f32[1,256], index: 6, kind: input, shape index: {}]
  %s7 = inlined_call_operand.hbm [shape: bf16[512,512], index: 7, kind: input, shape index: {}]
  %s8 = inlined_call_operand.vmem [shape: f32[4,512], index: 8, kind: input, shape index: {}]
  %s9 = inlined_call_operand.<no memory space> [shape: f32[1,1], index: 9, kind: input, shape index: {}]
  %s10 = inlined_call_operand.hbm [shape: f32[1,1,1,24], index: 10, kind: output, shape index: {}]
  %s11 = sld [smem:[#allocation0]]
  $region74: #{tpu_custom_call.1} parent=0
    _
  %s13 = ssub.s32 1, %s11
  %s14 = scalar_select 0, %s13, %s11
  %15 = sst [smem:[#allocation10]] %s9
  $region1: #{tpu_custom_call.1} parent=0
    #allocation11 [shape = 'u8[6144]{0}', space=vmem, size = 0x1800, scoped, tag = 'input window, operand 0, single buffered']
    #allocation12 [shape = 's32[1]{0}', space=sflag, size = 0x4, scoped, tag = 'scoped memory for tpu_custom_call.1']
    #allocation13 [shape = 's32[1]{0}', space=sflag, size = 0x4, scoped, tag = 'scoped memory for tpu_custom_call.1']
    #allocation14 [shape = 'u8[6144]{0}', space=vmem, size = 0x1800, scoped, tag = 'input window, operand 1, single buffered']
    #allocation15 [shape = 's32[1]{0}', space=sflag, size = 0x4, scoped, tag = 'scoped memory for tpu_custom_call.1']
    #allocation16 [shape = 'u8[18432]{0}', space=vmem, size = 0x4800, scoped, tag = 'input window, operand 2, single buffered']
    #allocation17 [shape = 'u8[65536]{0}', space=vmem, size = 0x10000, scoped, tag = 'input window, operand 5, single buffered']
    #allocation18 [shape = 's32[1]{0}', space=sflag, size = 0x4, scoped, tag = 'scoped memory for tpu_custom_call.1']
    #allocation19 [shape = 'u8[524288]{0}', space=vmem, size = 0x80000, scoped, tag = 'input window, operand 7, single buffered']
    #allocation20 [shape = 'u8[512]{0}', space=vmem, size = 0x400, scoped, tag = 'output window, operand 0, single buffered']
    %16 = vsyncpa [#allocation12], 0
    %17 = vsyncpa [#allocation15], 0
    %18 = vsyncpa [#allocation18], 0
    %19 = vsyncpa [#allocation13], 0
    // Predicated region
    $region2: #{tpu_custom_call.1} parent=1 // pred_check
      _
    $region3: #{tpu_custom_call.1} parent=1 // pred_check_branch
      %21 = sbr.rel (0) target = $region5
    $region4: #{tpu_custom_call.1} parent=1 // pred_region
      %s23 = ssub.s32 192, 192
      %24 = vsyncadd [#allocation12], %s23
      %s25 = sshll.u32 [#allocation11], 4
      %s26 = int_to_ptr.vmem [resolvable:$true] %s25
      %31 = dma.hbm_to_vmem [thread:$0]  %s0, 192, %s26, [#allocation12], 32, 32, 2
    $region5: #{tpu_custom_call.1} parent=1 // pred_fallthru
      _
    // Predicated region
    $region6: #{tpu_custom_call.1} parent=1 // pred_check
      _
    $region7: #{tpu_custom_call.1} parent=1 // pred_check_branch
      %33 = sbr.rel (0) target = $region9
    $region8: #{tpu_custom_call.1} parent=1 // pred_region
      %s35 = ssub.s32 192, 192
      %36 = vsyncadd [#allocation15], %s35
      %s37 = sshll.u32 [#allocation14], 4
      %s38 = int_to_ptr.vmem [resolvable:$true] %s37
      %43 = dma.hbm_to_vmem [thread:$0]  %s1, 192, %s38, [#allocation15], 32, 32, 2
    $region9: #{tpu_custom_call.1} parent=1 // pred_fallthru
      _
    // Predicated region
    $region10: #{tpu_custom_call.1} parent=1 // pred_check
      _
    $region11: #{tpu_custom_call.1} parent=1 // pred_check_branch
      %45 = sbr.rel (0) target = $region13
    $region12: #{tpu_custom_call.1} parent=1 // pred_region
      %s47 = ssub.s32 576, 576
      %48 = vsyncadd [#allocation15], %s47
      %s49 = sshll.u32 [#allocation16], 4
      %s50 = int_to_ptr.vmem [resolvable:$true] %s49
      %55 = dma.hbm_to_vmem [thread:$0]  %s2, 576, %s50, [#allocation15], 32, 32, 2
    $region13: #{tpu_custom_call.1} parent=1 // pred_fallthru
      _
    // Predicated region
    $region14: #{tpu_custom_call.1} parent=1 // pred_check
      _
    $region15: #{tpu_custom_call.1} parent=1 // pred_check_branch
      %57 = sbr.rel (0) target = $region17
    $region16: #{tpu_custom_call.1} parent=1 // pred_region
      _
    $region17: #{tpu_custom_call.1} parent=1 // pred_fallthru
      _
    // Predicated region
    $region18: #{tpu_custom_call.1} parent=1 // pred_check
      _
    $region19: #{tpu_custom_call.1} parent=1 // pred_check_branch
      %59 = sbr.rel (0) target = $region21
    $region20: #{tpu_custom_call.1} parent=1 // pred_region
      _
    $region21: #{tpu_custom_call.1} parent=1 // pred_fallthru
      _
    // Predicated region
    $region22: #{tpu_custom_call.1} parent=1 // pred_check
      _
    $region23: #{tpu_custom_call.1} parent=1 // pred_check_branch
      %61 = sbr.rel (0) target = $region25
    $region24: #{tpu_custom_call.1} parent=1 // pred_region
      %s63 = ssub.s32 2048, 2048
      %64 = vsyncadd [#allocation18], %s63
      %s65 = sshll.u32 [#allocation17], 4
      %s66 = int_to_ptr.vmem [resolvable:$true] %s65
      %71 = dma.hbm_to_vmem [thread:$0]  %s5, 2048, %s66, [#allocation18], 128, 128, 8
    $region25: #{tpu_custom_call.1} parent=1 // pred_fallthru
      _
    // Predicated region
    $region26: #{tpu_custom_call.1} parent=1 // pred_check
      _
    $region27: #{tpu_custom_call.1} parent=1 // pred_check_branch
      %73 = sbr.rel (0) target = $region29
    $region28: #{tpu_custom_call.1} parent=1 // pred_region
      _
    $region29: #{tpu_custom_call.1} parent=1 // pred_fallthru
      _
    // Predicated region
    $region30: #{tpu_custom_call.1} parent=1 // pred_check
      _
    $region31: #{tpu_custom_call.1} parent=1 // pred_check_branch
      %75 = sbr.rel (0) target = $region33
    $region32: #{tpu_custom_call.1} parent=1 // pred_region
      %s77 = ssub.s32 16384, 16384
      %78 = vsyncadd [#allocation18], %s77
      %s79 = sshll.u32 [#allocation19], 4
      %s80 = int_to_ptr.vmem [resolvable:$true] %s79
      %85 = dma.hbm_to_vmem [thread:$0]  %s7, 16384, %s80, [#allocation18], 256, 256, 16
    $region33: #{tpu_custom_call.1} parent=1 // pred_fallthru
      _
    // Predicated region
    $region34: #{tpu_custom_call.1} parent=1 // pred_check
      _
    $region35: #{tpu_custom_call.1} parent=1 // pred_check_branch
      %87 = sbr.rel (0) target = $region37
    $region36: #{tpu_custom_call.1} parent=1 // pred_region
      _
    $region37: #{tpu_custom_call.1} parent=1 // pred_fallthru
      _
    // Predicated region
    $region38: #{tpu_custom_call.1} parent=1 // pred_check
      _
    $region39: #{tpu_custom_call.1} parent=1 // pred_check_branch
      %89 = sbr.rel (0) target = $region41
    $region40: #{tpu_custom_call.1} parent=1 // pred_region
      _
    $region41: #{tpu_custom_call.1} parent=1 // pred_fallthru
      _
    // Predicated region
    $region42: #{tpu_custom_call.1} parent=1 // pred_check
      _
    $region43: #{tpu_custom_call.1} parent=1 // pred_check_branch
      %91 = sbr.rel (0) target = $region45
    $region44: #{tpu_custom_call.1} parent=1 // pred_region
      %92 = dma.done [#allocation12], 192
    $region45: #{tpu_custom_call.1} parent=1 // pred_fallthru
      _
    // Predicated region
    $region46: #{tpu_custom_call.1} parent=1 // pred_check
      _
    $region47: #{tpu_custom_call.1} parent=1 // pred_check_branch
      %94 = sbr.rel (0) target = $region49
    $region48: #{tpu_custom_call.1} parent=1 // pred_region
      %95 = dma.done [#allocation15], 192
    $region49: #{tpu_custom_call.1} parent=1 // pred_fallthru
      _
    // Predicated region
    $region50: #{tpu_custom_call.1} parent=1 // pred_check
      _
    $region51: #{tpu_custom_call.1} parent=1 // pred_check_branch
      %97 = sbr.rel (0) target = $region53
    $region52: #{tpu_custom_call.1} parent=1 // pred_region
      %98 = dma.done [#allocation15], 576
    $region53: #{tpu_custom_call.1} parent=1 // pred_fallthru
      _
    // Predicated region
    $region54: #{tpu_custom_call.1} parent=1 // pred_check
      _
    $region55: #{tpu_custom_call.1} parent=1 // pred_check_branch
      %100 = sbr.rel (0) target = $region57
    $region56: #{tpu_custom_call.1} parent=1 // pred_region
      %101 = dma.done [#allocation18], 2048
    $region57: #{tpu_custom_call.1} parent=1 // pred_fallthru
      _
    // Predicated region
    $region58: #{tpu_custom_call.1} parent=1 // pred_check
      _
    $region59: #{tpu_custom_call.1} parent=1 // pred_check_branch
      %103 = sbr.rel (0) target = $region61
    $region60: #{tpu_custom_call.1} parent=1 // pred_region
      %104 = dma.done [#allocation18], 16384
    $region61: #{tpu_custom_call.1} parent=1 // pred_fallthru
      _
    %p106 = scmp.eq.s32.totalorder 0, 0
    // Predicated region
    $region62: #{tpu_custom_call.1} parent=1 // pred_check
      %p107 = pneg %p106
    $region63: #{tpu_custom_call.1} parent=1 // pred_check_branch
      %109 = sbr.rel (%p107) target = $region65
    $region64: #{tpu_custom_call.1} parent=1 // pred_region
      %v110 = vld [vmem:[%s4] sm:$0xff]
      %111 = vst [vmem:[#allocation2] sm:$0xff] %v110
      %112 = vst [vmem:[#allocation2 + $0x8] sm:$0xff] %v110
      %113 = vst [vmem:[#allocation2 + $0x10] sm:$0xff] %v110
      %114 = vst [vmem:[#allocation2 + $0x18] sm:$0xff] %v110
    $region65: #{tpu_custom_call.1} parent=1 // pred_fallthru
      _
    %v115 = vld [vmem:[#allocation11] sm:$0x3]
    %v116 = vld [vmem:[#allocation11 + $0x2] sm:$0x3]
    %v117 = vld [vmem:[#allocation11 + $0x4] sm:$0x3]
    %v118 = vld [vmem:[#allocation11 + $0x6] sm:$0x3]
    %v119 = vld [vmem:[#allocation11 + $0x8] sm:$0x3]
    %v120 = vld [vmem:[#allocation11 + $0xa] sm:$0x3]
    %v121 = vld [vmem:[#allocation14] sm:$0x3]
    %v122 = vld [vmem:[#allocation14 + $0x2] sm:$0x3]
    %v123 = vld [vmem:[#allocation14 + $0x4] sm:$0x3]
    %v124 = vld [vmem:[#allocation14 + $0x6] sm:$0x3]
    %v125 = vld [vmem:[#allocation14 + $0x8] sm:$0x3]
    %v126 = vld [vmem:[#allocation14 + $0xa] sm:$0x3]
    %v127 = vld [vmem:[#allocation16] sm:$0x3]
    %v128 = vld [vmem:[#allocation16 + $0x2] sm:$0x3]
    %v129 = vld [vmem:[#allocation16 + $0x4] sm:$0x3]
    %v130 = vld [vmem:[#allocation16 + $0x6] sm:$0x3]
    %v131 = vld [vmem:[#allocation16 + $0x8] sm:$0x3]
    %v132 = vld [vmem:[#allocation16 + $0xa] sm:$0x3]
    %v133 = vld [vmem:[#allocation16 + $0xc] sm:$0x3]
    %v134 = vld [vmem:[#allocation16 + $0xe] sm:$0x3]
    %v135 = vld [vmem:[#allocation16 + $0x10] sm:$0x3]
    %v136 = vld [vmem:[#allocation16 + $0x12] sm:$0x3]
    %v137 = vld [vmem:[#allocation16 + $0x14] sm:$0x3]
    %v138 = vld [vmem:[#allocation16 + $0x16] sm:$0x3]
    %v139 = vld [vmem:[#allocation16 + $0x18] sm:$0x3]
    %v140 = vld [vmem:[#allocation16 + $0x1a] sm:$0x3]
    %v141 = vld [vmem:[#allocation16 + $0x1c] sm:$0x3]
    %v142 = vld [vmem:[#allocation16 + $0x1e] sm:$0x3]
    %v143 = vld [vmem:[#allocation16 + $0x20] sm:$0x3]
    %v144 = vld [vmem:[#allocation16 + $0x22] sm:$0x3]
    %v151 = vcombine.low %v115, %v116
    %v152 = vcombine.low %v117, %v118
    %v154 = vunpack.c.l.s4 1983009808
    %v155 = vunpack.c.0.s8 %v154
    %v156 = vlaneseq
    %v157 = vshrl.u32 %v156, 7
    %v158 = vsub.s32 %v155, %v157
    %v159 = vrot.slane %v151, %v158
    %v161 = vunpack.c.l.s4 1983009808
    %v162 = vunpack.c.0.s8 %v161
    %v163 = vlaneseq
    %v164 = vshrl.u32 %v163, 7
    %v165 = vsub.s32 %v162, %v164
    %v166 = vrot.slane %v152, %v165
    %v167 = vcombine.low %v159, %v166
    %v168 = vcombine.low %v119, %v120
    %v170 = vunpack.c.l.s4 1983009808
    %v171 = vunpack.c.0.s8 %v170
    %v172 = vlaneseq
    %v173 = vshrl.u32 %v172, 7
    %v174 = vsub.s32 %v171, %v173
    %v175 = vrot.slane %v168, %v174
    %v195 = vcombine.low %v127, %v128
    %v197 = vunpack.c.l.s4 1983009808
    %v198 = vunpack.c.0.s8 %v197
    %v199 = vlaneseq
    %v200 = vshrl.u32 %v199, 7
    %v201 = vsub.s32 %v198, %v200
    %v202 = vrot.slane %v195, %v201
    %v203 = vcombine.low %v202, %v202
    %v204 = vcombine.low %v129, %v130
    %v205 = vcombine.low %v131, %v132
    %v207 = vunpack.c.l.s4 1983009808
    %v208 = vunpack.c.0.s8 %v207
    %v209 = vlaneseq
    %v210 = vshrl.u32 %v209, 7
    %v211 = vsub.s32 %v208, %v210
    %v212 = vrot.slane %v204, %v211
    %v214 = vunpack.c.l.s4 1983009808
    %v215 = vunpack.c.0.s8 %v214
    %v216 = vlaneseq
    %v217 = vshrl.u32 %v216, 7
    %v218 = vsub.s32 %v215, %v217
    %v219 = vrot.slane %v205, %v218
    %v220 = vcombine.low %v212, %v219
    %v221 = vcombine.low %v133, %v134
    %v222 = vcombine.low %v135, %v136
    %v224 = vunpack.c.l.s4 1983009808
    %v225 = vunpack.c.0.s8 %v224
    %v226 = vlaneseq
    %v227 = vshrl.u32 %v226, 7
    %v228 = vsub.s32 %v225, %v227
    %v229 = vrot.slane %v221, %v228
    %v231 = vunpack.c.l.s4 1983009808
    %v232 = vunpack.c.0.s8 %v231
    %v233 = vlaneseq
    %v234 = vshrl.u32 %v233, 7
    %v235 = vsub.s32 %v232, %v234
    %v236 = vrot.slane %v222, %v235
    %v237 = vcombine.low %v229, %v236
    %v238 = vcombine.low %v137, %v138
    %v239 = vcombine.low %v139, %v140
    %v241 = vunpack.c.l.s4 1983009808
    %v242 = vunpack.c.0.s8 %v241
    %v243 = vlaneseq
    %v244 = vshrl.u32 %v243, 7
    %v245 = vsub.s32 %v242, %v244
    %v246 = vrot.slane %v238, %v245
    %v248 = vunpack.c.l.s4 1983009808
    %v249 = vunpack.c.0.s8 %v248
    %v250 = vlaneseq
    %v251 = vshrl.u32 %v250, 7
    %v252 = vsub.s32 %v249, %v251
    %v253 = vrot.slane %v239, %v252
    %v254 = vcombine.low %v246, %v253
    %v255 = vcombine.low %v141, %v142
    %v256 = vcombine.low %v143, %v144
    %v258 = vunpack.c.l.s4 1983009808
    %v259 = vunpack.c.0.s8 %v258
    %v260 = vlaneseq
    %v261 = vshrl.u32 %v260, 7
    %v262 = vsub.s32 %v259, %v261
    %v263 = vrot.slane %v255, %v262
    %v265 = vunpack.c.l.s4 1983009808
    %v266 = vunpack.c.0.s8 %v265
    %v267 = vlaneseq
    %v268 = vshrl.u32 %v267, 7
    %v269 = vsub.s32 %v266, %v268
    %v270 = vrot.slane %v256, %v269
    %v271 = vcombine.low %v263, %v270
    %vm276 = vcmask 1043456
    %v279 = vsel %vm276, %v175, %v203
    %v281 = vld [vmem:[%s3] sm:$0xf]
    %282 = vmatprep.subr.bf16.mxu0 0
    %283 = vmatpush1.bf16.xpose.msra.mxu0 %v281
    %284 = vmatprep.subr.bf16.mxu0 0
    %285 = vmatpush1.bf16.xpose.msra.mxu0 0
    %286 = vmatprep.subr.bf16.mxu0 0
    %287 = vmatpush1.bf16.xpose.msra.mxu0 0
    %288 = vmatprep.subr.bf16.mxu0 0
    %289 = vmatpush1.bf16.xpose.msra.mxu0 0
    %290 = vmatprep.subr.bf16.mxu0 0
    %291 = vmatpush1.bf16.xpose.msra.mxu0 0
    %292 = vmatprep.subr.bf16.mxu0 0
    %293 = vmatpush1.bf16.xpose.msra.mxu0 0
    %294 = vmatprep.subr.bf16.mxu0 0
    %295 = vmatpush1.bf16.xpose.msra.mxu0 0
    %296 = vmatprep.subr.bf16.mxu0 0
    %297 = vmatpush1.bf16.xpose.msra.mxu0 0
    %298 = vmatprep.subr.bf16.mxu0 0
    %299 = vmatpush1.bf16.xpose.msra.mxu0 0
    %300 = vmatprep.subr.bf16.mxu0 0
    %301 = vmatpush1.bf16.xpose.msra.mxu0 0
    %302 = vmatprep.subr.bf16.mxu0 0
    %303 = vmatpush1.bf16.xpose.msra.mxu0 0
    %304 = vmatprep.subr.bf16.mxu0 0
    %305 = vmatpush1.bf16.xpose.msra.mxu0 0
    %306 = vmatprep.subr.bf16.mxu0 0
    %307 = vmatpush1.bf16.xpose.msra.mxu0 0
    %308 = vmatprep.subr.bf16.mxu0 0
    %309 = vmatpush1.bf16.xpose.msra.mxu0 0
    %310 = vmatprep.subr.bf16.mxu0 0
    %311 = vmatpush1.bf16.xpose.msra.mxu0 0
    %312 = vmatprep.subr.bf16.mxu0 0
    %313 = vmatpush1.bf16.xpose.msra.mxu0 0
    %314 = vmatprep.mubr.bf16.mxu0 0
    %315 = vmatmul.mubr.bf16.gmra.mrb[0].mxu0 %v167
    %v316 = vpop.f32.mrb[0].mxu0
    %v317 = vadd.f32 0.0, %v316
    %v318 = vpop.f32.mrb[0].mxu0
    %v319 = vpop.f32.mrb[0].mxu0
    %v320 = vadd.f32 0.0, %v319
    %v321 = vpop.f32.mrb[0].mxu0
    %322 = vmatprep.mubr.bf16.mxu0 0
    %323 = vmatmul.mubr.bf16.gmra.mrb[0].mxu0 %v279
    %v324 = vpop.f32.mrb[0].mxu0
    %v325 = vadd.f32 0.0, %v324
    %v326 = vpop.f32.mrb[0].mxu0
    %v327 = vpop.f32.mrb[0].mxu0
    %v328 = vadd.f32 0.0, %v327
    %v329 = vpop.f32.mrb[0].mxu0
    %330 = vmatprep.mubr.bf16.mxu0 0
    %331 = vmatmul.mubr.bf16.gmra.mrb[0].mxu0 %v220
    %v332 = vpop.f32.mrb[0].mxu0
    %v333 = vadd.f32 0.0, %v332
    %v334 = vpop.f32.mrb[0].mxu0
    %v335 = vpop.f32.mrb[0].mxu0
    %v336 = vadd.f32 0.0, %v335
    %v337 = vpop.f32.mrb[0].mxu0
    %338 = vmatprep.mubr.bf16.mxu0 0
    %339 = vmatmul.mubr.bf16.gmra.mrb[0].mxu0 %v237
    %v340 = vpop.f32.mrb[0].mxu0
    %v341 = vadd.f32 0.0, %v340
    %v342 = vpop.f32.mrb[0].mxu0
    %v343 = vpop.f32.mrb[0].mxu0
    %v344 = vadd.f32 0.0, %v343
    %v345 = vpop.f32.mrb[0].mxu0
    %346 = vmatprep.mubr.bf16.mxu0 0
    %347 = vmatmul.mubr.bf16.gmra.mrb[0].mxu0 %v254
    %v348 = vpop.f32.mrb[0].mxu0
    %v349 = vadd.f32 0.0, %v348
    %v350 = vpop.f32.mrb[0].mxu0
    %v351 = vpop.f32.mrb[0].mxu0
    %v352 = vadd.f32 0.0, %v351
    %v353 = vpop.f32.mrb[0].mxu0
    %354 = vmatprep.mubr.bf16.mxu0 0
    %355 = vmatmul.mubr.bf16.gmra.mrb[0].mxu0 %v271
    %v356 = vpop.f32.mrb[0].mxu0
    %v357 = vadd.f32 0.0, %v356
    %v358 = vpop.f32.mrb[0].mxu0
    %v359 = vpop.f32.mrb[0].mxu0
    %v360 = vadd.f32 0.0, %v359
    %v361 = vpop.f32.mrb[0].mxu0
    %362 = vdwg.mxu0
    %vm363 = vcmask 64512
    %v364 = vsel %vm363, %v317, -inf
    %365 = vmax.xlane.f32.xlu0 %v364
    %v366 = vpop.xlane.xlu0 %365
    %v367 = vsel %vm363, %v320, -inf
    %368 = vmax.xlane.f32.xlu0 %v367
    %v369 = vpop.xlane.xlu0 %368
    %v370 = vsel %vm363, %v325, -inf
    %371 = vmax.xlane.f32.xlu0 %v370
    %v372 = vpop.xlane.xlu0 %371
    %v373 = vsel %vm363, %v328, -inf
    %374 = vmax.xlane.f32.xlu0 %v373
    %v375 = vpop.xlane.xlu0 %374
    %v376 = vsel %vm363, %v333, -inf
    %377 = vmax.xlane.f32.xlu0 %v376
    %v378 = vpop.xlane.xlu0 %377
    %v379 = vsel %vm363, %v336, -inf
    %380 = vmax.xlane.f32.xlu0 %v379
    %v381 = vpop.xlane.xlu0 %380
    %v382 = vsel %vm363, %v341, -inf
    %383 = vmax.xlane.f32.xlu0 %v382
    %v384 = vpop.xlane.xlu0 %383
    %v385 = vsel %vm363, %v344, -inf
    %386 = vmax.xlane.f32.xlu0 %v385
    %v387 = vpop.xlane.xlu0 %386
    %v388 = vsel %vm363, %v349, -inf
    %389 = vmax.xlane.f32.xlu0 %v388
    %v390 = vpop.xlane.xlu0 %389
    %v391 = vsel %vm363, %v352, -inf
    %392 = vmax.xlane.f32.xlu0 %v391
    %v393 = vpop.xlane.xlu0 %392
    %v394 = vsel %vm363, %v357, -inf
    %395 = vmax.xlane.f32.xlu0 %v394
    %v396 = vpop.xlane.xlu0 %395
    %v397 = vsel %vm363, %v360, -inf
    %398 = vmax.xlane.f32.xlu0 %v397
    %v399 = vpop.xlane.xlu0 %398
    %v400 = vsub.f32 %v317, %v366
    %v401 = vsub.f32 %v320, %v369
    %v402 = vsub.f32 %v325, %v372
    %v403 = vsub.f32 %v328, %v375
    %v404 = vsub.f32 %v333, %v378
    %v405 = vsub.f32 %v336, %v381
    %v406 = vsub.f32 %v341, %v384
    %v407 = vsub.f32 %v344, %v387
    %v408 = vsub.f32 %v349, %v390
    %v409 = vsub.f32 %v352, %v393
    %v410 = vsub.f32 %v357, %v396
    %v411 = vsub.f32 %v360, %v399
    %v412 = vmul.f32 %v400, 1.442695
    %v413 = vpow.pop %v412
    %v414 = vmul.f32 %v401, 1.442695
    %v415 = vpow.pop %v414
    %v416 = vmul.f32 %v402, 1.442695
    %v417 = vpow.pop %v416
    %v418 = vmul.f32 %v403, 1.442695
    %v419 = vpow.pop %v418
    %v420 = vmul.f32 %v404, 1.442695
    %v421 = vpow.pop %v420
    %v422 = vmul.f32 %v405, 1.442695
    %v423 = vpow.pop %v422
    %v424 = vmul.f32 %v406, 1.442695
    %v425 = vpow.pop %v424
    %v426 = vmul.f32 %v407, 1.442695
    %v427 = vpow.pop %v426
    %v428 = vmul.f32 %v408, 1.442695
    %v429 = vpow.pop %v428
    %v430 = vmul.f32 %v409, 1.442695
    %v431 = vpow.pop %v430
    %v432 = vmul.f32 %v410, 1.442695
    %v433 = vpow.pop %v432
    %v434 = vmul.f32 %v411, 1.442695
    %v435 = vpow.pop %v434
    %v436 = vsel %vm363, %v413, 0.0
    %437 = vadd.xlane.f32.xlu0 %v436
    %v438 = vpop.xlane.xlu0 %437
    %v439 = vsel %vm363, %v415, 0.0
    %440 = vadd.xlane.f32.xlu0 %v439
    %v441 = vpop.xlane.xlu0 %440
    %v442 = vsel %vm363, %v417, 0.0
    %443 = vadd.xlane.f32.xlu0 %v442
    %v444 = vpop.xlane.xlu0 %443
    %v445 = vsel %vm363, %v419, 0.0
    %446 = vadd.xlane.f32.xlu0 %v445
    %v447 = vpop.xlane.xlu0 %446
    %v448 = vsel %vm363, %v421, 0.0
    %449 = vadd.xlane.f32.xlu0 %v448
    %v450 = vpop.xlane.xlu0 %449
    %v451 = vsel %vm363, %v423, 0.0
    %452 = vadd.xlane.f32.xlu0 %v451
    %v453 = vpop.xlane.xlu0 %452
    %v454 = vsel %vm363, %v425, 0.0
    %455 = vadd.xlane.f32.xlu0 %v454
    %v456 = vpop.xlane.xlu0 %455
    %v457 = vsel %vm363, %v427, 0.0
    %458 = vadd.xlane.f32.xlu0 %v457
    %v459 = vpop.xlane.xlu0 %458
    %v460 = vsel %vm363, %v429, 0.0
    %461 = vadd.xlane.f32.xlu0 %v460
    %v462 = vpop.xlane.xlu0 %461
    %v463 = vsel %vm363, %v431, 0.0
    %464 = vadd.xlane.f32.xlu0 %v463
    %v465 = vpop.xlane.xlu0 %464
    %v466 = vsel %vm363, %v433, 0.0
    %467 = vadd.xlane.f32.xlu0 %v466
    %v468 = vpop.xlane.xlu0 %467
    %v469 = vsel %vm363, %v435, 0.0
    %470 = vadd.xlane.f32.xlu0 %v469
    %v471 = vpop.xlane.xlu0 %470
    %v472 = vrcp.pop %v438
    %v473 = vrcp.pop %v441
    %v474 = vrcp.pop %v444
    %v475 = vrcp.pop %v447
    %v476 = vrcp.pop %v450
    %v477 = vrcp.pop %v453
    %v478 = vrcp.pop %v456
    %v479 = vrcp.pop %v459
    %v480 = vrcp.pop %v462
    %v481 = vrcp.pop %v465
    %v482 = vrcp.pop %v468
    %v483 = vrcp.pop %v471
    %v484 = vmul.f32 %v413, %v472
    %v485 = vmul.f32 %v415, %v473
    %v486 = vmul.f32 %v417, %v474
    %v487 = vmul.f32 %v419, %v475
    %v488 = vmul.f32 %v421, %v476
    %v489 = vmul.f32 %v423, %v477
    %v490 = vmul.f32 %v425, %v478
    %v491 = vmul.f32 %v427, %v479
    %v492 = vmul.f32 %v429, %v480
    %v493 = vmul.f32 %v431, %v481
    %v494 = vmul.f32 %v433, %v482
    %v495 = vmul.f32 %v435, %v483
    %v496 = vlaneseq
    %v497 = vshrl.u32 %v496, 7
    %v498 = vsub.s32 0, %v497
    %v499 = vrot.slane %v484, %v498
    %501 = vbcast.lane.b32.xlu0 %v499, 256
    %v502 = vpop.permute.xlu0 %501
    %v503 = vlaneseq
    %v504 = vshrl.u32 %v503, 7
    %v505 = vsub.s32 1, %v504
    %v506 = vrot.slane %v484, %v505
    %508 = vbcast.lane.b32.xlu0 %v506, 256
    %v509 = vpop.permute.xlu0 %508
    %v510 = vlaneseq
    %v511 = vshrl.u32 %v510, 7
    %v512 = vsub.s32 2, %v511
    %v513 = vrot.slane %v484, %v512
    %515 = vbcast.lane.b32.xlu0 %v513, 256
    %v516 = vpop.permute.xlu0 %515
    %v517 = vlaneseq
    %v518 = vshrl.u32 %v517, 7
    %v519 = vsub.s32 3, %v518
    %v520 = vrot.slane %v484, %v519
    %522 = vbcast.lane.b32.xlu0 %v520, 256
    %v523 = vpop.permute.xlu0 %522
    %v524 = vlaneseq
    %v525 = vshrl.u32 %v524, 7
    %v526 = vsub.s32 4, %v525
    %v527 = vrot.slane %v484, %v526
    %529 = vbcast.lane.b32.xlu0 %v527, 256
    %v530 = vpop.permute.xlu0 %529
    %v531 = vlaneseq
    %v532 = vshrl.u32 %v531, 7
    %v533 = vsub.s32 5, %v532
    %v534 = vrot.slane %v484, %v533
    %536 = vbcast.lane.b32.xlu0 %v534, 256
    %v537 = vpop.permute.xlu0 %536
    %v538 = vlaneseq
    %v539 = vshrl.u32 %v538, 7
    %v540 = vsub.s32 6, %v539
    %v541 = vrot.slane %v484, %v540
    %543 = vbcast.lane.b32.xlu0 %v541, 256
    %v544 = vpop.permute.xlu0 %543
    %v545 = vlaneseq
    %v546 = vshrl.u32 %v545, 7
    %v547 = vsub.s32 7, %v546
    %v548 = vrot.slane %v484, %v547
    %550 = vbcast.lane.b32.xlu0 %v548, 256
    %v551 = vpop.permute.xlu0 %550
    %v552 = vlaneseq
    %v553 = vshrl.u32 %v552, 7
    %v554 = vsub.s32 0, %v553
    %v555 = vrot.slane %v485, %v554
    %557 = vbcast.lane.b32.xlu0 %v555, 256
    %v558 = vpop.permute.xlu0 %557
    %v559 = vlaneseq
    %v560 = vshrl.u32 %v559, 7
    %v561 = vsub.s32 1, %v560
    %v562 = vrot.slane %v485, %v561
    %564 = vbcast.lane.b32.xlu0 %v562, 256
    %v565 = vpop.permute.xlu0 %564
    %v566 = vlaneseq
    %v567 = vshrl.u32 %v566, 7
    %v568 = vsub.s32 2, %v567
    %v569 = vrot.slane %v485, %v568
    %571 = vbcast.lane.b32.xlu0 %v569, 256
    %v572 = vpop.permute.xlu0 %571
    %v573 = vlaneseq
    %v574 = vshrl.u32 %v573, 7
    %v575 = vsub.s32 3, %v574
    %v576 = vrot.slane %v485, %v575
    %578 = vbcast.lane.b32.xlu0 %v576, 256
    %v579 = vpop.permute.xlu0 %578
    %v580 = vlaneseq
    %v581 = vshrl.u32 %v580, 7
    %v582 = vsub.s32 4, %v581
    %v583 = vrot.slane %v485, %v582
    %585 = vbcast.lane.b32.xlu0 %v583, 256
    %v586 = vpop.permute.xlu0 %585
    %v587 = vlaneseq
    %v588 = vshrl.u32 %v587, 7
    %v589 = vsub.s32 5, %v588
    %v590 = vrot.slane %v485, %v589
    %592 = vbcast.lane.b32.xlu0 %v590, 256
    %v593 = vpop.permute.xlu0 %592
    %v594 = vlaneseq
    %v595 = vshrl.u32 %v594, 7
    %v596 = vsub.s32 6, %v595
    %v597 = vrot.slane %v485, %v596
    %599 = vbcast.lane.b32.xlu0 %v597, 256
    %v600 = vpop.permute.xlu0 %599
    %v601 = vlaneseq
    %v602 = vshrl.u32 %v601, 7
    %v603 = vsub.s32 7, %v602
    %v604 = vrot.slane %v485, %v603
    %606 = vbcast.lane.b32.xlu0 %v604, 256
    %v607 = vpop.permute.xlu0 %606
    %v608 = vlaneseq
    %v609 = vshrl.u32 %v608, 7
    %v610 = vsub.s32 0, %v609
    %v611 = vrot.slane %v486, %v610
    %613 = vbcast.lane.b32.xlu0 %v611, 256
    %v614 = vpop.permute.xlu0 %613
    %v615 = vlaneseq
    %v616 = vshrl.u32 %v615, 7
    %v617 = vsub.s32 1, %v616
    %v618 = vrot.slane %v486, %v617
    %620 = vbcast.lane.b32.xlu0 %v618, 256
    %v621 = vpop.permute.xlu0 %620
    %v622 = vlaneseq
    %v623 = vshrl.u32 %v622, 7
    %v624 = vsub.s32 2, %v623
    %v625 = vrot.slane %v486, %v624
    %627 = vbcast.lane.b32.xlu0 %v625, 256
    %v628 = vpop.permute.xlu0 %627
    %v629 = vlaneseq
    %v630 = vshrl.u32 %v629, 7
    %v631 = vsub.s32 3, %v630
    %v632 = vrot.slane %v486, %v631
    %634 = vbcast.lane.b32.xlu0 %v632, 256
    %v635 = vpop.permute.xlu0 %634
    %v636 = vlaneseq
    %v637 = vshrl.u32 %v636, 7
    %v638 = vsub.s32 4, %v637
    %v639 = vrot.slane %v486, %v638
    %641 = vbcast.lane.b32.xlu0 %v639, 256
    %v642 = vpop.permute.xlu0 %641
    %v643 = vlaneseq
    %v644 = vshrl.u32 %v643, 7
    %v645 = vsub.s32 5, %v644
    %v646 = vrot.slane %v486, %v645
    %648 = vbcast.lane.b32.xlu0 %v646, 256
    %v649 = vpop.permute.xlu0 %648
    %v650 = vlaneseq
    %v651 = vshrl.u32 %v650, 7
    %v652 = vsub.s32 6, %v651
    %v653 = vrot.slane %v486, %v652
    %655 = vbcast.lane.b32.xlu0 %v653, 256
    %v656 = vpop.permute.xlu0 %655
    %v657 = vlaneseq
    %v658 = vshrl.u32 %v657, 7
    %v659 = vsub.s32 7, %v658
    %v660 = vrot.slane %v486, %v659
    %662 = vbcast.lane.b32.xlu0 %v660, 256
    %v663 = vpop.permute.xlu0 %662
    %vm664 = vcmask 7168
    %665 = vst.msk [vmem:[#allocation3] sm:$0xff] %vm664, %v502
    %666 = vst.msk [vmem:[#allocation3 + $0x8] sm:$0xff] %vm664, %v509
    %667 = vst.msk [vmem:[#allocation3 + $0x10] sm:$0xff] %vm664, %v516
    %668 = vst.msk [vmem:[#allocation3 + $0x18] sm:$0xff] %vm664, %v523
    %669 = vst.msk [vmem:[#allocation3 + $0x20] sm:$0xff] %vm664, %v530
    %670 = vst.msk [vmem:[#allocation3 + $0x28] sm:$0xff] %vm664, %v537
    %671 = vst.msk [vmem:[#allocation3 + $0x30] sm:$0xff] %vm664, %v544
    %672 = vst.msk [vmem:[#allocation3 + $0x38] sm:$0xff] %vm664, %v551
    %673 = vst.msk [vmem:[#allocation3 + $0x40] sm:$0xff] %vm664, %v558
    %674 = vst.msk [vmem:[#allocation3 + $0x48] sm:$0xff] %vm664, %v565
    %675 = vst.msk [vmem:[#allocation3 + $0x50] sm:$0xff] %vm664, %v572
    %676 = vst.msk [vmem:[#allocation3 + $0x58] sm:$0xff] %vm664, %v579
    %677 = vst.msk [vmem:[#allocation3 + $0x60] sm:$0xff] %vm664, %v586
    %678 = vst.msk [vmem:[#allocation3 + $0x68] sm:$0xff] %vm664, %v593
    %679 = vst.msk [vmem:[#allocation3 + $0x70] sm:$0xff] %vm664, %v600
    %680 = vst.msk [vmem:[#allocation3 + $0x78] sm:$0xff] %vm664, %v607
    %681 = vst.msk [vmem:[#allocation3 + $0x80] sm:$0xff] %vm664, %v614
    %682 = vst.msk [vmem:[#allocation3 + $0x88] sm:$0xff] %vm664, %v621
    %683 = vst.msk [vmem:[#allocation3 + $0x90] sm:$0xff] %vm664, %v628
    %684 = vst.msk [vmem:[#allocation3 + $0x98] sm:$0xff] %vm664, %v635
    %685 = vst.msk [vmem:[#allocation3 + $0xa0] sm:$0xff] %vm664, %v642
    %686 = vst.msk [vmem:[#allocation3 + $0xa8] sm:$0xff] %vm664, %v649
    %687 = vst.msk [vmem:[#allocation3 + $0xb0] sm:$0xff] %vm664, %v656
    %688 = vst.msk [vmem:[#allocation3 + $0xb8] sm:$0xff] %vm664, %v663
    %v689 = vlaneseq
    %v690 = vshrl.u32 %v689, 7
    %v691 = vsub.s32 0, %v690
    %v692 = vrot.slane %v487, %v691
    %694 = vbcast.lane.b32.xlu0 %v692, 256
    %v695 = vpop.permute.xlu0 %694
    %v696 = vlaneseq
    %v697 = vshrl.u32 %v696, 7
    %v698 = vsub.s32 1, %v697
    %v699 = vrot.slane %v487, %v698
    %701 = vbcast.lane.b32.xlu0 %v699, 256
    %v702 = vpop.permute.xlu0 %701
    %v703 = vlaneseq
    %v704 = vshrl.u32 %v703, 7
    %v705 = vsub.s32 2, %v704
    %v706 = vrot.slane %v487, %v705
    %708 = vbcast.lane.b32.xlu0 %v706, 256
    %v709 = vpop.permute.xlu0 %708
    %v710 = vlaneseq
    %v711 = vshrl.u32 %v710, 7
    %v712 = vsub.s32 3, %v711
    %v713 = vrot.slane %v487, %v712
    %715 = vbcast.lane.b32.xlu0 %v713, 256
    %v716 = vpop.permute.xlu0 %715
    %v717 = vlaneseq
    %v718 = vshrl.u32 %v717, 7
    %v719 = vsub.s32 4, %v718
    %v720 = vrot.slane %v487, %v719
    %722 = vbcast.lane.b32.xlu0 %v720, 256
    %v723 = vpop.permute.xlu0 %722
    %v724 = vlaneseq
    %v725 = vshrl.u32 %v724, 7
    %v726 = vsub.s32 5, %v725
    %v727 = vrot.slane %v487, %v726
    %729 = vbcast.lane.b32.xlu0 %v727, 256
    %v730 = vpop.permute.xlu0 %729
    %v731 = vlaneseq
    %v732 = vshrl.u32 %v731, 7
    %v733 = vsub.s32 6, %v732
    %v734 = vrot.slane %v487, %v733
    %736 = vbcast.lane.b32.xlu0 %v734, 256
    %v737 = vpop.permute.xlu0 %736
    %v738 = vlaneseq
    %v739 = vshrl.u32 %v738, 7
    %v740 = vsub.s32 7, %v739
    %v741 = vrot.slane %v487, %v740
    %743 = vbcast.lane.b32.xlu0 %v741, 256
    %v744 = vpop.permute.xlu0 %743
    %v745 = vlaneseq
    %v746 = vshrl.u32 %v745, 7
    %v747 = vsub.s32 0, %v746
    %v748 = vrot.slane %v488, %v747
    %750 = vbcast.lane.b32.xlu0 %v748, 256
    %v751 = vpop.permute.xlu0 %750
    %v752 = vlaneseq
    %v753 = vshrl.u32 %v752, 7
    %v754 = vsub.s32 1, %v753
    %v755 = vrot.slane %v488, %v754
    %757 = vbcast.lane.b32.xlu0 %v755, 256
    %v758 = vpop.permute.xlu0 %757
    %v759 = vlaneseq
    %v760 = vshrl.u32 %v759, 7
    %v761 = vsub.s32 2, %v760
    %v762 = vrot.slane %v488, %v761
    %764 = vbcast.lane.b32.xlu0 %v762, 256
    %v765 = vpop.permute.xlu0 %764
    %v766 = vlaneseq
    %v767 = vshrl.u32 %v766, 7
    %v768 = vsub.s32 3, %v767
    %v769 = vrot.slane %v488, %v768
    %771 = vbcast.lane.b32.xlu0 %v769, 256
    %v772 = vpop.permute.xlu0 %771
    %v773 = vlaneseq
    %v774 = vshrl.u32 %v773, 7
    %v775 = vsub.s32 4, %v774
    %v776 = vrot.slane %v488, %v775
    %778 = vbcast.lane.b32.xlu0 %v776, 256
    %v779 = vpop.permute.xlu0 %778
    %v780 = vlaneseq
    %v781 = vshrl.u32 %v780, 7
    %v782 = vsub.s32 5, %v781
    %v783 = vrot.slane %v488, %v782
    %785 = vbcast.lane.b32.xlu0 %v783, 256
    %v786 = vpop.permute.xlu0 %785
    %v787 = vlaneseq
    %v788 = vshrl.u32 %v787, 7
    %v789 = vsub.s32 6, %v788
    %v790 = vrot.slane %v488, %v789
    %792 = vbcast.lane.b32.xlu0 %v790, 256
    %v793 = vpop.permute.xlu0 %792
    %v794 = vlaneseq
    %v795 = vshrl.u32 %v794, 7
    %v796 = vsub.s32 7, %v795
    %v797 = vrot.slane %v488, %v796
    %799 = vbcast.lane.b32.xlu0 %v797, 256
    %v800 = vpop.permute.xlu0 %799
    %v801 = vlaneseq
    %v802 = vshrl.u32 %v801, 7
    %v803 = vsub.s32 0, %v802
    %v804 = vrot.slane %v489, %v803
    %806 = vbcast.lane.b32.xlu0 %v804, 256
    %v807 = vpop.permute.xlu0 %806
    %v808 = vlaneseq
    %v809 = vshrl.u32 %v808, 7
    %v810 = vsub.s32 1, %v809
    %v811 = vrot.slane %v489, %v810
    %813 = vbcast.lane.b32.xlu0 %v811, 256
    %v814 = vpop.permute.xlu0 %813
    %v815 = vlaneseq
    %v816 = vshrl.u32 %v815, 7
    %v817 = vsub.s32 2, %v816
    %v818 = vrot.slane %v489, %v817
    %820 = vbcast.lane.b32.xlu0 %v818, 256
    %v821 = vpop.permute.xlu0 %820
    %v822 = vlaneseq
    %v823 = vshrl.u32 %v822, 7
    %v824 = vsub.s32 3, %v823
    %v825 = vrot.slane %v489, %v824
    %827 = vbcast.lane.b32.xlu0 %v825, 256
    %v828 = vpop.permute.xlu0 %827
    %v829 = vlaneseq
    %v830 = vshrl.u32 %v829, 7
    %v831 = vsub.s32 4, %v830
    %v832 = vrot.slane %v489, %v831
    %834 = vbcast.lane.b32.xlu0 %v832, 256
    %v835 = vpop.permute.xlu0 %834
    %v836 = vlaneseq
    %v837 = vshrl.u32 %v836, 7
    %v838 = vsub.s32 5, %v837
    %v839 = vrot.slane %v489, %v838
    %841 = vbcast.lane.b32.xlu0 %v839, 256
    %v842 = vpop.permute.xlu0 %841
    %v843 = vlaneseq
    %v844 = vshrl.u32 %v843, 7
    %v845 = vsub.s32 6, %v844
    %v846 = vrot.slane %v489, %v845
    %848 = vbcast.lane.b32.xlu0 %v846, 256
    %v849 = vpop.permute.xlu0 %848
    %v850 = vlaneseq
    %v851 = vshrl.u32 %v850, 7
    %v852 = vsub.s32 7, %v851
    %v853 = vrot.slane %v489, %v852
    %855 = vbcast.lane.b32.xlu0 %v853, 256
    %v856 = vpop.permute.xlu0 %855
    %v857 = vlaneseq
    %v858 = vshrl.u32 %v857, 7
    %v859 = vsub.s32 0, %v858
    %v860 = vrot.slane %v490, %v859
    %862 = vbcast.lane.b32.xlu0 %v860, 256
    %v863 = vpop.permute.xlu0 %862
    %v864 = vlaneseq
    %v865 = vshrl.u32 %v864, 7
    %v866 = vsub.s32 1, %v865
    %v867 = vrot.slane %v490, %v866
    %869 = vbcast.lane.b32.xlu0 %v867, 256
    %v870 = vpop.permute.xlu0 %869
    %v871 = vlaneseq
    %v872 = vshrl.u32 %v871, 7
    %v873 = vsub.s32 2, %v872
    %v874 = vrot.slane %v490, %v873
    %876 = vbcast.lane.b32.xlu0 %v874, 256
    %v877 = vpop.permute.xlu0 %876
    %v878 = vlaneseq
    %v879 = vshrl.u32 %v878, 7
    %v880 = vsub.s32 3, %v879
    %v881 = vrot.slane %v490, %v880
    %883 = vbcast.lane.b32.xlu0 %v881, 256
    %v884 = vpop.permute.xlu0 %883
    %v885 = vlaneseq
    %v886 = vshrl.u32 %v885, 7
    %v887 = vsub.s32 4, %v886
    %v888 = vrot.slane %v490, %v887
    %890 = vbcast.lane.b32.xlu0 %v888, 256
    %v891 = vpop.permute.xlu0 %890
    %v892 = vlaneseq
    %v893 = vshrl.u32 %v892, 7
    %v894 = vsub.s32 5, %v893
    %v895 = vrot.slane %v490, %v894
    %897 = vbcast.lane.b32.xlu0 %v895, 256
    %v898 = vpop.permute.xlu0 %897
    %v899 = vlaneseq
    %v900 = vshrl.u32 %v899, 7
    %v901 = vsub.s32 6, %v900
    %v902 = vrot.slane %v490, %v901
    %904 = vbcast.lane.b32.xlu0 %v902, 256
    %v905 = vpop.permute.xlu0 %904
    %v906 = vlaneseq
    %v907 = vshrl.u32 %v906, 7
    %v908 = vsub.s32 7, %v907
    %v909 = vrot.slane %v490, %v908
    %911 = vbcast.lane.b32.xlu0 %v909, 256
    %v912 = vpop.permute.xlu0 %911
    %v913 = vlaneseq
    %v914 = vshrl.u32 %v913, 7
    %v915 = vsub.s32 0, %v914
    %v916 = vrot.slane %v491, %v915
    %918 = vbcast.lane.b32.xlu0 %v916, 256
    %v919 = vpop.permute.xlu0 %918
    %v920 = vlaneseq
    %v921 = vshrl.u32 %v920, 7
    %v922 = vsub.s32 1, %v921
    %v923 = vrot.slane %v491, %v922
    %925 = vbcast.lane.b32.xlu0 %v923, 256
    %v926 = vpop.permute.xlu0 %925
    %v927 = vlaneseq
    %v928 = vshrl.u32 %v927, 7
    %v929 = vsub.s32 2, %v928
    %v930 = vrot.slane %v491, %v929
    %932 = vbcast.lane.b32.xlu0 %v930, 256
    %v933 = vpop.permute.xlu0 %932
    %v934 = vlaneseq
    %v935 = vshrl.u32 %v934, 7
    %v936 = vsub.s32 3, %v935
    %v937 = vrot.slane %v491, %v936
    %939 = vbcast.lane.b32.xlu0 %v937, 256
    %v940 = vpop.permute.xlu0 %939
    %v941 = vlaneseq
    %v942 = vshrl.u32 %v941, 7
    %v943 = vsub.s32 4, %v942
    %v944 = vrot.slane %v491, %v943
    %946 = vbcast.lane.b32.xlu0 %v944, 256
    %v947 = vpop.permute.xlu0 %946
    %v948 = vlaneseq
    %v949 = vshrl.u32 %v948, 7
    %v950 = vsub.s32 5, %v949
    %v951 = vrot.slane %v491, %v950
    %953 = vbcast.lane.b32.xlu0 %v951, 256
    %v954 = vpop.permute.xlu0 %953
    %v955 = vlaneseq
    %v956 = vshrl.u32 %v955, 7
    %v957 = vsub.s32 6, %v956
    %v958 = vrot.slane %v491, %v957
    %960 = vbcast.lane.b32.xlu0 %v958, 256
    %v961 = vpop.permute.xlu0 %960
    %v962 = vlaneseq
    %v963 = vshrl.u32 %v962, 7
    %v964 = vsub.s32 7, %v963
    %v965 = vrot.slane %v491, %v964
    %967 = vbcast.lane.b32.xlu0 %v965, 256
    %v968 = vpop.permute.xlu0 %967
    %v969 = vlaneseq
    %v970 = vshrl.u32 %v969, 7
    %v971 = vsub.s32 0, %v970
    %v972 = vrot.slane %v492, %v971
    %974 = vbcast.lane.b32.xlu0 %v972, 256
    %v975 = vpop.permute.xlu0 %974
    %v976 = vlaneseq
    %v977 = vshrl.u32 %v976, 7
    %v978 = vsub.s32 1, %v977
    %v979 = vrot.slane %v492, %v978
    %981 = vbcast.lane.b32.xlu0 %v979, 256
    %v982 = vpop.permute.xlu0 %981
    %v983 = vlaneseq
    %v984 = vshrl.u32 %v983, 7
    %v985 = vsub.s32 2, %v984
    %v986 = vrot.slane %v492, %v985
    %988 = vbcast.lane.b32.xlu0 %v986, 256
    %v989 = vpop.permute.xlu0 %988
    %v990 = vlaneseq
    %v991 = vshrl.u32 %v990, 7
    %v992 = vsub.s32 3, %v991
    %v993 = vrot.slane %v492, %v992
    %995 = vbcast.lane.b32.xlu0 %v993, 256
    %v996 = vpop.permute.xlu0 %995
    %v997 = vlaneseq
    %v998 = vshrl.u32 %v997, 7
    %v999 = vsub.s32 4, %v998
    %v1000 = vrot.slane %v492, %v999
    %1002 = vbcast.lane.b32.xlu0 %v1000, 256
    %v1003 = vpop.permute.xlu0 %1002
    %v1004 = vlaneseq
    %v1005 = vshrl.u32 %v1004, 7
    %v1006 = vsub.s32 5, %v1005
    %v1007 = vrot.slane %v492, %v1006
    %1009 = vbcast.lane.b32.xlu0 %v1007, 256
    %v1010 = vpop.permute.xlu0 %1009
    %v1011 = vlaneseq
    %v1012 = vshrl.u32 %v1011, 7
    %v1013 = vsub.s32 6, %v1012
    %v1014 = vrot.slane %v492, %v1013
    %1016 = vbcast.lane.b32.xlu0 %v1014, 256
    %v1017 = vpop.permute.xlu0 %1016
    %v1018 = vlaneseq
    %v1019 = vshrl.u32 %v1018, 7
    %v1020 = vsub.s32 7, %v1019
    %v1021 = vrot.slane %v492, %v1020
    %1023 = vbcast.lane.b32.xlu0 %v1021, 256
    %v1024 = vpop.permute.xlu0 %1023
    %v1025 = vlaneseq
    %v1026 = vshrl.u32 %v1025, 7
    %v1027 = vsub.s32 0, %v1026
    %v1028 = vrot.slane %v493, %v1027
    %1030 = vbcast.lane.b32.xlu0 %v1028, 256
    %v1031 = vpop.permute.xlu0 %1030
    %v1032 = vlaneseq
    %v1033 = vshrl.u32 %v1032, 7
    %v1034 = vsub.s32 1, %v1033
    %v1035 = vrot.slane %v493, %v1034
    %1037 = vbcast.lane.b32.xlu0 %v1035, 256
    %v1038 = vpop.permute.xlu0 %1037
    %v1039 = vlaneseq
    %v1040 = vshrl.u32 %v1039, 7
    %v1041 = vsub.s32 2, %v1040
    %v1042 = vrot.slane %v493, %v1041
    %1044 = vbcast.lane.b32.xlu0 %v1042, 256
    %v1045 = vpop.permute.xlu0 %1044
    %v1046 = vlaneseq
    %v1047 = vshrl.u32 %v1046, 7
    %v1048 = vsub.s32 3, %v1047
    %v1049 = vrot.slane %v493, %v1048
    %1051 = vbcast.lane.b32.xlu0 %v1049, 256
    %v1052 = vpop.permute.xlu0 %1051
    %v1053 = vlaneseq
    %v1054 = vshrl.u32 %v1053, 7
    %v1055 = vsub.s32 4, %v1054
    %v1056 = vrot.slane %v493, %v1055
    %1058 = vbcast.lane.b32.xlu0 %v1056, 256
    %v1059 = vpop.permute.xlu0 %1058
    %v1060 = vlaneseq
    %v1061 = vshrl.u32 %v1060, 7
    %v1062 = vsub.s32 5, %v1061
    %v1063 = vrot.slane %v493, %v1062
    %1065 = vbcast.lane.b32.xlu0 %v1063, 256
    %v1066 = vpop.permute.xlu0 %1065
    %v1067 = vlaneseq
    %v1068 = vshrl.u32 %v1067, 7
    %v1069 = vsub.s32 6, %v1068
    %v1070 = vrot.slane %v493, %v1069
    %1072 = vbcast.lane.b32.xlu0 %v1070, 256
    %v1073 = vpop.permute.xlu0 %1072
    %v1074 = vlaneseq
    %v1075 = vshrl.u32 %v1074, 7
    %v1076 = vsub.s32 7, %v1075
    %v1077 = vrot.slane %v493, %v1076
    %1079 = vbcast.lane.b32.xlu0 %v1077, 256
    %v1080 = vpop.permute.xlu0 %1079
    %v1081 = vlaneseq
    %v1082 = vshrl.u32 %v1081, 7
    %v1083 = vsub.s32 0, %v1082
    %v1084 = vrot.slane %v494, %v1083
    %1086 = vbcast.lane.b32.xlu0 %v1084, 256
    %v1087 = vpop.permute.xlu0 %1086
    %v1088 = vlaneseq
    %v1089 = vshrl.u32 %v1088, 7
    %v1090 = vsub.s32 1, %v1089
    %v1091 = vrot.slane %v494, %v1090
    %1093 = vbcast.lane.b32.xlu0 %v1091, 256
    %v1094 = vpop.permute.xlu0 %1093
    %v1095 = vlaneseq
    %v1096 = vshrl.u32 %v1095, 7
    %v1097 = vsub.s32 2, %v1096
    %v1098 = vrot.slane %v494, %v1097
    %1100 = vbcast.lane.b32.xlu0 %v1098, 256
    %v1101 = vpop.permute.xlu0 %1100
    %v1102 = vlaneseq
    %v1103 = vshrl.u32 %v1102, 7
    %v1104 = vsub.s32 3, %v1103
    %v1105 = vrot.slane %v494, %v1104
    %1107 = vbcast.lane.b32.xlu0 %v1105, 256
    %v1108 = vpop.permute.xlu0 %1107
    %v1109 = vlaneseq
    %v1110 = vshrl.u32 %v1109, 7
    %v1111 = vsub.s32 4, %v1110
    %v1112 = vrot.slane %v494, %v1111
    %1114 = vbcast.lane.b32.xlu0 %v1112, 256
    %v1115 = vpop.permute.xlu0 %1114
    %v1116 = vlaneseq
    %v1117 = vshrl.u32 %v1116, 7
    %v1118 = vsub.s32 5, %v1117
    %v1119 = vrot.slane %v494, %v1118
    %1121 = vbcast.lane.b32.xlu0 %v1119, 256
    %v1122 = vpop.permute.xlu0 %1121
    %v1123 = vlaneseq
    %v1124 = vshrl.u32 %v1123, 7
    %v1125 = vsub.s32 6, %v1124
    %v1126 = vrot.slane %v494, %v1125
    %1128 = vbcast.lane.b32.xlu0 %v1126, 256
    %v1129 = vpop.permute.xlu0 %1128
    %v1130 = vlaneseq
    %v1131 = vshrl.u32 %v1130, 7
    %v1132 = vsub.s32 7, %v1131
    %v1133 = vrot.slane %v494, %v1132
    %1135 = vbcast.lane.b32.xlu0 %v1133, 256
    %v1136 = vpop.permute.xlu0 %1135
    %v1137 = vlaneseq
    %v1138 = vshrl.u32 %v1137, 7
    %v1139 = vsub.s32 0, %v1138
    %v1140 = vrot.slane %v495, %v1139
    %1142 = vbcast.lane.b32.xlu0 %v1140, 256
    %v1143 = vpop.permute.xlu0 %1142
    %v1144 = vlaneseq
    %v1145 = vshrl.u32 %v1144, 7
    %v1146 = vsub.s32 1, %v1145
    %v1147 = vrot.slane %v495, %v1146
    %1149 = vbcast.lane.b32.xlu0 %v1147, 256
    %v1150 = vpop.permute.xlu0 %1149
    %v1151 = vlaneseq
    %v1152 = vshrl.u32 %v1151, 7
    %v1153 = vsub.s32 2, %v1152
    %v1154 = vrot.slane %v495, %v1153
    %1156 = vbcast.lane.b32.xlu0 %v1154, 256
    %v1157 = vpop.permute.xlu0 %1156
    %v1158 = vlaneseq
    %v1159 = vshrl.u32 %v1158, 7
    %v1160 = vsub.s32 3, %v1159
    %v1161 = vrot.slane %v495, %v1160
    %1163 = vbcast.lane.b32.xlu0 %v1161, 256
    %v1164 = vpop.permute.xlu0 %1163
    %v1165 = vlaneseq
    %v1166 = vshrl.u32 %v1165, 7
    %v1167 = vsub.s32 4, %v1166
    %v1168 = vrot.slane %v495, %v1167
    %1170 = vbcast.lane.b32.xlu0 %v1168, 256
    %v1171 = vpop.permute.xlu0 %1170
    %v1172 = vlaneseq
    %v1173 = vshrl.u32 %v1172, 7
    %v1174 = vsub.s32 5, %v1173
    %v1175 = vrot.slane %v495, %v1174
    %1177 = vbcast.lane.b32.xlu0 %v1175, 256
    %v1178 = vpop.permute.xlu0 %1177
    %v1179 = vlaneseq
    %v1180 = vshrl.u32 %v1179, 7
    %v1181 = vsub.s32 6, %v1180
    %v1182 = vrot.slane %v495, %v1181
    %1184 = vbcast.lane.b32.xlu0 %v1182, 256
    %v1185 = vpop.permute.xlu0 %1184
    %v1186 = vlaneseq
    %v1187 = vshrl.u32 %v1186, 7
    %v1188 = vsub.s32 7, %v1187
    %v1189 = vrot.slane %v495, %v1188
    %1191 = vbcast.lane.b32.xlu0 %v1189, 256
    %v1192 = vpop.permute.xlu0 %1191
    %1193 = vst.msk [vmem:[#allocation4] sm:$0xff] %vm664, %v695
    %1194 = vst.msk [vmem:[#allocation4 + $0x8] sm:$0xff] %vm664, %v702
    %1195 = vst.msk [vmem:[#allocation4 + $0x10] sm:$0xff] %vm664, %v709
    %1196 = vst.msk [vmem:[#allocation4 + $0x18] sm:$0xff] %vm664, %v716
    %1197 = vst.msk [vmem:[#allocation4 + $0x20] sm:$0xff] %vm664, %v723
    %1198 = vst.msk [vmem:[#allocation4 + $0x28] sm:$0xff] %vm664, %v730
    %1199 = vst.msk [vmem:[#allocation4 + $0x30] sm:$0xff] %vm664, %v737
    %1200 = vst.msk [vmem:[#allocation4 + $0x38] sm:$0xff] %vm664, %v744
    %1201 = vst.msk [vmem:[#allocation4 + $0x40] sm:$0xff] %vm664, %v751
    %1202 = vst.msk [vmem:[#allocation4 + $0x48] sm:$0xff] %vm664, %v758
    %1203 = vst.msk [vmem:[#allocation4 + $0x50] sm:$0xff] %vm664, %v765
    %1204 = vst.msk [vmem:[#allocation4 + $0x58] sm:$0xff] %vm664, %v772
    %1205 = vst.msk [vmem:[#allocation4 + $0x60] sm:$0xff] %vm664, %v779
    %1206 = vst.msk [vmem:[#allocation4 + $0x68] sm:$0xff] %vm664, %v786
    %1207 = vst.msk [vmem:[#allocation4 + $0x70] sm:$0xff] %vm664, %v793
    %1208 = vst.msk [vmem:[#allocation4 + $0x78] sm:$0xff] %vm664, %v800
    %1209 = vst.msk [vmem:[#allocation4 + $0x80] sm:$0xff] %vm664, %v807
    %1210 = vst.msk [vmem:[#allocation4 + $0x88] sm:$0xff] %vm664, %v814
    %1211 = vst.msk [vmem:[#allocation4 + $0x90] sm:$0xff] %vm664, %v821
    %1212 = vst.msk [vmem:[#allocation4 + $0x98] sm:$0xff] %vm664, %v828
    %1213 = vst.msk [vmem:[#allocation4 + $0xa0] sm:$0xff] %vm664, %v835
    %1214 = vst.msk [vmem:[#allocation4 + $0xa8] sm:$0xff] %vm664, %v842
    %1215 = vst.msk [vmem:[#allocation4 + $0xb0] sm:$0xff] %vm664, %v849
    %1216 = vst.msk [vmem:[#allocation4 + $0xb8] sm:$0xff] %vm664, %v856
    %1217 = vst.msk [vmem:[#allocation4 + $0xc0] sm:$0xff] %vm664, %v863
    %1218 = vst.msk [vmem:[#allocation4 + $0xc8] sm:$0xff] %vm664, %v870
    %1219 = vst.msk [vmem:[#allocation4 + $0xd0] sm:$0xff] %vm664, %v877
    %1220 = vst.msk [vmem:[#allocation4 + $0xd8] sm:$0xff] %vm664, %v884
    %1221 = vst.msk [vmem:[#allocation4 + $0xe0] sm:$0xff] %vm664, %v891
    %1222 = vst.msk [vmem:[#allocation4 + $0xe8] sm:$0xff] %vm664, %v898
    %1223 = vst.msk [vmem:[#allocation4 + $0xf0] sm:$0xff] %vm664, %v905
    %1224 = vst.msk [vmem:[#allocation4 + $0xf8] sm:$0xff] %vm664, %v912
    %1225 = vst.msk [vmem:[#allocation4 + $0x100] sm:$0xff] %vm664, %v919
    %1226 = vst.msk [vmem:[#allocation4 + $0x108] sm:$0xff] %vm664, %v926
    %1227 = vst.msk [vmem:[#allocation4 + $0x110] sm:$0xff] %vm664, %v933
    %1228 = vst.msk [vmem:[#allocation4 + $0x118] sm:$0xff] %vm664, %v940
    %1229 = vst.msk [vmem:[#allocation4 + $0x120] sm:$0xff] %vm664, %v947
    %1230 = vst.msk [vmem:[#allocation4 + $0x128] sm:$0xff] %vm664, %v954
    %1231 = vst.msk [vmem:[#allocation4 + $0x130] sm:$0xff] %vm664, %v961
    %1232 = vst.msk [vmem:[#allocation4 + $0x138] sm:$0xff] %vm664, %v968
    %1233 = vst.msk [vmem:[#allocation4 + $0x140] sm:$0xff] %vm664, %v975
    %1234 = vst.msk [vmem:[#allocation4 + $0x148] sm:$0xff] %vm664, %v982
    %1235 = vst.msk [vmem:[#allocation4 + $0x150] sm:$0xff] %vm664, %v989
    %1236 = vst.msk [vmem:[#allocation4 + $0x158] sm:$0xff] %vm664, %v996
    %1237 = vst.msk [vmem:[#allocation4 + $0x160] sm:$0xff] %vm664, %v1003
    %1238 = vst.msk [vmem:[#allocation4 + $0x168] sm:$0xff] %vm664, %v1010
    %1239 = vst.msk [vmem:[#allocation4 + $0x170] sm:$0xff] %vm664, %v1017
    %1240 = vst.msk [vmem:[#allocation4 + $0x178] sm:$0xff] %vm664, %v1024
    %1241 = vst.msk [vmem:[#allocation4 + $0x180] sm:$0xff] %vm664, %v1031
    %1242 = vst.msk [vmem:[#allocation4 + $0x188] sm:$0xff] %vm664, %v1038
    %1243 = vst.msk [vmem:[#allocation4 + $0x190] sm:$0xff] %vm664, %v1045
    %1244 = vst.msk [vmem:[#allocation4 + $0x198] sm:$0xff] %vm664, %v1052
    %1245 = vst.msk [vmem:[#allocation4 + $0x1a0] sm:$0xff] %vm664, %v1059
    %1246 = vst.msk [vmem:[#allocation4 + $0x1a8] sm:$0xff] %vm664, %v1066
    %1247 = vst.msk [vmem:[#allocation4 + $0x1b0] sm:$0xff] %vm664, %v1073
    %1248 = vst.msk [vmem:[#allocation4 + $0x1b8] sm:$0xff] %vm664, %v1080
    %1249 = vst.msk [vmem:[#allocation4 + $0x1c0] sm:$0xff] %vm664, %v1087
    %1250 = vst.msk [vmem:[#allocation4 + $0x1c8] sm:$0xff] %vm664, %v1094
    %1251 = vst.msk [vmem:[#allocation4 + $0x1d0] sm:$0xff] %vm664, %v1101
    %1252 = vst.msk [vmem:[#allocation4 + $0x1d8] sm:$0xff] %vm664, %v1108
    %1253 = vst.msk [vmem:[#allocation4 + $0x1e0] sm:$0xff] %vm664, %v1115
    %1254 = vst.msk [vmem:[#allocation4 + $0x1e8] sm:$0xff] %vm664, %v1122
    %1255 = vst.msk [vmem:[#allocation4 + $0x1f0] sm:$0xff] %vm664, %v1129
    %1256 = vst.msk [vmem:[#allocation4 + $0x1f8] sm:$0xff] %vm664, %v1136
    %1257 = vst.msk [vmem:[#allocation4 + $0x200] sm:$0xff] %vm664, %v1143
    %1258 = vst.msk [vmem:[#allocation4 + $0x208] sm:$0xff] %vm664, %v1150
    %1259 = vst.msk [vmem:[#allocation4 + $0x210] sm:$0xff] %vm664, %v1157
    %1260 = vst.msk [vmem:[#allocation4 + $0x218] sm:$0xff] %vm664, %v1164
    %1261 = vst.msk [vmem:[#allocation4 + $0x220] sm:$0xff] %vm664, %v1171
    %1262 = vst.msk [vmem:[#allocation4 + $0x228] sm:$0xff] %vm664, %v1178
    %1263 = vst.msk [vmem:[#allocation4 + $0x230] sm:$0xff] %vm664, %v1185
    %1264 = vst.msk [vmem:[#allocation4 + $0x238] sm:$0xff] %vm664, %v1192
    %v1265 = vcombine.low %v202, %v212
    %v1266 = vcombine.low %v219, %v229
    %v1267 = vcombine.low %v236, %v246
    %v1268 = vcombine.low %v253, %v263
    %v1279 = vcombine.low %v121, %v122
    %v1281 = vunpack.c.l.s4 1983009808
    %v1282 = vunpack.c.0.s8 %v1281
    %v1283 = vlaneseq
    %v1284 = vshrl.u32 %v1283, 7
    %v1285 = vsub.s32 %v1282, %v1284
    %v1286 = vrot.slane %v1279, %v1285
    %v1287 = vcombine.low %v1286, %v1286
    %v1288 = vcombine.low %v123, %v124
    %v1289 = vcombine.low %v125, %v126
    %v1291 = vunpack.c.l.s4 1983009808
    %v1292 = vunpack.c.0.s8 %v1291
    %v1293 = vlaneseq
    %v1294 = vshrl.u32 %v1293, 7
    %v1295 = vsub.s32 %v1292, %v1294
    %v1296 = vrot.slane %v1288, %v1295
    %v1298 = vunpack.c.l.s4 1983009808
    %v1299 = vunpack.c.0.s8 %v1298
    %v1300 = vlaneseq
    %v1301 = vshrl.u32 %v1300, 7
    %v1302 = vsub.s32 %v1299, %v1301
    %v1303 = vrot.slane %v1289, %v1302
    %v1304 = vcombine.low %v1296, %v1303
    %v1308 = vsel %vm276, %v270, %v1287
    %v1310 = vld [vmem:[#allocation17] sm:$0xff]
    %v1311 = vld [vmem:[#allocation17 + $0x8] sm:$0xff]
    %v1312 = vld [vmem:[#allocation17 + $0x10] sm:$0xff]
    %v1313 = vld [vmem:[#allocation17 + $0x18] sm:$0xff]
    %v1314 = vld [vmem:[#allocation17 + $0x20] sm:$0xff]
    %v1315 = vld [vmem:[#allocation17 + $0x28] sm:$0xff]
    %v1316 = vld [vmem:[#allocation17 + $0x30] sm:$0xff]
    %v1317 = vld [vmem:[#allocation17 + $0x38] sm:$0xff]
    %v1318 = vld [vmem:[#allocation17 + $0x40] sm:$0xff]
    %v1319 = vld [vmem:[#allocation17 + $0x48] sm:$0xff]
    %v1320 = vld [vmem:[#allocation17 + $0x50] sm:$0xff]
    %v1321 = vld [vmem:[#allocation17 + $0x58] sm:$0xff]
    %v1322 = vld [vmem:[#allocation17 + $0x60] sm:$0xff]
    %v1323 = vld [vmem:[#allocation17 + $0x68] sm:$0xff]
    %v1324 = vld [vmem:[#allocation17 + $0x70] sm:$0xff]
    %v1325 = vld [vmem:[#allocation17 + $0x78] sm:$0xff]
    %v1326 = vld [vmem:[%s6] sm:$0x3]
    %v1328 = vlaneseq
    %v1329 = vshrl.u32 %v1328, 7
    %v1330 = vsub.s32 0, %v1329
    %v1331 = vrot.slane %v1326, %v1330
    %v1332 = vlaneseq
    %v1333 = vshrl.u32 %v1332, 7
    %v1334 = vsub.s32 1, %v1333
    %v1335 = vrot.slane %v1326, %v1334
    %v1354 = vunpack.c.l.b16 %v1310
    %v1355 = vunpack.c.h.b16 %v1310
    %v1356 = vunpack.c.l.b16 %v1311
    %v1357 = vunpack.c.h.b16 %v1311
    %v1358 = vunpack.c.l.b16 %v1312
    %v1359 = vunpack.c.h.b16 %v1312
    %v1360 = vunpack.c.l.b16 %v1313
    %v1361 = vunpack.c.h.b16 %v1313
    %v1362 = vunpack.c.l.b16 %v1314
    %v1363 = vunpack.c.h.b16 %v1314
    %v1364 = vunpack.c.l.b16 %v1315
    %v1365 = vunpack.c.h.b16 %v1315
    %v1366 = vunpack.c.l.b16 %v1316
    %v1367 = vunpack.c.h.b16 %v1316
    %v1368 = vunpack.c.l.b16 %v1317
    %v1369 = vunpack.c.h.b16 %v1317
    %v1370 = vunpack.c.l.b16 %v1318
    %v1371 = vunpack.c.h.b16 %v1318
    %v1372 = vunpack.c.l.b16 %v1319
    %v1373 = vunpack.c.h.b16 %v1319
    %v1374 = vunpack.c.l.b16 %v1320
    %v1375 = vunpack.c.h.b16 %v1320
    %v1376 = vunpack.c.l.b16 %v1321
    %v1377 = vunpack.c.h.b16 %v1321
    %v1378 = vunpack.c.l.b16 %v1322
    %v1379 = vunpack.c.h.b16 %v1322
    %v1380 = vunpack.c.l.b16 %v1323
    %v1381 = vunpack.c.h.b16 %v1323
    %v1382 = vunpack.c.l.b16 %v1324
    %v1383 = vunpack.c.h.b16 %v1324
    %v1384 = vunpack.c.l.b16 %v1325
    %v1385 = vunpack.c.h.b16 %v1325
    %v1386 = vpack.c.b16 %v1356, %v1354
    %v1387 = vpack.c.b16 %v1357, %v1355
    %v1388 = vpack.c.b16 %v1360, %v1358
    %v1389 = vpack.c.b16 %v1361, %v1359
    %v1390 = vpack.c.b16 %v1364, %v1362
    %v1391 = vpack.c.b16 %v1365, %v1363
    %v1392 = vpack.c.b16 %v1368, %v1366
    %v1393 = vpack.c.b16 %v1369, %v1367
    %v1394 = vpack.c.b16 %v1372, %v1370
    %v1395 = vpack.c.b16 %v1373, %v1371
    %v1396 = vpack.c.b16 %v1376, %v1374
    %v1397 = vpack.c.b16 %v1377, %v1375
    %v1398 = vpack.c.b16 %v1380, %v1378
    %v1399 = vpack.c.b16 %v1381, %v1379
    %v1400 = vpack.c.b16 %v1384, %v1382
    %v1401 = vpack.c.b16 %v1385, %v1383
    %1418 = vmatprep.subr.bf16.mxu0 %v1387
    %1419 = vmatpush1.bf16.msra.mxu0 %v1386
    %1420 = vmatprep.subr.bf16.mxu0 %v1389
    %1421 = vmatpush1.bf16.msra.mxu0 %v1388
    %1422 = vmatprep.subr.bf16.mxu0 %v1391
    %1423 = vmatpush1.bf16.msra.mxu0 %v1390
    %1424 = vmatprep.subr.bf16.mxu0 %v1393
    %1425 = vmatpush1.bf16.msra.mxu0 %v1392
    %1426 = vmatprep.subr.bf16.mxu0 %v1395
    %1427 = vmatpush1.bf16.msra.mxu0 %v1394
    %1428 = vmatprep.subr.bf16.mxu0 %v1397
    %1429 = vmatpush1.bf16.msra.mxu0 %v1396
    %1430 = vmatprep.subr.bf16.mxu0 %v1399
    %1431 = vmatpush1.bf16.msra.mxu0 %v1398
    %1432 = vmatprep.subr.bf16.mxu0 %v1401
    %1433 = vmatpush1.bf16.msra.mxu0 %v1400
    %1434 = vmatprep.subr.bf16.mxu0 0
    %1435 = vmatpush1.bf16.msra.mxu0 0
    %1436 = vmatprep.subr.bf16.mxu0 0
    %1437 = vmatpush1.bf16.msra.mxu0 0
    %1438 = vmatprep.subr.bf16.mxu0 0
    %1439 = vmatpush1.bf16.msra.mxu0 0
    %1440 = vmatprep.subr.bf16.mxu0 0
    %1441 = vmatpush1.bf16.msra.mxu0 0
    %1442 = vmatprep.subr.bf16.mxu0 0
    %1443 = vmatpush1.bf16.msra.mxu0 0
    %1444 = vmatprep.subr.bf16.mxu0 0
    %1445 = vmatpush1.bf16.msra.mxu0 0
    %1446 = vmatprep.subr.bf16.mxu0 0
    %1447 = vmatpush1.bf16.msra.mxu0 0
    %1448 = vmatprep.subr.bf16.mxu0 0
    %1449 = vmatpush1.bf16.msra.mxu0 0
    %1450 = vmatprep.mubr.bf16.mxu0 0
    %1451 = vmatmul.mubr.bf16.gmra.mrb[0].mxu0 %v1265
    %v1452 = vpop.f32.mrb[0].mxu0
    %v1453 = vadd.f32 %v1331, %v1452
    %v1454 = vpop.f32.mrb[0].mxu0
    %v1455 = vadd.f32 %v1335, %v1454
    %v1456 = vpop.f32.mrb[0].mxu0
    %v1457 = vadd.f32 %v1331, %v1456
    %v1458 = vpop.f32.mrb[0].mxu0
    %v1459 = vadd.f32 %v1335, %v1458
    %1460 = vmatprep.mubr.bf16.mxu0 0
    %1461 = vmatmul.mubr.bf16.gmra.mrb[0].mxu0 %v1266
    %v1462 = vpop.f32.mrb[0].mxu0
    %v1463 = vadd.f32 %v1331, %v1462
    %v1464 = vpop.f32.mrb[0].mxu0
    %v1465 = vadd.f32 %v1335, %v1464
    %v1466 = vpop.f32.mrb[0].mxu0
    %v1467 = vadd.f32 %v1331, %v1466
    %v1468 = vpop.f32.mrb[0].mxu0
    %v1469 = vadd.f32 %v1335, %v1468
    %1470 = vmatprep.mubr.bf16.mxu0 0
    %1471 = vmatmul.mubr.bf16.gmra.mrb[0].mxu0 %v1267
    %v1472 = vpop.f32.mrb[0].mxu0
    %v1473 = vadd.f32 %v1331, %v1472
    %v1474 = vpop.f32.mrb[0].mxu0
    %v1475 = vadd.f32 %v1335, %v1474
    %v1476 = vpop.f32.mrb[0].mxu0
    %v1477 = vadd.f32 %v1331, %v1476
    %v1478 = vpop.f32.mrb[0].mxu0
    %v1479 = vadd.f32 %v1335, %v1478
    %1480 = vmatprep.mubr.bf16.mxu0 0
    %1481 = vmatmul.mubr.bf16.gmra.mrb[0].mxu0 %v1268
    %v1482 = vpop.f32.mrb[0].mxu0
    %v1483 = vadd.f32 %v1331, %v1482
    %v1484 = vpop.f32.mrb[0].mxu0
    %v1485 = vadd.f32 %v1335, %v1484
    %v1486 = vpop.f32.mrb[0].mxu0
    %v1487 = vadd.f32 %v1331, %v1486
    %v1488 = vpop.f32.mrb[0].mxu0
    %v1489 = vadd.f32 %v1335, %v1488
    %1490 = vmatprep.mubr.bf16.mxu0 0
    %1491 = vmatmul.mubr.bf16.gmra.mrb[0].mxu0 %v1308
    %v1492 = vpop.f32.mrb[0].mxu0
    %v1493 = vadd.f32 %v1331, %v1492
    %v1494 = vpop.f32.mrb[0].mxu0
    %v1495 = vadd.f32 %v1335, %v1494
    %v1496 = vpop.f32.mrb[0].mxu0
    %v1497 = vadd.f32 %v1331, %v1496
    %v1498 = vpop.f32.mrb[0].mxu0
    %v1499 = vadd.f32 %v1335, %v1498
    %1500 = vmatprep.mubr.bf16.mxu0 0
    %1501 = vmatmul.mubr.bf16.gmra.mrb[0].mxu0 %v1304
    %v1502 = vpop.f32.mrb[0].mxu0
    %v1503 = vadd.f32 %v1331, %v1502
    %v1504 = vpop.f32.mrb[0].mxu0
    %v1505 = vadd.f32 %v1335, %v1504
    %v1506 = vpop.f32.mrb[0].mxu0
    %v1507 = vadd.f32 %v1331, %v1506
    %v1508 = vpop.f32.mrb[0].mxu0
    %v1509 = vadd.f32 %v1335, %v1508
    %1510 = vdwg.mxu0
    %v1511 = vxor.u32 %v1453, 2147483648
    %v1512 = vxor.u32 %v1457, 2147483648
    %v1513 = vxor.u32 %v1463, 2147483648
    %v1514 = vxor.u32 %v1467, 2147483648
    %v1515 = vxor.u32 %v1473, 2147483648
    %v1516 = vxor.u32 %v1477, 2147483648
    %v1517 = vxor.u32 %v1483, 2147483648
    %v1518 = vxor.u32 %v1487, 2147483648
    %v1519 = vxor.u32 %v1493, 2147483648
    %v1520 = vxor.u32 %v1497, 2147483648
    %v1521 = vxor.u32 %v1503, 2147483648
    %v1522 = vxor.u32 %v1507, 2147483648
    %v1523 = vmul.f32 %v1511, 1.442695
    %v1524 = vpow.pop %v1523
    %v1525 = vmul.f32 %v1512, 1.442695
    %v1526 = vpow.pop %v1525
    %v1527 = vmul.f32 %v1513, 1.442695
    %v1528 = vpow.pop %v1527
    %v1529 = vmul.f32 %v1514, 1.442695
    %v1530 = vpow.pop %v1529
    %v1531 = vmul.f32 %v1515, 1.442695
    %v1532 = vpow.pop %v1531
    %v1533 = vmul.f32 %v1516, 1.442695
    %v1534 = vpow.pop %v1533
    %v1535 = vmul.f32 %v1517, 1.442695
    %v1536 = vpow.pop %v1535
    %v1537 = vmul.f32 %v1518, 1.442695
    %v1538 = vpow.pop %v1537
    %v1539 = vmul.f32 %v1519, 1.442695
    %v1540 = vpow.pop %v1539
    %v1541 = vmul.f32 %v1520, 1.442695
    %v1542 = vpow.pop %v1541
    %v1543 = vmul.f32 %v1521, 1.442695
    %v1544 = vpow.pop %v1543
    %v1545 = vmul.f32 %v1522, 1.442695
    %v1546 = vpow.pop %v1545
    %v1547 = vadd.f32 %v1524, 1.0
    %v1548 = vadd.f32 %v1526, 1.0
    %v1549 = vadd.f32 %v1528, 1.0
    %v1550 = vadd.f32 %v1530, 1.0
    %v1551 = vadd.f32 %v1532, 1.0
    %v1552 = vadd.f32 %v1534, 1.0
    %v1553 = vadd.f32 %v1536, 1.0
    %v1554 = vadd.f32 %v1538, 1.0
    %v1555 = vadd.f32 %v1540, 1.0
    %v1556 = vadd.f32 %v1542, 1.0
    %v1557 = vadd.f32 %v1544, 1.0
    %v1558 = vadd.f32 %v1546, 1.0
    %v1559 = vrcp.pop %v1547
    %v1560 = vmul.f32 1.0, %v1559
    %v1561 = vrcp.pop %v1548
    %v1562 = vmul.f32 1.0, %v1561
    %v1563 = vrcp.pop %v1549
    %v1564 = vmul.f32 1.0, %v1563
    %v1565 = vrcp.pop %v1550
    %v1566 = vmul.f32 1.0, %v1565
    %v1567 = vrcp.pop %v1551
    %v1568 = vmul.f32 1.0, %v1567
    %v1569 = vrcp.pop %v1552
    %v1570 = vmul.f32 1.0, %v1569
    %v1571 = vrcp.pop %v1553
    %v1572 = vmul.f32 1.0, %v1571
    %v1573 = vrcp.pop %v1554
    %v1574 = vmul.f32 1.0, %v1573
    %v1575 = vrcp.pop %v1555
    %v1576 = vmul.f32 1.0, %v1575
    %v1577 = vrcp.pop %v1556
    %v1578 = vmul.f32 1.0, %v1577
    %v1579 = vrcp.pop %v1557
    %v1580 = vmul.f32 1.0, %v1579
    %v1581 = vrcp.pop %v1558
    %v1582 = vmul.f32 1.0, %v1581
    %v1583 = vtanh.pop %v1455
    %v1584 = vtanh.pop %v1459
    %v1585 = vtanh.pop %v1465
    %v1586 = vtanh.pop %v1469
    %v1587 = vtanh.pop %v1475
    %v1588 = vtanh.pop %v1479
    %v1589 = vtanh.pop %v1485
    %v1590 = vtanh.pop %v1489
    %v1591 = vtanh.pop %v1495
    %v1592 = vtanh.pop %v1499
    %v1593 = vtanh.pop %v1505
    %v1594 = vtanh.pop %v1509
    %v1604 = vcombine.high %v1560, %v1560
    %v1605 = vcombine.high %v1562, %v1562
    %v1606 = vcombine.high %v1564, %v1564
    %v1607 = vcombine.high %v1566, %v1566
    %v1608 = vcombine.high %v1568, %v1568
    %v1609 = vcombine.high %v1570, %v1570
    %v1610 = vcombine.high %v1572, %v1572
    %v1611 = vcombine.high %v1574, %v1574
    %v1612 = vcombine.high %v1576, %v1576
    %1622 = vst [vmem:[#allocation5] sm:$0xf] %v1560
    %1623 = vst [vmem:[#allocation5 + $0x4] sm:$0xf] %v1604
    %1624 = vst [vmem:[#allocation5 + $0x8] sm:$0xf] %v1562
    %1625 = vst [vmem:[#allocation5 + $0xc] sm:$0xf] %v1605
    %1626 = vst [vmem:[#allocation5 + $0x10] sm:$0xf] %v1564
    %1627 = vst [vmem:[#allocation5 + $0x14] sm:$0xf] %v1606
    %1628 = vst [vmem:[#allocation5 + $0x18] sm:$0xf] %v1566
    %1629 = vst [vmem:[#allocation5 + $0x1c] sm:$0xf] %v1607
    %1630 = vst [vmem:[#allocation5 + $0x20] sm:$0xf] %v1568
    %1631 = vst [vmem:[#allocation5 + $0x24] sm:$0xf] %v1608
    %1632 = vst [vmem:[#allocation5 + $0x28] sm:$0xf] %v1570
    %1633 = vst [vmem:[#allocation5 + $0x2c] sm:$0xf] %v1609
    %1634 = vst [vmem:[#allocation5 + $0x30] sm:$0xf] %v1572
    %1635 = vst [vmem:[#allocation5 + $0x34] sm:$0xf] %v1610
    %1636 = vst [vmem:[#allocation5 + $0x38] sm:$0xf] %v1574
    %1637 = vst [vmem:[#allocation5 + $0x3c] sm:$0xf] %v1611
    %1638 = vst [vmem:[#allocation5 + $0x40] sm:$0xf] %v1576
    %1639 = vst [vmem:[#allocation5 + $0x44] sm:$0xf] %v1612
    %v1649 = vcombine.high %v1583, %v1583
    %v1650 = vcombine.high %v1584, %v1584
    %v1651 = vcombine.high %v1585, %v1585
    %v1652 = vcombine.high %v1586, %v1586
    %v1653 = vcombine.high %v1587, %v1587
    %v1654 = vcombine.high %v1588, %v1588
    %v1655 = vcombine.high %v1589, %v1589
    %v1656 = vcombine.high %v1590, %v1590
    %v1657 = vcombine.high %v1591, %v1591
    %1667 = vst [vmem:[#allocation6] sm:$0xf] %v1583
    %1668 = vst [vmem:[#allocation6 + $0x4] sm:$0xf] %v1649
    %1669 = vst [vmem:[#allocation6 + $0x8] sm:$0xf] %v1584
    %1670 = vst [vmem:[#allocation6 + $0xc] sm:$0xf] %v1650
    %1671 = vst [vmem:[#allocation6 + $0x10] sm:$0xf] %v1585
    %1672 = vst [vmem:[#allocation6 + $0x14] sm:$0xf] %v1651
    %1673 = vst [vmem:[#allocation6 + $0x18] sm:$0xf] %v1586
    %1674 = vst [vmem:[#allocation6 + $0x1c] sm:$0xf] %v1652
    %1675 = vst [vmem:[#allocation6 + $0x20] sm:$0xf] %v1587
    %1676 = vst [vmem:[#allocation6 + $0x24] sm:$0xf] %v1653
    %1677 = vst [vmem:[#allocation6 + $0x28] sm:$0xf] %v1588
    %1678 = vst [vmem:[#allocation6 + $0x2c] sm:$0xf] %v1654
    %1679 = vst [vmem:[#allocation6 + $0x30] sm:$0xf] %v1589
    %1680 = vst [vmem:[#allocation6 + $0x34] sm:$0xf] %v1655
    %1681 = vst [vmem:[#allocation6 + $0x38] sm:$0xf] %v1590
    %1682 = vst [vmem:[#allocation6 + $0x3c] sm:$0xf] %v1656
    %1683 = vst [vmem:[#allocation6 + $0x40] sm:$0xf] %v1591
    %1684 = vst [vmem:[#allocation6 + $0x44] sm:$0xf] %v1657
    %v1688 = vcombine.high %v1578, %v1578
    %v1689 = vcombine.high %v1580, %v1580
    %v1690 = vcombine.high %v1582, %v1582
    %1694 = vst [vmem:[#allocation7] sm:$0xf] %v1578
    %1695 = vst [vmem:[#allocation7 + $0x4] sm:$0xf] %v1688
    %1696 = vst [vmem:[#allocation7 + $0x8] sm:$0xf] %v1580
    %1697 = vst [vmem:[#allocation7 + $0xc] sm:$0xf] %v1689
    %1698 = vst [vmem:[#allocation7 + $0x10] sm:$0xf] %v1582
    %1699 = vst [vmem:[#allocation7 + $0x14] sm:$0xf] %v1690
    %v1703 = vcombine.high %v1592, %v1592
    %v1704 = vcombine.high %v1593, %v1593
    %v1705 = vcombine.high %v1594, %v1594
    %1709 = vst [vmem:[#allocation8] sm:$0xf] %v1592
    %1710 = vst [vmem:[#allocation8 + $0x4] sm:$0xf] %v1703
    %1711 = vst [vmem:[#allocation8 + $0x8] sm:$0xf] %v1593
    %1712 = vst [vmem:[#allocation8 + $0xc] sm:$0xf] %v1704
    %1713 = vst [vmem:[#allocation8 + $0x10] sm:$0xf] %v1594
    %1714 = vst [vmem:[#allocation8 + $0x14] sm:$0xf] %v1705
    %v1715 = vunpack.c.l.bf16 %v115
    %v1716 = vunpack.c.l.bf16 %v116
    %v1717 = vunpack.c.l.bf16 %v117
    %v1718 = vunpack.c.l.bf16 %v118
    %v1719 = vunpack.c.l.bf16 %v119
    %v1720 = vunpack.c.l.bf16 %v120
    %1721 = vst [vmem:[#allocation9 + $0x4] sm:$0xf] %v1715
    %1722 = vst [vmem:[#allocation9 + $0x14] sm:$0xf] %v1716
    %1723 = vst [vmem:[#allocation9 + $0x24] sm:$0xf] %v1717
    %1724 = vst [vmem:[#allocation9 + $0x34] sm:$0xf] %v1718
    %1725 = vst [vmem:[#allocation9 + $0x44] sm:$0xf] %v1719
    %1726 = vst [vmem:[#allocation9 + $0x54] sm:$0xf] %v1720
    %v1727 = vunpack.c.l.bf16 %v129
    %v1728 = vunpack.c.l.bf16 %v132
    %v1729 = vunpack.c.l.bf16 %v135
    %v1730 = vunpack.c.l.bf16 %v138
    %v1731 = vunpack.c.l.bf16 %v141
    %v1732 = vunpack.c.l.bf16 %v144
    %1733 = vst [vmem:[#allocation9 + $0xc] sm:$0xf] %v1727
    %1734 = vst [vmem:[#allocation9 + $0x1c] sm:$0xf] %v1728
    %1735 = vst [vmem:[#allocation9 + $0x2c] sm:$0xf] %v1729
    %1736 = vst [vmem:[#allocation9 + $0x3c] sm:$0xf] %v1730
    %1737 = vst [vmem:[#allocation9 + $0x4c] sm:$0xf] %v1731
    %1738 = vst [vmem:[#allocation9 + $0x5c] sm:$0xf] %v1732
    %v1739 = vld [vmem:[#allocation2] sm:$0xff]
    %v1740 = vld [vmem:[#allocation2 + $0x8] sm:$0xff]
    %v1741 = vld [vmem:[#allocation2 + $0x10] sm:$0xff]
    %v1742 = vld [vmem:[#allocation2 + $0x18] sm:$0xff]
    %v1743 = vld [vmem:[#allocation3] sm:$0xff]
    %v1744 = vld [vmem:[#allocation3 + $0x8] sm:$0xff]
    %v1745 = vld [vmem:[#allocation3 + $0x10] sm:$0xff]
    %v1746 = vld [vmem:[#allocation3 + $0x18] sm:$0xff]
    %1748 = vset.pattern.permute.xlu0 0
    %1749 = vperm.xlu0 %1748, %v1743
    %v1750 = vpop.permute.xlu0 %1749
    %1753 = vset.pattern.permute.xlu0 0
    %1754 = vperm.xlu0 %1753, %v1744
    %v1755 = vpop.permute.xlu0 %1754
    %1758 = vset.pattern.permute.xlu0 0
    %1759 = vperm.xlu0 %1758, %v1745
    %v1760 = vpop.permute.xlu0 %1759
    %1763 = vset.pattern.permute.xlu0 0
    %1764 = vperm.xlu0 %1763, %v1746
    %v1765 = vpop.permute.xlu0 %1764
    %v1767 = vmul.f32 %v1750, %v1739
    %v1768 = vmul.f32 %v1755, %v1740
    %v1769 = vmul.f32 %v1760, %v1741
    %v1770 = vmul.f32 %v1765, %v1742
    %v1771 = vrot.slane %v1767, 4
    %v1772 = vadd.f32 %v1767, %v1771
    %v1773 = vrot.slane %v1772, 2
    %v1774 = vadd.f32 %v1772, %v1773
    %v1775 = vrot.slane %v1774, 1
    %v1776 = vadd.f32 %v1774, %v1775
    %v1777 = vrot.slane %v1768, 4
    %v1778 = vadd.f32 %v1768, %v1777
    %v1779 = vrot.slane %v1778, 2
    %v1780 = vadd.f32 %v1778, %v1779
    %v1781 = vrot.slane %v1780, 1
    %v1782 = vadd.f32 %v1780, %v1781
    %v1783 = vrot.slane %v1769, 4
    %v1784 = vadd.f32 %v1769, %v1783
    %v1785 = vrot.slane %v1784, 2
    %v1786 = vadd.f32 %v1784, %v1785
    %v1787 = vrot.slane %v1786, 1
    %v1788 = vadd.f32 %v1786, %v1787
    %v1789 = vrot.slane %v1770, 4
    %v1790 = vadd.f32 %v1770, %v1789
    %v1791 = vrot.slane %v1790, 2
    %v1792 = vadd.f32 %v1790, %v1791
    %v1793 = vrot.slane %v1792, 1
    %v1794 = vadd.f32 %v1792, %v1793
    %v1799 = vrot.slane %v1782, 7
    %vm1800 = vcmask 1041409
    %v1801 = vsel %vm1800, %v1799, %v1776
    %vm1802 = vcmask 1045509
    %v1803 = vsel %vm1802, %v1799, %v1801
    %v1804 = vrot.slane %v1788, 6
    %vm1805 = vcmask 1042434
    %v1806 = vsel %vm1805, %v1804, %v1803
    %vm1807 = vcmask 1046534
    %v1808 = vsel %vm1807, %v1804, %v1806
    %v1809 = vrot.slane %v1794, 5
    %vm1810 = vcmask 1043459
    %v1811 = vsel %vm1810, %v1809, %v1808
    %vm1812 = vcmask 1047559
    %v1813 = vsel %vm1812, %v1809, %v1811
    %1815 = vst [vmem:[#allocation9] sm:$0xf] %v1813
    %v1816 = vld [vmem:[#allocation4] sm:$0xff]
    %v1817 = vld [vmem:[#allocation4 + $0x8] sm:$0xff]
    %v1818 = vld [vmem:[#allocation4 + $0x10] sm:$0xff]
    %v1819 = vld [vmem:[#allocation4 + $0x18] sm:$0xff]
    %1821 = vset.pattern.permute.xlu0 0
    %1822 = vperm.xlu0 %1821, %v1816
    %v1823 = vpop.permute.xlu0 %1822
    %1826 = vset.pattern.permute.xlu0 0
    %1827 = vperm.xlu0 %1826, %v1817
    %v1828 = vpop.permute.xlu0 %1827
    %1831 = vset.pattern.permute.xlu0 0
    %1832 = vperm.xlu0 %1831, %v1818
    %v1833 = vpop.permute.xlu0 %1832
    %1836 = vset.pattern.permute.xlu0 0
    %1837 = vperm.xlu0 %1836, %v1819
    %v1838 = vpop.permute.xlu0 %1837
    %v1840 = vmul.f32 %v1823, %v1739
    %v1841 = vmul.f32 %v1828, %v1740
    %v1842 = vmul.f32 %v1833, %v1741
    %v1843 = vmul.f32 %v1838, %v1742
    %v1844 = vrot.slane %v1840, 4
    %v1845 = vadd.f32 %v1840, %v1844
    %v1846 = vrot.slane %v1845, 2
    %v1847 = vadd.f32 %v1845, %v1846
    %v1848 = vrot.slane %v1847, 1
    %v1849 = vadd.f32 %v1847, %v1848
    %v1850 = vrot.slane %v1841, 4
    %v1851 = vadd.f32 %v1841, %v1850
    %v1852 = vrot.slane %v1851, 2
    %v1853 = vadd.f32 %v1851, %v1852
    %v1854 = vrot.slane %v1853, 1
    %v1855 = vadd.f32 %v1853, %v1854
    %v1856 = vrot.slane %v1842, 4
    %v1857 = vadd.f32 %v1842, %v1856
    %v1858 = vrot.slane %v1857, 2
    %v1859 = vadd.f32 %v1857, %v1858
    %v1860 = vrot.slane %v1859, 1
    %v1861 = vadd.f32 %v1859, %v1860
    %v1862 = vrot.slane %v1843, 4
    %v1863 = vadd.f32 %v1843, %v1862
    %v1864 = vrot.slane %v1863, 2
    %v1865 = vadd.f32 %v1863, %v1864
    %v1866 = vrot.slane %v1865, 1
    %v1867 = vadd.f32 %v1865, %v1866
    %v1868 = vadd.f32 %v1849, 0.0
    %v1869 = vadd.f32 %v1855, 0.0
    %v1870 = vadd.f32 %v1861, 0.0
    %v1871 = vadd.f32 %v1867, 0.0
    %v1872 = vld [vmem:[#allocation5] sm:$0xf]
    %v1875 = vunpack.c.l.s4 1966171168
    %v1876 = vunpack.c.0.s8 %v1875
    %v1877 = vlaneseq
    %v1878 = vshrl.u32 %v1877, 7
    %v1879 = vsub.s32 %v1876, %v1878
    %v1880 = vrot.slane %v1872, %v1879
    %v1881 = vcombine.high %v1880, %v1880
    %v1883 = vunpack.c.l.s4 1966171168
    %v1884 = vunpack.c.0.s8 %v1883
    %v1885 = vlaneseq
    %v1886 = vshrl.u32 %v1885, 7
    %v1887 = vsub.s32 %v1884, %v1886
    %v1888 = vrot.slane %v1880, %v1887
    %v1890 = vunpack.c.l.s4 1966171168
    %v1891 = vunpack.c.0.s8 %v1890
    %v1892 = vlaneseq
    %v1893 = vshrl.u32 %v1892, 7
    %v1894 = vsub.s32 %v1891, %v1893
    %v1895 = vrot.slane %v1881, %v1894
    %v1896 = vcombine.high %v1888, %v1888
    %v1897 = vcombine.high %v1895, %v1895
    %v1898 = vld [vmem:[#allocation6] sm:$0xf]
    %v1901 = vunpack.c.l.s4 1966171168
    %v1902 = vunpack.c.0.s8 %v1901
    %v1903 = vlaneseq
    %v1904 = vshrl.u32 %v1903, 7
    %v1905 = vsub.s32 %v1902, %v1904
    %v1906 = vrot.slane %v1898, %v1905
    %v1907 = vcombine.high %v1906, %v1906
    %v1909 = vunpack.c.l.s4 1966171168
    %v1910 = vunpack.c.0.s8 %v1909
    %v1911 = vlaneseq
    %v1912 = vshrl.u32 %v1911, 7
    %v1913 = vsub.s32 %v1910, %v1912
    %v1914 = vrot.slane %v1906, %v1913
    %v1916 = vunpack.c.l.s4 1966171168
    %v1917 = vunpack.c.0.s8 %v1916
    %v1918 = vlaneseq
    %v1919 = vshrl.u32 %v1918, 7
    %v1920 = vsub.s32 %v1917, %v1919
    %v1921 = vrot.slane %v1907, %v1920
    %v1922 = vcombine.high %v1914, %v1914
    %v1923 = vcombine.high %v1921, %v1921
    %v1924 = vlaneseq
    %v1925 = vshrl.u32 %v1924, 7
    %v1926 = vsub.s32 0, %v1925
    %v1927 = vrot.slane %v1888, %v1926
    %v1928 = vlaneseq
    %v1929 = vshrl.u32 %v1928, 7
    %v1930 = vsub.s32 0, %v1929
    %v1931 = vrot.slane %v1895, %v1930
    %v1932 = vlaneseq
    %v1933 = vshrl.u32 %v1932, 7
    %v1934 = vsub.s32 0, %v1933
    %v1935 = vrot.slane %v1896, %v1934
    %v1936 = vlaneseq
    %v1937 = vshrl.u32 %v1936, 7
    %v1938 = vsub.s32 0, %v1937
    %v1939 = vrot.slane %v1897, %v1938
    %v1944 = vmul.f32 %v1927, %v1823
    %v1945 = vmul.f32 %v1931, %v1828
    %v1946 = vmul.f32 %v1935, %v1833
    %v1947 = vmul.f32 %v1939, %v1838
    %v1948 = vsub.f32 1.0, %v1944
    %v1949 = vsub.f32 1.0, %v1945
    %v1950 = vsub.f32 1.0, %v1946
    %v1951 = vsub.f32 1.0, %v1947
    %v1952 = vmul.f32 %v1739, %v1948
    %v1953 = vmul.f32 %v1740, %v1949
    %v1954 = vmul.f32 %v1741, %v1950
    %v1955 = vmul.f32 %v1742, %v1951
    %v1956 = vlaneseq
    %v1957 = vshrl.u32 %v1956, 7
    %v1958 = vsub.s32 0, %v1957
    %v1959 = vrot.slane %v1914, %v1958
    %v1960 = vlaneseq
    %v1961 = vshrl.u32 %v1960, 7
    %v1962 = vsub.s32 0, %v1961
    %v1963 = vrot.slane %v1921, %v1962
    %v1964 = vlaneseq
    %v1965 = vshrl.u32 %v1964, 7
    %v1966 = vsub.s32 0, %v1965
    %v1967 = vrot.slane %v1922, %v1966
    %v1968 = vlaneseq
    %v1969 = vshrl.u32 %v1968, 7
    %v1970 = vsub.s32 0, %v1969
    %v1971 = vrot.slane %v1923, %v1970
    %v1976 = vmul.f32 %v1959, %v1823
    %v1977 = vmul.f32 %v1963, %v1828
    %v1978 = vmul.f32 %v1967, %v1833
    %v1979 = vmul.f32 %v1971, %v1838
    %v1980 = vadd.f32 %v1952, %v1976
    %v1981 = vadd.f32 %v1953, %v1977
    %v1982 = vadd.f32 %v1954, %v1978
    %v1983 = vadd.f32 %v1955, %v1979
    %s1984 = scalar_lea.vmem [#allocation4], 32
    %v1985 = vld [vmem:[%s1984] sm:$0xff]
    %v1986 = vld [vmem:[%s1984 + $0x8] sm:$0xff]
    %v1987 = vld [vmem:[%s1984 + $0x10] sm:$0xff]
    %v1988 = vld [vmem:[%s1984 + $0x18] sm:$0xff]
    %1990 = vset.pattern.permute.xlu0 0
    %1991 = vperm.xlu0 %1990, %v1985
    %v1992 = vpop.permute.xlu0 %1991
    %1995 = vset.pattern.permute.xlu0 0
    %1996 = vperm.xlu0 %1995, %v1986
    %v1997 = vpop.permute.xlu0 %1996
    %2000 = vset.pattern.permute.xlu0 0
    %2001 = vperm.xlu0 %2000, %v1987
    %v2002 = vpop.permute.xlu0 %2001
    %2005 = vset.pattern.permute.xlu0 0
    %2006 = vperm.xlu0 %2005, %v1988
    %v2007 = vpop.permute.xlu0 %2006
    %v2009 = vmul.f32 %v1992, %v1980
    %v2010 = vmul.f32 %v1997, %v1981
    %v2011 = vmul.f32 %v2002, %v1982
    %v2012 = vmul.f32 %v2007, %v1983
    %v2013 = vrot.slane %v2009, 4
    %v2014 = vadd.f32 %v2009, %v2013
    %v2015 = vrot.slane %v2014, 2
    %v2016 = vadd.f32 %v2014, %v2015
    %v2017 = vrot.slane %v2016, 1
    %v2018 = vadd.f32 %v2016, %v2017
    %v2019 = vrot.slane %v2010, 4
    %v2020 = vadd.f32 %v2010, %v2019
    %v2021 = vrot.slane %v2020, 2
    %v2022 = vadd.f32 %v2020, %v2021
    %v2023 = vrot.slane %v2022, 1
    %v2024 = vadd.f32 %v2022, %v2023
    %v2025 = vrot.slane %v2011, 4
    %v2026 = vadd.f32 %v2011, %v2025
    %v2027 = vrot.slane %v2026, 2
    %v2028 = vadd.f32 %v2026, %v2027
    %v2029 = vrot.slane %v2028, 1
    %v2030 = vadd.f32 %v2028, %v2029
    %v2031 = vrot.slane %v2012, 4
    %v2032 = vadd.f32 %v2012, %v2031
    %v2033 = vrot.slane %v2032, 2
    %v2034 = vadd.f32 %v2032, %v2033
    %v2035 = vrot.slane %v2034, 1
    %v2036 = vadd.f32 %v2034, %v2035
    %v2037 = vadd.f32 %v1868, %v2018
    %v2038 = vadd.f32 %v1869, %v2024
    %v2039 = vadd.f32 %v1870, %v2030
    %v2040 = vadd.f32 %v1871, %v2036
    %s2041 = scalar_lea.vmem [#allocation5], 4
    %v2042 = vld [vmem:[%s2041] sm:$0xf]
    %v2045 = vunpack.c.l.s4 1966171168
    %v2046 = vunpack.c.0.s8 %v2045
    %v2047 = vlaneseq
    %v2048 = vshrl.u32 %v2047, 7
    %v2049 = vsub.s32 %v2046, %v2048
    %v2050 = vrot.slane %v2042, %v2049
    %v2051 = vcombine.high %v2050, %v2050
    %v2053 = vunpack.c.l.s4 1966171168
    %v2054 = vunpack.c.0.s8 %v2053
    %v2055 = vlaneseq
    %v2056 = vshrl.u32 %v2055, 7
    %v2057 = vsub.s32 %v2054, %v2056
    %v2058 = vrot.slane %v2050, %v2057
    %v2060 = vunpack.c.l.s4 1966171168
    %v2061 = vunpack.c.0.s8 %v2060
    %v2062 = vlaneseq
    %v2063 = vshrl.u32 %v2062, 7
    %v2064 = vsub.s32 %v2061, %v2063
    %v2065 = vrot.slane %v2051, %v2064
    %v2066 = vcombine.high %v2058, %v2058
    %v2067 = vcombine.high %v2065, %v2065
    %s2068 = scalar_lea.vmem [#allocation6], 4
    %v2069 = vld [vmem:[%s2068] sm:$0xf]
    %v2072 = vunpack.c.l.s4 1966171168
    %v2073 = vunpack.c.0.s8 %v2072
    %v2074 = vlaneseq
    %v2075 = vshrl.u32 %v2074, 7
    %v2076 = vsub.s32 %v2073, %v2075
    %v2077 = vrot.slane %v2069, %v2076
    %v2078 = vcombine.high %v2077, %v2077
    %v2080 = vunpack.c.l.s4 1966171168
    %v2081 = vunpack.c.0.s8 %v2080
    %v2082 = vlaneseq
    %v2083 = vshrl.u32 %v2082, 7
    %v2084 = vsub.s32 %v2081, %v2083
    %v2085 = vrot.slane %v2077, %v2084
    %v2087 = vunpack.c.l.s4 1966171168
    %v2088 = vunpack.c.0.s8 %v2087
    %v2089 = vlaneseq
    %v2090 = vshrl.u32 %v2089, 7
    %v2091 = vsub.s32 %v2088, %v2090
    %v2092 = vrot.slane %v2078, %v2091
    %v2093 = vcombine.high %v2085, %v2085
    %v2094 = vcombine.high %v2092, %v2092
    %v2095 = vlaneseq
    %v2096 = vshrl.u32 %v2095, 7
    %v2097 = vsub.s32 0, %v2096
    %v2098 = vrot.slane %v2058, %v2097
    %v2099 = vlaneseq
    %v2100 = vshrl.u32 %v2099, 7
    %v2101 = vsub.s32 0, %v2100
    %v2102 = vrot.slane %v2065, %v2101
    %v2103 = vlaneseq
    %v2104 = vshrl.u32 %v2103, 7
    %v2105 = vsub.s32 0, %v2104
    %v2106 = vrot.slane %v2066, %v2105
    %v2107 = vlaneseq
    %v2108 = vshrl.u32 %v2107, 7
    %v2109 = vsub.s32 0, %v2108
    %v2110 = vrot.slane %v2067, %v2109
    %v2115 = vmul.f32 %v2098, %v1992
    %v2116 = vmul.f32 %v2102, %v1997
    %v2117 = vmul.f32 %v2106, %v2002
    %v2118 = vmul.f32 %v2110, %v2007
    %v2119 = vsub.f32 1.0, %v2115
    %v2120 = vsub.f32 1.0, %v2116
    %v2121 = vsub.f32 1.0, %v2117
    %v2122 = vsub.f32 1.0, %v2118
    %v2123 = vmul.f32 %v1980, %v2119
    %v2124 = vmul.f32 %v1981, %v2120
    %v2125 = vmul.f32 %v1982, %v2121
    %v2126 = vmul.f32 %v1983, %v2122
    %v2127 = vlaneseq
    %v2128 = vshrl.u32 %v2127, 7
    %v2129 = vsub.s32 0, %v2128
    %v2130 = vrot.slane %v2085, %v2129
    %v2131 = vlaneseq
    %v2132 = vshrl.u32 %v2131, 7
    %v2133 = vsub.s32 0, %v2132
    %v2134 = vrot.slane %v2092, %v2133
    %v2135 = vlaneseq
    %v2136 = vshrl.u32 %v2135, 7
    %v2137 = vsub.s32 0, %v2136
    %v2138 = vrot.slane %v2093, %v2137
    %v2139 = vlaneseq
    %v2140 = vshrl.u32 %v2139, 7
    %v2141 = vsub.s32 0, %v2140
    %v2142 = vrot.slane %v2094, %v2141
    %v2147 = vmul.f32 %v2130, %v1992
    %v2148 = vmul.f32 %v2134, %v1997
    %v2149 = vmul.f32 %v2138, %v2002
    %v2150 = vmul.f32 %v2142, %v2007
    %v2151 = vadd.f32 %v2123, %v2147
    %v2152 = vadd.f32 %v2124, %v2148
    %v2153 = vadd.f32 %v2125, %v2149
    %v2154 = vadd.f32 %v2126, %v2150
    %s2155 = scalar_lea.vmem [#allocation4], 64
    %v2156 = vld [vmem:[%s2155] sm:$0xff]
    %v2157 = vld [vmem:[%s2155 + $0x8] sm:$0xff]
    %v2158 = vld [vmem:[%s2155 + $0x10] sm:$0xff]
    %v2159 = vld [vmem:[%s2155 + $0x18] sm:$0xff]
    %2161 = vset.pattern.permute.xlu0 0
    %2162 = vperm.xlu0 %2161, %v2156
    %v2163 = vpop.permute.xlu0 %2162
    %2166 = vset.pattern.permute.xlu0 0
    %2167 = vperm.xlu0 %2166, %v2157
    %v2168 = vpop.permute.xlu0 %2167
    %2171 = vset.pattern.permute.xlu0 0
    %2172 = vperm.xlu0 %2171, %v2158
    %v2173 = vpop.permute.xlu0 %2172
    %2176 = vset.pattern.permute.xlu0 0
    %2177 = vperm.xlu0 %2176, %v2159
    %v2178 = vpop.permute.xlu0 %2177
    %v2180 = vmul.f32 %v2163, %v2151
    %v2181 = vmul.f32 %v2168, %v2152
    %v2182 = vmul.f32 %v2173, %v2153
    %v2183 = vmul.f32 %v2178, %v2154
    %v2184 = vrot.slane %v2180, 4
    %v2185 = vadd.f32 %v2180, %v2184
    %v2186 = vrot.slane %v2185, 2
    %v2187 = vadd.f32 %v2185, %v2186
    %v2188 = vrot.slane %v2187, 1
    %v2189 = vadd.f32 %v2187, %v2188
    %v2190 = vrot.slane %v2181, 4
    %v2191 = vadd.f32 %v2181, %v2190
    %v2192 = vrot.slane %v2191, 2
    %v2193 = vadd.f32 %v2191, %v2192
    %v2194 = vrot.slane %v2193, 1
    %v2195 = vadd.f32 %v2193, %v2194
    %v2196 = vrot.slane %v2182, 4
    %v2197 = vadd.f32 %v2182, %v2196
    %v2198 = vrot.slane %v2197, 2
    %v2199 = vadd.f32 %v2197, %v2198
    %v2200 = vrot.slane %v2199, 1
    %v2201 = vadd.f32 %v2199, %v2200
    %v2202 = vrot.slane %v2183, 4
    %v2203 = vadd.f32 %v2183, %v2202
    %v2204 = vrot.slane %v2203, 2
    %v2205 = vadd.f32 %v2203, %v2204
    %v2206 = vrot.slane %v2205, 1
    %v2207 = vadd.f32 %v2205, %v2206
    %v2208 = vadd.f32 %v2037, %v2189
    %v2209 = vadd.f32 %v2038, %v2195
    %v2210 = vadd.f32 %v2039, %v2201
    %v2211 = vadd.f32 %v2040, %v2207
    %s2212 = scalar_lea.vmem [#allocation5], 8
    %v2213 = vld [vmem:[%s2212] sm:$0xf]
    %v2216 = vunpack.c.l.s4 1966171168
    %v2217 = vunpack.c.0.s8 %v2216
    %v2218 = vlaneseq
    %v2219 = vshrl.u32 %v2218, 7
    %v2220 = vsub.s32 %v2217, %v2219
    %v2221 = vrot.slane %v2213, %v2220
    %v2222 = vcombine.high %v2221, %v2221
    %v2224 = vunpack.c.l.s4 1966171168
    %v2225 = vunpack.c.0.s8 %v2224
    %v2226 = vlaneseq
    %v2227 = vshrl.u32 %v2226, 7
    %v2228 = vsub.s32 %v2225, %v2227
    %v2229 = vrot.slane %v2221, %v2228
    %v2231 = vunpack.c.l.s4 1966171168
    %v2232 = vunpack.c.0.s8 %v2231
    %v2233 = vlaneseq
    %v2234 = vshrl.u32 %v2233, 7
    %v2235 = vsub.s32 %v2232, %v2234
    %v2236 = vrot.slane %v2222, %v2235
    %v2237 = vcombine.high %v2229, %v2229
    %v2238 = vcombine.high %v2236, %v2236
    %s2239 = scalar_lea.vmem [#allocation6], 8
    %v2240 = vld [vmem:[%s2239] sm:$0xf]
    %v2243 = vunpack.c.l.s4 1966171168
    %v2244 = vunpack.c.0.s8 %v2243
    %v2245 = vlaneseq
    %v2246 = vshrl.u32 %v2245, 7
    %v2247 = vsub.s32 %v2244, %v2246
    %v2248 = vrot.slane %v2240, %v2247
    %v2249 = vcombine.high %v2248, %v2248
    %v2251 = vunpack.c.l.s4 1966171168
    %v2252 = vunpack.c.0.s8 %v2251
    %v2253 = vlaneseq
    %v2254 = vshrl.u32 %v2253, 7
    %v2255 = vsub.s32 %v2252, %v2254
    %v2256 = vrot.slane %v2248, %v2255
    %v2258 = vunpack.c.l.s4 1966171168
    %v2259 = vunpack.c.0.s8 %v2258
    %v2260 = vlaneseq
    %v2261 = vshrl.u32 %v2260, 7
    %v2262 = vsub.s32 %v2259, %v2261
    %v2263 = vrot.slane %v2249, %v2262
    %v2264 = vcombine.high %v2256, %v2256
    %v2265 = vcombine.high %v2263, %v2263
    %v2266 = vlaneseq
    %v2267 = vshrl.u32 %v2266, 7
    %v2268 = vsub.s32 0, %v2267
    %v2269 = vrot.slane %v2229, %v2268
    %v2270 = vlaneseq
    %v2271 = vshrl.u32 %v2270, 7
    %v2272 = vsub.s32 0, %v2271
    %v2273 = vrot.slane %v2236, %v2272
    %v2274 = vlaneseq
    %v2275 = vshrl.u32 %v2274, 7
    %v2276 = vsub.s32 0, %v2275
    %v2277 = vrot.slane %v2237, %v2276
    %v2278 = vlaneseq
    %v2279 = vshrl.u32 %v2278, 7
    %v2280 = vsub.s32 0, %v2279
    %v2281 = vrot.slane %v2238, %v2280
    %v2286 = vmul.f32 %v2269, %v2163
    %v2287 = vmul.f32 %v2273, %v2168
    %v2288 = vmul.f32 %v2277, %v2173
    %v2289 = vmul.f32 %v2281, %v2178
    %v2290 = vsub.f32 1.0, %v2286
    %v2291 = vsub.f32 1.0, %v2287
    %v2292 = vsub.f32 1.0, %v2288
    %v2293 = vsub.f32 1.0, %v2289
    %v2294 = vmul.f32 %v2151, %v2290
    %v2295 = vmul.f32 %v2152, %v2291
    %v2296 = vmul.f32 %v2153, %v2292
    %v2297 = vmul.f32 %v2154, %v2293
    %v2298 = vlaneseq
    %v2299 = vshrl.u32 %v2298, 7
    %v2300 = vsub.s32 0, %v2299
    %v2301 = vrot.slane %v2256, %v2300
    %v2302 = vlaneseq
    %v2303 = vshrl.u32 %v2302, 7
    %v2304 = vsub.s32 0, %v2303
    %v2305 = vrot.slane %v2263, %v2304
    %v2306 = vlaneseq
    %v2307 = vshrl.u32 %v2306, 7
    %v2308 = vsub.s32 0, %v2307
    %v2309 = vrot.slane %v2264, %v2308
    %v2310 = vlaneseq
    %v2311 = vshrl.u32 %v2310, 7
    %v2312 = vsub.s32 0, %v2311
    %v2313 = vrot.slane %v2265, %v2312
    %v2318 = vmul.f32 %v2301, %v2163
    %v2319 = vmul.f32 %v2305, %v2168
    %v2320 = vmul.f32 %v2309, %v2173
    %v2321 = vmul.f32 %v2313, %v2178
    %v2322 = vadd.f32 %v2294, %v2318
    %v2323 = vadd.f32 %v2295, %v2319
    %v2324 = vadd.f32 %v2296, %v2320
    %v2325 = vadd.f32 %v2297, %v2321
    %v2330 = vrot.slane %v2209, 7
    %v2331 = vsel %vm1800, %v2330, %v2208
    %v2332 = vsel %vm1802, %v2330, %v2331
    %v2333 = vrot.slane %v2210, 6
    %v2334 = vsel %vm1805, %v2333, %v2332
    %v2335 = vsel %vm1807, %v2333, %v2334
    %v2336 = vrot.slane %v2211, 5
    %v2337 = vsel %vm1810, %v2336, %v2335
    %v2338 = vsel %vm1812, %v2336, %v2337
    %2340 = vst [vmem:[#allocation9 + $0x8] sm:$0xf] %v2338
    %v2341 = vld [vmem:[#allocation7] sm:$0xf]
    %v2344 = vunpack.c.l.s4 1966171168
    %v2345 = vunpack.c.0.s8 %v2344
    %v2346 = vlaneseq
    %v2347 = vshrl.u32 %v2346, 7
    %v2348 = vsub.s32 %v2345, %v2347
    %v2349 = vrot.slane %v2341, %v2348
    %v2350 = vcombine.high %v2349, %v2349
    %v2352 = vunpack.c.l.s4 1966171168
    %v2353 = vunpack.c.0.s8 %v2352
    %v2354 = vlaneseq
    %v2355 = vshrl.u32 %v2354, 7
    %v2356 = vsub.s32 %v2353, %v2355
    %v2357 = vrot.slane %v2349, %v2356
    %v2359 = vunpack.c.l.s4 1966171168
    %v2360 = vunpack.c.0.s8 %v2359
    %v2361 = vlaneseq
    %v2362 = vshrl.u32 %v2361, 7
    %v2363 = vsub.s32 %v2360, %v2362
    %v2364 = vrot.slane %v2350, %v2363
    %v2365 = vcombine.high %v2357, %v2357
    %v2366 = vcombine.high %v2364, %v2364
    %v2367 = vld [vmem:[#allocation8] sm:$0xf]
    %v2370 = vunpack.c.l.s4 1966171168
    %v2371 = vunpack.c.0.s8 %v2370
    %v2372 = vlaneseq
    %v2373 = vshrl.u32 %v2372, 7
    %v2374 = vsub.s32 %v2371, %v2373
    %v2375 = vrot.slane %v2367, %v2374
    %v2376 = vcombine.high %v2375, %v2375
    %v2378 = vunpack.c.l.s4 1966171168
    %v2379 = vunpack.c.0.s8 %v2378
    %v2380 = vlaneseq
    %v2381 = vshrl.u32 %v2380, 7
    %v2382 = vsub.s32 %v2379, %v2381
    %v2383 = vrot.slane %v2375, %v2382
    %v2385 = vunpack.c.l.s4 1966171168
    %v2386 = vunpack.c.0.s8 %v2385
    %v2387 = vlaneseq
    %v2388 = vshrl.u32 %v2387, 7
    %v2389 = vsub.s32 %v2386, %v2388
    %v2390 = vrot.slane %v2376, %v2389
    %v2391 = vcombine.high %v2383, %v2383
    %v2392 = vcombine.high %v2390, %v2390
    %v2393 = vlaneseq
    %v2394 = vshrl.u32 %v2393, 7
    %v2395 = vsub.s32 0, %v2394
    %v2396 = vrot.slane %v2357, %v2395
    %v2397 = vlaneseq
    %v2398 = vshrl.u32 %v2397, 7
    %v2399 = vsub.s32 0, %v2398
    %v2400 = vrot.slane %v2364, %v2399
    %v2401 = vlaneseq
    %v2402 = vshrl.u32 %v2401, 7
    %v2403 = vsub.s32 0, %v2402
    %v2404 = vrot.slane %v2365, %v2403
    %v2405 = vlaneseq
    %v2406 = vshrl.u32 %v2405, 7
    %v2407 = vsub.s32 0, %v2406
    %v2408 = vrot.slane %v2366, %v2407
    %v2413 = vmul.f32 %v2396, %v1750
    %v2414 = vmul.f32 %v2400, %v1755
    %v2415 = vmul.f32 %v2404, %v1760
    %v2416 = vmul.f32 %v2408, %v1765
    %v2417 = vsub.f32 1.0, %v2413
    %v2418 = vsub.f32 1.0, %v2414
    %v2419 = vsub.f32 1.0, %v2415
    %v2420 = vsub.f32 1.0, %v2416
    %v2421 = vmul.f32 %v2322, %v2417
    %v2422 = vmul.f32 %v2323, %v2418
    %v2423 = vmul.f32 %v2324, %v2419
    %v2424 = vmul.f32 %v2325, %v2420
    %v2425 = vlaneseq
    %v2426 = vshrl.u32 %v2425, 7
    %v2427 = vsub.s32 0, %v2426
    %v2428 = vrot.slane %v2383, %v2427
    %v2429 = vlaneseq
    %v2430 = vshrl.u32 %v2429, 7
    %v2431 = vsub.s32 0, %v2430
    %v2432 = vrot.slane %v2390, %v2431
    %v2433 = vlaneseq
    %v2434 = vshrl.u32 %v2433, 7
    %v2435 = vsub.s32 0, %v2434
    %v2436 = vrot.slane %v2391, %v2435
    %v2437 = vlaneseq
    %v2438 = vshrl.u32 %v2437, 7
    %v2439 = vsub.s32 0, %v2438
    %v2440 = vrot.slane %v2392, %v2439
    %v2445 = vmul.f32 %v2428, %v1750
    %v2446 = vmul.f32 %v2432, %v1755
    %v2447 = vmul.f32 %v2436, %v1760
    %v2448 = vmul.f32 %v2440, %v1765
    %v2449 = vadd.f32 %v2421, %v2445
    %v2450 = vadd.f32 %v2422, %v2446
    %v2451 = vadd.f32 %v2423, %v2447
    %v2452 = vadd.f32 %v2424, %v2448
    %s2453 = scalar_lea.vmem [#allocation3], 32
    %v2454 = vld [vmem:[%s2453] sm:$0xff]
    %v2455 = vld [vmem:[%s2453 + $0x8] sm:$0xff]
    %v2456 = vld [vmem:[%s2453 + $0x10] sm:$0xff]
    %v2457 = vld [vmem:[%s2453 + $0x18] sm:$0xff]
    %2459 = vset.pattern.permute.xlu0 0
    %2460 = vperm.xlu0 %2459, %v2454
    %v2461 = vpop.permute.xlu0 %2460
    %2464 = vset.pattern.permute.xlu0 0
    %2465 = vperm.xlu0 %2464, %v2455
    %v2466 = vpop.permute.xlu0 %2465
    %2469 = vset.pattern.permute.xlu0 0
    %2470 = vperm.xlu0 %2469, %v2456
    %v2471 = vpop.permute.xlu0 %2470
    %2474 = vset.pattern.permute.xlu0 0
    %2475 = vperm.xlu0 %2474, %v2457
    %v2476 = vpop.permute.xlu0 %2475
    %v2478 = vmul.f32 %v2461, %v2449
    %v2479 = vmul.f32 %v2466, %v2450
    %v2480 = vmul.f32 %v2471, %v2451
    %v2481 = vmul.f32 %v2476, %v2452
    %v2482 = vrot.slane %v2478, 4
    %v2483 = vadd.f32 %v2478, %v2482
    %v2484 = vrot.slane %v2483, 2
    %v2485 = vadd.f32 %v2483, %v2484
    %v2486 = vrot.slane %v2485, 1
    %v2487 = vadd.f32 %v2485, %v2486
    %v2488 = vrot.slane %v2479, 4
    %v2489 = vadd.f32 %v2479, %v2488
    %v2490 = vrot.slane %v2489, 2
    %v2491 = vadd.f32 %v2489, %v2490
    %v2492 = vrot.slane %v2491, 1
    %v2493 = vadd.f32 %v2491, %v2492
    %v2494 = vrot.slane %v2480, 4
    %v2495 = vadd.f32 %v2480, %v2494
    %v2496 = vrot.slane %v2495, 2
    %v2497 = vadd.f32 %v2495, %v2496
    %v2498 = vrot.slane %v2497, 1
    %v2499 = vadd.f32 %v2497, %v2498
    %v2500 = vrot.slane %v2481, 4
    %v2501 = vadd.f32 %v2481, %v2500
    %v2502 = vrot.slane %v2501, 2
    %v2503 = vadd.f32 %v2501, %v2502
    %v2504 = vrot.slane %v2503, 1
    %v2505 = vadd.f32 %v2503, %v2504
    %v2510 = vrot.slane %v2493, 7
    %v2511 = vsel %vm1800, %v2510, %v2487
    %v2512 = vsel %vm1802, %v2510, %v2511
    %v2513 = vrot.slane %v2499, 6
    %v2514 = vsel %vm1805, %v2513, %v2512
    %v2515 = vsel %vm1807, %v2513, %v2514
    %v2516 = vrot.slane %v2505, 5
    %v2517 = vsel %vm1810, %v2516, %v2515
    %v2518 = vsel %vm1812, %v2516, %v2517
    %s2520 = scalar_lea.vmem [#allocation9], 16
    %2521 = vst [vmem:[%s2520] sm:$0xf] %v2518
    %s2522 = scalar_lea.vmem [#allocation4], 96
    %v2523 = vld [vmem:[%s2522] sm:$0xff]
    %v2524 = vld [vmem:[%s2522 + $0x8] sm:$0xff]
    %v2525 = vld [vmem:[%s2522 + $0x10] sm:$0xff]
    %v2526 = vld [vmem:[%s2522 + $0x18] sm:$0xff]
    %2528 = vset.pattern.permute.xlu0 0
    %2529 = vperm.xlu0 %2528, %v2523
    %v2530 = vpop.permute.xlu0 %2529
    %2533 = vset.pattern.permute.xlu0 0
    %2534 = vperm.xlu0 %2533, %v2524
    %v2535 = vpop.permute.xlu0 %2534
    %2538 = vset.pattern.permute.xlu0 0
    %2539 = vperm.xlu0 %2538, %v2525
    %v2540 = vpop.permute.xlu0 %2539
    %2543 = vset.pattern.permute.xlu0 0
    %2544 = vperm.xlu0 %2543, %v2526
    %v2545 = vpop.permute.xlu0 %2544
    %v2547 = vmul.f32 %v2530, %v2449
    %v2548 = vmul.f32 %v2535, %v2450
    %v2549 = vmul.f32 %v2540, %v2451
    %v2550 = vmul.f32 %v2545, %v2452
    %v2551 = vrot.slane %v2547, 4
    %v2552 = vadd.f32 %v2547, %v2551
    %v2553 = vrot.slane %v2552, 2
    %v2554 = vadd.f32 %v2552, %v2553
    %v2555 = vrot.slane %v2554, 1
    %v2556 = vadd.f32 %v2554, %v2555
    %v2557 = vrot.slane %v2548, 4
    %v2558 = vadd.f32 %v2548, %v2557
    %v2559 = vrot.slane %v2558, 2
    %v2560 = vadd.f32 %v2558, %v2559
    %v2561 = vrot.slane %v2560, 1
    %v2562 = vadd.f32 %v2560, %v2561
    %v2563 = vrot.slane %v2549, 4
    %v2564 = vadd.f32 %v2549, %v2563
    %v2565 = vrot.slane %v2564, 2
    %v2566 = vadd.f32 %v2564, %v2565
    %v2567 = vrot.slane %v2566, 1
    %v2568 = vadd.f32 %v2566, %v2567
    %v2569 = vrot.slane %v2550, 4
    %v2570 = vadd.f32 %v2550, %v2569
    %v2571 = vrot.slane %v2570, 2
    %v2572 = vadd.f32 %v2570, %v2571
    %v2573 = vrot.slane %v2572, 1
    %v2574 = vadd.f32 %v2572, %v2573
    %v2575 = vadd.f32 %v2556, 0.0
    %v2576 = vadd.f32 %v2562, 0.0
    %v2577 = vadd.f32 %v2568, 0.0
    %v2578 = vadd.f32 %v2574, 0.0
    %s2579 = scalar_lea.vmem [#allocation5], 12
    %v2580 = vld [vmem:[%s2579] sm:$0xf]
    %v2583 = vunpack.c.l.s4 1966171168
    %v2584 = vunpack.c.0.s8 %v2583
    %v2585 = vlaneseq
    %v2586 = vshrl.u32 %v2585, 7
    %v2587 = vsub.s32 %v2584, %v2586
    %v2588 = vrot.slane %v2580, %v2587
    %v2589 = vcombine.high %v2588, %v2588
    %v2591 = vunpack.c.l.s4 1966171168
    %v2592 = vunpack.c.0.s8 %v2591
    %v2593 = vlaneseq
    %v2594 = vshrl.u32 %v2593, 7
    %v2595 = vsub.s32 %v2592, %v2594
    %v2596 = vrot.slane %v2588, %v2595
    %v2598 = vunpack.c.l.s4 1966171168
    %v2599 = vunpack.c.0.s8 %v2598
    %v2600 = vlaneseq
    %v2601 = vshrl.u32 %v2600, 7
    %v2602 = vsub.s32 %v2599, %v2601
    %v2603 = vrot.slane %v2589, %v2602
    %v2604 = vcombine.high %v2596, %v2596
    %v2605 = vcombine.high %v2603, %v2603
    %s2606 = scalar_lea.vmem [#allocation6], 12
    %v2607 = vld [vmem:[%s2606] sm:$0xf]
    %v2610 = vunpack.c.l.s4 1966171168
    %v2611 = vunpack.c.0.s8 %v2610
    %v2612 = vlaneseq
    %v2613 = vshrl.u32 %v2612, 7
    %v2614 = vsub.s32 %v2611, %v2613
    %v2615 = vrot.slane %v2607, %v2614
    %v2616 = vcombine.high %v2615, %v2615
    %v2618 = vunpack.c.l.s4 1966171168
    %v2619 = vunpack.c.0.s8 %v2618
    %v2620 = vlaneseq
    %v2621 = vshrl.u32 %v2620, 7
    %v2622 = vsub.s32 %v2619, %v2621
    %v2623 = vrot.slane %v2615, %v2622
    %v2625 = vunpack.c.l.s4 1966171168
    %v2626 = vunpack.c.0.s8 %v2625
    %v2627 = vlaneseq
    %v2628 = vshrl.u32 %v2627, 7
    %v2629 = vsub.s32 %v2626, %v2628
    %v2630 = vrot.slane %v2616, %v2629
    %v2631 = vcombine.high %v2623, %v2623
    %v2632 = vcombine.high %v2630, %v2630
    %v2633 = vlaneseq
    %v2634 = vshrl.u32 %v2633, 7
    %v2635 = vsub.s32 0, %v2634
    %v2636 = vrot.slane %v2596, %v2635
    %v2637 = vlaneseq
    %v2638 = vshrl.u32 %v2637, 7
    %v2639 = vsub.s32 0, %v2638
    %v2640 = vrot.slane %v2603, %v2639
    %v2641 = vlaneseq
    %v2642 = vshrl.u32 %v2641, 7
    %v2643 = vsub.s32 0, %v2642
    %v2644 = vrot.slane %v2604, %v2643
    %v2645 = vlaneseq
    %v2646 = vshrl.u32 %v2645, 7
    %v2647 = vsub.s32 0, %v2646
    %v2648 = vrot.slane %v2605, %v2647
    %v2653 = vmul.f32 %v2636, %v2530
    %v2654 = vmul.f32 %v2640, %v2535
    %v2655 = vmul.f32 %v2644, %v2540
    %v2656 = vmul.f32 %v2648, %v2545
    %v2657 = vsub.f32 1.0, %v2653
    %v2658 = vsub.f32 1.0, %v2654
    %v2659 = vsub.f32 1.0, %v2655
    %v2660 = vsub.f32 1.0, %v2656
    %v2661 = vmul.f32 %v2449, %v2657
    %v2662 = vmul.f32 %v2450, %v2658
    %v2663 = vmul.f32 %v2451, %v2659
    %v2664 = vmul.f32 %v2452, %v2660
    %v2665 = vlaneseq
    %v2666 = vshrl.u32 %v2665, 7
    %v2667 = vsub.s32 0, %v2666
    %v2668 = vrot.slane %v2623, %v2667
    %v2669 = vlaneseq
    %v2670 = vshrl.u32 %v2669, 7
    %v2671 = vsub.s32 0, %v2670
    %v2672 = vrot.slane %v2630, %v2671
    %v2673 = vlaneseq
    %v2674 = vshrl.u32 %v2673, 7
    %v2675 = vsub.s32 0, %v2674
    %v2676 = vrot.slane %v2631, %v2675
    %v2677 = vlaneseq
    %v2678 = vshrl.u32 %v2677, 7
    %v2679 = vsub.s32 0, %v2678
    %v2680 = vrot.slane %v2632, %v2679
    %v2685 = vmul.f32 %v2668, %v2530
    %v2686 = vmul.f32 %v2672, %v2535
    %v2687 = vmul.f32 %v2676, %v2540
    %v2688 = vmul.f32 %v2680, %v2545
    %v2689 = vadd.f32 %v2661, %v2685
    %v2690 = vadd.f32 %v2662, %v2686
    %v2691 = vadd.f32 %v2663, %v2687
    %v2692 = vadd.f32 %v2664, %v2688
    %s2693 = scalar_lea.vmem [#allocation4], 128
    %v2694 = vld [vmem:[%s2693] sm:$0xff]
    %v2695 = vld [vmem:[%s2693 + $0x8] sm:$0xff]
    %v2696 = vld [vmem:[%s2693 + $0x10] sm:$0xff]
    %v2697 = vld [vmem:[%s2693 + $0x18] sm:$0xff]
    %2699 = vset.pattern.permute.xlu0 0
    %2700 = vperm.xlu0 %2699, %v2694
    %v2701 = vpop.permute.xlu0 %2700
    %2704 = vset.pattern.permute.xlu0 0
    %2705 = vperm.xlu0 %2704, %v2695
    %v2706 = vpop.permute.xlu0 %2705
    %2709 = vset.pattern.permute.xlu0 0
    %2710 = vperm.xlu0 %2709, %v2696
    %v2711 = vpop.permute.xlu0 %2710
    %2714 = vset.pattern.permute.xlu0 0
    %2715 = vperm.xlu0 %2714, %v2697
    %v2716 = vpop.permute.xlu0 %2715
    %v2718 = vmul.f32 %v2701, %v2689
    %v2719 = vmul.f32 %v2706, %v2690
    %v2720 = vmul.f32 %v2711, %v2691
    %v2721 = vmul.f32 %v2716, %v2692
    %v2722 = vrot.slane %v2718, 4
    %v2723 = vadd.f32 %v2718, %v2722
    %v2724 = vrot.slane %v2723, 2
    %v2725 = vadd.f32 %v2723, %v2724
    %v2726 = vrot.slane %v2725, 1
    %v2727 = vadd.f32 %v2725, %v2726
    %v2728 = vrot.slane %v2719, 4
    %v2729 = vadd.f32 %v2719, %v2728
    %v2730 = vrot.slane %v2729, 2
    %v2731 = vadd.f32 %v2729, %v2730
    %v2732 = vrot.slane %v2731, 1
    %v2733 = vadd.f32 %v2731, %v2732
    %v2734 = vrot.slane %v2720, 4
    %v2735 = vadd.f32 %v2720, %v2734
    %v2736 = vrot.slane %v2735, 2
    %v2737 = vadd.f32 %v2735, %v2736
    %v2738 = vrot.slane %v2737, 1
    %v2739 = vadd.f32 %v2737, %v2738
    %v2740 = vrot.slane %v2721, 4
    %v2741 = vadd.f32 %v2721, %v2740
    %v2742 = vrot.slane %v2741, 2
    %v2743 = vadd.f32 %v2741, %v2742
    %v2744 = vrot.slane %v2743, 1
    %v2745 = vadd.f32 %v2743, %v2744
    %v2746 = vadd.f32 %v2575, %v2727
    %v2747 = vadd.f32 %v2576, %v2733
    %v2748 = vadd.f32 %v2577, %v2739
    %v2749 = vadd.f32 %v2578, %v2745
    %s2750 = scalar_lea.vmem [#allocation5], 16
    %v2751 = vld [vmem:[%s2750] sm:$0xf]
    %v2754 = vunpack.c.l.s4 1966171168
    %v2755 = vunpack.c.0.s8 %v2754
    %v2756 = vlaneseq
    %v2757 = vshrl.u32 %v2756, 7
    %v2758 = vsub.s32 %v2755, %v2757
    %v2759 = vrot.slane %v2751, %v2758
    %v2760 = vcombine.high %v2759, %v2759
    %v2762 = vunpack.c.l.s4 1966171168
    %v2763 = vunpack.c.0.s8 %v2762
    %v2764 = vlaneseq
    %v2765 = vshrl.u32 %v2764, 7
    %v2766 = vsub.s32 %v2763, %v2765
    %v2767 = vrot.slane %v2759, %v2766
    %v2769 = vunpack.c.l.s4 1966171168
    %v2770 = vunpack.c.0.s8 %v2769
    %v2771 = vlaneseq
    %v2772 = vshrl.u32 %v2771, 7
    %v2773 = vsub.s32 %v2770, %v2772
    %v2774 = vrot.slane %v2760, %v2773
    %v2775 = vcombine.high %v2767, %v2767
    %v2776 = vcombine.high %v2774, %v2774
    %s2777 = scalar_lea.vmem [#allocation6], 16
    %v2778 = vld [vmem:[%s2777] sm:$0xf]
    %v2781 = vunpack.c.l.s4 1966171168
    %v2782 = vunpack.c.0.s8 %v2781
    %v2783 = vlaneseq
    %v2784 = vshrl.u32 %v2783, 7
    %v2785 = vsub.s32 %v2782, %v2784
    %v2786 = vrot.slane %v2778, %v2785
    %v2787 = vcombine.high %v2786, %v2786
    %v2789 = vunpack.c.l.s4 1966171168
    %v2790 = vunpack.c.0.s8 %v2789
    %v2791 = vlaneseq
    %v2792 = vshrl.u32 %v2791, 7
    %v2793 = vsub.s32 %v2790, %v2792
    %v2794 = vrot.slane %v2786, %v2793
    %v2796 = vunpack.c.l.s4 1966171168
    %v2797 = vunpack.c.0.s8 %v2796
    %v2798 = vlaneseq
    %v2799 = vshrl.u32 %v2798, 7
    %v2800 = vsub.s32 %v2797, %v2799
    %v2801 = vrot.slane %v2787, %v2800
    %v2802 = vcombine.high %v2794, %v2794
    %v2803 = vcombine.high %v2801, %v2801
    %v2804 = vlaneseq
    %v2805 = vshrl.u32 %v2804, 7
    %v2806 = vsub.s32 0, %v2805
    %v2807 = vrot.slane %v2767, %v2806
    %v2808 = vlaneseq
    %v2809 = vshrl.u32 %v2808, 7
    %v2810 = vsub.s32 0, %v2809
    %v2811 = vrot.slane %v2774, %v2810
    %v2812 = vlaneseq
    %v2813 = vshrl.u32 %v2812, 7
    %v2814 = vsub.s32 0, %v2813
    %v2815 = vrot.slane %v2775, %v2814
    %v2816 = vlaneseq
    %v2817 = vshrl.u32 %v2816, 7
    %v2818 = vsub.s32 0, %v2817
    %v2819 = vrot.slane %v2776, %v2818
    %v2824 = vmul.f32 %v2807, %v2701
    %v2825 = vmul.f32 %v2811, %v2706
    %v2826 = vmul.f32 %v2815, %v2711
    %v2827 = vmul.f32 %v2819, %v2716
    %v2828 = vsub.f32 1.0, %v2824
    %v2829 = vsub.f32 1.0, %v2825
    %v2830 = vsub.f32 1.0, %v2826
    %v2831 = vsub.f32 1.0, %v2827
    %v2832 = vmul.f32 %v2689, %v2828
    %v2833 = vmul.f32 %v2690, %v2829
    %v2834 = vmul.f32 %v2691, %v2830
    %v2835 = vmul.f32 %v2692, %v2831
    %v2836 = vlaneseq
    %v2837 = vshrl.u32 %v2836, 7
    %v2838 = vsub.s32 0, %v2837
    %v2839 = vrot.slane %v2794, %v2838
    %v2840 = vlaneseq
    %v2841 = vshrl.u32 %v2840, 7
    %v2842 = vsub.s32 0, %v2841
    %v2843 = vrot.slane %v2801, %v2842
    %v2844 = vlaneseq
    %v2845 = vshrl.u32 %v2844, 7
    %v2846 = vsub.s32 0, %v2845
    %v2847 = vrot.slane %v2802, %v2846
    %v2848 = vlaneseq
    %v2849 = vshrl.u32 %v2848, 7
    %v2850 = vsub.s32 0, %v2849
    %v2851 = vrot.slane %v2803, %v2850
    %v2856 = vmul.f32 %v2839, %v2701
    %v2857 = vmul.f32 %v2843, %v2706
    %v2858 = vmul.f32 %v2847, %v2711
    %v2859 = vmul.f32 %v2851, %v2716
    %v2860 = vadd.f32 %v2832, %v2856
    %v2861 = vadd.f32 %v2833, %v2857
    %v2862 = vadd.f32 %v2834, %v2858
    %v2863 = vadd.f32 %v2835, %v2859
    %s2864 = scalar_lea.vmem [#allocation4], 160
    %v2865 = vld [vmem:[%s2864] sm:$0xff]
    %v2866 = vld [vmem:[%s2864 + $0x8] sm:$0xff]
    %v2867 = vld [vmem:[%s2864 + $0x10] sm:$0xff]
    %v2868 = vld [vmem:[%s2864 + $0x18] sm:$0xff]
    %2870 = vset.pattern.permute.xlu0 0
    %2871 = vperm.xlu0 %2870, %v2865
    %v2872 = vpop.permute.xlu0 %2871
    %2875 = vset.pattern.permute.xlu0 0
    %2876 = vperm.xlu0 %2875, %v2866
    %v2877 = vpop.permute.xlu0 %2876
    %2880 = vset.pattern.permute.xlu0 0
    %2881 = vperm.xlu0 %2880, %v2867
    %v2882 = vpop.permute.xlu0 %2881
    %2885 = vset.pattern.permute.xlu0 0
    %2886 = vperm.xlu0 %2885, %v2868
    %v2887 = vpop.permute.xlu0 %2886
    %v2889 = vmul.f32 %v2872, %v2860
    %v2890 = vmul.f32 %v2877, %v2861
    %v2891 = vmul.f32 %v2882, %v2862
    %v2892 = vmul.f32 %v2887, %v2863
    %v2893 = vrot.slane %v2889, 4
    %v2894 = vadd.f32 %v2889, %v2893
    %v2895 = vrot.slane %v2894, 2
    %v2896 = vadd.f32 %v2894, %v2895
    %v2897 = vrot.slane %v2896, 1
    %v2898 = vadd.f32 %v2896, %v2897
    %v2899 = vrot.slane %v2890, 4
    %v2900 = vadd.f32 %v2890, %v2899
    %v2901 = vrot.slane %v2900, 2
    %v2902 = vadd.f32 %v2900, %v2901
    %v2903 = vrot.slane %v2902, 1
    %v2904 = vadd.f32 %v2902, %v2903
    %v2905 = vrot.slane %v2891, 4
    %v2906 = vadd.f32 %v2891, %v2905
    %v2907 = vrot.slane %v2906, 2
    %v2908 = vadd.f32 %v2906, %v2907
    %v2909 = vrot.slane %v2908, 1
    %v2910 = vadd.f32 %v2908, %v2909
    %v2911 = vrot.slane %v2892, 4
    %v2912 = vadd.f32 %v2892, %v2911
    %v2913 = vrot.slane %v2912, 2
    %v2914 = vadd.f32 %v2912, %v2913
    %v2915 = vrot.slane %v2914, 1
    %v2916 = vadd.f32 %v2914, %v2915
    %v2917 = vadd.f32 %v2746, %v2898
    %v2918 = vadd.f32 %v2747, %v2904
    %v2919 = vadd.f32 %v2748, %v2910
    %v2920 = vadd.f32 %v2749, %v2916
    %s2921 = scalar_lea.vmem [#allocation5], 20
    %v2922 = vld [vmem:[%s2921] sm:$0xf]
    %v2925 = vunpack.c.l.s4 1966171168
    %v2926 = vunpack.c.0.s8 %v2925
    %v2927 = vlaneseq
    %v2928 = vshrl.u32 %v2927, 7
    %v2929 = vsub.s32 %v2926, %v2928
    %v2930 = vrot.slane %v2922, %v2929
    %v2931 = vcombine.high %v2930, %v2930
    %v2933 = vunpack.c.l.s4 1966171168
    %v2934 = vunpack.c.0.s8 %v2933
    %v2935 = vlaneseq
    %v2936 = vshrl.u32 %v2935, 7
    %v2937 = vsub.s32 %v2934, %v2936
    %v2938 = vrot.slane %v2930, %v2937
    %v2940 = vunpack.c.l.s4 1966171168
    %v2941 = vunpack.c.0.s8 %v2940
    %v2942 = vlaneseq
    %v2943 = vshrl.u32 %v2942, 7
    %v2944 = vsub.s32 %v2941, %v2943
    %v2945 = vrot.slane %v2931, %v2944
    %v2946 = vcombine.high %v2938, %v2938
    %v2947 = vcombine.high %v2945, %v2945
    %s2948 = scalar_lea.vmem [#allocation6], 20
    %v2949 = vld [vmem:[%s2948] sm:$0xf]
    %v2952 = vunpack.c.l.s4 1966171168
    %v2953 = vunpack.c.0.s8 %v2952
    %v2954 = vlaneseq
    %v2955 = vshrl.u32 %v2954, 7
    %v2956 = vsub.s32 %v2953, %v2955
    %v2957 = vrot.slane %v2949, %v2956
    %v2958 = vcombine.high %v2957, %v2957
    %v2960 = vunpack.c.l.s4 1966171168
    %v2961 = vunpack.c.0.s8 %v2960
    %v2962 = vlaneseq
    %v2963 = vshrl.u32 %v2962, 7
    %v2964 = vsub.s32 %v2961, %v2963
    %v2965 = vrot.slane %v2957, %v2964
    %v2967 = vunpack.c.l.s4 1966171168
    %v2968 = vunpack.c.0.s8 %v2967
    %v2969 = vlaneseq
    %v2970 = vshrl.u32 %v2969, 7
    %v2971 = vsub.s32 %v2968, %v2970
    %v2972 = vrot.slane %v2958, %v2971
    %v2973 = vcombine.high %v2965, %v2965
    %v2974 = vcombine.high %v2972, %v2972
    %v2975 = vlaneseq
    %v2976 = vshrl.u32 %v2975, 7
    %v2977 = vsub.s32 0, %v2976
    %v2978 = vrot.slane %v2938, %v2977
    %v2979 = vlaneseq
    %v2980 = vshrl.u32 %v2979, 7
    %v2981 = vsub.s32 0, %v2980
    %v2982 = vrot.slane %v2945, %v2981
    %v2983 = vlaneseq
    %v2984 = vshrl.u32 %v2983, 7
    %v2985 = vsub.s32 0, %v2984
    %v2986 = vrot.slane %v2946, %v2985
    %v2987 = vlaneseq
    %v2988 = vshrl.u32 %v2987, 7
    %v2989 = vsub.s32 0, %v2988
    %v2990 = vrot.slane %v2947, %v2989
    %v2995 = vmul.f32 %v2978, %v2872
    %v2996 = vmul.f32 %v2982, %v2877
    %v2997 = vmul.f32 %v2986, %v2882
    %v2998 = vmul.f32 %v2990, %v2887
    %v2999 = vsub.f32 1.0, %v2995
    %v3000 = vsub.f32 1.0, %v2996
    %v3001 = vsub.f32 1.0, %v2997
    %v3002 = vsub.f32 1.0, %v2998
    %v3003 = vmul.f32 %v2860, %v2999
    %v3004 = vmul.f32 %v2861, %v3000
    %v3005 = vmul.f32 %v2862, %v3001
    %v3006 = vmul.f32 %v2863, %v3002
    %v3007 = vlaneseq
    %v3008 = vshrl.u32 %v3007, 7
    %v3009 = vsub.s32 0, %v3008
    %v3010 = vrot.slane %v2965, %v3009
    %v3011 = vlaneseq
    %v3012 = vshrl.u32 %v3011, 7
    %v3013 = vsub.s32 0, %v3012
    %v3014 = vrot.slane %v2972, %v3013
    %v3015 = vlaneseq
    %v3016 = vshrl.u32 %v3015, 7
    %v3017 = vsub.s32 0, %v3016
    %v3018 = vrot.slane %v2973, %v3017
    %v3019 = vlaneseq
    %v3020 = vshrl.u32 %v3019, 7
    %v3021 = vsub.s32 0, %v3020
    %v3022 = vrot.slane %v2974, %v3021
    %v3027 = vmul.f32 %v3010, %v2872
    %v3028 = vmul.f32 %v3014, %v2877
    %v3029 = vmul.f32 %v3018, %v2882
    %v3030 = vmul.f32 %v3022, %v2887
    %v3031 = vadd.f32 %v3003, %v3027
    %v3032 = vadd.f32 %v3004, %v3028
    %v3033 = vadd.f32 %v3005, %v3029
    %v3034 = vadd.f32 %v3006, %v3030
    %v3039 = vrot.slane %v2918, 7
    %v3040 = vsel %vm1800, %v3039, %v2917
    %v3041 = vsel %vm1802, %v3039, %v3040
    %v3042 = vrot.slane %v2919, 6
    %v3043 = vsel %vm1805, %v3042, %v3041
    %v3044 = vsel %vm1807, %v3042, %v3043
    %v3045 = vrot.slane %v2920, 5
    %v3046 = vsel %vm1810, %v3045, %v3044
    %v3047 = vsel %vm1812, %v3045, %v3046
    %3049 = vst [vmem:[%s2520 + $0x8] sm:$0xf] %v3047
    %s3050 = scalar_lea.vmem [#allocation7], 4
    %v3051 = vld [vmem:[%s3050] sm:$0xf]
    %v3054 = vunpack.c.l.s4 1966171168
    %v3055 = vunpack.c.0.s8 %v3054
    %v3056 = vlaneseq
    %v3057 = vshrl.u32 %v3056, 7
    %v3058 = vsub.s32 %v3055, %v3057
    %v3059 = vrot.slane %v3051, %v3058
    %v3060 = vcombine.high %v3059, %v3059
    %v3062 = vunpack.c.l.s4 1966171168
    %v3063 = vunpack.c.0.s8 %v3062
    %v3064 = vlaneseq
    %v3065 = vshrl.u32 %v3064, 7
    %v3066 = vsub.s32 %v3063, %v3065
    %v3067 = vrot.slane %v3059, %v3066
    %v3069 = vunpack.c.l.s4 1966171168
    %v3070 = vunpack.c.0.s8 %v3069
    %v3071 = vlaneseq
    %v3072 = vshrl.u32 %v3071, 7
    %v3073 = vsub.s32 %v3070, %v3072
    %v3074 = vrot.slane %v3060, %v3073
    %v3075 = vcombine.high %v3067, %v3067
    %v3076 = vcombine.high %v3074, %v3074
    %s3077 = scalar_lea.vmem [#allocation8], 4
    %v3078 = vld [vmem:[%s3077] sm:$0xf]
    %v3081 = vunpack.c.l.s4 1966171168
    %v3082 = vunpack.c.0.s8 %v3081
    %v3083 = vlaneseq
    %v3084 = vshrl.u32 %v3083, 7
    %v3085 = vsub.s32 %v3082, %v3084
    %v3086 = vrot.slane %v3078, %v3085
    %v3087 = vcombine.high %v3086, %v3086
    %v3089 = vunpack.c.l.s4 1966171168
    %v3090 = vunpack.c.0.s8 %v3089
    %v3091 = vlaneseq
    %v3092 = vshrl.u32 %v3091, 7
    %v3093 = vsub.s32 %v3090, %v3092
    %v3094 = vrot.slane %v3086, %v3093
    %v3096 = vunpack.c.l.s4 1966171168
    %v3097 = vunpack.c.0.s8 %v3096
    %v3098 = vlaneseq
    %v3099 = vshrl.u32 %v3098, 7
    %v3100 = vsub.s32 %v3097, %v3099
    %v3101 = vrot.slane %v3087, %v3100
    %v3102 = vcombine.high %v3094, %v3094
    %v3103 = vcombine.high %v3101, %v3101
    %v3104 = vlaneseq
    %v3105 = vshrl.u32 %v3104, 7
    %v3106 = vsub.s32 0, %v3105
    %v3107 = vrot.slane %v3067, %v3106
    %v3108 = vlaneseq
    %v3109 = vshrl.u32 %v3108, 7
    %v3110 = vsub.s32 0, %v3109
    %v3111 = vrot.slane %v3074, %v3110
    %v3112 = vlaneseq
    %v3113 = vshrl.u32 %v3112, 7
    %v3114 = vsub.s32 0, %v3113
    %v3115 = vrot.slane %v3075, %v3114
    %v3116 = vlaneseq
    %v3117 = vshrl.u32 %v3116, 7
    %v3118 = vsub.s32 0, %v3117
    %v3119 = vrot.slane %v3076, %v3118
    %v3124 = vmul.f32 %v3107, %v2461
    %v3125 = vmul.f32 %v3111, %v2466
    %v3126 = vmul.f32 %v3115, %v2471
    %v3127 = vmul.f32 %v3119, %v2476
    %v3128 = vsub.f32 1.0, %v3124
    %v3129 = vsub.f32 1.0, %v3125
    %v3130 = vsub.f32 1.0, %v3126
    %v3131 = vsub.f32 1.0, %v3127
    %v3132 = vmul.f32 %v3031, %v3128
    %v3133 = vmul.f32 %v3032, %v3129
    %v3134 = vmul.f32 %v3033, %v3130
    %v3135 = vmul.f32 %v3034, %v3131
    %v3136 = vlaneseq
    %v3137 = vshrl.u32 %v3136, 7
    %v3138 = vsub.s32 0, %v3137
    %v3139 = vrot.slane %v3094, %v3138
    %v3140 = vlaneseq
    %v3141 = vshrl.u32 %v3140, 7
    %v3142 = vsub.s32 0, %v3141
    %v3143 = vrot.slane %v3101, %v3142
    %v3144 = vlaneseq
    %v3145 = vshrl.u32 %v3144, 7
    %v3146 = vsub.s32 0, %v3145
    %v3147 = vrot.slane %v3102, %v3146
    %v3148 = vlaneseq
    %v3149 = vshrl.u32 %v3148, 7
    %v3150 = vsub.s32 0, %v3149
    %v3151 = vrot.slane %v3103, %v3150
    %v3156 = vmul.f32 %v3139, %v2461
    %v3157 = vmul.f32 %v3143, %v2466
    %v3158 = vmul.f32 %v3147, %v2471
    %v3159 = vmul.f32 %v3151, %v2476
    %v3160 = vadd.f32 %v3132, %v3156
    %v3161 = vadd.f32 %v3133, %v3157
    %v3162 = vadd.f32 %v3134, %v3158
    %v3163 = vadd.f32 %v3135, %v3159
    %s3164 = scalar_lea.vmem [#allocation3], 64
    %v3165 = vld [vmem:[%s3164] sm:$0xff]
    %v3166 = vld [vmem:[%s3164 + $0x8] sm:$0xff]
    %v3167 = vld [vmem:[%s3164 + $0x10] sm:$0xff]
    %v3168 = vld [vmem:[%s3164 + $0x18] sm:$0xff]
    %3170 = vset.pattern.permute.xlu0 0
    %3171 = vperm.xlu0 %3170, %v3165
    %v3172 = vpop.permute.xlu0 %3171
    %3175 = vset.pattern.permute.xlu0 0
    %3176 = vperm.xlu0 %3175, %v3166
    %v3177 = vpop.permute.xlu0 %3176
    %3180 = vset.pattern.permute.xlu0 0
    %3181 = vperm.xlu0 %3180, %v3167
    %v3182 = vpop.permute.xlu0 %3181
    %3185 = vset.pattern.permute.xlu0 0
    %3186 = vperm.xlu0 %3185, %v3168
    %v3187 = vpop.permute.xlu0 %3186
    %v3189 = vmul.f32 %v3172, %v3160
    %v3190 = vmul.f32 %v3177, %v3161
    %v3191 = vmul.f32 %v3182, %v3162
    %v3192 = vmul.f32 %v3187, %v3163
    %v3193 = vrot.slane %v3189, 4
    %v3194 = vadd.f32 %v3189, %v3193
    %v3195 = vrot.slane %v3194, 2
    %v3196 = vadd.f32 %v3194, %v3195
    %v3197 = vrot.slane %v3196, 1
    %v3198 = vadd.f32 %v3196, %v3197
    %v3199 = vrot.slane %v3190, 4
    %v3200 = vadd.f32 %v3190, %v3199
    %v3201 = vrot.slane %v3200, 2
    %v3202 = vadd.f32 %v3200, %v3201
    %v3203 = vrot.slane %v3202, 1
    %v3204 = vadd.f32 %v3202, %v3203
    %v3205 = vrot.slane %v3191, 4
    %v3206 = vadd.f32 %v3191, %v3205
    %v3207 = vrot.slane %v3206, 2
    %v3208 = vadd.f32 %v3206, %v3207
    %v3209 = vrot.slane %v3208, 1
    %v3210 = vadd.f32 %v3208, %v3209
    %v3211 = vrot.slane %v3192, 4
    %v3212 = vadd.f32 %v3192, %v3211
    %v3213 = vrot.slane %v3212, 2
    %v3214 = vadd.f32 %v3212, %v3213
    %v3215 = vrot.slane %v3214, 1
    %v3216 = vadd.f32 %v3214, %v3215
    %v3221 = vrot.slane %v3204, 7
    %v3222 = vsel %vm1800, %v3221, %v3198
    %v3223 = vsel %vm1802, %v3221, %v3222
    %v3224 = vrot.slane %v3210, 6
    %v3225 = vsel %vm1805, %v3224, %v3223
    %v3226 = vsel %vm1807, %v3224, %v3225
    %v3227 = vrot.slane %v3216, 5
    %v3228 = vsel %vm1810, %v3227, %v3226
    %v3229 = vsel %vm1812, %v3227, %v3228
    %s3231 = scalar_lea.vmem [#allocation9], 32
    %3232 = vst [vmem:[%s3231] sm:$0xf] %v3229
    %s3233 = scalar_lea.vmem [#allocation4], 192
    %v3234 = vld [vmem:[%s3233] sm:$0xff]
    %v3235 = vld [vmem:[%s3233 + $0x8] sm:$0xff]
    %v3236 = vld [vmem:[%s3233 + $0x10] sm:$0xff]
    %v3237 = vld [vmem:[%s3233 + $0x18] sm:$0xff]
    %3239 = vset.pattern.permute.xlu0 0
    %3240 = vperm.xlu0 %3239, %v3234
    %v3241 = vpop.permute.xlu0 %3240
    %3244 = vset.pattern.permute.xlu0 0
    %3245 = vperm.xlu0 %3244, %v3235
    %v3246 = vpop.permute.xlu0 %3245
    %3249 = vset.pattern.permute.xlu0 0
    %3250 = vperm.xlu0 %3249, %v3236
    %v3251 = vpop.permute.xlu0 %3250
    %3254 = vset.pattern.permute.xlu0 0
    %3255 = vperm.xlu0 %3254, %v3237
    %v3256 = vpop.permute.xlu0 %3255
    %v3258 = vmul.f32 %v3241, %v3160
    %v3259 = vmul.f32 %v3246, %v3161
    %v3260 = vmul.f32 %v3251, %v3162
    %v3261 = vmul.f32 %v3256, %v3163
    %v3262 = vrot.slane %v3258, 4
    %v3263 = vadd.f32 %v3258, %v3262
    %v3264 = vrot.slane %v3263, 2
    %v3265 = vadd.f32 %v3263, %v3264
    %v3266 = vrot.slane %v3265, 1
    %v3267 = vadd.f32 %v3265, %v3266
    %v3268 = vrot.slane %v3259, 4
    %v3269 = vadd.f32 %v3259, %v3268
    %v3270 = vrot.slane %v3269, 2
    %v3271 = vadd.f32 %v3269, %v3270
    %v3272 = vrot.slane %v3271, 1
    %v3273 = vadd.f32 %v3271, %v3272
    %v3274 = vrot.slane %v3260, 4
    %v3275 = vadd.f32 %v3260, %v3274
    %v3276 = vrot.slane %v3275, 2
    %v3277 = vadd.f32 %v3275, %v3276
    %v3278 = vrot.slane %v3277, 1
    %v3279 = vadd.f32 %v3277, %v3278
    %v3280 = vrot.slane %v3261, 4
    %v3281 = vadd.f32 %v3261, %v3280
    %v3282 = vrot.slane %v3281, 2
    %v3283 = vadd.f32 %v3281, %v3282
    %v3284 = vrot.slane %v3283, 1
    %v3285 = vadd.f32 %v3283, %v3284
    %v3286 = vadd.f32 %v3267, 0.0
    %v3287 = vadd.f32 %v3273, 0.0
    %v3288 = vadd.f32 %v3279, 0.0
    %v3289 = vadd.f32 %v3285, 0.0
    %s3290 = scalar_lea.vmem [#allocation5], 24
    %v3291 = vld [vmem:[%s3290] sm:$0xf]
    %v3294 = vunpack.c.l.s4 1966171168
    %v3295 = vunpack.c.0.s8 %v3294
    %v3296 = vlaneseq
    %v3297 = vshrl.u32 %v3296, 7
    %v3298 = vsub.s32 %v3295, %v3297
    %v3299 = vrot.slane %v3291, %v3298
    %v3300 = vcombine.high %v3299, %v3299
    %v3302 = vunpack.c.l.s4 1966171168
    %v3303 = vunpack.c.0.s8 %v3302
    %v3304 = vlaneseq
    %v3305 = vshrl.u32 %v3304, 7
    %v3306 = vsub.s32 %v3303, %v3305
    %v3307 = vrot.slane %v3299, %v3306
    %v3309 = vunpack.c.l.s4 1966171168
    %v3310 = vunpack.c.0.s8 %v3309
    %v3311 = vlaneseq
    %v3312 = vshrl.u32 %v3311, 7
    %v3313 = vsub.s32 %v3310, %v3312
    %v3314 = vrot.slane %v3300, %v3313
    %v3315 = vcombine.high %v3307, %v3307
    %v3316 = vcombine.high %v3314, %v3314
    %s3317 = scalar_lea.vmem [#allocation6], 24
    %v3318 = vld [vmem:[%s3317] sm:$0xf]
    %v3321 = vunpack.c.l.s4 1966171168
    %v3322 = vunpack.c.0.s8 %v3321
    %v3323 = vlaneseq
    %v3324 = vshrl.u32 %v3323, 7
    %v3325 = vsub.s32 %v3322, %v3324
    %v3326 = vrot.slane %v3318, %v3325
    %v3327 = vcombine.high %v3326, %v3326
    %v3329 = vunpack.c.l.s4 1966171168
    %v3330 = vunpack.c.0.s8 %v3329
    %v3331 = vlaneseq
    %v3332 = vshrl.u32 %v3331, 7
    %v3333 = vsub.s32 %v3330, %v3332
    %v3334 = vrot.slane %v3326, %v3333
    %v3336 = vunpack.c.l.s4 1966171168
    %v3337 = vunpack.c.0.s8 %v3336
    %v3338 = vlaneseq
    %v3339 = vshrl.u32 %v3338, 7
    %v3340 = vsub.s32 %v3337, %v3339
    %v3341 = vrot.slane %v3327, %v3340
    %v3342 = vcombine.high %v3334, %v3334
    %v3343 = vcombine.high %v3341, %v3341
    %v3344 = vlaneseq
    %v3345 = vshrl.u32 %v3344, 7
    %v3346 = vsub.s32 0, %v3345
    %v3347 = vrot.slane %v3307, %v3346
    %v3348 = vlaneseq
    %v3349 = vshrl.u32 %v3348, 7
    %v3350 = vsub.s32 0, %v3349
    %v3351 = vrot.slane %v3314, %v3350
    %v3352 = vlaneseq
    %v3353 = vshrl.u32 %v3352, 7
    %v3354 = vsub.s32 0, %v3353
    %v3355 = vrot.slane %v3315, %v3354
    %v3356 = vlaneseq
    %v3357 = vshrl.u32 %v3356, 7
    %v3358 = vsub.s32 0, %v3357
    %v3359 = vrot.slane %v3316, %v3358
    %v3364 = vmul.f32 %v3347, %v3241
    %v3365 = vmul.f32 %v3351, %v3246
    %v3366 = vmul.f32 %v3355, %v3251
    %v3367 = vmul.f32 %v3359, %v3256
    %v3368 = vsub.f32 1.0, %v3364
    %v3369 = vsub.f32 1.0, %v3365
    %v3370 = vsub.f32 1.0, %v3366
    %v3371 = vsub.f32 1.0, %v3367
    %v3372 = vmul.f32 %v3160, %v3368
    %v3373 = vmul.f32 %v3161, %v3369
    %v3374 = vmul.f32 %v3162, %v3370
    %v3375 = vmul.f32 %v3163, %v3371
    %v3376 = vlaneseq
    %v3377 = vshrl.u32 %v3376, 7
    %v3378 = vsub.s32 0, %v3377
    %v3379 = vrot.slane %v3334, %v3378
    %v3380 = vlaneseq
    %v3381 = vshrl.u32 %v3380, 7
    %v3382 = vsub.s32 0, %v3381
    %v3383 = vrot.slane %v3341, %v3382
    %v3384 = vlaneseq
    %v3385 = vshrl.u32 %v3384, 7
    %v3386 = vsub.s32 0, %v3385
    %v3387 = vrot.slane %v3342, %v3386
    %v3388 = vlaneseq
    %v3389 = vshrl.u32 %v3388, 7
    %v3390 = vsub.s32 0, %v3389
    %v3391 = vrot.slane %v3343, %v3390
    %v3396 = vmul.f32 %v3379, %v3241
    %v3397 = vmul.f32 %v3383, %v3246
    %v3398 = vmul.f32 %v3387, %v3251
    %v3399 = vmul.f32 %v3391, %v3256
    %v3400 = vadd.f32 %v3372, %v3396
    %v3401 = vadd.f32 %v3373, %v3397
    %v3402 = vadd.f32 %v3374, %v3398
    %v3403 = vadd.f32 %v3375, %v3399
    %s3404 = scalar_lea.vmem [#allocation4], 224
    %v3405 = vld [vmem:[%s3404] sm:$0xff]
    %v3406 = vld [vmem:[%s3404 + $0x8] sm:$0xff]
    %v3407 = vld [vmem:[%s3404 + $0x10] sm:$0xff]
    %v3408 = vld [vmem:[%s3404 + $0x18] sm:$0xff]
    %3410 = vset.pattern.permute.xlu0 0
    %3411 = vperm.xlu0 %3410, %v3405
    %v3412 = vpop.permute.xlu0 %3411
    %3415 = vset.pattern.permute.xlu0 0
    %3416 = vperm.xlu0 %3415, %v3406
    %v3417 = vpop.permute.xlu0 %3416
    %3420 = vset.pattern.permute.xlu0 0
    %3421 = vperm.xlu0 %3420, %v3407
    %v3422 = vpop.permute.xlu0 %3421
    %3425 = vset.pattern.permute.xlu0 0
    %3426 = vperm.xlu0 %3425, %v3408
    %v3427 = vpop.permute.xlu0 %3426
    %v3429 = vmul.f32 %v3412, %v3400
    %v3430 = vmul.f32 %v3417, %v3401
    %v3431 = vmul.f32 %v3422, %v3402
    %v3432 = vmul.f32 %v3427, %v3403
    %v3433 = vrot.slane %v3429, 4
    %v3434 = vadd.f32 %v3429, %v3433
    %v3435 = vrot.slane %v3434, 2
    %v3436 = vadd.f32 %v3434, %v3435
    %v3437 = vrot.slane %v3436, 1
    %v3438 = vadd.f32 %v3436, %v3437
    %v3439 = vrot.slane %v3430, 4
    %v3440 = vadd.f32 %v3430, %v3439
    %v3441 = vrot.slane %v3440, 2
    %v3442 = vadd.f32 %v3440, %v3441
    %v3443 = vrot.slane %v3442, 1
    %v3444 = vadd.f32 %v3442, %v3443
    %v3445 = vrot.slane %v3431, 4
    %v3446 = vadd.f32 %v3431, %v3445
    %v3447 = vrot.slane %v3446, 2
    %v3448 = vadd.f32 %v3446, %v3447
    %v3449 = vrot.slane %v3448, 1
    %v3450 = vadd.f32 %v3448, %v3449
    %v3451 = vrot.slane %v3432, 4
    %v3452 = vadd.f32 %v3432, %v3451
    %v3453 = vrot.slane %v3452, 2
    %v3454 = vadd.f32 %v3452, %v3453
    %v3455 = vrot.slane %v3454, 1
    %v3456 = vadd.f32 %v3454, %v3455
    %v3457 = vadd.f32 %v3286, %v3438
    %v3458 = vadd.f32 %v3287, %v3444
    %v3459 = vadd.f32 %v3288, %v3450
    %v3460 = vadd.f32 %v3289, %v3456
    %s3461 = scalar_lea.vmem [#allocation5], 28
    %v3462 = vld [vmem:[%s3461] sm:$0xf]
    %v3465 = vunpack.c.l.s4 1966171168
    %v3466 = vunpack.c.0.s8 %v3465
    %v3467 = vlaneseq
    %v3468 = vshrl.u32 %v3467, 7
    %v3469 = vsub.s32 %v3466, %v3468
    %v3470 = vrot.slane %v3462, %v3469
    %v3471 = vcombine.high %v3470, %v3470
    %v3473 = vunpack.c.l.s4 1966171168
    %v3474 = vunpack.c.0.s8 %v3473
    %v3475 = vlaneseq
    %v3476 = vshrl.u32 %v3475, 7
    %v3477 = vsub.s32 %v3474, %v3476
    %v3478 = vrot.slane %v3470, %v3477
    %v3480 = vunpack.c.l.s4 1966171168
    %v3481 = vunpack.c.0.s8 %v3480
    %v3482 = vlaneseq
    %v3483 = vshrl.u32 %v3482, 7
    %v3484 = vsub.s32 %v3481, %v3483
    %v3485 = vrot.slane %v3471, %v3484
    %v3486 = vcombine.high %v3478, %v3478
    %v3487 = vcombine.high %v3485, %v3485
    %s3488 = scalar_lea.vmem [#allocation6], 28
    %v3489 = vld [vmem:[%s3488] sm:$0xf]
    %v3492 = vunpack.c.l.s4 1966171168
    %v3493 = vunpack.c.0.s8 %v3492
    %v3494 = vlaneseq
    %v3495 = vshrl.u32 %v3494, 7
    %v3496 = vsub.s32 %v3493, %v3495
    %v3497 = vrot.slane %v3489, %v3496
    %v3498 = vcombine.high %v3497, %v3497
    %v3500 = vunpack.c.l.s4 1966171168
    %v3501 = vunpack.c.0.s8 %v3500
    %v3502 = vlaneseq
    %v3503 = vshrl.u32 %v3502, 7
    %v3504 = vsub.s32 %v3501, %v3503
    %v3505 = vrot.slane %v3497, %v3504
    %v3507 = vunpack.c.l.s4 1966171168
    %v3508 = vunpack.c.0.s8 %v3507
    %v3509 = vlaneseq
    %v3510 = vshrl.u32 %v3509, 7
    %v3511 = vsub.s32 %v3508, %v3510
    %v3512 = vrot.slane %v3498, %v3511
    %v3513 = vcombine.high %v3505, %v3505
    %v3514 = vcombine.high %v3512, %v3512
    %v3515 = vlaneseq
    %v3516 = vshrl.u32 %v3515, 7
    %v3517 = vsub.s32 0, %v3516
    %v3518 = vrot.slane %v3478, %v3517
    %v3519 = vlaneseq
    %v3520 = vshrl.u32 %v3519, 7
    %v3521 = vsub.s32 0, %v3520
    %v3522 = vrot.slane %v3485, %v3521
    %v3523 = vlaneseq
    %v3524 = vshrl.u32 %v3523, 7
    %v3525 = vsub.s32 0, %v3524
    %v3526 = vrot.slane %v3486, %v3525
    %v3527 = vlaneseq
    %v3528 = vshrl.u32 %v3527, 7
    %v3529 = vsub.s32 0, %v3528
    %v3530 = vrot.slane %v3487, %v3529
    %v3535 = vmul.f32 %v3518, %v3412
    %v3536 = vmul.f32 %v3522, %v3417
    %v3537 = vmul.f32 %v3526, %v3422
    %v3538 = vmul.f32 %v3530, %v3427
    %v3539 = vsub.f32 1.0, %v3535
    %v3540 = vsub.f32 1.0, %v3536
    %v3541 = vsub.f32 1.0, %v3537
    %v3542 = vsub.f32 1.0, %v3538
    %v3543 = vmul.f32 %v3400, %v3539
    %v3544 = vmul.f32 %v3401, %v3540
    %v3545 = vmul.f32 %v3402, %v3541
    %v3546 = vmul.f32 %v3403, %v3542
    %v3547 = vlaneseq
    %v3548 = vshrl.u32 %v3547, 7
    %v3549 = vsub.s32 0, %v3548
    %v3550 = vrot.slane %v3505, %v3549
    %v3551 = vlaneseq
    %v3552 = vshrl.u32 %v3551, 7
    %v3553 = vsub.s32 0, %v3552
    %v3554 = vrot.slane %v3512, %v3553
    %v3555 = vlaneseq
    %v3556 = vshrl.u32 %v3555, 7
    %v3557 = vsub.s32 0, %v3556
    %v3558 = vrot.slane %v3513, %v3557
    %v3559 = vlaneseq
    %v3560 = vshrl.u32 %v3559, 7
    %v3561 = vsub.s32 0, %v3560
    %v3562 = vrot.slane %v3514, %v3561
    %v3567 = vmul.f32 %v3550, %v3412
    %v3568 = vmul.f32 %v3554, %v3417
    %v3569 = vmul.f32 %v3558, %v3422
    %v3570 = vmul.f32 %v3562, %v3427
    %v3571 = vadd.f32 %v3543, %v3567
    %v3572 = vadd.f32 %v3544, %v3568
    %v3573 = vadd.f32 %v3545, %v3569
    %v3574 = vadd.f32 %v3546, %v3570
    %s3575 = scalar_lea.vmem [#allocation4], 256
    %v3576 = vld [vmem:[%s3575] sm:$0xff]
    %v3577 = vld [vmem:[%s3575 + $0x8] sm:$0xff]
    %v3578 = vld [vmem:[%s3575 + $0x10] sm:$0xff]
    %v3579 = vld [vmem:[%s3575 + $0x18] sm:$0xff]
    %3581 = vset.pattern.permute.xlu0 0
    %3582 = vperm.xlu0 %3581, %v3576
    %v3583 = vpop.permute.xlu0 %3582
    %3586 = vset.pattern.permute.xlu0 0
    %3587 = vperm.xlu0 %3586, %v3577
    %v3588 = vpop.permute.xlu0 %3587
    %3591 = vset.pattern.permute.xlu0 0
    %3592 = vperm.xlu0 %3591, %v3578
    %v3593 = vpop.permute.xlu0 %3592
    %3596 = vset.pattern.permute.xlu0 0
    %3597 = vperm.xlu0 %3596, %v3579
    %v3598 = vpop.permute.xlu0 %3597
    %v3600 = vmul.f32 %v3583, %v3571
    %v3601 = vmul.f32 %v3588, %v3572
    %v3602 = vmul.f32 %v3593, %v3573
    %v3603 = vmul.f32 %v3598, %v3574
    %v3604 = vrot.slane %v3600, 4
    %v3605 = vadd.f32 %v3600, %v3604
    %v3606 = vrot.slane %v3605, 2
    %v3607 = vadd.f32 %v3605, %v3606
    %v3608 = vrot.slane %v3607, 1
    %v3609 = vadd.f32 %v3607, %v3608
    %v3610 = vrot.slane %v3601, 4
    %v3611 = vadd.f32 %v3601, %v3610
    %v3612 = vrot.slane %v3611, 2
    %v3613 = vadd.f32 %v3611, %v3612
    %v3614 = vrot.slane %v3613, 1
    %v3615 = vadd.f32 %v3613, %v3614
    %v3616 = vrot.slane %v3602, 4
    %v3617 = vadd.f32 %v3602, %v3616
    %v3618 = vrot.slane %v3617, 2
    %v3619 = vadd.f32 %v3617, %v3618
    %v3620 = vrot.slane %v3619, 1
    %v3621 = vadd.f32 %v3619, %v3620
    %v3622 = vrot.slane %v3603, 4
    %v3623 = vadd.f32 %v3603, %v3622
    %v3624 = vrot.slane %v3623, 2
    %v3625 = vadd.f32 %v3623, %v3624
    %v3626 = vrot.slane %v3625, 1
    %v3627 = vadd.f32 %v3625, %v3626
    %v3628 = vadd.f32 %v3457, %v3609
    %v3629 = vadd.f32 %v3458, %v3615
    %v3630 = vadd.f32 %v3459, %v3621
    %v3631 = vadd.f32 %v3460, %v3627
    %s3632 = scalar_lea.vmem [#allocation5], 32
    %v3633 = vld [vmem:[%s3632] sm:$0xf]
    %v3636 = vunpack.c.l.s4 1966171168
    %v3637 = vunpack.c.0.s8 %v3636
    %v3638 = vlaneseq
    %v3639 = vshrl.u32 %v3638, 7
    %v3640 = vsub.s32 %v3637, %v3639
    %v3641 = vrot.slane %v3633, %v3640
    %v3642 = vcombine.high %v3641, %v3641
    %v3644 = vunpack.c.l.s4 1966171168
    %v3645 = vunpack.c.0.s8 %v3644
    %v3646 = vlaneseq
    %v3647 = vshrl.u32 %v3646, 7
    %v3648 = vsub.s32 %v3645, %v3647
    %v3649 = vrot.slane %v3641, %v3648
    %v3651 = vunpack.c.l.s4 1966171168
    %v3652 = vunpack.c.0.s8 %v3651
    %v3653 = vlaneseq
    %v3654 = vshrl.u32 %v3653, 7
    %v3655 = vsub.s32 %v3652, %v3654
    %v3656 = vrot.slane %v3642, %v3655
    %v3657 = vcombine.high %v3649, %v3649
    %v3658 = vcombine.high %v3656, %v3656
    %s3659 = scalar_lea.vmem [#allocation6], 32
    %v3660 = vld [vmem:[%s3659] sm:$0xf]
    %v3663 = vunpack.c.l.s4 1966171168
    %v3664 = vunpack.c.0.s8 %v3663
    %v3665 = vlaneseq
    %v3666 = vshrl.u32 %v3665, 7
    %v3667 = vsub.s32 %v3664, %v3666
    %v3668 = vrot.slane %v3660, %v3667
    %v3669 = vcombine.high %v3668, %v3668
    %v3671 = vunpack.c.l.s4 1966171168
    %v3672 = vunpack.c.0.s8 %v3671
    %v3673 = vlaneseq
    %v3674 = vshrl.u32 %v3673, 7
    %v3675 = vsub.s32 %v3672, %v3674
    %v3676 = vrot.slane %v3668, %v3675
    %v3678 = vunpack.c.l.s4 1966171168
    %v3679 = vunpack.c.0.s8 %v3678
    %v3680 = vlaneseq
    %v3681 = vshrl.u32 %v3680, 7
    %v3682 = vsub.s32 %v3679, %v3681
    %v3683 = vrot.slane %v3669, %v3682
    %v3684 = vcombine.high %v3676, %v3676
    %v3685 = vcombine.high %v3683, %v3683
    %v3686 = vlaneseq
    %v3687 = vshrl.u32 %v3686, 7
    %v3688 = vsub.s32 0, %v3687
    %v3689 = vrot.slane %v3649, %v3688
    %v3690 = vlaneseq
    %v3691 = vshrl.u32 %v3690, 7
    %v3692 = vsub.s32 0, %v3691
    %v3693 = vrot.slane %v3656, %v3692
    %v3694 = vlaneseq
    %v3695 = vshrl.u32 %v3694, 7
    %v3696 = vsub.s32 0, %v3695
    %v3697 = vrot.slane %v3657, %v3696
    %v3698 = vlaneseq
    %v3699 = vshrl.u32 %v3698, 7
    %v3700 = vsub.s32 0, %v3699
    %v3701 = vrot.slane %v3658, %v3700
    %v3706 = vmul.f32 %v3689, %v3583
    %v3707 = vmul.f32 %v3693, %v3588
    %v3708 = vmul.f32 %v3697, %v3593
    %v3709 = vmul.f32 %v3701, %v3598
    %v3710 = vsub.f32 1.0, %v3706
    %v3711 = vsub.f32 1.0, %v3707
    %v3712 = vsub.f32 1.0, %v3708
    %v3713 = vsub.f32 1.0, %v3709
    %v3714 = vmul.f32 %v3571, %v3710
    %v3715 = vmul.f32 %v3572, %v3711
    %v3716 = vmul.f32 %v3573, %v3712
    %v3717 = vmul.f32 %v3574, %v3713
    %v3718 = vlaneseq
    %v3719 = vshrl.u32 %v3718, 7
    %v3720 = vsub.s32 0, %v3719
    %v3721 = vrot.slane %v3676, %v3720
    %v3722 = vlaneseq
    %v3723 = vshrl.u32 %v3722, 7
    %v3724 = vsub.s32 0, %v3723
    %v3725 = vrot.slane %v3683, %v3724
    %v3726 = vlaneseq
    %v3727 = vshrl.u32 %v3726, 7
    %v3728 = vsub.s32 0, %v3727
    %v3729 = vrot.slane %v3684, %v3728
    %v3730 = vlaneseq
    %v3731 = vshrl.u32 %v3730, 7
    %v3732 = vsub.s32 0, %v3731
    %v3733 = vrot.slane %v3685, %v3732
    %v3738 = vmul.f32 %v3721, %v3583
    %v3739 = vmul.f32 %v3725, %v3588
    %v3740 = vmul.f32 %v3729, %v3593
    %v3741 = vmul.f32 %v3733, %v3598
    %v3742 = vadd.f32 %v3714, %v3738
    %v3743 = vadd.f32 %v3715, %v3739
    %v3744 = vadd.f32 %v3716, %v3740
    %v3745 = vadd.f32 %v3717, %v3741
    %v3750 = vrot.slane %v3629, 7
    %v3751 = vsel %vm1800, %v3750, %v3628
    %v3752 = vsel %vm1802, %v3750, %v3751
    %v3753 = vrot.slane %v3630, 6
    %v3754 = vsel %vm1805, %v3753, %v3752
    %v3755 = vsel %vm1807, %v3753, %v3754
    %v3756 = vrot.slane %v3631, 5
    %v3757 = vsel %vm1810, %v3756, %v3755
    %v3758 = vsel %vm1812, %v3756, %v3757
    %3760 = vst [vmem:[%s3231 + $0x8] sm:$0xf] %v3758
    %s3761 = scalar_lea.vmem [#allocation7], 8
    %v3762 = vld [vmem:[%s3761] sm:$0xf]
    %v3765 = vunpack.c.l.s4 1966171168
    %v3766 = vunpack.c.0.s8 %v3765
    %v3767 = vlaneseq
    %v3768 = vshrl.u32 %v3767, 7
    %v3769 = vsub.s32 %v3766, %v3768
    %v3770 = vrot.slane %v3762, %v3769
    %v3771 = vcombine.high %v3770, %v3770
    %v3773 = vunpack.c.l.s4 1966171168
    %v3774 = vunpack.c.0.s8 %v3773
    %v3775 = vlaneseq
    %v3776 = vshrl.u32 %v3775, 7
    %v3777 = vsub.s32 %v3774, %v3776
    %v3778 = vrot.slane %v3770, %v3777
    %v3780 = vunpack.c.l.s4 1966171168
    %v3781 = vunpack.c.0.s8 %v3780
    %v3782 = vlaneseq
    %v3783 = vshrl.u32 %v3782, 7
    %v3784 = vsub.s32 %v3781, %v3783
    %v3785 = vrot.slane %v3771, %v3784
    %v3786 = vcombine.high %v3778, %v3778
    %v3787 = vcombine.high %v3785, %v3785
    %s3788 = scalar_lea.vmem [#allocation8], 8
    %v3789 = vld [vmem:[%s3788] sm:$0xf]
    %v3792 = vunpack.c.l.s4 1966171168
    %v3793 = vunpack.c.0.s8 %v3792
    %v3794 = vlaneseq
    %v3795 = vshrl.u32 %v3794, 7
    %v3796 = vsub.s32 %v3793, %v3795
    %v3797 = vrot.slane %v3789, %v3796
    %v3798 = vcombine.high %v3797, %v3797
    %v3800 = vunpack.c.l.s4 1966171168
    %v3801 = vunpack.c.0.s8 %v3800
    %v3802 = vlaneseq
    %v3803 = vshrl.u32 %v3802, 7
    %v3804 = vsub.s32 %v3801, %v3803
    %v3805 = vrot.slane %v3797, %v3804
    %v3807 = vunpack.c.l.s4 1966171168
    %v3808 = vunpack.c.0.s8 %v3807
    %v3809 = vlaneseq
    %v3810 = vshrl.u32 %v3809, 7
    %v3811 = vsub.s32 %v3808, %v3810
    %v3812 = vrot.slane %v3798, %v3811
    %v3813 = vcombine.high %v3805, %v3805
    %v3814 = vcombine.high %v3812, %v3812
    %v3815 = vlaneseq
    %v3816 = vshrl.u32 %v3815, 7
    %v3817 = vsub.s32 0, %v3816
    %v3818 = vrot.slane %v3778, %v3817
    %v3819 = vlaneseq
    %v3820 = vshrl.u32 %v3819, 7
    %v3821 = vsub.s32 0, %v3820
    %v3822 = vrot.slane %v3785, %v3821
    %v3823 = vlaneseq
    %v3824 = vshrl.u32 %v3823, 7
    %v3825 = vsub.s32 0, %v3824
    %v3826 = vrot.slane %v3786, %v3825
    %v3827 = vlaneseq
    %v3828 = vshrl.u32 %v3827, 7
    %v3829 = vsub.s32 0, %v3828
    %v3830 = vrot.slane %v3787, %v3829
    %v3835 = vmul.f32 %v3818, %v3172
    %v3836 = vmul.f32 %v3822, %v3177
    %v3837 = vmul.f32 %v3826, %v3182
    %v3838 = vmul.f32 %v3830, %v3187
    %v3839 = vsub.f32 1.0, %v3835
    %v3840 = vsub.f32 1.0, %v3836
    %v3841 = vsub.f32 1.0, %v3837
    %v3842 = vsub.f32 1.0, %v3838
    %v3843 = vmul.f32 %v3742, %v3839
    %v3844 = vmul.f32 %v3743, %v3840
    %v3845 = vmul.f32 %v3744, %v3841
    %v3846 = vmul.f32 %v3745, %v3842
    %v3847 = vlaneseq
    %v3848 = vshrl.u32 %v3847, 7
    %v3849 = vsub.s32 0, %v3848
    %v3850 = vrot.slane %v3805, %v3849
    %v3851 = vlaneseq
    %v3852 = vshrl.u32 %v3851, 7
    %v3853 = vsub.s32 0, %v3852
    %v3854 = vrot.slane %v3812, %v3853
    %v3855 = vlaneseq
    %v3856 = vshrl.u32 %v3855, 7
    %v3857 = vsub.s32 0, %v3856
    %v3858 = vrot.slane %v3813, %v3857
    %v3859 = vlaneseq
    %v3860 = vshrl.u32 %v3859, 7
    %v3861 = vsub.s32 0, %v3860
    %v3862 = vrot.slane %v3814, %v3861
    %v3867 = vmul.f32 %v3850, %v3172
    %v3868 = vmul.f32 %v3854, %v3177
    %v3869 = vmul.f32 %v3858, %v3182
    %v3870 = vmul.f32 %v3862, %v3187
    %v3871 = vadd.f32 %v3843, %v3867
    %v3872 = vadd.f32 %v3844, %v3868
    %v3873 = vadd.f32 %v3845, %v3869
    %v3874 = vadd.f32 %v3846, %v3870
    %s3875 = scalar_lea.vmem [#allocation3], 96
    %v3876 = vld [vmem:[%s3875] sm:$0xff]
    %v3877 = vld [vmem:[%s3875 + $0x8] sm:$0xff]
    %v3878 = vld [vmem:[%s3875 + $0x10] sm:$0xff]
    %v3879 = vld [vmem:[%s3875 + $0x18] sm:$0xff]
    %3881 = vset.pattern.permute.xlu0 0
    %3882 = vperm.xlu0 %3881, %v3876
    %v3883 = vpop.permute.xlu0 %3882
    %3886 = vset.pattern.permute.xlu0 0
    %3887 = vperm.xlu0 %3886, %v3877
    %v3888 = vpop.permute.xlu0 %3887
    %3891 = vset.pattern.permute.xlu0 0
    %3892 = vperm.xlu0 %3891, %v3878
    %v3893 = vpop.permute.xlu0 %3892
    %3896 = vset.pattern.permute.xlu0 0
    %3897 = vperm.xlu0 %3896, %v3879
    %v3898 = vpop.permute.xlu0 %3897
    %v3900 = vmul.f32 %v3883, %v3871
    %v3901 = vmul.f32 %v3888, %v3872
    %v3902 = vmul.f32 %v3893, %v3873
    %v3903 = vmul.f32 %v3898, %v3874
    %v3904 = vrot.slane %v3900, 4
    %v3905 = vadd.f32 %v3900, %v3904
    %v3906 = vrot.slane %v3905, 2
    %v3907 = vadd.f32 %v3905, %v3906
    %v3908 = vrot.slane %v3907, 1
    %v3909 = vadd.f32 %v3907, %v3908
    %v3910 = vrot.slane %v3901, 4
    %v3911 = vadd.f32 %v3901, %v3910
    %v3912 = vrot.slane %v3911, 2
    %v3913 = vadd.f32 %v3911, %v3912
    %v3914 = vrot.slane %v3913, 1
    %v3915 = vadd.f32 %v3913, %v3914
    %v3916 = vrot.slane %v3902, 4
    %v3917 = vadd.f32 %v3902, %v3916
    %v3918 = vrot.slane %v3917, 2
    %v3919 = vadd.f32 %v3917, %v3918
    %v3920 = vrot.slane %v3919, 1
    %v3921 = vadd.f32 %v3919, %v3920
    %v3922 = vrot.slane %v3903, 4
    %v3923 = vadd.f32 %v3903, %v3922
    %v3924 = vrot.slane %v3923, 2
    %v3925 = vadd.f32 %v3923, %v3924
    %v3926 = vrot.slane %v3925, 1
    %v3927 = vadd.f32 %v3925, %v3926
    %v3932 = vrot.slane %v3915, 7
    %v3933 = vsel %vm1800, %v3932, %v3909
    %v3934 = vsel %vm1802, %v3932, %v3933
    %v3935 = vrot.slane %v3921, 6
    %v3936 = vsel %vm1805, %v3935, %v3934
    %v3937 = vsel %vm1807, %v3935, %v3936
    %v3938 = vrot.slane %v3927, 5
    %v3939 = vsel %vm1810, %v3938, %v3937
    %v3940 = vsel %vm1812, %v3938, %v3939
    %s3942 = scalar_lea.vmem [#allocation9], 48
    %3943 = vst [vmem:[%s3942] sm:$0xf] %v3940
    %s3944 = scalar_lea.vmem [#allocation4], 288
    %v3945 = vld [vmem:[%s3944] sm:$0xff]
    %v3946 = vld [vmem:[%s3944 + $0x8] sm:$0xff]
    %v3947 = vld [vmem:[%s3944 + $0x10] sm:$0xff]
    %v3948 = vld [vmem:[%s3944 + $0x18] sm:$0xff]
    %3950 = vset.pattern.permute.xlu0 0
    %3951 = vperm.xlu0 %3950, %v3945
    %v3952 = vpop.permute.xlu0 %3951
    %3955 = vset.pattern.permute.xlu0 0
    %3956 = vperm.xlu0 %3955, %v3946
    %v3957 = vpop.permute.xlu0 %3956
    %3960 = vset.pattern.permute.xlu0 0
    %3961 = vperm.xlu0 %3960, %v3947
    %v3962 = vpop.permute.xlu0 %3961
    %3965 = vset.pattern.permute.xlu0 0
    %3966 = vperm.xlu0 %3965, %v3948
    %v3967 = vpop.permute.xlu0 %3966
    %v3969 = vmul.f32 %v3952, %v3871
    %v3970 = vmul.f32 %v3957, %v3872
    %v3971 = vmul.f32 %v3962, %v3873
    %v3972 = vmul.f32 %v3967, %v3874
    %v3973 = vrot.slane %v3969, 4
    %v3974 = vadd.f32 %v3969, %v3973
    %v3975 = vrot.slane %v3974, 2
    %v3976 = vadd.f32 %v3974, %v3975
    %v3977 = vrot.slane %v3976, 1
    %v3978 = vadd.f32 %v3976, %v3977
    %v3979 = vrot.slane %v3970, 4
    %v3980 = vadd.f32 %v3970, %v3979
    %v3981 = vrot.slane %v3980, 2
    %v3982 = vadd.f32 %v3980, %v3981
    %v3983 = vrot.slane %v3982, 1
    %v3984 = vadd.f32 %v3982, %v3983
    %v3985 = vrot.slane %v3971, 4
    %v3986 = vadd.f32 %v3971, %v3985
    %v3987 = vrot.slane %v3986, 2
    %v3988 = vadd.f32 %v3986, %v3987
    %v3989 = vrot.slane %v3988, 1
    %v3990 = vadd.f32 %v3988, %v3989
    %v3991 = vrot.slane %v3972, 4
    %v3992 = vadd.f32 %v3972, %v3991
    %v3993 = vrot.slane %v3992, 2
    %v3994 = vadd.f32 %v3992, %v3993
    %v3995 = vrot.slane %v3994, 1
    %v3996 = vadd.f32 %v3994, %v3995
    %v3997 = vadd.f32 %v3978, 0.0
    %v3998 = vadd.f32 %v3984, 0.0
    %v3999 = vadd.f32 %v3990, 0.0
    %v4000 = vadd.f32 %v3996, 0.0
    %s4001 = scalar_lea.vmem [#allocation5], 36
    %v4002 = vld [vmem:[%s4001] sm:$0xf]
    %v4005 = vunpack.c.l.s4 1966171168
    %v4006 = vunpack.c.0.s8 %v4005
    %v4007 = vlaneseq
    %v4008 = vshrl.u32 %v4007, 7
    %v4009 = vsub.s32 %v4006, %v4008
    %v4010 = vrot.slane %v4002, %v4009
    %v4011 = vcombine.high %v4010, %v4010
    %v4013 = vunpack.c.l.s4 1966171168
    %v4014 = vunpack.c.0.s8 %v4013
    %v4015 = vlaneseq
    %v4016 = vshrl.u32 %v4015, 7
    %v4017 = vsub.s32 %v4014, %v4016
    %v4018 = vrot.slane %v4010, %v4017
    %v4020 = vunpack.c.l.s4 1966171168
    %v4021 = vunpack.c.0.s8 %v4020
    %v4022 = vlaneseq
    %v4023 = vshrl.u32 %v4022, 7
    %v4024 = vsub.s32 %v4021, %v4023
    %v4025 = vrot.slane %v4011, %v4024
    %v4026 = vcombine.high %v4018, %v4018
    %v4027 = vcombine.high %v4025, %v4025
    %s4028 = scalar_lea.vmem [#allocation6], 36
    %v4029 = vld [vmem:[%s4028] sm:$0xf]
    %v4032 = vunpack.c.l.s4 1966171168
    %v4033 = vunpack.c.0.s8 %v4032
    %v4034 = vlaneseq
    %v4035 = vshrl.u32 %v4034, 7
    %v4036 = vsub.s32 %v4033, %v4035
    %v4037 = vrot.slane %v4029, %v4036
    %v4038 = vcombine.high %v4037, %v4037
    %v4040 = vunpack.c.l.s4 1966171168
    %v4041 = vunpack.c.0.s8 %v4040
    %v4042 = vlaneseq
    %v4043 = vshrl.u32 %v4042, 7
    %v4044 = vsub.s32 %v4041, %v4043
    %v4045 = vrot.slane %v4037, %v4044
    %v4047 = vunpack.c.l.s4 1966171168
    %v4048 = vunpack.c.0.s8 %v4047
    %v4049 = vlaneseq
    %v4050 = vshrl.u32 %v4049, 7
    %v4051 = vsub.s32 %v4048, %v4050
    %v4052 = vrot.slane %v4038, %v4051
    %v4053 = vcombine.high %v4045, %v4045
    %v4054 = vcombine.high %v4052, %v4052
    %v4055 = vlaneseq
    %v4056 = vshrl.u32 %v4055, 7
    %v4057 = vsub.s32 0, %v4056
    %v4058 = vrot.slane %v4018, %v4057
    %v4059 = vlaneseq
    %v4060 = vshrl.u32 %v4059, 7
    %v4061 = vsub.s32 0, %v4060
    %v4062 = vrot.slane %v4025, %v4061
    %v4063 = vlaneseq
    %v4064 = vshrl.u32 %v4063, 7
    %v4065 = vsub.s32 0, %v4064
    %v4066 = vrot.slane %v4026, %v4065
    %v4067 = vlaneseq
    %v4068 = vshrl.u32 %v4067, 7
    %v4069 = vsub.s32 0, %v4068
    %v4070 = vrot.slane %v4027, %v4069
    %v4075 = vmul.f32 %v4058, %v3952
    %v4076 = vmul.f32 %v4062, %v3957
    %v4077 = vmul.f32 %v4066, %v3962
    %v4078 = vmul.f32 %v4070, %v3967
    %v4079 = vsub.f32 1.0, %v4075
    %v4080 = vsub.f32 1.0, %v4076
    %v4081 = vsub.f32 1.0, %v4077
    %v4082 = vsub.f32 1.0, %v4078
    %v4083 = vmul.f32 %v3871, %v4079
    %v4084 = vmul.f32 %v3872, %v4080
    %v4085 = vmul.f32 %v3873, %v4081
    %v4086 = vmul.f32 %v3874, %v4082
    %v4087 = vlaneseq
    %v4088 = vshrl.u32 %v4087, 7
    %v4089 = vsub.s32 0, %v4088
    %v4090 = vrot.slane %v4045, %v4089
    %v4091 = vlaneseq
    %v4092 = vshrl.u32 %v4091, 7
    %v4093 = vsub.s32 0, %v4092
    %v4094 = vrot.slane %v4052, %v4093
    %v4095 = vlaneseq
    %v4096 = vshrl.u32 %v4095, 7
    %v4097 = vsub.s32 0, %v4096
    %v4098 = vrot.slane %v4053, %v4097
    %v4099 = vlaneseq
    %v4100 = vshrl.u32 %v4099, 7
    %v4101 = vsub.s32 0, %v4100
    %v4102 = vrot.slane %v4054, %v4101
    %v4107 = vmul.f32 %v4090, %v3952
    %v4108 = vmul.f32 %v4094, %v3957
    %v4109 = vmul.f32 %v4098, %v3962
    %v4110 = vmul.f32 %v4102, %v3967
    %v4111 = vadd.f32 %v4083, %v4107
    %v4112 = vadd.f32 %v4084, %v4108
    %v4113 = vadd.f32 %v4085, %v4109
    %v4114 = vadd.f32 %v4086, %v4110
    %s4115 = scalar_lea.vmem [#allocation4], 320
    %v4116 = vld [vmem:[%s4115] sm:$0xff]
    %v4117 = vld [vmem:[%s4115 + $0x8] sm:$0xff]
    %v4118 = vld [vmem:[%s4115 + $0x10] sm:$0xff]
    %v4119 = vld [vmem:[%s4115 + $0x18] sm:$0xff]
    %4121 = vset.pattern.permute.xlu0 0
    %4122 = vperm.xlu0 %4121, %v4116
    %v4123 = vpop.permute.xlu0 %4122
    %4126 = vset.pattern.permute.xlu0 0
    %4127 = vperm.xlu0 %4126, %v4117
    %v4128 = vpop.permute.xlu0 %4127
    %4131 = vset.pattern.permute.xlu0 0
    %4132 = vperm.xlu0 %4131, %v4118
    %v4133 = vpop.permute.xlu0 %4132
    %4136 = vset.pattern.permute.xlu0 0
    %4137 = vperm.xlu0 %4136, %v4119
    %v4138 = vpop.permute.xlu0 %4137
    %v4140 = vmul.f32 %v4123, %v4111
    %v4141 = vmul.f32 %v4128, %v4112
    %v4142 = vmul.f32 %v4133, %v4113
    %v4143 = vmul.f32 %v4138, %v4114
    %v4144 = vrot.slane %v4140, 4
    %v4145 = vadd.f32 %v4140, %v4144
    %v4146 = vrot.slane %v4145, 2
    %v4147 = vadd.f32 %v4145, %v4146
    %v4148 = vrot.slane %v4147, 1
    %v4149 = vadd.f32 %v4147, %v4148
    %v4150 = vrot.slane %v4141, 4
    %v4151 = vadd.f32 %v4141, %v4150
    %v4152 = vrot.slane %v4151, 2
    %v4153 = vadd.f32 %v4151, %v4152
    %v4154 = vrot.slane %v4153, 1
    %v4155 = vadd.f32 %v4153, %v4154
    %v4156 = vrot.slane %v4142, 4
    %v4157 = vadd.f32 %v4142, %v4156
    %v4158 = vrot.slane %v4157, 2
    %v4159 = vadd.f32 %v4157, %v4158
    %v4160 = vrot.slane %v4159, 1
    %v4161 = vadd.f32 %v4159, %v4160
    %v4162 = vrot.slane %v4143, 4
    %v4163 = vadd.f32 %v4143, %v4162
    %v4164 = vrot.slane %v4163, 2
    %v4165 = vadd.f32 %v4163, %v4164
    %v4166 = vrot.slane %v4165, 1
    %v4167 = vadd.f32 %v4165, %v4166
    %v4168 = vadd.f32 %v3997, %v4149
    %v4169 = vadd.f32 %v3998, %v4155
    %v4170 = vadd.f32 %v3999, %v4161
    %v4171 = vadd.f32 %v4000, %v4167
    %s4172 = scalar_lea.vmem [#allocation5], 40
    %v4173 = vld [vmem:[%s4172] sm:$0xf]
    %v4176 = vunpack.c.l.s4 1966171168
    %v4177 = vunpack.c.0.s8 %v4176
    %v4178 = vlaneseq
    %v4179 = vshrl.u32 %v4178, 7
    %v4180 = vsub.s32 %v4177, %v4179
    %v4181 = vrot.slane %v4173, %v4180
    %v4182 = vcombine.high %v4181, %v4181
    %v4184 = vunpack.c.l.s4 1966171168
    %v4185 = vunpack.c.0.s8 %v4184
    %v4186 = vlaneseq
    %v4187 = vshrl.u32 %v4186, 7
    %v4188 = vsub.s32 %v4185, %v4187
    %v4189 = vrot.slane %v4181, %v4188
    %v4191 = vunpack.c.l.s4 1966171168
    %v4192 = vunpack.c.0.s8 %v4191
    %v4193 = vlaneseq
    %v4194 = vshrl.u32 %v4193, 7
    %v4195 = vsub.s32 %v4192, %v4194
    %v4196 = vrot.slane %v4182, %v4195
    %v4197 = vcombine.high %v4189, %v4189
    %v4198 = vcombine.high %v4196, %v4196
    %s4199 = scalar_lea.vmem [#allocation6], 40
    %v4200 = vld [vmem:[%s4199] sm:$0xf]
    %v4203 = vunpack.c.l.s4 1966171168
    %v4204 = vunpack.c.0.s8 %v4203
    %v4205 = vlaneseq
    %v4206 = vshrl.u32 %v4205, 7
    %v4207 = vsub.s32 %v4204, %v4206
    %v4208 = vrot.slane %v4200, %v4207
    %v4209 = vcombine.high %v4208, %v4208
    %v4211 = vunpack.c.l.s4 1966171168
    %v4212 = vunpack.c.0.s8 %v4211
    %v4213 = vlaneseq
    %v4214 = vshrl.u32 %v4213, 7
    %v4215 = vsub.s32 %v4212, %v4214
    %v4216 = vrot.slane %v4208, %v4215
    %v4218 = vunpack.c.l.s4 1966171168
    %v4219 = vunpack.c.0.s8 %v4218
    %v4220 = vlaneseq
    %v4221 = vshrl.u32 %v4220, 7
    %v4222 = vsub.s32 %v4219, %v4221
    %v4223 = vrot.slane %v4209, %v4222
    %v4224 = vcombine.high %v4216, %v4216
    %v4225 = vcombine.high %v4223, %v4223
    %v4226 = vlaneseq
    %v4227 = vshrl.u32 %v4226, 7
    %v4228 = vsub.s32 0, %v4227
    %v4229 = vrot.slane %v4189, %v4228
    %v4230 = vlaneseq
    %v4231 = vshrl.u32 %v4230, 7
    %v4232 = vsub.s32 0, %v4231
    %v4233 = vrot.slane %v4196, %v4232
    %v4234 = vlaneseq
    %v4235 = vshrl.u32 %v4234, 7
    %v4236 = vsub.s32 0, %v4235
    %v4237 = vrot.slane %v4197, %v4236
    %v4238 = vlaneseq
    %v4239 = vshrl.u32 %v4238, 7
    %v4240 = vsub.s32 0, %v4239
    %v4241 = vrot.slane %v4198, %v4240
    %v4246 = vmul.f32 %v4229, %v4123
    %v4247 = vmul.f32 %v4233, %v4128
    %v4248 = vmul.f32 %v4237, %v4133
    %v4249 = vmul.f32 %v4241, %v4138
    %v4250 = vsub.f32 1.0, %v4246
    %v4251 = vsub.f32 1.0, %v4247
    %v4252 = vsub.f32 1.0, %v4248
    %v4253 = vsub.f32 1.0, %v4249
    %v4254 = vmul.f32 %v4111, %v4250
    %v4255 = vmul.f32 %v4112, %v4251
    %v4256 = vmul.f32 %v4113, %v4252
    %v4257 = vmul.f32 %v4114, %v4253
    %v4258 = vlaneseq
    %v4259 = vshrl.u32 %v4258, 7
    %v4260 = vsub.s32 0, %v4259
    %v4261 = vrot.slane %v4216, %v4260
    %v4262 = vlaneseq
    %v4263 = vshrl.u32 %v4262, 7
    %v4264 = vsub.s32 0, %v4263
    %v4265 = vrot.slane %v4223, %v4264
    %v4266 = vlaneseq
    %v4267 = vshrl.u32 %v4266, 7
    %v4268 = vsub.s32 0, %v4267
    %v4269 = vrot.slane %v4224, %v4268
    %v4270 = vlaneseq
    %v4271 = vshrl.u32 %v4270, 7
    %v4272 = vsub.s32 0, %v4271
    %v4273 = vrot.slane %v4225, %v4272
    %v4278 = vmul.f32 %v4261, %v4123
    %v4279 = vmul.f32 %v4265, %v4128
    %v4280 = vmul.f32 %v4269, %v4133
    %v4281 = vmul.f32 %v4273, %v4138
    %v4282 = vadd.f32 %v4254, %v4278
    %v4283 = vadd.f32 %v4255, %v4279
    %v4284 = vadd.f32 %v4256, %v4280
    %v4285 = vadd.f32 %v4257, %v4281
    %s4286 = scalar_lea.vmem [#allocation4], 352
    %v4287 = vld [vmem:[%s4286] sm:$0xff]
    %v4288 = vld [vmem:[%s4286 + $0x8] sm:$0xff]
    %v4289 = vld [vmem:[%s4286 + $0x10] sm:$0xff]
    %v4290 = vld [vmem:[%s4286 + $0x18] sm:$0xff]
    %4292 = vset.pattern.permute.xlu0 0
    %4293 = vperm.xlu0 %4292, %v4287
    %v4294 = vpop.permute.xlu0 %4293
    %4297 = vset.pattern.permute.xlu0 0
    %4298 = vperm.xlu0 %4297, %v4288
    %v4299 = vpop.permute.xlu0 %4298
    %4302 = vset.pattern.permute.xlu0 0
    %4303 = vperm.xlu0 %4302, %v4289
    %v4304 = vpop.permute.xlu0 %4303
    %4307 = vset.pattern.permute.xlu0 0
    %4308 = vperm.xlu0 %4307, %v4290
    %v4309 = vpop.permute.xlu0 %4308
    %v4311 = vmul.f32 %v4294, %v4282
    %v4312 = vmul.f32 %v4299, %v4283
    %v4313 = vmul.f32 %v4304, %v4284
    %v4314 = vmul.f32 %v4309, %v4285
    %v4315 = vrot.slane %v4311, 4
    %v4316 = vadd.f32 %v4311, %v4315
    %v4317 = vrot.slane %v4316, 2
    %v4318 = vadd.f32 %v4316, %v4317
    %v4319 = vrot.slane %v4318, 1
    %v4320 = vadd.f32 %v4318, %v4319
    %v4321 = vrot.slane %v4312, 4
    %v4322 = vadd.f32 %v4312, %v4321
    %v4323 = vrot.slane %v4322, 2
    %v4324 = vadd.f32 %v4322, %v4323
    %v4325 = vrot.slane %v4324, 1
    %v4326 = vadd.f32 %v4324, %v4325
    %v4327 = vrot.slane %v4313, 4
    %v4328 = vadd.f32 %v4313, %v4327
    %v4329 = vrot.slane %v4328, 2
    %v4330 = vadd.f32 %v4328, %v4329
    %v4331 = vrot.slane %v4330, 1
    %v4332 = vadd.f32 %v4330, %v4331
    %v4333 = vrot.slane %v4314, 4
    %v4334 = vadd.f32 %v4314, %v4333
    %v4335 = vrot.slane %v4334, 2
    %v4336 = vadd.f32 %v4334, %v4335
    %v4337 = vrot.slane %v4336, 1
    %v4338 = vadd.f32 %v4336, %v4337
    %v4339 = vadd.f32 %v4168, %v4320
    %v4340 = vadd.f32 %v4169, %v4326
    %v4341 = vadd.f32 %v4170, %v4332
    %v4342 = vadd.f32 %v4171, %v4338
    %s4343 = scalar_lea.vmem [#allocation5], 44
    %v4344 = vld [vmem:[%s4343] sm:$0xf]
    %v4347 = vunpack.c.l.s4 1966171168
    %v4348 = vunpack.c.0.s8 %v4347
    %v4349 = vlaneseq
    %v4350 = vshrl.u32 %v4349, 7
    %v4351 = vsub.s32 %v4348, %v4350
    %v4352 = vrot.slane %v4344, %v4351
    %v4353 = vcombine.high %v4352, %v4352
    %v4355 = vunpack.c.l.s4 1966171168
    %v4356 = vunpack.c.0.s8 %v4355
    %v4357 = vlaneseq
    %v4358 = vshrl.u32 %v4357, 7
    %v4359 = vsub.s32 %v4356, %v4358
    %v4360 = vrot.slane %v4352, %v4359
    %v4362 = vunpack.c.l.s4 1966171168
    %v4363 = vunpack.c.0.s8 %v4362
    %v4364 = vlaneseq
    %v4365 = vshrl.u32 %v4364, 7
    %v4366 = vsub.s32 %v4363, %v4365
    %v4367 = vrot.slane %v4353, %v4366
    %v4368 = vcombine.high %v4360, %v4360
    %v4369 = vcombine.high %v4367, %v4367
    %s4370 = scalar_lea.vmem [#allocation6], 44
    %v4371 = vld [vmem:[%s4370] sm:$0xf]
    %v4374 = vunpack.c.l.s4 1966171168
    %v4375 = vunpack.c.0.s8 %v4374
    %v4376 = vlaneseq
    %v4377 = vshrl.u32 %v4376, 7
    %v4378 = vsub.s32 %v4375, %v4377
    %v4379 = vrot.slane %v4371, %v4378
    %v4380 = vcombine.high %v4379, %v4379
    %v4382 = vunpack.c.l.s4 1966171168
    %v4383 = vunpack.c.0.s8 %v4382
    %v4384 = vlaneseq
    %v4385 = vshrl.u32 %v4384, 7
    %v4386 = vsub.s32 %v4383, %v4385
    %v4387 = vrot.slane %v4379, %v4386
    %v4389 = vunpack.c.l.s4 1966171168
    %v4390 = vunpack.c.0.s8 %v4389
    %v4391 = vlaneseq
    %v4392 = vshrl.u32 %v4391, 7
    %v4393 = vsub.s32 %v4390, %v4392
    %v4394 = vrot.slane %v4380, %v4393
    %v4395 = vcombine.high %v4387, %v4387
    %v4396 = vcombine.high %v4394, %v4394
    %v4397 = vlaneseq
    %v4398 = vshrl.u32 %v4397, 7
    %v4399 = vsub.s32 0, %v4398
    %v4400 = vrot.slane %v4360, %v4399
    %v4401 = vlaneseq
    %v4402 = vshrl.u32 %v4401, 7
    %v4403 = vsub.s32 0, %v4402
    %v4404 = vrot.slane %v4367, %v4403
    %v4405 = vlaneseq
    %v4406 = vshrl.u32 %v4405, 7
    %v4407 = vsub.s32 0, %v4406
    %v4408 = vrot.slane %v4368, %v4407
    %v4409 = vlaneseq
    %v4410 = vshrl.u32 %v4409, 7
    %v4411 = vsub.s32 0, %v4410
    %v4412 = vrot.slane %v4369, %v4411
    %v4417 = vmul.f32 %v4400, %v4294
    %v4418 = vmul.f32 %v4404, %v4299
    %v4419 = vmul.f32 %v4408, %v4304
    %v4420 = vmul.f32 %v4412, %v4309
    %v4421 = vsub.f32 1.0, %v4417
    %v4422 = vsub.f32 1.0, %v4418
    %v4423 = vsub.f32 1.0, %v4419
    %v4424 = vsub.f32 1.0, %v4420
    %v4425 = vmul.f32 %v4282, %v4421
    %v4426 = vmul.f32 %v4283, %v4422
    %v4427 = vmul.f32 %v4284, %v4423
    %v4428 = vmul.f32 %v4285, %v4424
    %v4429 = vlaneseq
    %v4430 = vshrl.u32 %v4429, 7
    %v4431 = vsub.s32 0, %v4430
    %v4432 = vrot.slane %v4387, %v4431
    %v4433 = vlaneseq
    %v4434 = vshrl.u32 %v4433, 7
    %v4435 = vsub.s32 0, %v4434
    %v4436 = vrot.slane %v4394, %v4435
    %v4437 = vlaneseq
    %v4438 = vshrl.u32 %v4437, 7
    %v4439 = vsub.s32 0, %v4438
    %v4440 = vrot.slane %v4395, %v4439
    %v4441 = vlaneseq
    %v4442 = vshrl.u32 %v4441, 7
    %v4443 = vsub.s32 0, %v4442
    %v4444 = vrot.slane %v4396, %v4443
    %v4449 = vmul.f32 %v4432, %v4294
    %v4450 = vmul.f32 %v4436, %v4299
    %v4451 = vmul.f32 %v4440, %v4304
    %v4452 = vmul.f32 %v4444, %v4309
    %v4453 = vadd.f32 %v4425, %v4449
    %v4454 = vadd.f32 %v4426, %v4450
    %v4455 = vadd.f32 %v4427, %v4451
    %v4456 = vadd.f32 %v4428, %v4452
    %v4461 = vrot.slane %v4340, 7
    %v4462 = vsel %vm1800, %v4461, %v4339
    %v4463 = vsel %vm1802, %v4461, %v4462
    %v4464 = vrot.slane %v4341, 6
    %v4465 = vsel %vm1805, %v4464, %v4463
    %v4466 = vsel %vm1807, %v4464, %v4465
    %v4467 = vrot.slane %v4342, 5
    %v4468 = vsel %vm1810, %v4467, %v4466
    %v4469 = vsel %vm1812, %v4467, %v4468
    %4471 = vst [vmem:[%s3942 + $0x8] sm:$0xf] %v4469
    %s4472 = scalar_lea.vmem [#allocation7], 12
    %v4473 = vld [vmem:[%s4472] sm:$0xf]
    %v4476 = vunpack.c.l.s4 1966171168
    %v4477 = vunpack.c.0.s8 %v4476
    %v4478 = vlaneseq
    %v4479 = vshrl.u32 %v4478, 7
    %v4480 = vsub.s32 %v4477, %v4479
    %v4481 = vrot.slane %v4473, %v4480
    %v4482 = vcombine.high %v4481, %v4481
    %v4484 = vunpack.c.l.s4 1966171168
    %v4485 = vunpack.c.0.s8 %v4484
    %v4486 = vlaneseq
    %v4487 = vshrl.u32 %v4486, 7
    %v4488 = vsub.s32 %v4485, %v4487
    %v4489 = vrot.slane %v4481, %v4488
    %v4491 = vunpack.c.l.s4 1966171168
    %v4492 = vunpack.c.0.s8 %v4491
    %v4493 = vlaneseq
    %v4494 = vshrl.u32 %v4493, 7
    %v4495 = vsub.s32 %v4492, %v4494
    %v4496 = vrot.slane %v4482, %v4495
    %v4497 = vcombine.high %v4489, %v4489
    %v4498 = vcombine.high %v4496, %v4496
    %s4499 = scalar_lea.vmem [#allocation8], 12
    %v4500 = vld [vmem:[%s4499] sm:$0xf]
    %v4503 = vunpack.c.l.s4 1966171168
    %v4504 = vunpack.c.0.s8 %v4503
    %v4505 = vlaneseq
    %v4506 = vshrl.u32 %v4505, 7
    %v4507 = vsub.s32 %v4504, %v4506
    %v4508 = vrot.slane %v4500, %v4507
    %v4509 = vcombine.high %v4508, %v4508
    %v4511 = vunpack.c.l.s4 1966171168
    %v4512 = vunpack.c.0.s8 %v4511
    %v4513 = vlaneseq
    %v4514 = vshrl.u32 %v4513, 7
    %v4515 = vsub.s32 %v4512, %v4514
    %v4516 = vrot.slane %v4508, %v4515
    %v4518 = vunpack.c.l.s4 1966171168
    %v4519 = vunpack.c.0.s8 %v4518
    %v4520 = vlaneseq
    %v4521 = vshrl.u32 %v4520, 7
    %v4522 = vsub.s32 %v4519, %v4521
    %v4523 = vrot.slane %v4509, %v4522
    %v4524 = vcombine.high %v4516, %v4516
    %v4525 = vcombine.high %v4523, %v4523
    %v4526 = vlaneseq
    %v4527 = vshrl.u32 %v4526, 7
    %v4528 = vsub.s32 0, %v4527
    %v4529 = vrot.slane %v4489, %v4528
    %v4530 = vlaneseq
    %v4531 = vshrl.u32 %v4530, 7
    %v4532 = vsub.s32 0, %v4531
    %v4533 = vrot.slane %v4496, %v4532
    %v4534 = vlaneseq
    %v4535 = vshrl.u32 %v4534, 7
    %v4536 = vsub.s32 0, %v4535
    %v4537 = vrot.slane %v4497, %v4536
    %v4538 = vlaneseq
    %v4539 = vshrl.u32 %v4538, 7
    %v4540 = vsub.s32 0, %v4539
    %v4541 = vrot.slane %v4498, %v4540
    %v4546 = vmul.f32 %v4529, %v3883
    %v4547 = vmul.f32 %v4533, %v3888
    %v4548 = vmul.f32 %v4537, %v3893
    %v4549 = vmul.f32 %v4541, %v3898
    %v4550 = vsub.f32 1.0, %v4546
    %v4551 = vsub.f32 1.0, %v4547
    %v4552 = vsub.f32 1.0, %v4548
    %v4553 = vsub.f32 1.0, %v4549
    %v4554 = vmul.f32 %v4453, %v4550
    %v4555 = vmul.f32 %v4454, %v4551
    %v4556 = vmul.f32 %v4455, %v4552
    %v4557 = vmul.f32 %v4456, %v4553
    %v4558 = vlaneseq
    %v4559 = vshrl.u32 %v4558, 7
    %v4560 = vsub.s32 0, %v4559
    %v4561 = vrot.slane %v4516, %v4560
    %v4562 = vlaneseq
    %v4563 = vshrl.u32 %v4562, 7
    %v4564 = vsub.s32 0, %v4563
    %v4565 = vrot.slane %v4523, %v4564
    %v4566 = vlaneseq
    %v4567 = vshrl.u32 %v4566, 7
    %v4568 = vsub.s32 0, %v4567
    %v4569 = vrot.slane %v4524, %v4568
    %v4570 = vlaneseq
    %v4571 = vshrl.u32 %v4570, 7
    %v4572 = vsub.s32 0, %v4571
    %v4573 = vrot.slane %v4525, %v4572
    %v4578 = vmul.f32 %v4561, %v3883
    %v4579 = vmul.f32 %v4565, %v3888
    %v4580 = vmul.f32 %v4569, %v3893
    %v4581 = vmul.f32 %v4573, %v3898
    %v4582 = vadd.f32 %v4554, %v4578
    %v4583 = vadd.f32 %v4555, %v4579
    %v4584 = vadd.f32 %v4556, %v4580
    %v4585 = vadd.f32 %v4557, %v4581
    %s4586 = scalar_lea.vmem [#allocation3], 128
    %v4587 = vld [vmem:[%s4586] sm:$0xff]
    %v4588 = vld [vmem:[%s4586 + $0x8] sm:$0xff]
    %v4589 = vld [vmem:[%s4586 + $0x10] sm:$0xff]
    %v4590 = vld [vmem:[%s4586 + $0x18] sm:$0xff]
    %4592 = vset.pattern.permute.xlu0 0
    %4593 = vperm.xlu0 %4592, %v4587
    %v4594 = vpop.permute.xlu0 %4593
    %4597 = vset.pattern.permute.xlu0 0
    %4598 = vperm.xlu0 %4597, %v4588
    %v4599 = vpop.permute.xlu0 %4598
    %4602 = vset.pattern.permute.xlu0 0
    %4603 = vperm.xlu0 %4602, %v4589
    %v4604 = vpop.permute.xlu0 %4603
    %4607 = vset.pattern.permute.xlu0 0
    %4608 = vperm.xlu0 %4607, %v4590
    %v4609 = vpop.permute.xlu0 %4608
    %v4611 = vmul.f32 %v4594, %v4582
    %v4612 = vmul.f32 %v4599, %v4583
    %v4613 = vmul.f32 %v4604, %v4584
    %v4614 = vmul.f32 %v4609, %v4585
    %v4615 = vrot.slane %v4611, 4
    %v4616 = vadd.f32 %v4611, %v4615
    %v4617 = vrot.slane %v4616, 2
    %v4618 = vadd.f32 %v4616, %v4617
    %v4619 = vrot.slane %v4618, 1
    %v4620 = vadd.f32 %v4618, %v4619
    %v4621 = vrot.slane %v4612, 4
    %v4622 = vadd.f32 %v4612, %v4621
    %v4623 = vrot.slane %v4622, 2
    %v4624 = vadd.f32 %v4622, %v4623
    %v4625 = vrot.slane %v4624, 1
    %v4626 = vadd.f32 %v4624, %v4625
    %v4627 = vrot.slane %v4613, 4
    %v4628 = vadd.f32 %v4613, %v4627
    %v4629 = vrot.slane %v4628, 2
    %v4630 = vadd.f32 %v4628, %v4629
    %v4631 = vrot.slane %v4630, 1
    %v4632 = vadd.f32 %v4630, %v4631
    %v4633 = vrot.slane %v4614, 4
    %v4634 = vadd.f32 %v4614, %v4633
    %v4635 = vrot.slane %v4634, 2
    %v4636 = vadd.f32 %v4634, %v4635
    %v4637 = vrot.slane %v4636, 1
    %v4638 = vadd.f32 %v4636, %v4637
    %v4643 = vrot.slane %v4626, 7
    %v4644 = vsel %vm1800, %v4643, %v4620
    %v4645 = vsel %vm1802, %v4643, %v4644
    %v4646 = vrot.slane %v4632, 6
    %v4647 = vsel %vm1805, %v4646, %v4645
    %v4648 = vsel %vm1807, %v4646, %v4647
    %v4649 = vrot.slane %v4638, 5
    %v4650 = vsel %vm1810, %v4649, %v4648
    %v4651 = vsel %vm1812, %v4649, %v4650
    %s4653 = scalar_lea.vmem [#allocation9], 64
    %4654 = vst [vmem:[%s4653] sm:$0xf] %v4651
    %s4655 = scalar_lea.vmem [#allocation4], 384
    %v4656 = vld [vmem:[%s4655] sm:$0xff]
    %v4657 = vld [vmem:[%s4655 + $0x8] sm:$0xff]
    %v4658 = vld [vmem:[%s4655 + $0x10] sm:$0xff]
    %v4659 = vld [vmem:[%s4655 + $0x18] sm:$0xff]
    %4661 = vset.pattern.permute.xlu0 0
    %4662 = vperm.xlu0 %4661, %v4656
    %v4663 = vpop.permute.xlu0 %4662
    %4666 = vset.pattern.permute.xlu0 0
    %4667 = vperm.xlu0 %4666, %v4657
    %v4668 = vpop.permute.xlu0 %4667
    %4671 = vset.pattern.permute.xlu0 0
    %4672 = vperm.xlu0 %4671, %v4658
    %v4673 = vpop.permute.xlu0 %4672
    %4676 = vset.pattern.permute.xlu0 0
    %4677 = vperm.xlu0 %4676, %v4659
    %v4678 = vpop.permute.xlu0 %4677
    %v4680 = vmul.f32 %v4663, %v4582
    %v4681 = vmul.f32 %v4668, %v4583
    %v4682 = vmul.f32 %v4673, %v4584
    %v4683 = vmul.f32 %v4678, %v4585
    %v4684 = vrot.slane %v4680, 4
    %v4685 = vadd.f32 %v4680, %v4684
    %v4686 = vrot.slane %v4685, 2
    %v4687 = vadd.f32 %v4685, %v4686
    %v4688 = vrot.slane %v4687, 1
    %v4689 = vadd.f32 %v4687, %v4688
    %v4690 = vrot.slane %v4681, 4
    %v4691 = vadd.f32 %v4681, %v4690
    %v4692 = vrot.slane %v4691, 2
    %v4693 = vadd.f32 %v4691, %v4692
    %v4694 = vrot.slane %v4693, 1
    %v4695 = vadd.f32 %v4693, %v4694
    %v4696 = vrot.slane %v4682, 4
    %v4697 = vadd.f32 %v4682, %v4696
    %v4698 = vrot.slane %v4697, 2
    %v4699 = vadd.f32 %v4697, %v4698
    %v4700 = vrot.slane %v4699, 1
    %v4701 = vadd.f32 %v4699, %v4700
    %v4702 = vrot.slane %v4683, 4
    %v4703 = vadd.f32 %v4683, %v4702
    %v4704 = vrot.slane %v4703, 2
    %v4705 = vadd.f32 %v4703, %v4704
    %v4706 = vrot.slane %v4705, 1
    %v4707 = vadd.f32 %v4705, %v4706
    %v4708 = vadd.f32 %v4689, 0.0
    %v4709 = vadd.f32 %v4695, 0.0
    %v4710 = vadd.f32 %v4701, 0.0
    %v4711 = vadd.f32 %v4707, 0.0
    %s4712 = scalar_lea.vmem [#allocation5], 48
    %v4713 = vld [vmem:[%s4712] sm:$0xf]
    %v4716 = vunpack.c.l.s4 1966171168
    %v4717 = vunpack.c.0.s8 %v4716
    %v4718 = vlaneseq
    %v4719 = vshrl.u32 %v4718, 7
    %v4720 = vsub.s32 %v4717, %v4719
    %v4721 = vrot.slane %v4713, %v4720
    %v4722 = vcombine.high %v4721, %v4721
    %v4724 = vunpack.c.l.s4 1966171168
    %v4725 = vunpack.c.0.s8 %v4724
    %v4726 = vlaneseq
    %v4727 = vshrl.u32 %v4726, 7
    %v4728 = vsub.s32 %v4725, %v4727
    %v4729 = vrot.slane %v4721, %v4728
    %v4731 = vunpack.c.l.s4 1966171168
    %v4732 = vunpack.c.0.s8 %v4731
    %v4733 = vlaneseq
    %v4734 = vshrl.u32 %v4733, 7
    %v4735 = vsub.s32 %v4732, %v4734
    %v4736 = vrot.slane %v4722, %v4735
    %v4737 = vcombine.high %v4729, %v4729
    %v4738 = vcombine.high %v4736, %v4736
    %s4739 = scalar_lea.vmem [#allocation6], 48
    %v4740 = vld [vmem:[%s4739] sm:$0xf]
    %v4743 = vunpack.c.l.s4 1966171168
    %v4744 = vunpack.c.0.s8 %v4743
    %v4745 = vlaneseq
    %v4746 = vshrl.u32 %v4745, 7
    %v4747 = vsub.s32 %v4744, %v4746
    %v4748 = vrot.slane %v4740, %v4747
    %v4749 = vcombine.high %v4748, %v4748
    %v4751 = vunpack.c.l.s4 1966171168
    %v4752 = vunpack.c.0.s8 %v4751
    %v4753 = vlaneseq
    %v4754 = vshrl.u32 %v4753, 7
    %v4755 = vsub.s32 %v4752, %v4754
    %v4756 = vrot.slane %v4748, %v4755
    %v4758 = vunpack.c.l.s4 1966171168
    %v4759 = vunpack.c.0.s8 %v4758
    %v4760 = vlaneseq
    %v4761 = vshrl.u32 %v4760, 7
    %v4762 = vsub.s32 %v4759, %v4761
    %v4763 = vrot.slane %v4749, %v4762
    %v4764 = vcombine.high %v4756, %v4756
    %v4765 = vcombine.high %v4763, %v4763
    %v4766 = vlaneseq
    %v4767 = vshrl.u32 %v4766, 7
    %v4768 = vsub.s32 0, %v4767
    %v4769 = vrot.slane %v4729, %v4768
    %v4770 = vlaneseq
    %v4771 = vshrl.u32 %v4770, 7
    %v4772 = vsub.s32 0, %v4771
    %v4773 = vrot.slane %v4736, %v4772
    %v4774 = vlaneseq
    %v4775 = vshrl.u32 %v4774, 7
    %v4776 = vsub.s32 0, %v4775
    %v4777 = vrot.slane %v4737, %v4776
    %v4778 = vlaneseq
    %v4779 = vshrl.u32 %v4778, 7
    %v4780 = vsub.s32 0, %v4779
    %v4781 = vrot.slane %v4738, %v4780
    %v4786 = vmul.f32 %v4769, %v4663
    %v4787 = vmul.f32 %v4773, %v4668
    %v4788 = vmul.f32 %v4777, %v4673
    %v4789 = vmul.f32 %v4781, %v4678
    %v4790 = vsub.f32 1.0, %v4786
    %v4791 = vsub.f32 1.0, %v4787
    %v4792 = vsub.f32 1.0, %v4788
    %v4793 = vsub.f32 1.0, %v4789
    %v4794 = vmul.f32 %v4582, %v4790
    %v4795 = vmul.f32 %v4583, %v4791
    %v4796 = vmul.f32 %v4584, %v4792
    %v4797 = vmul.f32 %v4585, %v4793
    %v4798 = vlaneseq
    %v4799 = vshrl.u32 %v4798, 7
    %v4800 = vsub.s32 0, %v4799
    %v4801 = vrot.slane %v4756, %v4800
    %v4802 = vlaneseq
    %v4803 = vshrl.u32 %v4802, 7
    %v4804 = vsub.s32 0, %v4803
    %v4805 = vrot.slane %v4763, %v4804
    %v4806 = vlaneseq
    %v4807 = vshrl.u32 %v4806, 7
    %v4808 = vsub.s32 0, %v4807
    %v4809 = vrot.slane %v4764, %v4808
    %v4810 = vlaneseq
    %v4811 = vshrl.u32 %v4810, 7
    %v4812 = vsub.s32 0, %v4811
    %v4813 = vrot.slane %v4765, %v4812
    %v4818 = vmul.f32 %v4801, %v4663
    %v4819 = vmul.f32 %v4805, %v4668
    %v4820 = vmul.f32 %v4809, %v4673
    %v4821 = vmul.f32 %v4813, %v4678
    %v4822 = vadd.f32 %v4794, %v4818
    %v4823 = vadd.f32 %v4795, %v4819
    %v4824 = vadd.f32 %v4796, %v4820
    %v4825 = vadd.f32 %v4797, %v4821
    %s4826 = scalar_lea.vmem [#allocation4], 416
    %v4827 = vld [vmem:[%s4826] sm:$0xff]
    %v4828 = vld [vmem:[%s4826 + $0x8] sm:$0xff]
    %v4829 = vld [vmem:[%s4826 + $0x10] sm:$0xff]
    %v4830 = vld [vmem:[%s4826 + $0x18] sm:$0xff]
    %4832 = vset.pattern.permute.xlu0 0
    %4833 = vperm.xlu0 %4832, %v4827
    %v4834 = vpop.permute.xlu0 %4833
    %4837 = vset.pattern.permute.xlu0 0
    %4838 = vperm.xlu0 %4837, %v4828
    %v4839 = vpop.permute.xlu0 %4838
    %4842 = vset.pattern.permute.xlu0 0
    %4843 = vperm.xlu0 %4842, %v4829
    %v4844 = vpop.permute.xlu0 %4843
    %4847 = vset.pattern.permute.xlu0 0
    %4848 = vperm.xlu0 %4847, %v4830
    %v4849 = vpop.permute.xlu0 %4848
    %v4851 = vmul.f32 %v4834, %v4822
    %v4852 = vmul.f32 %v4839, %v4823
    %v4853 = vmul.f32 %v4844, %v4824
    %v4854 = vmul.f32 %v4849, %v4825
    %v4855 = vrot.slane %v4851, 4
    %v4856 = vadd.f32 %v4851, %v4855
    %v4857 = vrot.slane %v4856, 2
    %v4858 = vadd.f32 %v4856, %v4857
    %v4859 = vrot.slane %v4858, 1
    %v4860 = vadd.f32 %v4858, %v4859
    %v4861 = vrot.slane %v4852, 4
    %v4862 = vadd.f32 %v4852, %v4861
    %v4863 = vrot.slane %v4862, 2
    %v4864 = vadd.f32 %v4862, %v4863
    %v4865 = vrot.slane %v4864, 1
    %v4866 = vadd.f32 %v4864, %v4865
    %v4867 = vrot.slane %v4853, 4
    %v4868 = vadd.f32 %v4853, %v4867
    %v4869 = vrot.slane %v4868, 2
    %v4870 = vadd.f32 %v4868, %v4869
    %v4871 = vrot.slane %v4870, 1
    %v4872 = vadd.f32 %v4870, %v4871
    %v4873 = vrot.slane %v4854, 4
    %v4874 = vadd.f32 %v4854, %v4873
    %v4875 = vrot.slane %v4874, 2
    %v4876 = vadd.f32 %v4874, %v4875
    %v4877 = vrot.slane %v4876, 1
    %v4878 = vadd.f32 %v4876, %v4877
    %v4879 = vadd.f32 %v4708, %v4860
    %v4880 = vadd.f32 %v4709, %v4866
    %v4881 = vadd.f32 %v4710, %v4872
    %v4882 = vadd.f32 %v4711, %v4878
    %s4883 = scalar_lea.vmem [#allocation5], 52
    %v4884 = vld [vmem:[%s4883] sm:$0xf]
    %v4887 = vunpack.c.l.s4 1966171168
    %v4888 = vunpack.c.0.s8 %v4887
    %v4889 = vlaneseq
    %v4890 = vshrl.u32 %v4889, 7
    %v4891 = vsub.s32 %v4888, %v4890
    %v4892 = vrot.slane %v4884, %v4891
    %v4893 = vcombine.high %v4892, %v4892
    %v4895 = vunpack.c.l.s4 1966171168
    %v4896 = vunpack.c.0.s8 %v4895
    %v4897 = vlaneseq
    %v4898 = vshrl.u32 %v4897, 7
    %v4899 = vsub.s32 %v4896, %v4898
    %v4900 = vrot.slane %v4892, %v4899
    %v4902 = vunpack.c.l.s4 1966171168
    %v4903 = vunpack.c.0.s8 %v4902
    %v4904 = vlaneseq
    %v4905 = vshrl.u32 %v4904, 7
    %v4906 = vsub.s32 %v4903, %v4905
    %v4907 = vrot.slane %v4893, %v4906
    %v4908 = vcombine.high %v4900, %v4900
    %v4909 = vcombine.high %v4907, %v4907
    %s4910 = scalar_lea.vmem [#allocation6], 52
    %v4911 = vld [vmem:[%s4910] sm:$0xf]
    %v4914 = vunpack.c.l.s4 1966171168
    %v4915 = vunpack.c.0.s8 %v4914
    %v4916 = vlaneseq
    %v4917 = vshrl.u32 %v4916, 7
    %v4918 = vsub.s32 %v4915, %v4917
    %v4919 = vrot.slane %v4911, %v4918
    %v4920 = vcombine.high %v4919, %v4919
    %v4922 = vunpack.c.l.s4 1966171168
    %v4923 = vunpack.c.0.s8 %v4922
    %v4924 = vlaneseq
    %v4925 = vshrl.u32 %v4924, 7
    %v4926 = vsub.s32 %v4923, %v4925
    %v4927 = vrot.slane %v4919, %v4926
    %v4929 = vunpack.c.l.s4 1966171168
    %v4930 = vunpack.c.0.s8 %v4929
    %v4931 = vlaneseq
    %v4932 = vshrl.u32 %v4931, 7
    %v4933 = vsub.s32 %v4930, %v4932
    %v4934 = vrot.slane %v4920, %v4933
    %v4935 = vcombine.high %v4927, %v4927
    %v4936 = vcombine.high %v4934, %v4934
    %v4937 = vlaneseq
    %v4938 = vshrl.u32 %v4937, 7
    %v4939 = vsub.s32 0, %v4938
    %v4940 = vrot.slane %v4900, %v4939
    %v4941 = vlaneseq
    %v4942 = vshrl.u32 %v4941, 7
    %v4943 = vsub.s32 0, %v4942
    %v4944 = vrot.slane %v4907, %v4943
    %v4945 = vlaneseq
    %v4946 = vshrl.u32 %v4945, 7
    %v4947 = vsub.s32 0, %v4946
    %v4948 = vrot.slane %v4908, %v4947
    %v4949 = vlaneseq
    %v4950 = vshrl.u32 %v4949, 7
    %v4951 = vsub.s32 0, %v4950
    %v4952 = vrot.slane %v4909, %v4951
    %v4957 = vmul.f32 %v4940, %v4834
    %v4958 = vmul.f32 %v4944, %v4839
    %v4959 = vmul.f32 %v4948, %v4844
    %v4960 = vmul.f32 %v4952, %v4849
    %v4961 = vsub.f32 1.0, %v4957
    %v4962 = vsub.f32 1.0, %v4958
    %v4963 = vsub.f32 1.0, %v4959
    %v4964 = vsub.f32 1.0, %v4960
    %v4965 = vmul.f32 %v4822, %v4961
    %v4966 = vmul.f32 %v4823, %v4962
    %v4967 = vmul.f32 %v4824, %v4963
    %v4968 = vmul.f32 %v4825, %v4964
    %v4969 = vlaneseq
    %v4970 = vshrl.u32 %v4969, 7
    %v4971 = vsub.s32 0, %v4970
    %v4972 = vrot.slane %v4927, %v4971
    %v4973 = vlaneseq
    %v4974 = vshrl.u32 %v4973, 7
    %v4975 = vsub.s32 0, %v4974
    %v4976 = vrot.slane %v4934, %v4975
    %v4977 = vlaneseq
    %v4978 = vshrl.u32 %v4977, 7
    %v4979 = vsub.s32 0, %v4978
    %v4980 = vrot.slane %v4935, %v4979
    %v4981 = vlaneseq
    %v4982 = vshrl.u32 %v4981, 7
    %v4983 = vsub.s32 0, %v4982
    %v4984 = vrot.slane %v4936, %v4983
    %v4989 = vmul.f32 %v4972, %v4834
    %v4990 = vmul.f32 %v4976, %v4839
    %v4991 = vmul.f32 %v4980, %v4844
    %v4992 = vmul.f32 %v4984, %v4849
    %v4993 = vadd.f32 %v4965, %v4989
    %v4994 = vadd.f32 %v4966, %v4990
    %v4995 = vadd.f32 %v4967, %v4991
    %v4996 = vadd.f32 %v4968, %v4992
    %s4997 = scalar_lea.vmem [#allocation4], 448
    %v4998 = vld [vmem:[%s4997] sm:$0xff]
    %v4999 = vld [vmem:[%s4997 + $0x8] sm:$0xff]
    %v5000 = vld [vmem:[%s4997 + $0x10] sm:$0xff]
    %v5001 = vld [vmem:[%s4997 + $0x18] sm:$0xff]
    %5003 = vset.pattern.permute.xlu0 0
    %5004 = vperm.xlu0 %5003, %v4998
    %v5005 = vpop.permute.xlu0 %5004
    %5008 = vset.pattern.permute.xlu0 0
    %5009 = vperm.xlu0 %5008, %v4999
    %v5010 = vpop.permute.xlu0 %5009
    %5013 = vset.pattern.permute.xlu0 0
    %5014 = vperm.xlu0 %5013, %v5000
    %v5015 = vpop.permute.xlu0 %5014
    %5018 = vset.pattern.permute.xlu0 0
    %5019 = vperm.xlu0 %5018, %v5001
    %v5020 = vpop.permute.xlu0 %5019
    %v5022 = vmul.f32 %v5005, %v4993
    %v5023 = vmul.f32 %v5010, %v4994
    %v5024 = vmul.f32 %v5015, %v4995
    %v5025 = vmul.f32 %v5020, %v4996
    %v5026 = vrot.slane %v5022, 4
    %v5027 = vadd.f32 %v5022, %v5026
    %v5028 = vrot.slane %v5027, 2
    %v5029 = vadd.f32 %v5027, %v5028
    %v5030 = vrot.slane %v5029, 1
    %v5031 = vadd.f32 %v5029, %v5030
    %v5032 = vrot.slane %v5023, 4
    %v5033 = vadd.f32 %v5023, %v5032
    %v5034 = vrot.slane %v5033, 2
    %v5035 = vadd.f32 %v5033, %v5034
    %v5036 = vrot.slane %v5035, 1
    %v5037 = vadd.f32 %v5035, %v5036
    %v5038 = vrot.slane %v5024, 4
    %v5039 = vadd.f32 %v5024, %v5038
    %v5040 = vrot.slane %v5039, 2
    %v5041 = vadd.f32 %v5039, %v5040
    %v5042 = vrot.slane %v5041, 1
    %v5043 = vadd.f32 %v5041, %v5042
    %v5044 = vrot.slane %v5025, 4
    %v5045 = vadd.f32 %v5025, %v5044
    %v5046 = vrot.slane %v5045, 2
    %v5047 = vadd.f32 %v5045, %v5046
    %v5048 = vrot.slane %v5047, 1
    %v5049 = vadd.f32 %v5047, %v5048
    %v5050 = vadd.f32 %v4879, %v5031
    %v5051 = vadd.f32 %v4880, %v5037
    %v5052 = vadd.f32 %v4881, %v5043
    %v5053 = vadd.f32 %v4882, %v5049
    %s5054 = scalar_lea.vmem [#allocation5], 56
    %v5055 = vld [vmem:[%s5054] sm:$0xf]
    %v5058 = vunpack.c.l.s4 1966171168
    %v5059 = vunpack.c.0.s8 %v5058
    %v5060 = vlaneseq
    %v5061 = vshrl.u32 %v5060, 7
    %v5062 = vsub.s32 %v5059, %v5061
    %v5063 = vrot.slane %v5055, %v5062
    %v5064 = vcombine.high %v5063, %v5063
    %v5066 = vunpack.c.l.s4 1966171168
    %v5067 = vunpack.c.0.s8 %v5066
    %v5068 = vlaneseq
    %v5069 = vshrl.u32 %v5068, 7
    %v5070 = vsub.s32 %v5067, %v5069
    %v5071 = vrot.slane %v5063, %v5070
    %v5073 = vunpack.c.l.s4 1966171168
    %v5074 = vunpack.c.0.s8 %v5073
    %v5075 = vlaneseq
    %v5076 = vshrl.u32 %v5075, 7
    %v5077 = vsub.s32 %v5074, %v5076
    %v5078 = vrot.slane %v5064, %v5077
    %v5079 = vcombine.high %v5071, %v5071
    %v5080 = vcombine.high %v5078, %v5078
    %s5081 = scalar_lea.vmem [#allocation6], 56
    %v5082 = vld [vmem:[%s5081] sm:$0xf]
    %v5085 = vunpack.c.l.s4 1966171168
    %v5086 = vunpack.c.0.s8 %v5085
    %v5087 = vlaneseq
    %v5088 = vshrl.u32 %v5087, 7
    %v5089 = vsub.s32 %v5086, %v5088
    %v5090 = vrot.slane %v5082, %v5089
    %v5091 = vcombine.high %v5090, %v5090
    %v5093 = vunpack.c.l.s4 1966171168
    %v5094 = vunpack.c.0.s8 %v5093
    %v5095 = vlaneseq
    %v5096 = vshrl.u32 %v5095, 7
    %v5097 = vsub.s32 %v5094, %v5096
    %v5098 = vrot.slane %v5090, %v5097
    %v5100 = vunpack.c.l.s4 1966171168
    %v5101 = vunpack.c.0.s8 %v5100
    %v5102 = vlaneseq
    %v5103 = vshrl.u32 %v5102, 7
    %v5104 = vsub.s32 %v5101, %v5103
    %v5105 = vrot.slane %v5091, %v5104
    %v5106 = vcombine.high %v5098, %v5098
    %v5107 = vcombine.high %v5105, %v5105
    %v5108 = vlaneseq
    %v5109 = vshrl.u32 %v5108, 7
    %v5110 = vsub.s32 0, %v5109
    %v5111 = vrot.slane %v5071, %v5110
    %v5112 = vlaneseq
    %v5113 = vshrl.u32 %v5112, 7
    %v5114 = vsub.s32 0, %v5113
    %v5115 = vrot.slane %v5078, %v5114
    %v5116 = vlaneseq
    %v5117 = vshrl.u32 %v5116, 7
    %v5118 = vsub.s32 0, %v5117
    %v5119 = vrot.slane %v5079, %v5118
    %v5120 = vlaneseq
    %v5121 = vshrl.u32 %v5120, 7
    %v5122 = vsub.s32 0, %v5121
    %v5123 = vrot.slane %v5080, %v5122
    %v5128 = vmul.f32 %v5111, %v5005
    %v5129 = vmul.f32 %v5115, %v5010
    %v5130 = vmul.f32 %v5119, %v5015
    %v5131 = vmul.f32 %v5123, %v5020
    %v5132 = vsub.f32 1.0, %v5128
    %v5133 = vsub.f32 1.0, %v5129
    %v5134 = vsub.f32 1.0, %v5130
    %v5135 = vsub.f32 1.0, %v5131
    %v5136 = vmul.f32 %v4993, %v5132
    %v5137 = vmul.f32 %v4994, %v5133
    %v5138 = vmul.f32 %v4995, %v5134
    %v5139 = vmul.f32 %v4996, %v5135
    %v5140 = vlaneseq
    %v5141 = vshrl.u32 %v5140, 7
    %v5142 = vsub.s32 0, %v5141
    %v5143 = vrot.slane %v5098, %v5142
    %v5144 = vlaneseq
    %v5145 = vshrl.u32 %v5144, 7
    %v5146 = vsub.s32 0, %v5145
    %v5147 = vrot.slane %v5105, %v5146
    %v5148 = vlaneseq
    %v5149 = vshrl.u32 %v5148, 7
    %v5150 = vsub.s32 0, %v5149
    %v5151 = vrot.slane %v5106, %v5150
    %v5152 = vlaneseq
    %v5153 = vshrl.u32 %v5152, 7
    %v5154 = vsub.s32 0, %v5153
    %v5155 = vrot.slane %v5107, %v5154
    %v5160 = vmul.f32 %v5143, %v5005
    %v5161 = vmul.f32 %v5147, %v5010
    %v5162 = vmul.f32 %v5151, %v5015
    %v5163 = vmul.f32 %v5155, %v5020
    %v5164 = vadd.f32 %v5136, %v5160
    %v5165 = vadd.f32 %v5137, %v5161
    %v5166 = vadd.f32 %v5138, %v5162
    %v5167 = vadd.f32 %v5139, %v5163
    %v5172 = vrot.slane %v5051, 7
    %v5173 = vsel %vm1800, %v5172, %v5050
    %v5174 = vsel %vm1802, %v5172, %v5173
    %v5175 = vrot.slane %v5052, 6
    %v5176 = vsel %vm1805, %v5175, %v5174
    %v5177 = vsel %vm1807, %v5175, %v5176
    %v5178 = vrot.slane %v5053, 5
    %v5179 = vsel %vm1810, %v5178, %v5177
    %v5180 = vsel %vm1812, %v5178, %v5179
    %5182 = vst [vmem:[%s4653 + $0x8] sm:$0xf] %v5180
    %s5183 = scalar_lea.vmem [#allocation7], 16
    %v5184 = vld [vmem:[%s5183] sm:$0xf]
    %v5187 = vunpack.c.l.s4 1966171168
    %v5188 = vunpack.c.0.s8 %v5187
    %v5189 = vlaneseq
    %v5190 = vshrl.u32 %v5189, 7
    %v5191 = vsub.s32 %v5188, %v5190
    %v5192 = vrot.slane %v5184, %v5191
    %v5193 = vcombine.high %v5192, %v5192
    %v5195 = vunpack.c.l.s4 1966171168
    %v5196 = vunpack.c.0.s8 %v5195
    %v5197 = vlaneseq
    %v5198 = vshrl.u32 %v5197, 7
    %v5199 = vsub.s32 %v5196, %v5198
    %v5200 = vrot.slane %v5192, %v5199
    %v5202 = vunpack.c.l.s4 1966171168
    %v5203 = vunpack.c.0.s8 %v5202
    %v5204 = vlaneseq
    %v5205 = vshrl.u32 %v5204, 7
    %v5206 = vsub.s32 %v5203, %v5205
    %v5207 = vrot.slane %v5193, %v5206
    %v5208 = vcombine.high %v5200, %v5200
    %v5209 = vcombine.high %v5207, %v5207
    %s5210 = scalar_lea.vmem [#allocation8], 16
    %v5211 = vld [vmem:[%s5210] sm:$0xf]
    %v5214 = vunpack.c.l.s4 1966171168
    %v5215 = vunpack.c.0.s8 %v5214
    %v5216 = vlaneseq
    %v5217 = vshrl.u32 %v5216, 7
    %v5218 = vsub.s32 %v5215, %v5217
    %v5219 = vrot.slane %v5211, %v5218
    %v5220 = vcombine.high %v5219, %v5219
    %v5222 = vunpack.c.l.s4 1966171168
    %v5223 = vunpack.c.0.s8 %v5222
    %v5224 = vlaneseq
    %v5225 = vshrl.u32 %v5224, 7
    %v5226 = vsub.s32 %v5223, %v5225
    %v5227 = vrot.slane %v5219, %v5226
    %v5229 = vunpack.c.l.s4 1966171168
    %v5230 = vunpack.c.0.s8 %v5229
    %v5231 = vlaneseq
    %v5232 = vshrl.u32 %v5231, 7
    %v5233 = vsub.s32 %v5230, %v5232
    %v5234 = vrot.slane %v5220, %v5233
    %v5235 = vcombine.high %v5227, %v5227
    %v5236 = vcombine.high %v5234, %v5234
    %v5237 = vlaneseq
    %v5238 = vshrl.u32 %v5237, 7
    %v5239 = vsub.s32 0, %v5238
    %v5240 = vrot.slane %v5200, %v5239
    %v5241 = vlaneseq
    %v5242 = vshrl.u32 %v5241, 7
    %v5243 = vsub.s32 0, %v5242
    %v5244 = vrot.slane %v5207, %v5243
    %v5245 = vlaneseq
    %v5246 = vshrl.u32 %v5245, 7
    %v5247 = vsub.s32 0, %v5246
    %v5248 = vrot.slane %v5208, %v5247
    %v5249 = vlaneseq
    %v5250 = vshrl.u32 %v5249, 7
    %v5251 = vsub.s32 0, %v5250
    %v5252 = vrot.slane %v5209, %v5251
    %v5257 = vmul.f32 %v5240, %v4594
    %v5258 = vmul.f32 %v5244, %v4599
    %v5259 = vmul.f32 %v5248, %v4604
    %v5260 = vmul.f32 %v5252, %v4609
    %v5261 = vsub.f32 1.0, %v5257
    %v5262 = vsub.f32 1.0, %v5258
    %v5263 = vsub.f32 1.0, %v5259
    %v5264 = vsub.f32 1.0, %v5260
    %v5265 = vmul.f32 %v5164, %v5261
    %v5266 = vmul.f32 %v5165, %v5262
    %v5267 = vmul.f32 %v5166, %v5263
    %v5268 = vmul.f32 %v5167, %v5264
    %v5269 = vlaneseq
    %v5270 = vshrl.u32 %v5269, 7
    %v5271 = vsub.s32 0, %v5270
    %v5272 = vrot.slane %v5227, %v5271
    %v5273 = vlaneseq
    %v5274 = vshrl.u32 %v5273, 7
    %v5275 = vsub.s32 0, %v5274
    %v5276 = vrot.slane %v5234, %v5275
    %v5277 = vlaneseq
    %v5278 = vshrl.u32 %v5277, 7
    %v5279 = vsub.s32 0, %v5278
    %v5280 = vrot.slane %v5235, %v5279
    %v5281 = vlaneseq
    %v5282 = vshrl.u32 %v5281, 7
    %v5283 = vsub.s32 0, %v5282
    %v5284 = vrot.slane %v5236, %v5283
    %v5289 = vmul.f32 %v5272, %v4594
    %v5290 = vmul.f32 %v5276, %v4599
    %v5291 = vmul.f32 %v5280, %v4604
    %v5292 = vmul.f32 %v5284, %v4609
    %v5293 = vadd.f32 %v5265, %v5289
    %v5294 = vadd.f32 %v5266, %v5290
    %v5295 = vadd.f32 %v5267, %v5291
    %v5296 = vadd.f32 %v5268, %v5292
    %s5297 = scalar_lea.vmem [#allocation3], 160
    %v5298 = vld [vmem:[%s5297] sm:$0xff]
    %v5299 = vld [vmem:[%s5297 + $0x8] sm:$0xff]
    %v5300 = vld [vmem:[%s5297 + $0x10] sm:$0xff]
    %v5301 = vld [vmem:[%s5297 + $0x18] sm:$0xff]
    %5303 = vset.pattern.permute.xlu0 0
    %5304 = vperm.xlu0 %5303, %v5298
    %v5305 = vpop.permute.xlu0 %5304
    %5308 = vset.pattern.permute.xlu0 0
    %5309 = vperm.xlu0 %5308, %v5299
    %v5310 = vpop.permute.xlu0 %5309
    %5313 = vset.pattern.permute.xlu0 0
    %5314 = vperm.xlu0 %5313, %v5300
    %v5315 = vpop.permute.xlu0 %5314
    %5318 = vset.pattern.permute.xlu0 0
    %5319 = vperm.xlu0 %5318, %v5301
    %v5320 = vpop.permute.xlu0 %5319
    %v5322 = vmul.f32 %v5305, %v5293
    %v5323 = vmul.f32 %v5310, %v5294
    %v5324 = vmul.f32 %v5315, %v5295
    %v5325 = vmul.f32 %v5320, %v5296
    %v5326 = vrot.slane %v5322, 4
    %v5327 = vadd.f32 %v5322, %v5326
    %v5328 = vrot.slane %v5327, 2
    %v5329 = vadd.f32 %v5327, %v5328
    %v5330 = vrot.slane %v5329, 1
    %v5331 = vadd.f32 %v5329, %v5330
    %v5332 = vrot.slane %v5323, 4
    %v5333 = vadd.f32 %v5323, %v5332
    %v5334 = vrot.slane %v5333, 2
    %v5335 = vadd.f32 %v5333, %v5334
    %v5336 = vrot.slane %v5335, 1
    %v5337 = vadd.f32 %v5335, %v5336
    %v5338 = vrot.slane %v5324, 4
    %v5339 = vadd.f32 %v5324, %v5338
    %v5340 = vrot.slane %v5339, 2
    %v5341 = vadd.f32 %v5339, %v5340
    %v5342 = vrot.slane %v5341, 1
    %v5343 = vadd.f32 %v5341, %v5342
    %v5344 = vrot.slane %v5325, 4
    %v5345 = vadd.f32 %v5325, %v5344
    %v5346 = vrot.slane %v5345, 2
    %v5347 = vadd.f32 %v5345, %v5346
    %v5348 = vrot.slane %v5347, 1
    %v5349 = vadd.f32 %v5347, %v5348
    %v5354 = vrot.slane %v5337, 7
    %v5355 = vsel %vm1800, %v5354, %v5331
    %v5356 = vsel %vm1802, %v5354, %v5355
    %v5357 = vrot.slane %v5343, 6
    %v5358 = vsel %vm1805, %v5357, %v5356
    %v5359 = vsel %vm1807, %v5357, %v5358
    %v5360 = vrot.slane %v5349, 5
    %v5361 = vsel %vm1810, %v5360, %v5359
    %v5362 = vsel %vm1812, %v5360, %v5361
    %s5364 = scalar_lea.vmem [#allocation9], 80
    %5365 = vst [vmem:[%s5364] sm:$0xf] %v5362
    %s5366 = scalar_lea.vmem [#allocation4], 480
    %v5367 = vld [vmem:[%s5366] sm:$0xff]
    %v5368 = vld [vmem:[%s5366 + $0x8] sm:$0xff]
    %v5369 = vld [vmem:[%s5366 + $0x10] sm:$0xff]
    %v5370 = vld [vmem:[%s5366 + $0x18] sm:$0xff]
    %5372 = vset.pattern.permute.xlu0 0
    %5373 = vperm.xlu0 %5372, %v5367
    %v5374 = vpop.permute.xlu0 %5373
    %5377 = vset.pattern.permute.xlu0 0
    %5378 = vperm.xlu0 %5377, %v5368
    %v5379 = vpop.permute.xlu0 %5378
    %5382 = vset.pattern.permute.xlu0 0
    %5383 = vperm.xlu0 %5382, %v5369
    %v5384 = vpop.permute.xlu0 %5383
    %5387 = vset.pattern.permute.xlu0 0
    %5388 = vperm.xlu0 %5387, %v5370
    %v5389 = vpop.permute.xlu0 %5388
    %v5391 = vmul.f32 %v5374, %v5293
    %v5392 = vmul.f32 %v5379, %v5294
    %v5393 = vmul.f32 %v5384, %v5295
    %v5394 = vmul.f32 %v5389, %v5296
    %v5395 = vrot.slane %v5391, 4
    %v5396 = vadd.f32 %v5391, %v5395
    %v5397 = vrot.slane %v5396, 2
    %v5398 = vadd.f32 %v5396, %v5397
    %v5399 = vrot.slane %v5398, 1
    %v5400 = vadd.f32 %v5398, %v5399
    %v5401 = vrot.slane %v5392, 4
    %v5402 = vadd.f32 %v5392, %v5401
    %v5403 = vrot.slane %v5402, 2
    %v5404 = vadd.f32 %v5402, %v5403
    %v5405 = vrot.slane %v5404, 1
    %v5406 = vadd.f32 %v5404, %v5405
    %v5407 = vrot.slane %v5393, 4
    %v5408 = vadd.f32 %v5393, %v5407
    %v5409 = vrot.slane %v5408, 2
    %v5410 = vadd.f32 %v5408, %v5409
    %v5411 = vrot.slane %v5410, 1
    %v5412 = vadd.f32 %v5410, %v5411
    %v5413 = vrot.slane %v5394, 4
    %v5414 = vadd.f32 %v5394, %v5413
    %v5415 = vrot.slane %v5414, 2
    %v5416 = vadd.f32 %v5414, %v5415
    %v5417 = vrot.slane %v5416, 1
    %v5418 = vadd.f32 %v5416, %v5417
    %v5419 = vadd.f32 %v5400, 0.0
    %v5420 = vadd.f32 %v5406, 0.0
    %v5421 = vadd.f32 %v5412, 0.0
    %v5422 = vadd.f32 %v5418, 0.0
    %s5423 = scalar_lea.vmem [#allocation5], 60
    %v5424 = vld [vmem:[%s5423] sm:$0xf]
    %v5427 = vunpack.c.l.s4 1966171168
    %v5428 = vunpack.c.0.s8 %v5427
    %v5429 = vlaneseq
    %v5430 = vshrl.u32 %v5429, 7
    %v5431 = vsub.s32 %v5428, %v5430
    %v5432 = vrot.slane %v5424, %v5431
    %v5433 = vcombine.high %v5432, %v5432
    %v5435 = vunpack.c.l.s4 1966171168
    %v5436 = vunpack.c.0.s8 %v5435
    %v5437 = vlaneseq
    %v5438 = vshrl.u32 %v5437, 7
    %v5439 = vsub.s32 %v5436, %v5438
    %v5440 = vrot.slane %v5432, %v5439
    %v5442 = vunpack.c.l.s4 1966171168
    %v5443 = vunpack.c.0.s8 %v5442
    %v5444 = vlaneseq
    %v5445 = vshrl.u32 %v5444, 7
    %v5446 = vsub.s32 %v5443, %v5445
    %v5447 = vrot.slane %v5433, %v5446
    %v5448 = vcombine.high %v5440, %v5440
    %v5449 = vcombine.high %v5447, %v5447
    %s5450 = scalar_lea.vmem [#allocation6], 60
    %v5451 = vld [vmem:[%s5450] sm:$0xf]
    %v5454 = vunpack.c.l.s4 1966171168
    %v5455 = vunpack.c.0.s8 %v5454
    %v5456 = vlaneseq
    %v5457 = vshrl.u32 %v5456, 7
    %v5458 = vsub.s32 %v5455, %v5457
    %v5459 = vrot.slane %v5451, %v5458
    %v5460 = vcombine.high %v5459, %v5459
    %v5462 = vunpack.c.l.s4 1966171168
    %v5463 = vunpack.c.0.s8 %v5462
    %v5464 = vlaneseq
    %v5465 = vshrl.u32 %v5464, 7
    %v5466 = vsub.s32 %v5463, %v5465
    %v5467 = vrot.slane %v5459, %v5466
    %v5469 = vunpack.c.l.s4 1966171168
    %v5470 = vunpack.c.0.s8 %v5469
    %v5471 = vlaneseq
    %v5472 = vshrl.u32 %v5471, 7
    %v5473 = vsub.s32 %v5470, %v5472
    %v5474 = vrot.slane %v5460, %v5473
    %v5475 = vcombine.high %v5467, %v5467
    %v5476 = vcombine.high %v5474, %v5474
    %v5477 = vlaneseq
    %v5478 = vshrl.u32 %v5477, 7
    %v5479 = vsub.s32 0, %v5478
    %v5480 = vrot.slane %v5440, %v5479
    %v5481 = vlaneseq
    %v5482 = vshrl.u32 %v5481, 7
    %v5483 = vsub.s32 0, %v5482
    %v5484 = vrot.slane %v5447, %v5483
    %v5485 = vlaneseq
    %v5486 = vshrl.u32 %v5485, 7
    %v5487 = vsub.s32 0, %v5486
    %v5488 = vrot.slane %v5448, %v5487
    %v5489 = vlaneseq
    %v5490 = vshrl.u32 %v5489, 7
    %v5491 = vsub.s32 0, %v5490
    %v5492 = vrot.slane %v5449, %v5491
    %v5497 = vmul.f32 %v5480, %v5374
    %v5498 = vmul.f32 %v5484, %v5379
    %v5499 = vmul.f32 %v5488, %v5384
    %v5500 = vmul.f32 %v5492, %v5389
    %v5501 = vsub.f32 1.0, %v5497
    %v5502 = vsub.f32 1.0, %v5498
    %v5503 = vsub.f32 1.0, %v5499
    %v5504 = vsub.f32 1.0, %v5500
    %v5505 = vmul.f32 %v5293, %v5501
    %v5506 = vmul.f32 %v5294, %v5502
    %v5507 = vmul.f32 %v5295, %v5503
    %v5508 = vmul.f32 %v5296, %v5504
    %v5509 = vlaneseq
    %v5510 = vshrl.u32 %v5509, 7
    %v5511 = vsub.s32 0, %v5510
    %v5512 = vrot.slane %v5467, %v5511
    %v5513 = vlaneseq
    %v5514 = vshrl.u32 %v5513, 7
    %v5515 = vsub.s32 0, %v5514
    %v5516 = vrot.slane %v5474, %v5515
    %v5517 = vlaneseq
    %v5518 = vshrl.u32 %v5517, 7
    %v5519 = vsub.s32 0, %v5518
    %v5520 = vrot.slane %v5475, %v5519
    %v5521 = vlaneseq
    %v5522 = vshrl.u32 %v5521, 7
    %v5523 = vsub.s32 0, %v5522
    %v5524 = vrot.slane %v5476, %v5523
    %v5529 = vmul.f32 %v5512, %v5374
    %v5530 = vmul.f32 %v5516, %v5379
    %v5531 = vmul.f32 %v5520, %v5384
    %v5532 = vmul.f32 %v5524, %v5389
    %v5533 = vadd.f32 %v5505, %v5529
    %v5534 = vadd.f32 %v5506, %v5530
    %v5535 = vadd.f32 %v5507, %v5531
    %v5536 = vadd.f32 %v5508, %v5532
    %s5537 = scalar_lea.vmem [#allocation4], 512
    %v5538 = vld [vmem:[%s5537] sm:$0xff]
    %v5539 = vld [vmem:[%s5537 + $0x8] sm:$0xff]
    %v5540 = vld [vmem:[%s5537 + $0x10] sm:$0xff]
    %v5541 = vld [vmem:[%s5537 + $0x18] sm:$0xff]
    %5543 = vset.pattern.permute.xlu0 0
    %5544 = vperm.xlu0 %5543, %v5538
    %v5545 = vpop.permute.xlu0 %5544
    %5548 = vset.pattern.permute.xlu0 0
    %5549 = vperm.xlu0 %5548, %v5539
    %v5550 = vpop.permute.xlu0 %5549
    %5553 = vset.pattern.permute.xlu0 0
    %5554 = vperm.xlu0 %5553, %v5540
    %v5555 = vpop.permute.xlu0 %5554
    %5558 = vset.pattern.permute.xlu0 0
    %5559 = vperm.xlu0 %5558, %v5541
    %v5560 = vpop.permute.xlu0 %5559
    %v5562 = vmul.f32 %v5545, %v5533
    %v5563 = vmul.f32 %v5550, %v5534
    %v5564 = vmul.f32 %v5555, %v5535
    %v5565 = vmul.f32 %v5560, %v5536
    %v5566 = vrot.slane %v5562, 4
    %v5567 = vadd.f32 %v5562, %v5566
    %v5568 = vrot.slane %v5567, 2
    %v5569 = vadd.f32 %v5567, %v5568
    %v5570 = vrot.slane %v5569, 1
    %v5571 = vadd.f32 %v5569, %v5570
    %v5572 = vrot.slane %v5563, 4
    %v5573 = vadd.f32 %v5563, %v5572
    %v5574 = vrot.slane %v5573, 2
    %v5575 = vadd.f32 %v5573, %v5574
    %v5576 = vrot.slane %v5575, 1
    %v5577 = vadd.f32 %v5575, %v5576
    %v5578 = vrot.slane %v5564, 4
    %v5579 = vadd.f32 %v5564, %v5578
    %v5580 = vrot.slane %v5579, 2
    %v5581 = vadd.f32 %v5579, %v5580
    %v5582 = vrot.slane %v5581, 1
    %v5583 = vadd.f32 %v5581, %v5582
    %v5584 = vrot.slane %v5565, 4
    %v5585 = vadd.f32 %v5565, %v5584
    %v5586 = vrot.slane %v5585, 2
    %v5587 = vadd.f32 %v5585, %v5586
    %v5588 = vrot.slane %v5587, 1
    %v5589 = vadd.f32 %v5587, %v5588
    %v5590 = vadd.f32 %v5419, %v5571
    %v5591 = vadd.f32 %v5420, %v5577
    %v5592 = vadd.f32 %v5421, %v5583
    %v5593 = vadd.f32 %v5422, %v5589
    %s5594 = scalar_lea.vmem [#allocation5], 64
    %v5595 = vld [vmem:[%s5594] sm:$0xf]
    %v5598 = vunpack.c.l.s4 1966171168
    %v5599 = vunpack.c.0.s8 %v5598
    %v5600 = vlaneseq
    %v5601 = vshrl.u32 %v5600, 7
    %v5602 = vsub.s32 %v5599, %v5601
    %v5603 = vrot.slane %v5595, %v5602
    %v5604 = vcombine.high %v5603, %v5603
    %v5606 = vunpack.c.l.s4 1966171168
    %v5607 = vunpack.c.0.s8 %v5606
    %v5608 = vlaneseq
    %v5609 = vshrl.u32 %v5608, 7
    %v5610 = vsub.s32 %v5607, %v5609
    %v5611 = vrot.slane %v5603, %v5610
    %v5613 = vunpack.c.l.s4 1966171168
    %v5614 = vunpack.c.0.s8 %v5613
    %v5615 = vlaneseq
    %v5616 = vshrl.u32 %v5615, 7
    %v5617 = vsub.s32 %v5614, %v5616
    %v5618 = vrot.slane %v5604, %v5617
    %v5619 = vcombine.high %v5611, %v5611
    %v5620 = vcombine.high %v5618, %v5618
    %s5621 = scalar_lea.vmem [#allocation6], 64
    %v5622 = vld [vmem:[%s5621] sm:$0xf]
    %v5625 = vunpack.c.l.s4 1966171168
    %v5626 = vunpack.c.0.s8 %v5625
    %v5627 = vlaneseq
    %v5628 = vshrl.u32 %v5627, 7
    %v5629 = vsub.s32 %v5626, %v5628
    %v5630 = vrot.slane %v5622, %v5629
    %v5631 = vcombine.high %v5630, %v5630
    %v5633 = vunpack.c.l.s4 1966171168
    %v5634 = vunpack.c.0.s8 %v5633
    %v5635 = vlaneseq
    %v5636 = vshrl.u32 %v5635, 7
    %v5637 = vsub.s32 %v5634, %v5636
    %v5638 = vrot.slane %v5630, %v5637
    %v5640 = vunpack.c.l.s4 1966171168
    %v5641 = vunpack.c.0.s8 %v5640
    %v5642 = vlaneseq
    %v5643 = vshrl.u32 %v5642, 7
    %v5644 = vsub.s32 %v5641, %v5643
    %v5645 = vrot.slane %v5631, %v5644
    %v5646 = vcombine.high %v5638, %v5638
    %v5647 = vcombine.high %v5645, %v5645
    %v5648 = vlaneseq
    %v5649 = vshrl.u32 %v5648, 7
    %v5650 = vsub.s32 0, %v5649
    %v5651 = vrot.slane %v5611, %v5650
    %v5652 = vlaneseq
    %v5653 = vshrl.u32 %v5652, 7
    %v5654 = vsub.s32 0, %v5653
    %v5655 = vrot.slane %v5618, %v5654
    %v5656 = vlaneseq
    %v5657 = vshrl.u32 %v5656, 7
    %v5658 = vsub.s32 0, %v5657
    %v5659 = vrot.slane %v5619, %v5658
    %v5660 = vlaneseq
    %v5661 = vshrl.u32 %v5660, 7
    %v5662 = vsub.s32 0, %v5661
    %v5663 = vrot.slane %v5620, %v5662
    %v5668 = vmul.f32 %v5651, %v5545
    %v5669 = vmul.f32 %v5655, %v5550
    %v5670 = vmul.f32 %v5659, %v5555
    %v5671 = vmul.f32 %v5663, %v5560
    %v5672 = vsub.f32 1.0, %v5668
    %v5673 = vsub.f32 1.0, %v5669
    %v5674 = vsub.f32 1.0, %v5670
    %v5675 = vsub.f32 1.0, %v5671
    %v5676 = vmul.f32 %v5533, %v5672
    %v5677 = vmul.f32 %v5534, %v5673
    %v5678 = vmul.f32 %v5535, %v5674
    %v5679 = vmul.f32 %v5536, %v5675
    %v5680 = vlaneseq
    %v5681 = vshrl.u32 %v5680, 7
    %v5682 = vsub.s32 0, %v5681
    %v5683 = vrot.slane %v5638, %v5682
    %v5684 = vlaneseq
    %v5685 = vshrl.u32 %v5684, 7
    %v5686 = vsub.s32 0, %v5685
    %v5687 = vrot.slane %v5645, %v5686
    %v5688 = vlaneseq
    %v5689 = vshrl.u32 %v5688, 7
    %v5690 = vsub.s32 0, %v5689
    %v5691 = vrot.slane %v5646, %v5690
    %v5692 = vlaneseq
    %v5693 = vshrl.u32 %v5692, 7
    %v5694 = vsub.s32 0, %v5693
    %v5695 = vrot.slane %v5647, %v5694
    %v5700 = vmul.f32 %v5683, %v5545
    %v5701 = vmul.f32 %v5687, %v5550
    %v5702 = vmul.f32 %v5691, %v5555
    %v5703 = vmul.f32 %v5695, %v5560
    %v5704 = vadd.f32 %v5676, %v5700
    %v5705 = vadd.f32 %v5677, %v5701
    %v5706 = vadd.f32 %v5678, %v5702
    %v5707 = vadd.f32 %v5679, %v5703
    %s5708 = scalar_lea.vmem [#allocation4], 544
    %v5709 = vld [vmem:[%s5708] sm:$0xff]
    %v5710 = vld [vmem:[%s5708 + $0x8] sm:$0xff]
    %v5711 = vld [vmem:[%s5708 + $0x10] sm:$0xff]
    %v5712 = vld [vmem:[%s5708 + $0x18] sm:$0xff]
    %5714 = vset.pattern.permute.xlu0 0
    %5715 = vperm.xlu0 %5714, %v5709
    %v5716 = vpop.permute.xlu0 %5715
    %5719 = vset.pattern.permute.xlu0 0
    %5720 = vperm.xlu0 %5719, %v5710
    %v5721 = vpop.permute.xlu0 %5720
    %5724 = vset.pattern.permute.xlu0 0
    %5725 = vperm.xlu0 %5724, %v5711
    %v5726 = vpop.permute.xlu0 %5725
    %5729 = vset.pattern.permute.xlu0 0
    %5730 = vperm.xlu0 %5729, %v5712
    %v5731 = vpop.permute.xlu0 %5730
    %v5733 = vmul.f32 %v5716, %v5704
    %v5734 = vmul.f32 %v5721, %v5705
    %v5735 = vmul.f32 %v5726, %v5706
    %v5736 = vmul.f32 %v5731, %v5707
    %v5737 = vrot.slane %v5733, 4
    %v5738 = vadd.f32 %v5733, %v5737
    %v5739 = vrot.slane %v5738, 2
    %v5740 = vadd.f32 %v5738, %v5739
    %v5741 = vrot.slane %v5740, 1
    %v5742 = vadd.f32 %v5740, %v5741
    %v5743 = vrot.slane %v5734, 4
    %v5744 = vadd.f32 %v5734, %v5743
    %v5745 = vrot.slane %v5744, 2
    %v5746 = vadd.f32 %v5744, %v5745
    %v5747 = vrot.slane %v5746, 1
    %v5748 = vadd.f32 %v5746, %v5747
    %v5749 = vrot.slane %v5735, 4
    %v5750 = vadd.f32 %v5735, %v5749
    %v5751 = vrot.slane %v5750, 2
    %v5752 = vadd.f32 %v5750, %v5751
    %v5753 = vrot.slane %v5752, 1
    %v5754 = vadd.f32 %v5752, %v5753
    %v5755 = vrot.slane %v5736, 4
    %v5756 = vadd.f32 %v5736, %v5755
    %v5757 = vrot.slane %v5756, 2
    %v5758 = vadd.f32 %v5756, %v5757
    %v5759 = vrot.slane %v5758, 1
    %v5760 = vadd.f32 %v5758, %v5759
    %v5761 = vadd.f32 %v5590, %v5742
    %v5762 = vadd.f32 %v5591, %v5748
    %v5763 = vadd.f32 %v5592, %v5754
    %v5764 = vadd.f32 %v5593, %v5760
    %s5765 = scalar_lea.vmem [#allocation5], 68
    %v5766 = vld [vmem:[%s5765] sm:$0xf]
    %v5769 = vunpack.c.l.s4 1966171168
    %v5770 = vunpack.c.0.s8 %v5769
    %v5771 = vlaneseq
    %v5772 = vshrl.u32 %v5771, 7
    %v5773 = vsub.s32 %v5770, %v5772
    %v5774 = vrot.slane %v5766, %v5773
    %v5775 = vcombine.high %v5774, %v5774
    %v5777 = vunpack.c.l.s4 1966171168
    %v5778 = vunpack.c.0.s8 %v5777
    %v5779 = vlaneseq
    %v5780 = vshrl.u32 %v5779, 7
    %v5781 = vsub.s32 %v5778, %v5780
    %v5782 = vrot.slane %v5774, %v5781
    %v5784 = vunpack.c.l.s4 1966171168
    %v5785 = vunpack.c.0.s8 %v5784
    %v5786 = vlaneseq
    %v5787 = vshrl.u32 %v5786, 7
    %v5788 = vsub.s32 %v5785, %v5787
    %v5789 = vrot.slane %v5775, %v5788
    %v5790 = vcombine.high %v5782, %v5782
    %v5791 = vcombine.high %v5789, %v5789
    %s5792 = scalar_lea.vmem [#allocation6], 68
    %v5793 = vld [vmem:[%s5792] sm:$0xf]
    %v5796 = vunpack.c.l.s4 1966171168
    %v5797 = vunpack.c.0.s8 %v5796
    %v5798 = vlaneseq
    %v5799 = vshrl.u32 %v5798, 7
    %v5800 = vsub.s32 %v5797, %v5799
    %v5801 = vrot.slane %v5793, %v5800
    %v5802 = vcombine.high %v5801, %v5801
    %v5804 = vunpack.c.l.s4 1966171168
    %v5805 = vunpack.c.0.s8 %v5804
    %v5806 = vlaneseq
    %v5807 = vshrl.u32 %v5806, 7
    %v5808 = vsub.s32 %v5805, %v5807
    %v5809 = vrot.slane %v5801, %v5808
    %v5811 = vunpack.c.l.s4 1966171168
    %v5812 = vunpack.c.0.s8 %v5811
    %v5813 = vlaneseq
    %v5814 = vshrl.u32 %v5813, 7
    %v5815 = vsub.s32 %v5812, %v5814
    %v5816 = vrot.slane %v5802, %v5815
    %v5817 = vcombine.high %v5809, %v5809
    %v5818 = vcombine.high %v5816, %v5816
    %v5819 = vlaneseq
    %v5820 = vshrl.u32 %v5819, 7
    %v5821 = vsub.s32 0, %v5820
    %v5822 = vrot.slane %v5782, %v5821
    %v5823 = vlaneseq
    %v5824 = vshrl.u32 %v5823, 7
    %v5825 = vsub.s32 0, %v5824
    %v5826 = vrot.slane %v5789, %v5825
    %v5827 = vlaneseq
    %v5828 = vshrl.u32 %v5827, 7
    %v5829 = vsub.s32 0, %v5828
    %v5830 = vrot.slane %v5790, %v5829
    %v5831 = vlaneseq
    %v5832 = vshrl.u32 %v5831, 7
    %v5833 = vsub.s32 0, %v5832
    %v5834 = vrot.slane %v5791, %v5833
    %v5839 = vmul.f32 %v5822, %v5716
    %v5840 = vmul.f32 %v5826, %v5721
    %v5841 = vmul.f32 %v5830, %v5726
    %v5842 = vmul.f32 %v5834, %v5731
    %v5843 = vsub.f32 1.0, %v5839
    %v5844 = vsub.f32 1.0, %v5840
    %v5845 = vsub.f32 1.0, %v5841
    %v5846 = vsub.f32 1.0, %v5842
    %v5847 = vmul.f32 %v5704, %v5843
    %v5848 = vmul.f32 %v5705, %v5844
    %v5849 = vmul.f32 %v5706, %v5845
    %v5850 = vmul.f32 %v5707, %v5846
    %v5851 = vlaneseq
    %v5852 = vshrl.u32 %v5851, 7
    %v5853 = vsub.s32 0, %v5852
    %v5854 = vrot.slane %v5809, %v5853
    %v5855 = vlaneseq
    %v5856 = vshrl.u32 %v5855, 7
    %v5857 = vsub.s32 0, %v5856
    %v5858 = vrot.slane %v5816, %v5857
    %v5859 = vlaneseq
    %v5860 = vshrl.u32 %v5859, 7
    %v5861 = vsub.s32 0, %v5860
    %v5862 = vrot.slane %v5817, %v5861
    %v5863 = vlaneseq
    %v5864 = vshrl.u32 %v5863, 7
    %v5865 = vsub.s32 0, %v5864
    %v5866 = vrot.slane %v5818, %v5865
    %v5871 = vmul.f32 %v5854, %v5716
    %v5872 = vmul.f32 %v5858, %v5721
    %v5873 = vmul.f32 %v5862, %v5726
    %v5874 = vmul.f32 %v5866, %v5731
    %v5875 = vadd.f32 %v5847, %v5871
    %v5876 = vadd.f32 %v5848, %v5872
    %v5877 = vadd.f32 %v5849, %v5873
    %v5878 = vadd.f32 %v5850, %v5874
    %v5883 = vrot.slane %v5762, 7
    %v5884 = vsel %vm1800, %v5883, %v5761
    %v5885 = vsel %vm1802, %v5883, %v5884
    %v5886 = vrot.slane %v5763, 6
    %v5887 = vsel %vm1805, %v5886, %v5885
    %v5888 = vsel %vm1807, %v5886, %v5887
    %v5889 = vrot.slane %v5764, 5
    %v5890 = vsel %vm1810, %v5889, %v5888
    %v5891 = vsel %vm1812, %v5889, %v5890
    %5893 = vst [vmem:[%s5364 + $0x8] sm:$0xf] %v5891
    %s5894 = scalar_lea.vmem [#allocation7], 20
    %v5895 = vld [vmem:[%s5894] sm:$0xf]
    %v5898 = vunpack.c.l.s4 1966171168
    %v5899 = vunpack.c.0.s8 %v5898
    %v5900 = vlaneseq
    %v5901 = vshrl.u32 %v5900, 7
    %v5902 = vsub.s32 %v5899, %v5901
    %v5903 = vrot.slane %v5895, %v5902
    %v5904 = vcombine.high %v5903, %v5903
    %v5906 = vunpack.c.l.s4 1966171168
    %v5907 = vunpack.c.0.s8 %v5906
    %v5908 = vlaneseq
    %v5909 = vshrl.u32 %v5908, 7
    %v5910 = vsub.s32 %v5907, %v5909
    %v5911 = vrot.slane %v5903, %v5910
    %v5913 = vunpack.c.l.s4 1966171168
    %v5914 = vunpack.c.0.s8 %v5913
    %v5915 = vlaneseq
    %v5916 = vshrl.u32 %v5915, 7
    %v5917 = vsub.s32 %v5914, %v5916
    %v5918 = vrot.slane %v5904, %v5917
    %v5919 = vcombine.high %v5911, %v5911
    %v5920 = vcombine.high %v5918, %v5918
    %s5921 = scalar_lea.vmem [#allocation8], 20
    %v5922 = vld [vmem:[%s5921] sm:$0xf]
    %v5925 = vunpack.c.l.s4 1966171168
    %v5926 = vunpack.c.0.s8 %v5925
    %v5927 = vlaneseq
    %v5928 = vshrl.u32 %v5927, 7
    %v5929 = vsub.s32 %v5926, %v5928
    %v5930 = vrot.slane %v5922, %v5929
    %v5931 = vcombine.high %v5930, %v5930
    %v5933 = vunpack.c.l.s4 1966171168
    %v5934 = vunpack.c.0.s8 %v5933
    %v5935 = vlaneseq
    %v5936 = vshrl.u32 %v5935, 7
    %v5937 = vsub.s32 %v5934, %v5936
    %v5938 = vrot.slane %v5930, %v5937
    %v5940 = vunpack.c.l.s4 1966171168
    %v5941 = vunpack.c.0.s8 %v5940
    %v5942 = vlaneseq
    %v5943 = vshrl.u32 %v5942, 7
    %v5944 = vsub.s32 %v5941, %v5943
    %v5945 = vrot.slane %v5931, %v5944
    %v5946 = vcombine.high %v5938, %v5938
    %v5947 = vcombine.high %v5945, %v5945
    %v5948 = vlaneseq
    %v5949 = vshrl.u32 %v5948, 7
    %v5950 = vsub.s32 0, %v5949
    %v5951 = vrot.slane %v5911, %v5950
    %v5952 = vlaneseq
    %v5953 = vshrl.u32 %v5952, 7
    %v5954 = vsub.s32 0, %v5953
    %v5955 = vrot.slane %v5918, %v5954
    %v5956 = vlaneseq
    %v5957 = vshrl.u32 %v5956, 7
    %v5958 = vsub.s32 0, %v5957
    %v5959 = vrot.slane %v5919, %v5958
    %v5960 = vlaneseq
    %v5961 = vshrl.u32 %v5960, 7
    %v5962 = vsub.s32 0, %v5961
    %v5963 = vrot.slane %v5920, %v5962
    %v5968 = vmul.f32 %v5951, %v5305
    %v5969 = vmul.f32 %v5955, %v5310
    %v5970 = vmul.f32 %v5959, %v5315
    %v5971 = vmul.f32 %v5963, %v5320
    %v5972 = vsub.f32 1.0, %v5968
    %v5973 = vsub.f32 1.0, %v5969
    %v5974 = vsub.f32 1.0, %v5970
    %v5975 = vsub.f32 1.0, %v5971
    %v5976 = vmul.f32 %v5875, %v5972
    %v5977 = vmul.f32 %v5876, %v5973
    %v5978 = vmul.f32 %v5877, %v5974
    %v5979 = vmul.f32 %v5878, %v5975
    %v5980 = vlaneseq
    %v5981 = vshrl.u32 %v5980, 7
    %v5982 = vsub.s32 0, %v5981
    %v5983 = vrot.slane %v5938, %v5982
    %v5984 = vlaneseq
    %v5985 = vshrl.u32 %v5984, 7
    %v5986 = vsub.s32 0, %v5985
    %v5987 = vrot.slane %v5945, %v5986
    %v5988 = vlaneseq
    %v5989 = vshrl.u32 %v5988, 7
    %v5990 = vsub.s32 0, %v5989
    %v5991 = vrot.slane %v5946, %v5990
    %v5992 = vlaneseq
    %v5993 = vshrl.u32 %v5992, 7
    %v5994 = vsub.s32 0, %v5993
    %v5995 = vrot.slane %v5947, %v5994
    %v6000 = vmul.f32 %v5983, %v5305
    %v6001 = vmul.f32 %v5987, %v5310
    %v6002 = vmul.f32 %v5991, %v5315
    %v6003 = vmul.f32 %v5995, %v5320
    %v6004 = vadd.f32 %v5976, %v6000
    %v6005 = vadd.f32 %v5977, %v6001
    %v6006 = vadd.f32 %v5978, %v6002
    %v6007 = vadd.f32 %v5979, %v6003
    %6008 = vst [vmem:[#allocation2] sm:$0xff] %v6004
    %6009 = vst [vmem:[#allocation2 + $0x8] sm:$0xff] %v6005
    %6010 = vst [vmem:[#allocation2 + $0x10] sm:$0xff] %v6006
    %6011 = vst [vmem:[#allocation2 + $0x18] sm:$0xff] %v6007
    %v6012 = vld [vmem:[%s8] sm:$0xff]
    %v6013 = vld [vmem:[%s8 + $0x8] sm:$0xff]
    %v6014 = vld [vmem:[#allocation9] sm:$0xff]
    %v6015 = vld [vmem:[#allocation9 + $0x8] sm:$0xff]
    %v6016 = vld [vmem:[#allocation9 + $0x10] sm:$0xff]
    %v6017 = vld [vmem:[#allocation9 + $0x18] sm:$0xff]
    %v6018 = vld [vmem:[#allocation9 + $0x20] sm:$0xff]
    %v6019 = vld [vmem:[#allocation9 + $0x28] sm:$0xff]
    %v6020 = vld [vmem:[#allocation9 + $0x30] sm:$0xff]
    %v6021 = vld [vmem:[#allocation9 + $0x38] sm:$0xff]
    %v6022 = vld [vmem:[#allocation9 + $0x40] sm:$0xff]
    %v6023 = vld [vmem:[#allocation9 + $0x48] sm:$0xff]
    %v6024 = vld [vmem:[#allocation9 + $0x50] sm:$0xff]
    %v6025 = vld [vmem:[#allocation9 + $0x58] sm:$0xff]
    %v6038 = vcombine.low %v6014, %v6016
    %v6039 = vcombine.high %v6014, %v6016
    %v6040 = vcombine.low %v6015, %v6017
    %v6041 = vcombine.high %v6015, %v6017
    %v6042 = vcombine.low %v6018, %v6020
    %v6043 = vcombine.high %v6018, %v6020
    %v6044 = vcombine.low %v6019, %v6021
    %v6045 = vcombine.high %v6019, %v6021
    %v6046 = vcombine.low %v6022, %v6024
    %v6047 = vcombine.high %v6022, %v6024
    %v6048 = vcombine.low %v6023, %v6025
    %v6049 = vcombine.high %v6023, %v6025
    %v6062 = vadd.f32 %v6038, %v6039
    %v6063 = vadd.f32 %v6062, %v6040
    %v6064 = vadd.f32 %v6063, %v6041
    %6065 = vadd.xlane.f32.xlu0 %v6064
    %v6066 = vpop.xlane.xlu0 %6065
    %v6067 = vadd.f32 %v6042, %v6043
    %v6068 = vadd.f32 %v6067, %v6044
    %v6069 = vadd.f32 %v6068, %v6045
    %6070 = vadd.xlane.f32.xlu0 %v6069
    %v6071 = vpop.xlane.xlu0 %6070
    %v6072 = vadd.f32 %v6046, %v6047
    %v6073 = vadd.f32 %v6072, %v6048
    %v6074 = vadd.f32 %v6073, %v6049
    %6075 = vadd.xlane.f32.xlu0 %v6074
    %v6076 = vpop.xlane.xlu0 %6075
    %v6077 = vrcp.pop 512.0
    %v6078 = vmul.f32 %v6066, %v6077
    %v6079 = vmul.f32 %v6071, %v6077
    %v6080 = vmul.f32 %v6076, %v6077
    %v6085 = vunpack.c.l.s4 839922192
    %v6086 = vunpack.c.0.s8 %v6085
    %v6087 = vlaneseq
    %v6088 = vshrl.u32 %v6087, 7
    %v6089 = vsub.s32 %v6086, %v6088
    %v6090 = vrot.slane %v6078, %v6089
    %v6092 = vunpack.c.l.s4 1985246804
    %v6093 = vunpack.c.0.s8 %v6092
    %v6094 = vlaneseq
    %v6095 = vshrl.u32 %v6094, 7
    %v6096 = vsub.s32 %v6093, %v6095
    %v6097 = vrot.slane %v6078, %v6096
    %v6099 = vunpack.c.l.s4 839922192
    %v6100 = vunpack.c.0.s8 %v6099
    %v6101 = vlaneseq
    %v6102 = vshrl.u32 %v6101, 7
    %v6103 = vsub.s32 %v6100, %v6102
    %v6104 = vrot.slane %v6079, %v6103
    %v6106 = vunpack.c.l.s4 1985246804
    %v6107 = vunpack.c.0.s8 %v6106
    %v6108 = vlaneseq
    %v6109 = vshrl.u32 %v6108, 7
    %v6110 = vsub.s32 %v6107, %v6109
    %v6111 = vrot.slane %v6079, %v6110
    %v6113 = vunpack.c.l.s4 839922192
    %v6114 = vunpack.c.0.s8 %v6113
    %v6115 = vlaneseq
    %v6116 = vshrl.u32 %v6115, 7
    %v6117 = vsub.s32 %v6114, %v6116
    %v6118 = vrot.slane %v6080, %v6117
    %v6120 = vunpack.c.l.s4 1985246804
    %v6121 = vunpack.c.0.s8 %v6120
    %v6122 = vlaneseq
    %v6123 = vshrl.u32 %v6122, 7
    %v6124 = vsub.s32 %v6121, %v6123
    %v6125 = vrot.slane %v6080, %v6124
    %v6132 = vsub.f32 %v6014, %v6090
    %v6133 = vsub.f32 %v6015, %v6090
    %v6134 = vsub.f32 %v6016, %v6097
    %v6135 = vsub.f32 %v6017, %v6097
    %v6136 = vsub.f32 %v6018, %v6104
    %v6137 = vsub.f32 %v6019, %v6104
    %v6138 = vsub.f32 %v6020, %v6111
    %v6139 = vsub.f32 %v6021, %v6111
    %v6140 = vsub.f32 %v6022, %v6118
    %v6141 = vsub.f32 %v6023, %v6118
    %v6142 = vsub.f32 %v6024, %v6125
    %v6143 = vsub.f32 %v6025, %v6125
    %v6144 = vmul.f32 %v6132, %v6132
    %v6145 = vmul.f32 %v6133, %v6133
    %v6146 = vmul.f32 %v6134, %v6134
    %v6147 = vmul.f32 %v6135, %v6135
    %v6148 = vmul.f32 %v6136, %v6136
    %v6149 = vmul.f32 %v6137, %v6137
    %v6150 = vmul.f32 %v6138, %v6138
    %v6151 = vmul.f32 %v6139, %v6139
    %v6152 = vmul.f32 %v6140, %v6140
    %v6153 = vmul.f32 %v6141, %v6141
    %v6154 = vmul.f32 %v6142, %v6142
    %v6155 = vmul.f32 %v6143, %v6143
    %v6168 = vcombine.low %v6144, %v6146
    %v6169 = vcombine.high %v6144, %v6146
    %v6170 = vcombine.low %v6145, %v6147
    %v6171 = vcombine.high %v6145, %v6147
    %v6172 = vcombine.low %v6148, %v6150
    %v6173 = vcombine.high %v6148, %v6150
    %v6174 = vcombine.low %v6149, %v6151
    %v6175 = vcombine.high %v6149, %v6151
    %v6176 = vcombine.low %v6152, %v6154
    %v6177 = vcombine.high %v6152, %v6154
    %v6178 = vcombine.low %v6153, %v6155
    %v6179 = vcombine.high %v6153, %v6155
    %v6192 = vadd.f32 %v6168, %v6169
    %v6193 = vadd.f32 %v6192, %v6170
    %v6194 = vadd.f32 %v6193, %v6171
    %6195 = vadd.xlane.f32.xlu0 %v6194
    %v6196 = vpop.xlane.xlu0 %6195
    %v6197 = vadd.f32 %v6172, %v6173
    %v6198 = vadd.f32 %v6197, %v6174
    %v6199 = vadd.f32 %v6198, %v6175
    %6200 = vadd.xlane.f32.xlu0 %v6199
    %v6201 = vpop.xlane.xlu0 %6200
    %v6202 = vadd.f32 %v6176, %v6177
    %v6203 = vadd.f32 %v6202, %v6178
    %v6204 = vadd.f32 %v6203, %v6179
    %6205 = vadd.xlane.f32.xlu0 %v6204
    %v6206 = vpop.xlane.xlu0 %6205
    %v6207 = vmul.f32 %v6196, %v6077
    %v6208 = vmul.f32 %v6201, %v6077
    %v6209 = vmul.f32 %v6206, %v6077
    %v6210 = vadd.f32 %v6207, 1e-05
    %v6211 = vadd.f32 %v6208, 1e-05
    %v6212 = vadd.f32 %v6209, 1e-05
    %v6213 = vrsqrt.pop %v6210
    %v6214 = vrsqrt.pop %v6211
    %v6215 = vrsqrt.pop %v6212
    %v6220 = vunpack.c.l.s4 839922192
    %v6221 = vunpack.c.0.s8 %v6220
    %v6222 = vlaneseq
    %v6223 = vshrl.u32 %v6222, 7
    %v6224 = vsub.s32 %v6221, %v6223
    %v6225 = vrot.slane %v6213, %v6224
    %v6227 = vunpack.c.l.s4 1985246804
    %v6228 = vunpack.c.0.s8 %v6227
    %v6229 = vlaneseq
    %v6230 = vshrl.u32 %v6229, 7
    %v6231 = vsub.s32 %v6228, %v6230
    %v6232 = vrot.slane %v6213, %v6231
    %v6234 = vunpack.c.l.s4 839922192
    %v6235 = vunpack.c.0.s8 %v6234
    %v6236 = vlaneseq
    %v6237 = vshrl.u32 %v6236, 7
    %v6238 = vsub.s32 %v6235, %v6237
    %v6239 = vrot.slane %v6214, %v6238
    %v6241 = vunpack.c.l.s4 1985246804
    %v6242 = vunpack.c.0.s8 %v6241
    %v6243 = vlaneseq
    %v6244 = vshrl.u32 %v6243, 7
    %v6245 = vsub.s32 %v6242, %v6244
    %v6246 = vrot.slane %v6214, %v6245
    %v6248 = vunpack.c.l.s4 839922192
    %v6249 = vunpack.c.0.s8 %v6248
    %v6250 = vlaneseq
    %v6251 = vshrl.u32 %v6250, 7
    %v6252 = vsub.s32 %v6249, %v6251
    %v6253 = vrot.slane %v6215, %v6252
    %v6255 = vunpack.c.l.s4 1985246804
    %v6256 = vunpack.c.0.s8 %v6255
    %v6257 = vlaneseq
    %v6258 = vshrl.u32 %v6257, 7
    %v6259 = vsub.s32 %v6256, %v6258
    %v6260 = vrot.slane %v6215, %v6259
    %v6267 = vmul.f32 %v6132, %v6225
    %v6268 = vmul.f32 %v6133, %v6225
    %v6269 = vmul.f32 %v6134, %v6232
    %v6270 = vmul.f32 %v6135, %v6232
    %v6271 = vmul.f32 %v6136, %v6239
    %v6272 = vmul.f32 %v6137, %v6239
    %v6273 = vmul.f32 %v6138, %v6246
    %v6274 = vmul.f32 %v6139, %v6246
    %v6275 = vmul.f32 %v6140, %v6253
    %v6276 = vmul.f32 %v6141, %v6253
    %v6277 = vmul.f32 %v6142, %v6260
    %v6278 = vmul.f32 %v6143, %v6260
    %v6281 = vlaneseq
    %v6282 = vshrl.u32 %v6281, 7
    %v6283 = vsub.s32 0, %v6282
    %v6284 = vrot.slane %v6012, %v6283
    %v6285 = vlaneseq
    %v6286 = vshrl.u32 %v6285, 7
    %v6287 = vsub.s32 4, %v6286
    %v6288 = vrot.slane %v6012, %v6287
    %v6289 = vlaneseq
    %v6290 = vshrl.u32 %v6289, 7
    %v6291 = vsub.s32 0, %v6290
    %v6292 = vrot.slane %v6013, %v6291
    %v6293 = vlaneseq
    %v6294 = vshrl.u32 %v6293, 7
    %v6295 = vsub.s32 4, %v6294
    %v6296 = vrot.slane %v6013, %v6295
    %v6301 = vlaneseq
    %v6302 = vshrl.u32 %v6301, 7
    %v6303 = vsub.s32 0, %v6302
    %v6304 = vrot.slane %v6284, %v6303
    %v6305 = vlaneseq
    %v6306 = vshrl.u32 %v6305, 7
    %v6307 = vsub.s32 0, %v6306
    %v6308 = vrot.slane %v6288, %v6307
    %v6309 = vlaneseq
    %v6310 = vshrl.u32 %v6309, 7
    %v6311 = vsub.s32 0, %v6310
    %v6312 = vrot.slane %v6292, %v6311
    %v6313 = vlaneseq
    %v6314 = vshrl.u32 %v6313, 7
    %v6315 = vsub.s32 0, %v6314
    %v6316 = vrot.slane %v6296, %v6315
    %v6321 = vcombine.low %v6304, %v6308
    %v6322 = vcombine.high %v6304, %v6308
    %v6323 = vcombine.low %v6312, %v6316
    %v6324 = vcombine.high %v6312, %v6316
    %v6329 = vmul.f32 %v6267, %v6321
    %v6330 = vmul.f32 %v6268, %v6323
    %v6331 = vmul.f32 %v6269, %v6322
    %v6332 = vmul.f32 %v6270, %v6324
    %v6333 = vmul.f32 %v6271, %v6321
    %v6334 = vmul.f32 %v6272, %v6323
    %v6335 = vmul.f32 %v6273, %v6322
    %v6336 = vmul.f32 %v6274, %v6324
    %v6337 = vmul.f32 %v6275, %v6321
    %v6338 = vmul.f32 %v6276, %v6323
    %v6339 = vmul.f32 %v6277, %v6322
    %v6340 = vmul.f32 %v6278, %v6324
    %v6341 = vlaneseq
    %v6342 = vshrl.u32 %v6341, 7
    %v6343 = vsub.s32 1, %v6342
    %v6344 = vrot.slane %v6012, %v6343
    %v6345 = vlaneseq
    %v6346 = vshrl.u32 %v6345, 7
    %v6347 = vsub.s32 5, %v6346
    %v6348 = vrot.slane %v6012, %v6347
    %v6349 = vlaneseq
    %v6350 = vshrl.u32 %v6349, 7
    %v6351 = vsub.s32 1, %v6350
    %v6352 = vrot.slane %v6013, %v6351
    %v6353 = vlaneseq
    %v6354 = vshrl.u32 %v6353, 7
    %v6355 = vsub.s32 5, %v6354
    %v6356 = vrot.slane %v6013, %v6355
    %v6361 = vlaneseq
    %v6362 = vshrl.u32 %v6361, 7
    %v6363 = vsub.s32 1, %v6362
    %v6364 = vrot.slane %v6344, %v6363
    %v6365 = vlaneseq
    %v6366 = vshrl.u32 %v6365, 7
    %v6367 = vsub.s32 1, %v6366
    %v6368 = vrot.slane %v6348, %v6367
    %v6369 = vlaneseq
    %v6370 = vshrl.u32 %v6369, 7
    %v6371 = vsub.s32 1, %v6370
    %v6372 = vrot.slane %v6352, %v6371
    %v6373 = vlaneseq
    %v6374 = vshrl.u32 %v6373, 7
    %v6375 = vsub.s32 1, %v6374
    %v6376 = vrot.slane %v6356, %v6375
    %v6381 = vcombine.low %v6364, %v6368
    %v6382 = vcombine.high %v6364, %v6368
    %v6383 = vcombine.low %v6372, %v6376
    %v6384 = vcombine.high %v6372, %v6376
    %v6389 = vadd.f32 %v6329, %v6381
    %v6390 = vadd.f32 %v6330, %v6383
    %v6391 = vadd.f32 %v6331, %v6382
    %v6392 = vadd.f32 %v6332, %v6384
    %v6393 = vadd.f32 %v6333, %v6381
    %v6394 = vadd.f32 %v6334, %v6383
    %v6395 = vadd.f32 %v6335, %v6382
    %v6396 = vadd.f32 %v6336, %v6384
    %v6397 = vadd.f32 %v6337, %v6381
    %v6398 = vadd.f32 %v6338, %v6383
    %v6399 = vadd.f32 %v6339, %v6382
    %v6400 = vadd.f32 %v6340, %v6384
    %v6413 = vcombine.low %v6389, %v6391
    %v6414 = vcombine.high %v6389, %v6391
    %v6415 = vcombine.low %v6390, %v6392
    %v6416 = vcombine.high %v6390, %v6392
    %v6417 = vcombine.low %v6393, %v6395
    %v6418 = vcombine.high %v6393, %v6395
    %v6419 = vcombine.low %v6394, %v6396
    %v6420 = vcombine.high %v6394, %v6396
    %v6421 = vcombine.low %v6397, %v6399
    %v6422 = vcombine.high %v6397, %v6399
    %v6423 = vcombine.low %v6398, %v6400
    %v6424 = vcombine.high %v6398, %v6400
    %v6437 = vpack.c.bf16 %v6417, %v6413
    %v6438 = vpack.c.bf16 %v6418, %v6414
    %v6439 = vpack.c.bf16 %v6419, %v6415
    %v6440 = vpack.c.bf16 %v6420, %v6416
    %v6441 = vpack.c.bf16 %v6421, %v6421
    %v6442 = vpack.c.bf16 %v6422, %v6422
    %v6443 = vpack.c.bf16 %v6423, %v6423
    %v6444 = vpack.c.bf16 %v6424, %v6424
    %v6445 = vld [vmem:[#allocation19] sm:$0xff]
    %v6446 = vld [vmem:[#allocation19 + $0x8] sm:$0xff]
    %v6447 = vld [vmem:[#allocation19 + $0x10] sm:$0xff]
    %v6448 = vld [vmem:[#allocation19 + $0x18] sm:$0xff]
    %v6449 = vld [vmem:[#allocation19 + $0x20] sm:$0xff]
    %v6450 = vld [vmem:[#allocation19 + $0x28] sm:$0xff]
    %v6451 = vld [vmem:[#allocation19 + $0x30] sm:$0xff]
    %v6452 = vld [vmem:[#allocation19 + $0x38] sm:$0xff]
    %v6453 = vld [vmem:[#allocation19 + $0x40] sm:$0xff]
    %v6454 = vld [vmem:[#allocation19 + $0x48] sm:$0xff]
    %v6455 = vld [vmem:[#allocation19 + $0x50] sm:$0xff]
    %v6456 = vld [vmem:[#allocation19 + $0x58] sm:$0xff]
    %v6457 = vld [vmem:[#allocation19 + $0x60] sm:$0xff]
    %v6458 = vld [vmem:[#allocation19 + $0x68] sm:$0xff]
    %v6459 = vld [vmem:[#allocation19 + $0x70] sm:$0xff]
    %v6460 = vld [vmem:[#allocation19 + $0x78] sm:$0xff]
    %v6461 = vld [vmem:[#allocation19 + $0x80] sm:$0xff]
    %v6462 = vld [vmem:[#allocation19 + $0x88] sm:$0xff]
    %v6463 = vld [vmem:[#allocation19 + $0x90] sm:$0xff]
    %v6464 = vld [vmem:[#allocation19 + $0x98] sm:$0xff]
    %v6465 = vld [vmem:[#allocation19 + $0xa0] sm:$0xff]
    %v6466 = vld [vmem:[#allocation19 + $0xa8] sm:$0xff]
    %v6467 = vld [vmem:[#allocation19 + $0xb0] sm:$0xff]
    %v6468 = vld [vmem:[#allocation19 + $0xb8] sm:$0xff]
    %v6469 = vld [vmem:[#allocation19 + $0xc0] sm:$0xff]
    %v6470 = vld [vmem:[#allocation19 + $0xc8] sm:$0xff]
    %v6471 = vld [vmem:[#allocation19 + $0xd0] sm:$0xff]
    %v6472 = vld [vmem:[#allocation19 + $0xd8] sm:$0xff]
    %v6473 = vld [vmem:[#allocation19 + $0xe0] sm:$0xff]
    %v6474 = vld [vmem:[#allocation19 + $0xe8] sm:$0xff]
    %v6475 = vld [vmem:[#allocation19 + $0xf0] sm:$0xff]
    %v6476 = vld [vmem:[#allocation19 + $0xf8] sm:$0xff]
    %v6477 = vld [vmem:[#allocation19 + $0x100] sm:$0xff]
    %v6478 = vld [vmem:[#allocation19 + $0x108] sm:$0xff]
    %v6479 = vld [vmem:[#allocation19 + $0x110] sm:$0xff]
    %v6480 = vld [vmem:[#allocation19 + $0x118] sm:$0xff]
    %v6481 = vld [vmem:[#allocation19 + $0x120] sm:$0xff]
    %v6482 = vld [vmem:[#allocation19 + $0x128] sm:$0xff]
    %v6483 = vld [vmem:[#allocation19 + $0x130] sm:$0xff]
    %v6484 = vld [vmem:[#allocation19 + $0x138] sm:$0xff]
    %v6485 = vld [vmem:[#allocation19 + $0x140] sm:$0xff]
    %v6486 = vld [vmem:[#allocation19 + $0x148] sm:$0xff]
    %v6487 = vld [vmem:[#allocation19 + $0x150] sm:$0xff]
    %v6488 = vld [vmem:[#allocation19 + $0x158] sm:$0xff]
    %v6489 = vld [vmem:[#allocation19 + $0x160] sm:$0xff]
    %v6490 = vld [vmem:[#allocation19 + $0x168] sm:$0xff]
    %v6491 = vld [vmem:[#allocation19 + $0x170] sm:$0xff]
    %v6492 = vld [vmem:[#allocation19 + $0x178] sm:$0xff]
    %v6493 = vld [vmem:[#allocation19 + $0x180] sm:$0xff]
    %v6494 = vld [vmem:[#allocation19 + $0x188] sm:$0xff]
    %v6495 = vld [vmem:[#allocation19 + $0x190] sm:$0xff]
    %v6496 = vld [vmem:[#allocation19 + $0x198] sm:$0xff]
    %v6497 = vld [vmem:[#allocation19 + $0x1a0] sm:$0xff]
    %v6498 = vld [vmem:[#allocation19 + $0x1a8] sm:$0xff]
    %v6499 = vld [vmem:[#allocation19 + $0x1b0] sm:$0xff]
    %v6500 = vld [vmem:[#allocation19 + $0x1b8] sm:$0xff]
    %v6501 = vld [vmem:[#allocation19 + $0x1c0] sm:$0xff]
    %v6502 = vld [vmem:[#allocation19 + $0x1c8] sm:$0xff]
    %v6503 = vld [vmem:[#allocation19 + $0x1d0] sm:$0xff]
    %v6504 = vld [vmem:[#allocation19 + $0x1d8] sm:$0xff]
    %v6505 = vld [vmem:[#allocation19 + $0x1e0] sm:$0xff]
    %v6506 = vld [vmem:[#allocation19 + $0x1e8] sm:$0xff]
    %v6507 = vld [vmem:[#allocation19 + $0x1f0] sm:$0xff]
    %v6508 = vld [vmem:[#allocation19 + $0x1f8] sm:$0xff]
    %v6509 = vld [vmem:[#allocation19 + $0x200] sm:$0xff]
    %v6510 = vld [vmem:[#allocation19 + $0x208] sm:$0xff]
    %v6511 = vld [vmem:[#allocation19 + $0x210] sm:$0xff]
    %v6512 = vld [vmem:[#allocation19 + $0x218] sm:$0xff]
    %v6513 = vld [vmem:[#allocation19 + $0x220] sm:$0xff]
    %v6514 = vld [vmem:[#allocation19 + $0x228] sm:$0xff]
    %v6515 = vld [vmem:[#allocation19 + $0x230] sm:$0xff]
    %v6516 = vld [vmem:[#allocation19 + $0x238] sm:$0xff]
    %v6517 = vld [vmem:[#allocation19 + $0x240] sm:$0xff]
    %v6518 = vld [vmem:[#allocation19 + $0x248] sm:$0xff]
    %v6519 = vld [vmem:[#allocation19 + $0x250] sm:$0xff]
    %v6520 = vld [vmem:[#allocation19 + $0x258] sm:$0xff]
    %v6521 = vld [vmem:[#allocation19 + $0x260] sm:$0xff]
    %v6522 = vld [vmem:[#allocation19 + $0x268] sm:$0xff]
    %v6523 = vld [vmem:[#allocation19 + $0x270] sm:$0xff]
    %v6524 = vld [vmem:[#allocation19 + $0x278] sm:$0xff]
    %v6525 = vld [vmem:[#allocation19 + $0x280] sm:$0xff]
    %v6526 = vld [vmem:[#allocation19 + $0x288] sm:$0xff]
    %v6527 = vld [vmem:[#allocation19 + $0x290] sm:$0xff]
    %v6528 = vld [vmem:[#allocation19 + $0x298] sm:$0xff]
    %v6529 = vld [vmem:[#allocation19 + $0x2a0] sm:$0xff]
    %v6530 = vld [vmem:[#allocation19 + $0x2a8] sm:$0xff]
    %v6531 = vld [vmem:[#allocation19 + $0x2b0] sm:$0xff]
    %v6532 = vld [vmem:[#allocation19 + $0x2b8] sm:$0xff]
    %v6533 = vld [vmem:[#allocation19 + $0x2c0] sm:$0xff]
    %v6534 = vld [vmem:[#allocation19 + $0x2c8] sm:$0xff]
    %v6535 = vld [vmem:[#allocation19 + $0x2d0] sm:$0xff]
    %v6536 = vld [vmem:[#allocation19 + $0x2d8] sm:$0xff]
    %v6537 = vld [vmem:[#allocation19 + $0x2e0] sm:$0xff]
    %v6538 = vld [vmem:[#allocation19 + $0x2e8] sm:$0xff]
    %v6539 = vld [vmem:[#allocation19 + $0x2f0] sm:$0xff]
    %v6540 = vld [vmem:[#allocation19 + $0x2f8] sm:$0xff]
    %v6541 = vld [vmem:[#allocation19 + $0x300] sm:$0xff]
    %v6542 = vld [vmem:[#allocation19 + $0x308] sm:$0xff]
    %v6543 = vld [vmem:[#allocation19 + $0x310] sm:$0xff]
    %v6544 = vld [vmem:[#allocation19 + $0x318] sm:$0xff]
    %v6545 = vld [vmem:[#allocation19 + $0x320] sm:$0xff]
    %v6546 = vld [vmem:[#allocation19 + $0x328] sm:$0xff]
    %v6547 = vld [vmem:[#allocation19 + $0x330] sm:$0xff]
    %v6548 = vld [vmem:[#allocation19 + $0x338] sm:$0xff]
    %v6549 = vld [vmem:[#allocation19 + $0x340] sm:$0xff]
    %v6550 = vld [vmem:[#allocation19 + $0x348] sm:$0xff]
    %v6551 = vld [vmem:[#allocation19 + $0x350] sm:$0xff]
    %v6552 = vld [vmem:[#allocation19 + $0x358] sm:$0xff]
    %v6553 = vld [vmem:[#allocation19 + $0x360] sm:$0xff]
    %v6554 = vld [vmem:[#allocation19 + $0x368] sm:$0xff]
    %v6555 = vld [vmem:[#allocation19 + $0x370] sm:$0xff]
    %v6556 = vld [vmem:[#allocation19 + $0x378] sm:$0xff]
    %v6557 = vld [vmem:[#allocation19 + $0x380] sm:$0xff]
    %v6558 = vld [vmem:[#allocation19 + $0x388] sm:$0xff]
    %v6559 = vld [vmem:[#allocation19 + $0x390] sm:$0xff]
    %v6560 = vld [vmem:[#allocation19 + $0x398] sm:$0xff]
    %v6561 = vld [vmem:[#allocation19 + $0x3a0] sm:$0xff]
    %v6562 = vld [vmem:[#allocation19 + $0x3a8] sm:$0xff]
    %v6563 = vld [vmem:[#allocation19 + $0x3b0] sm:$0xff]
    %v6564 = vld [vmem:[#allocation19 + $0x3b8] sm:$0xff]
    %v6565 = vld [vmem:[#allocation19 + $0x3c0] sm:$0xff]
    %v6566 = vld [vmem:[#allocation19 + $0x3c8] sm:$0xff]
    %v6567 = vld [vmem:[#allocation19 + $0x3d0] sm:$0xff]
    %v6568 = vld [vmem:[#allocation19 + $0x3d8] sm:$0xff]
    %v6569 = vld [vmem:[#allocation19 + $0x3e0] sm:$0xff]
    %v6570 = vld [vmem:[#allocation19 + $0x3e8] sm:$0xff]
    %v6571 = vld [vmem:[#allocation19 + $0x3f0] sm:$0xff]
    %v6572 = vld [vmem:[#allocation19 + $0x3f8] sm:$0xff]
    %v6573 = vlaneseq
    %v6574 = vshrl.u32 %v6573, 7
    %v6575 = vsub.s32 2, %v6574
    %v6576 = vrot.slane %v6012, %v6575
    %v6577 = vlaneseq
    %v6578 = vshrl.u32 %v6577, 7
    %v6579 = vsub.s32 6, %v6578
    %v6580 = vrot.slane %v6012, %v6579
    %v6581 = vlaneseq
    %v6582 = vshrl.u32 %v6581, 7
    %v6583 = vsub.s32 2, %v6582
    %v6584 = vrot.slane %v6013, %v6583
    %v6585 = vlaneseq
    %v6586 = vshrl.u32 %v6585, 7
    %v6587 = vsub.s32 6, %v6586
    %v6588 = vrot.slane %v6013, %v6587
    %v6593 = vlaneseq
    %v6594 = vshrl.u32 %v6593, 7
    %v6595 = vsub.s32 2, %v6594
    %v6596 = vrot.slane %v6576, %v6595
    %v6597 = vlaneseq
    %v6598 = vshrl.u32 %v6597, 7
    %v6599 = vsub.s32 2, %v6598
    %v6600 = vrot.slane %v6580, %v6599
    %v6601 = vlaneseq
    %v6602 = vshrl.u32 %v6601, 7
    %v6603 = vsub.s32 2, %v6602
    %v6604 = vrot.slane %v6584, %v6603
    %v6605 = vlaneseq
    %v6606 = vshrl.u32 %v6605, 7
    %v6607 = vsub.s32 2, %v6606
    %v6608 = vrot.slane %v6588, %v6607
    %v6737 = vunpack.c.l.b16 %v6445
    %v6738 = vunpack.c.h.b16 %v6445
    %v6739 = vunpack.c.l.b16 %v6446
    %v6740 = vunpack.c.h.b16 %v6446
    %v6741 = vunpack.c.l.b16 %v6447
    %v6742 = vunpack.c.h.b16 %v6447
    %v6743 = vunpack.c.l.b16 %v6448
    %v6744 = vunpack.c.h.b16 %v6448
    %v6745 = vunpack.c.l.b16 %v6449
    %v6746 = vunpack.c.h.b16 %v6449
    %v6747 = vunpack.c.l.b16 %v6450
    %v6748 = vunpack.c.h.b16 %v6450
    %v6749 = vunpack.c.l.b16 %v6451
    %v6750 = vunpack.c.h.b16 %v6451
    %v6751 = vunpack.c.l.b16 %v6452
    %v6752 = vunpack.c.h.b16 %v6452
    %v6753 = vunpack.c.l.b16 %v6453
    %v6754 = vunpack.c.h.b16 %v6453
    %v6755 = vunpack.c.l.b16 %v6454
    %v6756 = vunpack.c.h.b16 %v6454
    %v6757 = vunpack.c.l.b16 %v6455
    %v6758 = vunpack.c.h.b16 %v6455
    %v6759 = vunpack.c.l.b16 %v6456
    %v6760 = vunpack.c.h.b16 %v6456
    %v6761 = vunpack.c.l.b16 %v6457
    %v6762 = vunpack.c.h.b16 %v6457
    %v6763 = vunpack.c.l.b16 %v6458
    %v6764 = vunpack.c.h.b16 %v6458
    %v6765 = vunpack.c.l.b16 %v6459
    %v6766 = vunpack.c.h.b16 %v6459
    %v6767 = vunpack.c.l.b16 %v6460
    %v6768 = vunpack.c.h.b16 %v6460
    %v6769 = vunpack.c.l.b16 %v6461
    %v6770 = vunpack.c.h.b16 %v6461
    %v6771 = vunpack.c.l.b16 %v6462
    %v6772 = vunpack.c.h.b16 %v6462
    %v6773 = vunpack.c.l.b16 %v6463
    %v6774 = vunpack.c.h.b16 %v6463
    %v6775 = vunpack.c.l.b16 %v6464
    %v6776 = vunpack.c.h.b16 %v6464
    %v6777 = vunpack.c.l.b16 %v6465
    %v6778 = vunpack.c.h.b16 %v6465
    %v6779 = vunpack.c.l.b16 %v6466
    %v6780 = vunpack.c.h.b16 %v6466
    %v6781 = vunpack.c.l.b16 %v6467
    %v6782 = vunpack.c.h.b16 %v6467
    %v6783 = vunpack.c.l.b16 %v6468
    %v6784 = vunpack.c.h.b16 %v6468
    %v6785 = vunpack.c.l.b16 %v6469
    %v6786 = vunpack.c.h.b16 %v6469
    %v6787 = vunpack.c.l.b16 %v6470
    %v6788 = vunpack.c.h.b16 %v6470
    %v6789 = vunpack.c.l.b16 %v6471
    %v6790 = vunpack.c.h.b16 %v6471
    %v6791 = vunpack.c.l.b16 %v6472
    %v6792 = vunpack.c.h.b16 %v6472
    %v6793 = vunpack.c.l.b16 %v6473
    %v6794 = vunpack.c.h.b16 %v6473
    %v6795 = vunpack.c.l.b16 %v6474
    %v6796 = vunpack.c.h.b16 %v6474
    %v6797 = vunpack.c.l.b16 %v6475
    %v6798 = vunpack.c.h.b16 %v6475
    %v6799 = vunpack.c.l.b16 %v6476
    %v6800 = vunpack.c.h.b16 %v6476
    %v6801 = vunpack.c.l.b16 %v6477
    %v6802 = vunpack.c.h.b16 %v6477
    %v6803 = vunpack.c.l.b16 %v6478
    %v6804 = vunpack.c.h.b16 %v6478
    %v6805 = vunpack.c.l.b16 %v6479
    %v6806 = vunpack.c.h.b16 %v6479
    %v6807 = vunpack.c.l.b16 %v6480
    %v6808 = vunpack.c.h.b16 %v6480
    %v6809 = vunpack.c.l.b16 %v6481
    %v6810 = vunpack.c.h.b16 %v6481
    %v6811 = vunpack.c.l.b16 %v6482
    %v6812 = vunpack.c.h.b16 %v6482
    %v6813 = vunpack.c.l.b16 %v6483
    %v6814 = vunpack.c.h.b16 %v6483
    %v6815 = vunpack.c.l.b16 %v6484
    %v6816 = vunpack.c.h.b16 %v6484
    %v6817 = vunpack.c.l.b16 %v6485
    %v6818 = vunpack.c.h.b16 %v6485
    %v6819 = vunpack.c.l.b16 %v6486
    %v6820 = vunpack.c.h.b16 %v6486
    %v6821 = vunpack.c.l.b16 %v6487
    %v6822 = vunpack.c.h.b16 %v6487
    %v6823 = vunpack.c.l.b16 %v6488
    %v6824 = vunpack.c.h.b16 %v6488
    %v6825 = vunpack.c.l.b16 %v6489
    %v6826 = vunpack.c.h.b16 %v6489
    %v6827 = vunpack.c.l.b16 %v6490
    %v6828 = vunpack.c.h.b16 %v6490
    %v6829 = vunpack.c.l.b16 %v6491
    %v6830 = vunpack.c.h.b16 %v6491
    %v6831 = vunpack.c.l.b16 %v6492
    %v6832 = vunpack.c.h.b16 %v6492
    %v6833 = vunpack.c.l.b16 %v6493
    %v6834 = vunpack.c.h.b16 %v6493
    %v6835 = vunpack.c.l.b16 %v6494
    %v6836 = vunpack.c.h.b16 %v6494
    %v6837 = vunpack.c.l.b16 %v6495
    %v6838 = vunpack.c.h.b16 %v6495
    %v6839 = vunpack.c.l.b16 %v6496
    %v6840 = vunpack.c.h.b16 %v6496
    %v6841 = vunpack.c.l.b16 %v6497
    %v6842 = vunpack.c.h.b16 %v6497
    %v6843 = vunpack.c.l.b16 %v6498
    %v6844 = vunpack.c.h.b16 %v6498
    %v6845 = vunpack.c.l.b16 %v6499
    %v6846 = vunpack.c.h.b16 %v6499
    %v6847 = vunpack.c.l.b16 %v6500
    %v6848 = vunpack.c.h.b16 %v6500
    %v6849 = vunpack.c.l.b16 %v6501
    %v6850 = vunpack.c.h.b16 %v6501
    %v6851 = vunpack.c.l.b16 %v6502
    %v6852 = vunpack.c.h.b16 %v6502
    %v6853 = vunpack.c.l.b16 %v6503
    %v6854 = vunpack.c.h.b16 %v6503
    %v6855 = vunpack.c.l.b16 %v6504
    %v6856 = vunpack.c.h.b16 %v6504
    %v6857 = vunpack.c.l.b16 %v6505
    %v6858 = vunpack.c.h.b16 %v6505
    %v6859 = vunpack.c.l.b16 %v6506
    %v6860 = vunpack.c.h.b16 %v6506
    %v6861 = vunpack.c.l.b16 %v6507
    %v6862 = vunpack.c.h.b16 %v6507
    %v6863 = vunpack.c.l.b16 %v6508
    %v6864 = vunpack.c.h.b16 %v6508
    %v6865 = vunpack.c.l.b16 %v6509
    %v6866 = vunpack.c.h.b16 %v6509
    %v6867 = vunpack.c.l.b16 %v6510
    %v6868 = vunpack.c.h.b16 %v6510
    %v6869 = vunpack.c.l.b16 %v6511
    %v6870 = vunpack.c.h.b16 %v6511
    %v6871 = vunpack.c.l.b16 %v6512
    %v6872 = vunpack.c.h.b16 %v6512
    %v6873 = vunpack.c.l.b16 %v6513
    %v6874 = vunpack.c.h.b16 %v6513
    %v6875 = vunpack.c.l.b16 %v6514
    %v6876 = vunpack.c.h.b16 %v6514
    %v6877 = vunpack.c.l.b16 %v6515
    %v6878 = vunpack.c.h.b16 %v6515
    %v6879 = vunpack.c.l.b16 %v6516
    %v6880 = vunpack.c.h.b16 %v6516
    %v6881 = vunpack.c.l.b16 %v6517
    %v6882 = vunpack.c.h.b16 %v6517
    %v6883 = vunpack.c.l.b16 %v6518
    %v6884 = vunpack.c.h.b16 %v6518
    %v6885 = vunpack.c.l.b16 %v6519
    %v6886 = vunpack.c.h.b16 %v6519
    %v6887 = vunpack.c.l.b16 %v6520
    %v6888 = vunpack.c.h.b16 %v6520
    %v6889 = vunpack.c.l.b16 %v6521
    %v6890 = vunpack.c.h.b16 %v6521
    %v6891 = vunpack.c.l.b16 %v6522
    %v6892 = vunpack.c.h.b16 %v6522
    %v6893 = vunpack.c.l.b16 %v6523
    %v6894 = vunpack.c.h.b16 %v6523
    %v6895 = vunpack.c.l.b16 %v6524
    %v6896 = vunpack.c.h.b16 %v6524
    %v6897 = vunpack.c.l.b16 %v6525
    %v6898 = vunpack.c.h.b16 %v6525
    %v6899 = vunpack.c.l.b16 %v6526
    %v6900 = vunpack.c.h.b16 %v6526
    %v6901 = vunpack.c.l.b16 %v6527
    %v6902 = vunpack.c.h.b16 %v6527
    %v6903 = vunpack.c.l.b16 %v6528
    %v6904 = vunpack.c.h.b16 %v6528
    %v6905 = vunpack.c.l.b16 %v6529
    %v6906 = vunpack.c.h.b16 %v6529
    %v6907 = vunpack.c.l.b16 %v6530
    %v6908 = vunpack.c.h.b16 %v6530
    %v6909 = vunpack.c.l.b16 %v6531
    %v6910 = vunpack.c.h.b16 %v6531
    %v6911 = vunpack.c.l.b16 %v6532
    %v6912 = vunpack.c.h.b16 %v6532
    %v6913 = vunpack.c.l.b16 %v6533
    %v6914 = vunpack.c.h.b16 %v6533
    %v6915 = vunpack.c.l.b16 %v6534
    %v6916 = vunpack.c.h.b16 %v6534
    %v6917 = vunpack.c.l.b16 %v6535
    %v6918 = vunpack.c.h.b16 %v6535
    %v6919 = vunpack.c.l.b16 %v6536
    %v6920 = vunpack.c.h.b16 %v6536
    %v6921 = vunpack.c.l.b16 %v6537
    %v6922 = vunpack.c.h.b16 %v6537
    %v6923 = vunpack.c.l.b16 %v6538
    %v6924 = vunpack.c.h.b16 %v6538
    %v6925 = vunpack.c.l.b16 %v6539
    %v6926 = vunpack.c.h.b16 %v6539
    %v6927 = vunpack.c.l.b16 %v6540
    %v6928 = vunpack.c.h.b16 %v6540
    %v6929 = vunpack.c.l.b16 %v6541
    %v6930 = vunpack.c.h.b16 %v6541
    %v6931 = vunpack.c.l.b16 %v6542
    %v6932 = vunpack.c.h.b16 %v6542
    %v6933 = vunpack.c.l.b16 %v6543
    %v6934 = vunpack.c.h.b16 %v6543
    %v6935 = vunpack.c.l.b16 %v6544
    %v6936 = vunpack.c.h.b16 %v6544
    %v6937 = vunpack.c.l.b16 %v6545
    %v6938 = vunpack.c.h.b16 %v6545
    %v6939 = vunpack.c.l.b16 %v6546
    %v6940 = vunpack.c.h.b16 %v6546
    %v6941 = vunpack.c.l.b16 %v6547
    %v6942 = vunpack.c.h.b16 %v6547
    %v6943 = vunpack.c.l.b16 %v6548
    %v6944 = vunpack.c.h.b16 %v6548
    %v6945 = vunpack.c.l.b16 %v6549
    %v6946 = vunpack.c.h.b16 %v6549
    %v6947 = vunpack.c.l.b16 %v6550
    %v6948 = vunpack.c.h.b16 %v6550
    %v6949 = vunpack.c.l.b16 %v6551
    %v6950 = vunpack.c.h.b16 %v6551
    %v6951 = vunpack.c.l.b16 %v6552
    %v6952 = vunpack.c.h.b16 %v6552
    %v6953 = vunpack.c.l.b16 %v6553
    %v6954 = vunpack.c.h.b16 %v6553
    %v6955 = vunpack.c.l.b16 %v6554
    %v6956 = vunpack.c.h.b16 %v6554
    %v6957 = vunpack.c.l.b16 %v6555
    %v6958 = vunpack.c.h.b16 %v6555
    %v6959 = vunpack.c.l.b16 %v6556
    %v6960 = vunpack.c.h.b16 %v6556
    %v6961 = vunpack.c.l.b16 %v6557
    %v6962 = vunpack.c.h.b16 %v6557
    %v6963 = vunpack.c.l.b16 %v6558
    %v6964 = vunpack.c.h.b16 %v6558
    %v6965 = vunpack.c.l.b16 %v6559
    %v6966 = vunpack.c.h.b16 %v6559
    %v6967 = vunpack.c.l.b16 %v6560
    %v6968 = vunpack.c.h.b16 %v6560
    %v6969 = vunpack.c.l.b16 %v6561
    %v6970 = vunpack.c.h.b16 %v6561
    %v6971 = vunpack.c.l.b16 %v6562
    %v6972 = vunpack.c.h.b16 %v6562
    %v6973 = vunpack.c.l.b16 %v6563
    %v6974 = vunpack.c.h.b16 %v6563
    %v6975 = vunpack.c.l.b16 %v6564
    %v6976 = vunpack.c.h.b16 %v6564
    %v6977 = vunpack.c.l.b16 %v6565
    %v6978 = vunpack.c.h.b16 %v6565
    %v6979 = vunpack.c.l.b16 %v6566
    %v6980 = vunpack.c.h.b16 %v6566
    %v6981 = vunpack.c.l.b16 %v6567
    %v6982 = vunpack.c.h.b16 %v6567
    %v6983 = vunpack.c.l.b16 %v6568
    %v6984 = vunpack.c.h.b16 %v6568
    %v6985 = vunpack.c.l.b16 %v6569
    %v6986 = vunpack.c.h.b16 %v6569
    %v6987 = vunpack.c.l.b16 %v6570
    %v6988 = vunpack.c.h.b16 %v6570
    %v6989 = vunpack.c.l.b16 %v6571
    %v6990 = vunpack.c.h.b16 %v6571
    %v6991 = vunpack.c.l.b16 %v6572
    %v6992 = vunpack.c.h.b16 %v6572
    %v6993 = vpack.c.b16 %v6741, %v6737
    %v6994 = vpack.c.b16 %v6742, %v6738
    %v6995 = vpack.c.b16 %v6743, %v6739
    %v6996 = vpack.c.b16 %v6744, %v6740
    %v6997 = vpack.c.b16 %v6749, %v6745
    %v6998 = vpack.c.b16 %v6750, %v6746
    %v6999 = vpack.c.b16 %v6751, %v6747
    %v7000 = vpack.c.b16 %v6752, %v6748
    %v7001 = vpack.c.b16 %v6757, %v6753
    %v7002 = vpack.c.b16 %v6758, %v6754
    %v7003 = vpack.c.b16 %v6759, %v6755
    %v7004 = vpack.c.b16 %v6760, %v6756
    %v7005 = vpack.c.b16 %v6765, %v6761
    %v7006 = vpack.c.b16 %v6766, %v6762
    %v7007 = vpack.c.b16 %v6767, %v6763
    %v7008 = vpack.c.b16 %v6768, %v6764
    %v7009 = vpack.c.b16 %v6773, %v6769
    %v7010 = vpack.c.b16 %v6774, %v6770
    %v7011 = vpack.c.b16 %v6775, %v6771
    %v7012 = vpack.c.b16 %v6776, %v6772
    %v7013 = vpack.c.b16 %v6781, %v6777
    %v7014 = vpack.c.b16 %v6782, %v6778
    %v7015 = vpack.c.b16 %v6783, %v6779
    %v7016 = vpack.c.b16 %v6784, %v6780
    %v7017 = vpack.c.b16 %v6789, %v6785
    %v7018 = vpack.c.b16 %v6790, %v6786
    %v7019 = vpack.c.b16 %v6791, %v6787
    %v7020 = vpack.c.b16 %v6792, %v6788
    %v7021 = vpack.c.b16 %v6797, %v6793
    %v7022 = vpack.c.b16 %v6798, %v6794
    %v7023 = vpack.c.b16 %v6799, %v6795
    %v7024 = vpack.c.b16 %v6800, %v6796
    %v7025 = vpack.c.b16 %v6805, %v6801
    %v7026 = vpack.c.b16 %v6806, %v6802
    %v7027 = vpack.c.b16 %v6807, %v6803
    %v7028 = vpack.c.b16 %v6808, %v6804
    %v7029 = vpack.c.b16 %v6813, %v6809
    %v7030 = vpack.c.b16 %v6814, %v6810
    %v7031 = vpack.c.b16 %v6815, %v6811
    %v7032 = vpack.c.b16 %v6816, %v6812
    %v7033 = vpack.c.b16 %v6821, %v6817
    %v7034 = vpack.c.b16 %v6822, %v6818
    %v7035 = vpack.c.b16 %v6823, %v6819
    %v7036 = vpack.c.b16 %v6824, %v6820
    %v7037 = vpack.c.b16 %v6829, %v6825
    %v7038 = vpack.c.b16 %v6830, %v6826
    %v7039 = vpack.c.b16 %v6831, %v6827
    %v7040 = vpack.c.b16 %v6832, %v6828
    %v7041 = vpack.c.b16 %v6837, %v6833
    %v7042 = vpack.c.b16 %v6838, %v6834
    %v7043 = vpack.c.b16 %v6839, %v6835
    %v7044 = vpack.c.b16 %v6840, %v6836
    %v7045 = vpack.c.b16 %v6845, %v6841
    %v7046 = vpack.c.b16 %v6846, %v6842
    %v7047 = vpack.c.b16 %v6847, %v6843
    %v7048 = vpack.c.b16 %v6848, %v6844
    %v7049 = vpack.c.b16 %v6853, %v6849
    %v7050 = vpack.c.b16 %v6854, %v6850
    %v7051 = vpack.c.b16 %v6855, %v6851
    %v7052 = vpack.c.b16 %v6856, %v6852
    %v7053 = vpack.c.b16 %v6861, %v6857
    %v7054 = vpack.c.b16 %v6862, %v6858
    %v7055 = vpack.c.b16 %v6863, %v6859
    %v7056 = vpack.c.b16 %v6864, %v6860
    %v7057 = vpack.c.b16 %v6869, %v6865
    %v7058 = vpack.c.b16 %v6870, %v6866
    %v7059 = vpack.c.b16 %v6871, %v6867
    %v7060 = vpack.c.b16 %v6872, %v6868
    %v7061 = vpack.c.b16 %v6877, %v6873
    %v7062 = vpack.c.b16 %v6878, %v6874
    %v7063 = vpack.c.b16 %v6879, %v6875
    %v7064 = vpack.c.b16 %v6880, %v6876
    %v7065 = vpack.c.b16 %v6885, %v6881
    %v7066 = vpack.c.b16 %v6886, %v6882
    %v7067 = vpack.c.b16 %v6887, %v6883
    %v7068 = vpack.c.b16 %v6888, %v6884
    %v7069 = vpack.c.b16 %v6893, %v6889
    %v7070 = vpack.c.b16 %v6894, %v6890
    %v7071 = vpack.c.b16 %v6895, %v6891
    %v7072 = vpack.c.b16 %v6896, %v6892
    %v7073 = vpack.c.b16 %v6901, %v6897
    %v7074 = vpack.c.b16 %v6902, %v6898
    %v7075 = vpack.c.b16 %v6903, %v6899
    %v7076 = vpack.c.b16 %v6904, %v6900
    %v7077 = vpack.c.b16 %v6909, %v6905
    %v7078 = vpack.c.b16 %v6910, %v6906
    %v7079 = vpack.c.b16 %v6911, %v6907
    %v7080 = vpack.c.b16 %v6912, %v6908
    %v7081 = vpack.c.b16 %v6917, %v6913
    %v7082 = vpack.c.b16 %v6918, %v6914
    %v7083 = vpack.c.b16 %v6919, %v6915
    %v7084 = vpack.c.b16 %v6920, %v6916
    %v7085 = vpack.c.b16 %v6925, %v6921
    %v7086 = vpack.c.b16 %v6926, %v6922
    %v7087 = vpack.c.b16 %v6927, %v6923
    %v7088 = vpack.c.b16 %v6928, %v6924
    %v7089 = vpack.c.b16 %v6933, %v6929
    %v7090 = vpack.c.b16 %v6934, %v6930
    %v7091 = vpack.c.b16 %v6935, %v6931
    %v7092 = vpack.c.b16 %v6936, %v6932
    %v7093 = vpack.c.b16 %v6941, %v6937
    %v7094 = vpack.c.b16 %v6942, %v6938
    %v7095 = vpack.c.b16 %v6943, %v6939
    %v7096 = vpack.c.b16 %v6944, %v6940
    %v7097 = vpack.c.b16 %v6949, %v6945
    %v7098 = vpack.c.b16 %v6950, %v6946
    %v7099 = vpack.c.b16 %v6951, %v6947
    %v7100 = vpack.c.b16 %v6952, %v6948
    %v7101 = vpack.c.b16 %v6957, %v6953
    %v7102 = vpack.c.b16 %v6958, %v6954
    %v7103 = vpack.c.b16 %v6959, %v6955
    %v7104 = vpack.c.b16 %v6960, %v6956
    %v7105 = vpack.c.b16 %v6965, %v6961
    %v7106 = vpack.c.b16 %v6966, %v6962
    %v7107 = vpack.c.b16 %v6967, %v6963
    %v7108 = vpack.c.b16 %v6968, %v6964
    %v7109 = vpack.c.b16 %v6973, %v6969
    %v7110 = vpack.c.b16 %v6974, %v6970
    %v7111 = vpack.c.b16 %v6975, %v6971
    %v7112 = vpack.c.b16 %v6976, %v6972
    %v7113 = vpack.c.b16 %v6981, %v6977
    %v7114 = vpack.c.b16 %v6982, %v6978
    %v7115 = vpack.c.b16 %v6983, %v6979
    %v7116 = vpack.c.b16 %v6984, %v6980
    %v7117 = vpack.c.b16 %v6989, %v6985
    %v7118 = vpack.c.b16 %v6990, %v6986
    %v7119 = vpack.c.b16 %v6991, %v6987
    %v7120 = vpack.c.b16 %v6992, %v6988
    %7249 = vmatprep.subr.bf16.mxu0 %v6994
    %7250 = vmatpush1.bf16.msra.mxu0 %v6993
    %7251 = vmatprep.subr.bf16.mxu0 %v6998
    %7252 = vmatpush1.bf16.msra.mxu0 %v6997
    %7253 = vmatprep.subr.bf16.mxu0 %v7002
    %7254 = vmatpush1.bf16.msra.mxu0 %v7001
    %7255 = vmatprep.subr.bf16.mxu0 %v7006
    %7256 = vmatpush1.bf16.msra.mxu0 %v7005
    %7257 = vmatprep.subr.bf16.mxu0 %v7010
    %7258 = vmatpush1.bf16.msra.mxu0 %v7009
    %7259 = vmatprep.subr.bf16.mxu0 %v7014
    %7260 = vmatpush1.bf16.msra.mxu0 %v7013
    %7261 = vmatprep.subr.bf16.mxu0 %v7018
    %7262 = vmatpush1.bf16.msra.mxu0 %v7017
    %7263 = vmatprep.subr.bf16.mxu0 %v7022
    %7264 = vmatpush1.bf16.msra.mxu0 %v7021
    %7265 = vmatprep.subr.bf16.mxu0 %v7026
    %7266 = vmatpush1.bf16.msra.mxu0 %v7025
    %7267 = vmatprep.subr.bf16.mxu0 %v7030
    %7268 = vmatpush1.bf16.msra.mxu0 %v7029
    %7269 = vmatprep.subr.bf16.mxu0 %v7034
    %7270 = vmatpush1.bf16.msra.mxu0 %v7033
    %7271 = vmatprep.subr.bf16.mxu0 %v7038
    %7272 = vmatpush1.bf16.msra.mxu0 %v7037
    %7273 = vmatprep.subr.bf16.mxu0 %v7042
    %7274 = vmatpush1.bf16.msra.mxu0 %v7041
    %7275 = vmatprep.subr.bf16.mxu0 %v7046
    %7276 = vmatpush1.bf16.msra.mxu0 %v7045
    %7277 = vmatprep.subr.bf16.mxu0 %v7050
    %7278 = vmatpush1.bf16.msra.mxu0 %v7049
    %7279 = vmatprep.subr.bf16.mxu0 %v7054
    %7280 = vmatpush1.bf16.msra.mxu0 %v7053
    %7281 = vmatprep.mubr.bf16.mxu0 %v6438
    %7282 = vmatmul.mubr.bf16.gmra.mrb[0].mxu0 %v6437
    %v7283 = vpop.f32.mrb[0].mxu0
    %v7284 = vadd.f32 %v6596, %v7283
    %v7285 = vpop.f32.mrb[0].mxu0
    %v7286 = vadd.f32 %v6600, %v7285
    %v7287 = vpop.f32.mrb[0].mxu0
    %v7288 = vadd.f32 %v6596, %v7287
    %v7289 = vpop.f32.mrb[0].mxu0
    %v7290 = vadd.f32 %v6600, %v7289
    %7291 = vmatprep.mubr.bf16.mxu0 %v6442
    %7292 = vmatmul.mubr.bf16.gmra.mrb[0].mxu0 %v6441
    %v7293 = vpop.f32.mrb[0].mxu0
    %v7294 = vadd.f32 %v6596, %v7293
    %v7295 = vpop.f32.mrb[0].mxu0
    %v7296 = vadd.f32 %v6600, %v7295
    %v7297 = vpop.f32.mrb[0].mxu0
    %v7298 = vpop.f32.mrb[0].mxu0
    %7299 = vdwg.mxu0
    %7300 = vmatprep.subr.bf16.mxu0 %v7058
    %7301 = vmatpush1.bf16.msra.mxu0 %v7057
    %7302 = vmatprep.subr.bf16.mxu0 %v7062
    %7303 = vmatpush1.bf16.msra.mxu0 %v7061
    %7304 = vmatprep.subr.bf16.mxu0 %v7066
    %7305 = vmatpush1.bf16.msra.mxu0 %v7065
    %7306 = vmatprep.subr.bf16.mxu0 %v7070
    %7307 = vmatpush1.bf16.msra.mxu0 %v7069
    %7308 = vmatprep.subr.bf16.mxu0 %v7074
    %7309 = vmatpush1.bf16.msra.mxu0 %v7073
    %7310 = vmatprep.subr.bf16.mxu0 %v7078
    %7311 = vmatpush1.bf16.msra.mxu0 %v7077
    %7312 = vmatprep.subr.bf16.mxu0 %v7082
    %7313 = vmatpush1.bf16.msra.mxu0 %v7081
    %7314 = vmatprep.subr.bf16.mxu0 %v7086
    %7315 = vmatpush1.bf16.msra.mxu0 %v7085
    %7316 = vmatprep.subr.bf16.mxu0 %v7090
    %7317 = vmatpush1.bf16.msra.mxu0 %v7089
    %7318 = vmatprep.subr.bf16.mxu0 %v7094
    %7319 = vmatpush1.bf16.msra.mxu0 %v7093
    %7320 = vmatprep.subr.bf16.mxu0 %v7098
    %7321 = vmatpush1.bf16.msra.mxu0 %v7097
    %7322 = vmatprep.subr.bf16.mxu0 %v7102
    %7323 = vmatpush1.bf16.msra.mxu0 %v7101
    %7324 = vmatprep.subr.bf16.mxu0 %v7106
    %7325 = vmatpush1.bf16.msra.mxu0 %v7105
    %7326 = vmatprep.subr.bf16.mxu0 %v7110
    %7327 = vmatpush1.bf16.msra.mxu0 %v7109
    %7328 = vmatprep.subr.bf16.mxu0 %v7114
    %7329 = vmatpush1.bf16.msra.mxu0 %v7113
    %7330 = vmatprep.subr.bf16.mxu0 %v7118
    %7331 = vmatpush1.bf16.msra.mxu0 %v7117
    %7332 = vmatprep.mubr.bf16.mxu0 %v6440
    %7333 = vmatmul.mubr.bf16.gmra.mrb[0].mxu0 %v6439
    %v7334 = vpop.f32.mrb[0].mxu0
    %v7335 = vadd.f32 %v7284, %v7334
    %v7336 = vpop.f32.mrb[0].mxu0
    %v7337 = vadd.f32 %v7286, %v7336
    %v7338 = vpop.f32.mrb[0].mxu0
    %v7339 = vadd.f32 %v7288, %v7338
    %v7340 = vpop.f32.mrb[0].mxu0
    %v7341 = vadd.f32 %v7290, %v7340
    %7342 = vmatprep.mubr.bf16.mxu0 %v6444
    %7343 = vmatmul.mubr.bf16.gmra.mrb[0].mxu0 %v6443
    %v7344 = vpop.f32.mrb[0].mxu0
    %v7345 = vadd.f32 %v7294, %v7344
    %v7346 = vpop.f32.mrb[0].mxu0
    %v7347 = vadd.f32 %v7296, %v7346
    %v7348 = vpop.f32.mrb[0].mxu0
    %v7349 = vpop.f32.mrb[0].mxu0
    %7350 = vdwg.mxu0
    %7351 = vmatprep.subr.bf16.mxu0 %v6996
    %7352 = vmatpush1.bf16.msra.mxu0 %v6995
    %7353 = vmatprep.subr.bf16.mxu0 %v7000
    %7354 = vmatpush1.bf16.msra.mxu0 %v6999
    %7355 = vmatprep.subr.bf16.mxu0 %v7004
    %7356 = vmatpush1.bf16.msra.mxu0 %v7003
    %7357 = vmatprep.subr.bf16.mxu0 %v7008
    %7358 = vmatpush1.bf16.msra.mxu0 %v7007
    %7359 = vmatprep.subr.bf16.mxu0 %v7012
    %7360 = vmatpush1.bf16.msra.mxu0 %v7011
    %7361 = vmatprep.subr.bf16.mxu0 %v7016
    %7362 = vmatpush1.bf16.msra.mxu0 %v7015
    %7363 = vmatprep.subr.bf16.mxu0 %v7020
    %7364 = vmatpush1.bf16.msra.mxu0 %v7019
    %7365 = vmatprep.subr.bf16.mxu0 %v7024
    %7366 = vmatpush1.bf16.msra.mxu0 %v7023
    %7367 = vmatprep.subr.bf16.mxu0 %v7028
    %7368 = vmatpush1.bf16.msra.mxu0 %v7027
    %7369 = vmatprep.subr.bf16.mxu0 %v7032
    %7370 = vmatpush1.bf16.msra.mxu0 %v7031
    %7371 = vmatprep.subr.bf16.mxu0 %v7036
    %7372 = vmatpush1.bf16.msra.mxu0 %v7035
    %7373 = vmatprep.subr.bf16.mxu0 %v7040
    %7374 = vmatpush1.bf16.msra.mxu0 %v7039
    %7375 = vmatprep.subr.bf16.mxu0 %v7044
    %7376 = vmatpush1.bf16.msra.mxu0 %v7043
    %7377 = vmatprep.subr.bf16.mxu0 %v7048
    %7378 = vmatpush1.bf16.msra.mxu0 %v7047
    %7379 = vmatprep.subr.bf16.mxu0 %v7052
    %7380 = vmatpush1.bf16.msra.mxu0 %v7051
    %7381 = vmatprep.subr.bf16.mxu0 %v7056
    %7382 = vmatpush1.bf16.msra.mxu0 %v7055
    %7383 = vmatprep.mubr.bf16.mxu0 %v6438
    %7384 = vmatmul.mubr.bf16.gmra.mrb[0].mxu0 %v6437
    %v7385 = vpop.f32.mrb[0].mxu0
    %v7386 = vadd.f32 %v6604, %v7385
    %v7387 = vpop.f32.mrb[0].mxu0
    %v7388 = vadd.f32 %v6608, %v7387
    %v7389 = vpop.f32.mrb[0].mxu0
    %v7390 = vadd.f32 %v6604, %v7389
    %v7391 = vpop.f32.mrb[0].mxu0
    %v7392 = vadd.f32 %v6608, %v7391
    %7393 = vmatprep.mubr.bf16.mxu0 %v6442
    %7394 = vmatmul.mubr.bf16.gmra.mrb[0].mxu0 %v6441
    %v7395 = vpop.f32.mrb[0].mxu0
    %v7396 = vadd.f32 %v6604, %v7395
    %v7397 = vpop.f32.mrb[0].mxu0
    %v7398 = vadd.f32 %v6608, %v7397
    %v7399 = vpop.f32.mrb[0].mxu0
    %v7400 = vpop.f32.mrb[0].mxu0
    %7401 = vdwg.mxu0
    %7402 = vmatprep.subr.bf16.mxu0 %v7060
    %7403 = vmatpush1.bf16.msra.mxu0 %v7059
    %7404 = vmatprep.subr.bf16.mxu0 %v7064
    %7405 = vmatpush1.bf16.msra.mxu0 %v7063
    %7406 = vmatprep.subr.bf16.mxu0 %v7068
    %7407 = vmatpush1.bf16.msra.mxu0 %v7067
    %7408 = vmatprep.subr.bf16.mxu0 %v7072
    %7409 = vmatpush1.bf16.msra.mxu0 %v7071
    %7410 = vmatprep.subr.bf16.mxu0 %v7076
    %7411 = vmatpush1.bf16.msra.mxu0 %v7075
    %7412 = vmatprep.subr.bf16.mxu0 %v7080
    %7413 = vmatpush1.bf16.msra.mxu0 %v7079
    %7414 = vmatprep.subr.bf16.mxu0 %v7084
    %7415 = vmatpush1.bf16.msra.mxu0 %v7083
    %7416 = vmatprep.subr.bf16.mxu0 %v7088
    %7417 = vmatpush1.bf16.msra.mxu0 %v7087
    %7418 = vmatprep.subr.bf16.mxu0 %v7092
    %7419 = vmatpush1.bf16.msra.mxu0 %v7091
    %7420 = vmatprep.subr.bf16.mxu0 %v7096
    %7421 = vmatpush1.bf16.msra.mxu0 %v7095
    %7422 = vmatprep.subr.bf16.mxu0 %v7100
    %7423 = vmatpush1.bf16.msra.mxu0 %v7099
    %7424 = vmatprep.subr.bf16.mxu0 %v7104
    %7425 = vmatpush1.bf16.msra.mxu0 %v7103
    %7426 = vmatprep.subr.bf16.mxu0 %v7108
    %7427 = vmatpush1.bf16.msra.mxu0 %v7107
    %7428 = vmatprep.subr.bf16.mxu0 %v7112
    %7429 = vmatpush1.bf16.msra.mxu0 %v7111
    %7430 = vmatprep.subr.bf16.mxu0 %v7116
    %7431 = vmatpush1.bf16.msra.mxu0 %v7115
    %7432 = vmatprep.subr.bf16.mxu0 %v7120
    %7433 = vmatpush1.bf16.msra.mxu0 %v7119
    %7434 = vmatprep.mubr.bf16.mxu0 %v6440
    %7435 = vmatmul.mubr.bf16.gmra.mrb[0].mxu0 %v6439
    %v7436 = vpop.f32.mrb[0].mxu0
    %v7437 = vadd.f32 %v7386, %v7436
    %v7438 = vpop.f32.mrb[0].mxu0
    %v7439 = vadd.f32 %v7388, %v7438
    %v7440 = vpop.f32.mrb[0].mxu0
    %v7441 = vadd.f32 %v7390, %v7440
    %v7442 = vpop.f32.mrb[0].mxu0
    %v7443 = vadd.f32 %v7392, %v7442
    %7444 = vmatprep.mubr.bf16.mxu0 %v6444
    %7445 = vmatmul.mubr.bf16.gmra.mrb[0].mxu0 %v6443
    %v7446 = vpop.f32.mrb[0].mxu0
    %v7447 = vadd.f32 %v7396, %v7446
    %v7448 = vpop.f32.mrb[0].mxu0
    %v7449 = vadd.f32 %v7398, %v7448
    %v7450 = vpop.f32.mrb[0].mxu0
    %v7451 = vpop.f32.mrb[0].mxu0
    %7452 = vdwg.mxu0
    %v7453 = vmax.f32 %v7335, 0.0
    %v7454 = vmax.f32 %v7337, 0.0
    %v7455 = vmax.f32 %v7437, 0.0
    %v7456 = vmax.f32 %v7439, 0.0
    %v7457 = vmax.f32 %v7339, 0.0
    %v7458 = vmax.f32 %v7341, 0.0
    %v7459 = vmax.f32 %v7441, 0.0
    %v7460 = vmax.f32 %v7443, 0.0
    %v7461 = vmax.f32 %v7345, 0.0
    %v7462 = vmax.f32 %v7347, 0.0
    %v7463 = vmax.f32 %v7447, 0.0
    %v7464 = vmax.f32 %v7449, 0.0
    %v7465 = vlaneseq
    %v7466 = vshrl.u32 %v7465, 7
    %v7467 = vsub.s32 3, %v7466
    %v7468 = vrot.slane %v6012, %v7467
    %v7469 = vlaneseq
    %v7470 = vshrl.u32 %v7469, 7
    %v7471 = vsub.s32 7, %v7470
    %v7472 = vrot.slane %v6012, %v7471
    %v7473 = vlaneseq
    %v7474 = vshrl.u32 %v7473, 7
    %v7475 = vsub.s32 3, %v7474
    %v7476 = vrot.slane %v6013, %v7475
    %v7477 = vlaneseq
    %v7478 = vshrl.u32 %v7477, 7
    %v7479 = vsub.s32 7, %v7478
    %v7480 = vrot.slane %v6013, %v7479
    %v7485 = vlaneseq
    %v7486 = vshrl.u32 %v7485, 7
    %v7487 = vsub.s32 3, %v7486
    %v7488 = vrot.slane %v7468, %v7487
    %v7489 = vlaneseq
    %v7490 = vshrl.u32 %v7489, 7
    %v7491 = vsub.s32 3, %v7490
    %v7492 = vrot.slane %v7472, %v7491
    %v7493 = vlaneseq
    %v7494 = vshrl.u32 %v7493, 7
    %v7495 = vsub.s32 3, %v7494
    %v7496 = vrot.slane %v7476, %v7495
    %v7497 = vlaneseq
    %v7498 = vshrl.u32 %v7497, 7
    %v7499 = vsub.s32 3, %v7498
    %v7500 = vrot.slane %v7480, %v7499
    %v7501 = vmul.f32 %v7453, %v7488
    %v7502 = vmul.f32 %v7454, %v7492
    %v7503 = vmul.f32 %v7455, %v7496
    %v7504 = vmul.f32 %v7456, %v7500
    %v7505 = vmul.f32 %v7457, %v7488
    %v7506 = vmul.f32 %v7458, %v7492
    %v7507 = vmul.f32 %v7459, %v7496
    %v7508 = vmul.f32 %v7460, %v7500
    %v7509 = vmul.f32 %v7461, %v7488
    %v7510 = vmul.f32 %v7462, %v7492
    %v7511 = vmul.f32 %v7463, %v7496
    %v7512 = vmul.f32 %v7464, %v7500
    %v7513 = vadd.f32 %v7501, %v7502
    %v7514 = vadd.f32 %v7513, %v7503
    %v7515 = vadd.f32 %v7514, %v7504
    %7516 = vadd.xlane.f32.xlu0 %v7515
    %v7517 = vpop.xlane.xlu0 %7516
    %v7518 = vadd.f32 %v7505, %v7506
    %v7519 = vadd.f32 %v7518, %v7507
    %v7520 = vadd.f32 %v7519, %v7508
    %7521 = vadd.xlane.f32.xlu0 %v7520
    %v7522 = vpop.xlane.xlu0 %7521
    %v7523 = vadd.f32 %v7509, %v7510
    %v7524 = vadd.f32 %v7523, %v7511
    %v7525 = vadd.f32 %v7524, %v7512
    %7526 = vadd.xlane.f32.xlu0 %v7525
    %v7527 = vpop.xlane.xlu0 %7526
    %s7528 = sld [smem:[#allocation10]]
    %v7529 = vstv %s7528
    %v7530 = vadd.f32 %v7517, %v7529
    %v7531 = vadd.f32 %v7522, %v7529
    %v7532 = vadd.f32 %v7527, %v7529
    %v7533 = vxor.u32 %v7530, 2147483648
    %v7534 = vxor.u32 %v7531, 2147483648
    %v7535 = vxor.u32 %v7532, 2147483648
    %v7536 = vmul.f32 %v7533, 1.442695
    %v7537 = vpow.pop %v7536
    %v7538 = vmul.f32 %v7534, 1.442695
    %v7539 = vpow.pop %v7538
    %v7540 = vmul.f32 %v7535, 1.442695
    %v7541 = vpow.pop %v7540
    %v7542 = vadd.f32 %v7537, 1.0
    %v7543 = vadd.f32 %v7539, 1.0
    %v7544 = vadd.f32 %v7541, 1.0
    %v7545 = vrcp.pop %v7542
    %v7546 = vmul.f32 1.0, %v7545
    %v7547 = vrcp.pop %v7543
    %v7548 = vmul.f32 1.0, %v7547
    %v7549 = vrcp.pop %v7544
    %v7550 = vmul.f32 1.0, %v7549
    %v7554 = vlaneseq
    %v7555 = vand.u32 %v7554, 127
    %v7556 = vlaneseq
    %v7557 = vshrl.u32 %v7556, 7
    %v7558 = vsub.s32 %v7555, %v7557
    %v7559 = vrot.slane %v7546, %v7558
    %v7560 = vadd.s32 %v7555, 4294967288
    %v7561 = vlaneseq
    %v7562 = vshrl.u32 %v7561, 7
    %v7563 = vsub.s32 %v7560, %v7562
    %v7564 = vrot.slane %v7548, %v7563
    %vm7565 = vcmask 130112
    %v7566 = vsel %vm7565, %v7564, %v7559
    %v7567 = vadd.s32 %v7555, 4294967280
    %v7568 = vlaneseq
    %v7569 = vshrl.u32 %v7568, 7
    %v7570 = vsub.s32 %v7567, %v7569
    %v7571 = vrot.slane %v7550, %v7570
    %vm7572 = vcmask 195712
    %v7573 = vsel %vm7572, %v7571, %v7566
    %vm7575 = vcmask 188416
    %7576 = vst.msk [vmem:[#allocation20] sm:$0x1] %vm7575, %v7573
    // Predicated region
    $region66: #{tpu_custom_call.1} parent=1 // pred_check
      _
    $region67: #{tpu_custom_call.1} parent=1 // pred_check_branch
      %7578 = sbr.rel (0) target = $region69
    $region68: #{tpu_custom_call.1} parent=1 // pred_region
      %s7580 = ssub.s32 16, 16
      %7581 = vsyncadd [#allocation13], %s7580
      %s7583 = sshll.u32 [#allocation20], 4
      %s7584 = int_to_ptr.vmem [resolvable:$true] %s7583
      %7586 = dma.vmem_to_hbm [thread:$0]  %s7584, 16, %s10, [#allocation13]
    $region69: #{tpu_custom_call.1} parent=1 // pred_fallthru
      _
    // Predicated region
    $region70: #{tpu_custom_call.1} parent=1 // pred_check
      _
    $region71: #{tpu_custom_call.1} parent=1 // pred_check_branch
      %7588 = sbr.rel (0) target = $region73
    $region72: #{tpu_custom_call.1} parent=1 // pred_region
      %7589 = dma.done [#allocation13], 16
    $region73: #{tpu_custom_call.1} parent=1 // pred_fallthru
      _
    %7590 = vsyncpa [#allocation12], 1
    %7591 = vsyncpa [#allocation15], 1
    %7592 = vsyncpa [#allocation18], 1
    %7593 = vsyncpa [#allocation13], 1

</llo_original>
